<compile_context>
chip_gen: v6e
topology: v6e:2x2x1
jax: 0.10.0
libtpu: 0.0.40
codegen_flags: <defaults>
</compile_context>

<pallas_src>
import functools
import math

import jax
import jax.numpy as jnp
from jax import lax
from jax.experimental import pallas as pl
from jax.experimental.pallas import tpu as pltpu

KSIZE = 7
PAD = 3
EPS = 1e-6

# Flipped off automatically (and the call retried) if this jax build rejects a
# single-buffer pipeline_mode on pallas_call BlockSpecs.
_USE_SINGLE_BUFFER = [True]


def _round_up(x, m):
    return (x + m - 1) // m * m


def _vmem_capacity_bytes():
    try:
        return int(pltpu.get_tpu_info().vmem_capacity_bytes)
    except Exception:
        return 64 * 1024 * 1024            # conservative fallback (v7x per-TensorCore VMEM)


def _single_buffer_kwargs():
    """pipeline_mode=pl.Buffered(1) for blocks whose index_map is constant across bands."""
    if not _USE_SINGLE_BUFFER[0] or not hasattr(pl, "Buffered"):
        return {}
    try:
        pl.BlockSpec((8, 128), lambda i: (0, 0), pipeline_mode=pl.Buffered(1))
        return {"pipeline_mode": pl.Buffered(1)}
    except TypeError:
        return {}


def _choose_tile_h(H, w_rows, N, *, target_rows, min_steps=8, min_rows=128):
    """Band height TH (divisor of H): TH*w_rows rows should fill the MXU while keeping
    enough grid steps for pipelining / megacore sharding."""
    divs = [d for d in range(1, H + 1)
            if H % d == 0 and ((d * w_rows) % 8 == 0 or d == H)]
    fitting = [d for d in divs if d * w_rows <= target_rows]
    th = max(fitting) if fitting else min(divs)
    while N * (H // th) < min_steps:
        smaller = [d for d in divs if d < th and d * w_rows >= min_rows]
        if not smaller:
            smaller = [d for d in divs if d < th]
        if not smaller:
            break
        th = max(smaller)
    return th


# ------------------------- fused ConvNeXt block kernel -------------------------
def _block_kernel(xflat_ref, dww_ref, dwb_ref, w1_ref, b1_ref, w2_ref, b2_ref, o_ref,
                  *, tile_h, width, wpad, c_valid, compact):
    TH, W, Wpad, C = tile_h, width, wpad, c_valid
    Cpad = xflat_ref.shape[-1]
    band_rows = (TH + 2 * PAD) * Wpad       # TH output rows + 3-row halo on each side
    out_rows = TH * Wpad

    h0 = pl.program_id(1) * TH
    start = pl.multiple_of(h0 * Wpad, 8)    # Wpad % 8 == 0 -> aligned window
    xb = xflat_ref[0, pl.ds(start, band_rows), :]          # ((TH+6)*Wpad, Cpad)

    dww = dww_ref[...]                      # (49, Cpad) f32 -- hoisted single read

    # ---- depthwise 7x7 conv: 7 XLU sublane rolls + 49 aligned slices + FMAs -----
    # Column shift (dw): roll wrap only touches padded columns that are discarded;
    # row shift (dh): aligned sublane slice (multiple of Wpad, Wpad % 8 == 0).
    acc = jnp.zeros((out_rows, Cpad), jnp.float32)
    res = None
    for dw in range(KSIZE):
        shifted = xb if dw == 0 else pltpu.roll(xb, band_rows - dw, axis=0)
        if dw == PAD:
            # window center == the pre-conv activations -> reuse as residual
            # instead of re-reading x from HBM.
            if compact:
                res = jnp.concatenate(
                    [shifted[(t + PAD) * Wpad:(t + PAD) * Wpad + W, :]
                     for t in range(TH)], axis=0)
            else:
                res = shifted[PAD * Wpad:PAD * Wpad + out_rows, :]
        for dh in range(KSIZE):
            row0 = dh * Wpad
            acc = acc + (shifted[row0:row0 + out_rows, :].astype(jnp.float32)
                         * dww[dh * KSIZE + dw])

    if compact:
        # compact to the W valid columns per output row (misaligned slices -> only
        # used when the Wpad/W overhead would be large).
        conv = jnp.concatenate([acc[t * Wpad:t * Wpad + W, :] for t in range(TH)], axis=0)
    else:
        conv = acc                           # padded columns stripped in the wrapper
    conv = conv + dwb_ref[0, :]

    # ---- LayerNorm over the C valid channels (padded channels of conv are zero) ---
    mu = jnp.sum(conv, axis=-1, keepdims=True) * (1.0 / C)
    xc = conv - mu
    ssq = jnp.sum(xc * xc, axis=-1, keepdims=True)
    if Cpad != C:
        ssq = ssq - float(Cpad - C) * (mu * mu)   # padded channels contributed (0-mu)^2
    var = jnp.maximum(ssq * (1.0 / C), 0.0)
    xn = xc * lax.rsqrt(var + EPS)           # LN affine is folded into w1/b1

    # ---- pwconv1 -> GELU -> pwconv2 (bf16 MXU operands, f32 accumulation) ---------
    h = jnp.dot(xn.astype(w1_ref.dtype), w1_ref[...],
                preferred_element_type=jnp.float32) + b1_ref[0, :]
    # Exact (erf) GELU to match nn.GELU() semantics.
    # TODO(synk): tanh-approx GELU would move this onto the EUP slot but changes numerics.
    h = 0.5 * h * (1.0 + lax.erf(h * (1.0 / math.sqrt(2.0))))
    y = jnp.dot(h.astype(w2_ref.dtype), w2_ref[...],
                preferred_element_type=jnp.float32) + b2_ref[0, :]
    # layer-scale gamma is folded into w2/b2; drop_path rate 0 -> identity.

    o_ref[0] = (res.astype(jnp.float32) + y).astype(o_ref.dtype)


# ---------------------------------- wrapper ----------------------------------
def _fold_and_pad_params(params, C, Cpad, mm_dtype):
    """Fold LN affine + layer-scale into the pointwise weights; zero-pad channels."""
    f32 = jnp.float32
    ln_w, ln_b = params["ln_w"].astype(f32), params["ln_b"].astype(f32)
    w1, b1 = params["w1"].astype(f32), params["b1"].astype(f32)
    w2, b2 = params["w2"].astype(f32), params["b2"].astype(f32)
    gamma = params["gamma"].astype(f32)

    w1f = ln_w[:, None] * w1                 # (xn*lnw + lnb) @ w1 + b1
    b1f = b1 + ln_b @ w1
    w2f = w2 * gamma[None, :]                # (h @ w2 + b2) * gamma
    b2f = b2 * gamma

    dC = Cpad - C
    dww = jnp.pad(params["dw_w"].astype(f32), ((0, 0), (0, 0), (0, dC)))
    dww = dww.reshape(KSIZE * KSIZE, Cpad)
    dwb = jnp.pad(params["dw_b"].astype(f32), ((0, dC),)).reshape(1, Cpad)
    w1p = jnp.pad(w1f, ((0, dC), (0, 4 * dC))).astype(mm_dtype)
    b1p = jnp.pad(b1f, ((0, 4 * dC),)).reshape(1, 4 * Cpad)
    w2p = jnp.pad(w2f, ((0, 4 * dC), (0, dC))).astype(mm_dtype)
    b2p = jnp.pad(b2f, ((0, dC),)).reshape(1, Cpad)
    return dww, dwb, w1p, b1p, w2p, b2p


def convnext_block_forward(x_nchw, params, *, compact=None, mm_dtype=jnp.bfloat16):
    N, C, H, W = x_nchw.shape
    Cpad = _round_up(C, 128)                      # lane-dense stores / full MXU tiles
    Hp = H + 2 * PAD
    Wpad = _round_up(W + 2 * PAD, 8)
    if compact is None:
        # keep the W-row compaction only when the pad-column overhead is large (>= 1.5x)
        compact = (2 * Wpad >= 3 * W)
    Wout = W if compact else Wpad

    vmem_cap = _vmem_capacity_bytes()
    target_rows = 1536 if (vmem_cap >= 96 * 1024 * 1024 and C <= 384) else 512
    TH = _choose_tile_h(H, Wout, N, target_rows=target_rows)
    n_bands = H // TH

    # TODO(synk): keeping the model NHWC end-to-end would remove the NCHW<->NHWC
    # transposes (extra HBM passes) that bracket this fused kernel.
    x = jnp.transpose(x_nchw, (0, 2, 3, 1))                       # NHWC
    # zero halo + right-pad W to a multiple of 8 + zero-pad C to 128 lanes; the
    # flatten to (Hp*Wpad, Cpad) rows is a free bitcast.
    xp = jnp.pad(x, ((0, 0), (PAD, PAD), (PAD, Wpad - W - PAD), (0, Cpad - C)))
    xflat = xp.reshape(N, Hp * Wpad, Cpad)
    dww, dwb, w1p, b1p, w2p, b2p = _fold_and_pad_params(params, C, Cpad, mm_dtype)

    # ---- advisory cost estimate ----
    rows = N * H * Wout
    flops = int(2 * KSIZE * KSIZE * N * H * Wpad * Cpad          # depthwise MACs
                + 2 * 2 * rows * Cpad * 4 * Cpad                 # two pointwise matmuls
                + 12 * rows * Cpad)                              # LN / residual
    transcendentals = int(rows * 4 * Cpad + 2 * rows)
    bytes_accessed = int(x.dtype.itemsize * (N * Hp * Wpad * Cpad + N * H * Wout * Cpad)
                         + 2 * w1p.dtype.itemsize * 4 * Cpad * Cpad + 4 * 60 * Cpad)

    # ---- VMEM footprint estimate -> explicit, generation-aware limit ----
    itemsize = x.dtype.itemsize
    band_rows = (TH + 2 * PAD) * Wpad
    rows_blk = TH * Wout
    est_vmem = (Hp * Wpad * Cpad * itemsize                       # resident image (1 buffer)
                + 55 * Cpad * 4                                   # dw weights + biases (f32)
                + 2 * 4 * Cpad * Cpad * w1p.dtype.itemsize        # w1 + w2 (bf16, 1 buffer)
                + 2 * rows_blk * Cpad * itemsize                  # double-buffered output
                + 4 * (2 * band_rows * Cpad + TH * Wpad * Cpad    # xb / roll tmp / acc
                       + 3 * rows_blk * Cpad                      # conv / xn / y
                       + 2 * rows_blk * 4 * Cpad))                # h (f32 + bf16 copy)
    vmem_limit = int(min(max(2 * est_vmem, 32 * 1024 * 1024),
                         vmem_cap - 8 * 1024 * 1024))

    # band axis "arbitrary" when N >= 2 so megacore splits on batch, not bands.
    sem = ("parallel", "arbitrary") if N >= 2 else ("parallel", "parallel")
    sb = _single_buffer_kwargs()
    const2 = lambda b, h: (0, 0)

    kernel = functools.partial(_block_kernel, tile_h=TH, width=W, wpad=Wpad,
                               c_valid=C, compact=compact)
    out_flat = pl.pallas_call(
        kernel,
        out_shape=jax.ShapeDtypeStruct((N, H * Wout, Cpad), x.dtype),
        grid=(N, n_bands),
        in_specs=[
            pl.BlockSpec((1, Hp * Wpad, Cpad), lambda b, h: (b, 0, 0), **sb),  # image (resident per b)
            pl.BlockSpec((KSIZE * KSIZE, Cpad), const2, **sb),                 # dw weights (49, Cpad)
            pl.BlockSpec((1, Cpad), const2, **sb),                             # dw bias
            pl.BlockSpec((Cpad, 4 * Cpad), const2, **sb),                      # w1 (LN folded, bf16)
            pl.BlockSpec((1, 4 * Cpad), const2, **sb),                         # b1 (LN folded)
            pl.BlockSpec((4 * Cpad, Cpad), const2, **sb),                      # w2 (gamma folded, bf16)
            pl.BlockSpec((1, Cpad), const2, **sb),                             # b2 (gamma folded)
        ],
        out_specs=pl.BlockSpec((1, TH * Wout, Cpad), lambda b, h: (b, h, 0)),
        compiler_params=pltpu.CompilerParams(
            dimension_semantics=sem, vmem_limit_bytes=vmem_limit),
        cost_estimate=pl.CostEstimate(flops=flops, transcendentals=transcendentals,
                                      bytes_accessed=bytes_accessed),
    )(xflat, dww, dwb, w1p, b1p, w2p, b2p)

    out = out_flat.reshape(N, H, Wout, Cpad)[:, :, :W, :C]
    return jnp.transpose(out, (0, 3, 1, 2))                       # back to NCHW


# -------------------- pure-JAX reference (sanity check) --------------------
def ref_block(x_nchw, params):
    x = jnp.transpose(x_nchw, (0, 2, 3, 1))
    C = x.shape[-1]
    kern = params["dw_w"][:, :, None, :]                          # (7,7,1,C) HWIO depthwise
    conv = lax.conv_general_dilated(
        x, kern, (1, 1), ((PAD, PAD), (PAD, PAD)),
        dimension_numbers=("NHWC", "HWIO", "NHWC"),
        feature_group_count=C) + params["dw_b"]
    mu = conv.mean(-1, keepdims=True)
    var = ((conv - mu) ** 2).mean(-1, keepdims=True)
    xn = (conv - mu) / jnp.sqrt(var + EPS) * params["ln_w"] + params["ln_b"]
    h = xn @ params["w1"] + params["b1"]
    h = 0.5 * h * (1.0 + lax.erf(h / math.sqrt(2.0)))
    y = (h @ params["w2"] + params["b2"]) * params["gamma"]
    return jnp.transpose(x + y, (0, 3, 1, 2))


def init_params(key, dim, layer_scale_init_value=1e-6):
    ks = jax.random.split(key, 8)
    return {
        "dw_w": 0.1 * jax.random.normal(ks[0], (KSIZE, KSIZE, dim), jnp.float32),
        "dw_b": 0.1 * jax.random.normal(ks[1], (dim,), jnp.float32),
        "ln_w": 1.0 + 0.1 * jax.random.normal(ks[2], (dim,), jnp.float32),
        "ln_b": 0.1 * jax.random.normal(ks[3], (dim,), jnp.float32),
        "w1": 0.05 * jax.random.normal(ks[4], (dim, 4 * dim), jnp.float32),
        "b1": 0.05 * jax.random.normal(ks[5], (4 * dim,), jnp.float32),
        "w2": 0.05 * jax.random.normal(ks[6], (4 * dim, dim), jnp.float32),
        "b2": 0.05 * jax.random.normal(ks[7], (dim,), jnp.float32),
        "gamma": layer_scale_init_value * jnp.ones((dim,), jnp.float32),
    }


if __name__ == "__main__":
    N, C, H, W = 2, 32, 16, 16
    key = jax.random.PRNGKey(0)
    kx, kp = jax.random.split(key)
    x = jax.random.normal(kx, (N, C, H, W), jnp.float32)
    # layer_scale_init=1.0 so the MLP branch actually contributes to the check
    # (the module default 1e-6 would make the test trivially pass on the residual).
    params = init_params(kp, C, layer_scale_init_value=1.0)

    ref = ref_block(x, params)

    def run(compact):
        fwd = jax.jit(functools.partial(convnext_block_forward, compact=compact))
        try:
            return jax.block_until_ready(fwd(x, params))
        except Exception:
            # retry without the single-buffer pipeline_mode hint if this build rejects it
            _USE_SINGLE_BUFFER[0] = False
            fwd = jax.jit(functools.partial(convnext_block_forward, compact=compact))
            return jax.block_until_ready(fwd(x, params))

    for compact in (True, False):          # exercise both the compacted and padded-row paths
        out = run(compact)
        assert out.shape == (N, C, H, W)
        err = float(jnp.max(jnp.abs(out - ref)))
        assert jnp.allclose(out, ref, atol=2e-2, rtol=2e-2), \
            f"mismatch vs reference (compact={compact}), max abs err {err}"

    print("KERNEL_OK")
</pallas_src>

<mosaic_0001>
module attributes {stable_mosaic.version = 11 : i64} {
  func.func @_block_kernel(%arg0: i32, %arg1: i32, %arg2: memref<1x528x128xf32, #tpu.memory_space<vmem>>, %arg3: memref<49x128xf32, #tpu.memory_space<vmem>>, %arg4: memref<1x128xf32, #tpu.memory_space<vmem>>, %arg5: memref<128x512xbf16, #tpu.memory_space<vmem>>, %arg6: memref<1x512xf32, #tpu.memory_space<vmem>>, %arg7: memref<512x128xbf16, #tpu.memory_space<vmem>>, %arg8: memref<1x128xf32, #tpu.memory_space<vmem>>, %arg9: memref<1x64x128xf32, #tpu.memory_space<vmem>>) attributes {dimension_semantics = [#tpu.dimension_semantics<parallel>, #tpu.dimension_semantics<arbitrary>], iteration_bounds = array<i64: 2, 4>, scalar_prefetch = 0 : i64, scratch_operands = 0 : i64, tpu.core_type = #tpu.core_type<tc>, window_params = [{pipeline_mode = #tpu.pipeline_mode<synchronous>, transform_indices = @transform_0, window_bounds = array<i64: 1, 528, 128>}, {pipeline_mode = #tpu.pipeline_mode<synchronous>, transform_indices = @transform_1, window_bounds = array<i64: 49, 128>}, {pipeline_mode = #tpu.pipeline_mode<synchronous>, transform_indices = @transform_2, window_bounds = array<i64: 1, 128>}, {pipeline_mode = #tpu.pipeline_mode<synchronous>, transform_indices = @transform_3, window_bounds = array<i64: 128, 512>}, {pipeline_mode = #tpu.pipeline_mode<synchronous>, transform_indices = @transform_4, window_bounds = array<i64: 1, 512>}, {pipeline_mode = #tpu.pipeline_mode<synchronous>, transform_indices = @transform_5, window_bounds = array<i64: 512, 128>}, {pipeline_mode = #tpu.pipeline_mode<synchronous>, transform_indices = @transform_6, window_bounds = array<i64: 1, 128>}, {transform_indices = @transform_7, window_bounds = array<i64: 1, 64, 128>}]} {
    %c4_i32 = arith.constant 4 : i32
    %0 = arith.muli %arg1, %c4_i32 : i32
    %c24_i32 = arith.constant 24 : i32
    %1 = arith.muli %0, %c24_i32 : i32
    %2 = tpu.assume_multiple %1, 8 : i32
    %c0 = arith.constant 0 : index
    %3 = arith.index_cast %2 : i32 to index
    %c0_0 = arith.constant 0 : index
    %4 = vector.load %arg2[%c0, %3, %c0_0] : memref<1x528x128xf32, #tpu.memory_space<vmem>>, vector<1x240x128xf32>
    %5 = vector.shape_cast %4 : vector<1x240x128xf32> to vector<240x128xf32>
    %c0_1 = arith.constant 0 : index
    %c0_2 = arith.constant 0 : index
    %6 = vector.load %arg3[%c0_1, %c0_2] : memref<49x128xf32, #tpu.memory_space<vmem>>, vector<49x128xf32>
    %cst = arith.constant 0.000000e+00 : f32
    %7 = vector.broadcast %cst : f32 to vector<96x128xf32>
    %8 = vector.extract_strided_slice %5 {offsets = [0, 0], sizes = [96, 128], strides = [1, 1]} : vector<240x128xf32> to vector<96x128xf32>
    %9 = vector.extract_strided_slice %6 {offsets = [0, 0], sizes = [1, 128], strides = [1, 1]} : vector<49x128xf32> to vector<1x128xf32>
    %10 = vector.shape_cast %9 : vector<1x128xf32> to vector<128xf32>
    %11 = vector.shape_cast %10 : vector<128xf32> to vector<1x128xf32>
    %12 = vector.broadcast %11 : vector<1x128xf32> to vector<96x128xf32>
    %13 = arith.mulf %8, %12 : vector<96x128xf32>
    %14 = arith.addf %7, %13 : vector<96x128xf32>
    %15 = vector.extract_strided_slice %5 {offsets = [24, 0], sizes = [96, 128], strides = [1, 1]} : vector<240x128xf32> to vector<96x128xf32>
    %16 = vector.extract_strided_slice %6 {offsets = [7, 0], sizes = [1, 128], strides = [1, 1]} : vector<49x128xf32> to vector<1x128xf32>
    %17 = vector.shape_cast %16 : vector<1x128xf32> to vector<128xf32>
    %18 = vector.shape_cast %17 : vector<128xf32> to vector<1x128xf32>
    %19 = vector.broadcast %18 : vector<1x128xf32> to vector<96x128xf32>
    %20 = arith.mulf %15, %19 : vector<96x128xf32>
    %21 = arith.addf %14, %20 : vector<96x128xf32>
    %22 = vector.extract_strided_slice %5 {offsets = [48, 0], sizes = [96, 128], strides = [1, 1]} : vector<240x128xf32> to vector<96x128xf32>
    %23 = vector.extract_strided_slice %6 {offsets = [14, 0], sizes = [1, 128], strides = [1, 1]} : vector<49x128xf32> to vector<1x128xf32>
    %24 = vector.shape_cast %23 : vector<1x128xf32> to vector<128xf32>
    %25 = vector.shape_cast %24 : vector<128xf32> to vector<1x128xf32>
    %26 = vector.broadcast %25 : vector<1x128xf32> to vector<96x128xf32>
    %27 = arith.mulf %22, %26 : vector<96x128xf32>
    %28 = arith.addf %21, %27 : vector<96x128xf32>
    %29 = vector.extract_strided_slice %5 {offsets = [72, 0], sizes = [96, 128], strides = [1, 1]} : vector<240x128xf32> to vector<96x128xf32>
    %30 = vector.extract_strided_slice %6 {offsets = [21, 0], sizes = [1, 128], strides = [1, 1]} : vector<49x128xf32> to vector<1x128xf32>
    %31 = vector.shape_cast %30 : vector<1x128xf32> to vector<128xf32>
    %32 = vector.shape_cast %31 : vector<128xf32> to vector<1x128xf32>
    %33 = vector.broadcast %32 : vector<1x128xf32> to vector<96x128xf32>
    %34 = arith.mulf %29, %33 : vector<96x128xf32>
    %35 = arith.addf %28, %34 : vector<96x128xf32>
    %36 = vector.extract_strided_slice %5 {offsets = [96, 0], sizes = [96, 128], strides = [1, 1]} : vector<240x128xf32> to vector<96x128xf32>
    %37 = vector.extract_strided_slice %6 {offsets = [28, 0], sizes = [1, 128], strides = [1, 1]} : vector<49x128xf32> to vector<1x128xf32>
    %38 = vector.shape_cast %37 : vector<1x128xf32> to vector<128xf32>
    %39 = vector.shape_cast %38 : vector<128xf32> to vector<1x128xf32>
    %40 = vector.broadcast %39 : vector<1x128xf32> to vector<96x128xf32>
    %41 = arith.mulf %36, %40 : vector<96x128xf32>
    %42 = arith.addf %35, %41 : vector<96x128xf32>
    %43 = vector.extract_strided_slice %5 {offsets = [120, 0], sizes = [96, 128], strides = [1, 1]} : vector<240x128xf32> to vector<96x128xf32>
    %44 = vector.extract_strided_slice %6 {offsets = [35, 0], sizes = [1, 128], strides = [1, 1]} : vector<49x128xf32> to vector<1x128xf32>
    %45 = vector.shape_cast %44 : vector<1x128xf32> to vector<128xf32>
    %46 = vector.shape_cast %45 : vector<128xf32> to vector<1x128xf32>
    %47 = vector.broadcast %46 : vector<1x128xf32> to vector<96x128xf32>
    %48 = arith.mulf %43, %47 : vector<96x128xf32>
    %49 = arith.addf %42, %48 : vector<96x128xf32>
    %50 = vector.extract_strided_slice %5 {offsets = [144, 0], sizes = [96, 128], strides = [1, 1]} : vector<240x128xf32> to vector<96x128xf32>
    %51 = vector.extract_strided_slice %6 {offsets = [42, 0], sizes = [1, 128], strides = [1, 1]} : vector<49x128xf32> to vector<1x128xf32>
    %52 = vector.shape_cast %51 : vector<1x128xf32> to vector<128xf32>
    %53 = vector.shape_cast %52 : vector<128xf32> to vector<1x128xf32>
    %54 = vector.broadcast %53 : vector<1x128xf32> to vector<96x128xf32>
    %55 = arith.mulf %50, %54 : vector<96x128xf32>
    %56 = arith.addf %49, %55 : vector<96x128xf32>
    %c239_i32 = arith.constant 239 : i32
    %57 = tpu.dynamic_rotate %5 by %c239_i32 dim 0 : vector<240x128xf32>, i32 -> vector<240x128xf32>
    %58 = vector.extract_strided_slice %57 {offsets = [0, 0], sizes = [96, 128], strides = [1, 1]} : vector<240x128xf32> to vector<96x128xf32>
    %59 = vector.extract_strided_slice %6 {offsets = [1, 0], sizes = [1, 128], strides = [1, 1]} : vector<49x128xf32> to vector<1x128xf32>
    %60 = vector.shape_cast %59 : vector<1x128xf32> to vector<128xf32>
    %61 = vector.shape_cast %60 : vector<128xf32> to vector<1x128xf32>
    %62 = vector.broadcast %61 : vector<1x128xf32> to vector<96x128xf32>
    %63 = arith.mulf %58, %62 : vector<96x128xf32>
    %64 = arith.addf %56, %63 : vector<96x128xf32>
    %65 = vector.extract_strided_slice %57 {offsets = [24, 0], sizes = [96, 128], strides = [1, 1]} : vector<240x128xf32> to vector<96x128xf32>
    %66 = vector.extract_strided_slice %6 {offsets = [8, 0], sizes = [1, 128], strides = [1, 1]} : vector<49x128xf32> to vector<1x128xf32>
    %67 = vector.shape_cast %66 : vector<1x128xf32> to vector<128xf32>
    %68 = vector.shape_cast %67 : vector<128xf32> to vector<1x128xf32>
    %69 = vector.broadcast %68 : vector<1x128xf32> to vector<96x128xf32>
    %70 = arith.mulf %65, %69 : vector<96x128xf32>
    %71 = arith.addf %64, %70 : vector<96x128xf32>
    %72 = vector.extract_strided_slice %57 {offsets = [48, 0], sizes = [96, 128], strides = [1, 1]} : vector<240x128xf32> to vector<96x128xf32>
    %73 = vector.extract_strided_slice %6 {offsets = [15, 0], sizes = [1, 128], strides = [1, 1]} : vector<49x128xf32> to vector<1x128xf32>
    %74 = vector.shape_cast %73 : vector<1x128xf32> to vector<128xf32>
    %75 = vector.shape_cast %74 : vector<128xf32> to vector<1x128xf32>
    %76 = vector.broadcast %75 : vector<1x128xf32> to vector<96x128xf32>
    %77 = arith.mulf %72, %76 : vector<96x128xf32>
    %78 = arith.addf %71, %77 : vector<96x128xf32>
    %79 = vector.extract_strided_slice %57 {offsets = [72, 0], sizes = [96, 128], strides = [1, 1]} : vector<240x128xf32> to vector<96x128xf32>
    %80 = vector.extract_strided_slice %6 {offsets = [22, 0], sizes = [1, 128], strides = [1, 1]} : vector<49x128xf32> to vector<1x128xf32>
    %81 = vector.shape_cast %80 : vector<1x128xf32> to vector<128xf32>
    %82 = vector.shape_cast %81 : vector<128xf32> to vector<1x128xf32>
    %83 = vector.broadcast %82 : vector<1x128xf32> to vector<96x128xf32>
    %84 = arith.mulf %79, %83 : vector<96x128xf32>
    %85 = arith.addf %78, %84 : vector<96x128xf32>
    %86 = vector.extract_strided_slice %57 {offsets = [96, 0], sizes = [96, 128], strides = [1, 1]} : vector<240x128xf32> to vector<96x128xf32>
    %87 = vector.extract_strided_slice %6 {offsets = [29, 0], sizes = [1, 128], strides = [1, 1]} : vector<49x128xf32> to vector<1x128xf32>
    %88 = vector.shape_cast %87 : vector<1x128xf32> to vector<128xf32>
    %89 = vector.shape_cast %88 : vector<128xf32> to vector<1x128xf32>
    %90 = vector.broadcast %89 : vector<1x128xf32> to vector<96x128xf32>
    %91 = arith.mulf %86, %90 : vector<96x128xf32>
    %92 = arith.addf %85, %91 : vector<96x128xf32>
    %93 = vector.extract_strided_slice %57 {offsets = [120, 0], sizes = [96, 128], strides = [1, 1]} : vector<240x128xf32> to vector<96x128xf32>
    %94 = vector.extract_strided_slice %6 {offsets = [36, 0], sizes = [1, 128], strides = [1, 1]} : vector<49x128xf32> to vector<1x128xf32>
    %95 = vector.shape_cast %94 : vector<1x128xf32> to vector<128xf32>
    %96 = vector.shape_cast %95 : vector<128xf32> to vector<1x128xf32>
    %97 = vector.broadcast %96 : vector<1x128xf32> to vector<96x128xf32>
    %98 = arith.mulf %93, %97 : vector<96x128xf32>
    %99 = arith.addf %92, %98 : vector<96x128xf32>
    %100 = vector.extract_strided_slice %57 {offsets = [144, 0], sizes = [96, 128], strides = [1, 1]} : vector<240x128xf32> to vector<96x128xf32>
    %101 = vector.extract_strided_slice %6 {offsets = [43, 0], sizes = [1, 128], strides = [1, 1]} : vector<49x128xf32> to vector<1x128xf32>
    %102 = vector.shape_cast %101 : vector<1x128xf32> to vector<128xf32>
    %103 = vector.shape_cast %102 : vector<128xf32> to vector<1x128xf32>
    %104 = vector.broadcast %103 : vector<1x128xf32> to vector<96x128xf32>
    %105 = arith.mulf %100, %104 : vector<96x128xf32>
    %106 = arith.addf %99, %105 : vector<96x128xf32>
    %c238_i32 = arith.constant 238 : i32
    %107 = tpu.dynamic_rotate %5 by %c238_i32 dim 0 : vector<240x128xf32>, i32 -> vector<240x128xf32>
    %108 = vector.extract_strided_slice %107 {offsets = [0, 0], sizes = [96, 128], strides = [1, 1]} : vector<240x128xf32> to vector<96x128xf32>
    %109 = vector.extract_strided_slice %6 {offsets = [2, 0], sizes = [1, 128], strides = [1, 1]} : vector<49x128xf32> to vector<1x128xf32>
    %110 = vector.shape_cast %109 : vector<1x128xf32> to vector<128xf32>
    %111 = vector.shape_cast %110 : vector<128xf32> to vector<1x128xf32>
    %112 = vector.broadcast %111 : vector<1x128xf32> to vector<96x128xf32>
    %113 = arith.mulf %108, %112 : vector<96x128xf32>
    %114 = arith.addf %106, %113 : vector<96x128xf32>
    %115 = vector.extract_strided_slice %107 {offsets = [24, 0], sizes = [96, 128], strides = [1, 1]} : vector<240x128xf32> to vector<96x128xf32>
    %116 = vector.extract_strided_slice %6 {offsets = [9, 0], sizes = [1, 128], strides = [1, 1]} : vector<49x128xf32> to vector<1x128xf32>
    %117 = vector.shape_cast %116 : vector<1x128xf32> to vector<128xf32>
    %118 = vector.shape_cast %117 : vector<128xf32> to vector<1x128xf32>
    %119 = vector.broadcast %118 : vector<1x128xf32> to vector<96x128xf32>
    %120 = arith.mulf %115, %119 : vector<96x128xf32>
    %121 = arith.addf %114, %120 : vector<96x128xf32>
    %122 = vector.extract_strided_slice %107 {offsets = [48, 0], sizes = [96, 128], strides = [1, 1]} : vector<240x128xf32> to vector<96x128xf32>
    %123 = vector.extract_strided_slice %6 {offsets = [16, 0], sizes = [1, 128], strides = [1, 1]} : vector<49x128xf32> to vector<1x128xf32>
    %124 = vector.shape_cast %123 : vector<1x128xf32> to vector<128xf32>
    %125 = vector.shape_cast %124 : vector<128xf32> to vector<1x128xf32>
    %126 = vector.broadcast %125 : vector<1x128xf32> to vector<96x128xf32>
    %127 = arith.mulf %122, %126 : vector<96x128xf32>
    %128 = arith.addf %121, %127 : vector<96x128xf32>
    %129 = vector.extract_strided_slice %107 {offsets = [72, 0], sizes = [96, 128], strides = [1, 1]} : vector<240x128xf32> to vector<96x128xf32>
    %130 = vector.extract_strided_slice %6 {offsets = [23, 0], sizes = [1, 128], strides = [1, 1]} : vector<49x128xf32> to vector<1x128xf32>
    %131 = vector.shape_cast %130 : vector<1x128xf32> to vector<128xf32>
    %132 = vector.shape_cast %131 : vector<128xf32> to vector<1x128xf32>
    %133 = vector.broadcast %132 : vector<1x128xf32> to vector<96x128xf32>
    %134 = arith.mulf %129, %133 : vector<96x128xf32>
    %135 = arith.addf %128, %134 : vector<96x128xf32>
    %136 = vector.extract_strided_slice %107 {offsets = [96, 0], sizes = [96, 128], strides = [1, 1]} : vector<240x128xf32> to vector<96x128xf32>
    %137 = vector.extract_strided_slice %6 {offsets = [30, 0], sizes = [1, 128], strides = [1, 1]} : vector<49x128xf32> to vector<1x128xf32>
    %138 = vector.shape_cast %137 : vector<1x128xf32> to vector<128xf32>
    %139 = vector.shape_cast %138 : vector<128xf32> to vector<1x128xf32>
    %140 = vector.broadcast %139 : vector<1x128xf32> to vector<96x128xf32>
    %141 = arith.mulf %136, %140 : vector<96x128xf32>
    %142 = arith.addf %135, %141 : vector<96x128xf32>
    %143 = vector.extract_strided_slice %107 {offsets = [120, 0], sizes = [96, 128], strides = [1, 1]} : vector<240x128xf32> to vector<96x128xf32>
    %144 = vector.extract_strided_slice %6 {offsets = [37, 0], sizes = [1, 128], strides = [1, 1]} : vector<49x128xf32> to vector<1x128xf32>
    %145 = vector.shape_cast %144 : vector<1x128xf32> to vector<128xf32>
    %146 = vector.shape_cast %145 : vector<128xf32> to vector<1x128xf32>
    %147 = vector.broadcast %146 : vector<1x128xf32> to vector<96x128xf32>
    %148 = arith.mulf %143, %147 : vector<96x128xf32>
    %149 = arith.addf %142, %148 : vector<96x128xf32>
    %150 = vector.extract_strided_slice %107 {offsets = [144, 0], sizes = [96, 128], strides = [1, 1]} : vector<240x128xf32> to vector<96x128xf32>
    %151 = vector.extract_strided_slice %6 {offsets = [44, 0], sizes = [1, 128], strides = [1, 1]} : vector<49x128xf32> to vector<1x128xf32>
    %152 = vector.shape_cast %151 : vector<1x128xf32> to vector<128xf32>
    %153 = vector.shape_cast %152 : vector<128xf32> to vector<1x128xf32>
    %154 = vector.broadcast %153 : vector<1x128xf32> to vector<96x128xf32>
    %155 = arith.mulf %150, %154 : vector<96x128xf32>
    %156 = arith.addf %149, %155 : vector<96x128xf32>
    %c237_i32 = arith.constant 237 : i32
    %157 = tpu.dynamic_rotate %5 by %c237_i32 dim 0 : vector<240x128xf32>, i32 -> vector<240x128xf32>
    %158 = vector.extract_strided_slice %157 {offsets = [72, 0], sizes = [16, 128], strides = [1, 1]} : vector<240x128xf32> to vector<16x128xf32>
    %159 = vector.extract_strided_slice %157 {offsets = [96, 0], sizes = [16, 128], strides = [1, 1]} : vector<240x128xf32> to vector<16x128xf32>
    %160 = vector.extract_strided_slice %157 {offsets = [120, 0], sizes = [16, 128], strides = [1, 1]} : vector<240x128xf32> to vector<16x128xf32>
    %161 = vector.extract_strided_slice %157 {offsets = [144, 0], sizes = [16, 128], strides = [1, 1]} : vector<240x128xf32> to vector<16x128xf32>
    %162 = tpu.concatenate %158, %159, %160, %161 in 0 : vector<16x128xf32>, vector<16x128xf32>, vector<16x128xf32>, vector<16x128xf32> -> vector<64x128xf32>
    %163 = vector.extract_strided_slice %157 {offsets = [0, 0], sizes = [96, 128], strides = [1, 1]} : vector<240x128xf32> to vector<96x128xf32>
    %164 = vector.extract_strided_slice %6 {offsets = [3, 0], sizes = [1, 128], strides = [1, 1]} : vector<49x128xf32> to vector<1x128xf32>
    %165 = vector.shape_cast %164 : vector<1x128xf32> to vector<128xf32>
    %166 = vector.shape_cast %165 : vector<128xf32> to vector<1x128xf32>
    %167 = vector.broadcast %166 : vector<1x128xf32> to vector<96x128xf32>
    %168 = arith.mulf %163, %167 : vector<96x128xf32>
    %169 = arith.addf %156, %168 : vector<96x128xf32>
    %170 = vector.extract_strided_slice %157 {offsets = [24, 0], sizes = [96, 128], strides = [1, 1]} : vector<240x128xf32> to vector<96x128xf32>
    %171 = vector.extract_strided_slice %6 {offsets = [10, 0], sizes = [1, 128], strides = [1, 1]} : vector<49x128xf32> to vector<1x128xf32>
    %172 = vector.shape_cast %171 : vector<1x128xf32> to vector<128xf32>
    %173 = vector.shape_cast %172 : vector<128xf32> to vector<1x128xf32>
    %174 = vector.broadcast %173 : vector<1x128xf32> to vector<96x128xf32>
    %175 = arith.mulf %170, %174 : vector<96x128xf32>
    %176 = arith.addf %169, %175 : vector<96x128xf32>
    %177 = vector.extract_strided_slice %157 {offsets = [48, 0], sizes = [96, 128], strides = [1, 1]} : vector<240x128xf32> to vector<96x128xf32>
    %178 = vector.extract_strided_slice %6 {offsets = [17, 0], sizes = [1, 128], strides = [1, 1]} : vector<49x128xf32> to vector<1x128xf32>
    %179 = vector.shape_cast %178 : vector<1x128xf32> to vector<128xf32>
    %180 = vector.shape_cast %179 : vector<128xf32> to vector<1x128xf32>
    %181 = vector.broadcast %180 : vector<1x128xf32> to vector<96x128xf32>
    %182 = arith.mulf %177, %181 : vector<96x128xf32>
    %183 = arith.addf %176, %182 : vector<96x128xf32>
    %184 = vector.extract_strided_slice %157 {offsets = [72, 0], sizes = [96, 128], strides = [1, 1]} : vector<240x128xf32> to vector<96x128xf32>
    %185 = vector.extract_strided_slice %6 {offsets = [24, 0], sizes = [1, 128], strides = [1, 1]} : vector<49x128xf32> to vector<1x128xf32>
    %186 = vector.shape_cast %185 : vector<1x128xf32> to vector<128xf32>
    %187 = vector.shape_cast %186 : vector<128xf32> to vector<1x128xf32>
    %188 = vector.broadcast %187 : vector<1x128xf32> to vector<96x128xf32>
    %189 = arith.mulf %184, %188 : vector<96x128xf32>
    %190 = arith.addf %183, %189 : vector<96x128xf32>
    %191 = vector.extract_strided_slice %157 {offsets = [96, 0], sizes = [96, 128], strides = [1, 1]} : vector<240x128xf32> to vector<96x128xf32>
    %192 = vector.extract_strided_slice %6 {offsets = [31, 0], sizes = [1, 128], strides = [1, 1]} : vector<49x128xf32> to vector<1x128xf32>
    %193 = vector.shape_cast %192 : vector<1x128xf32> to vector<128xf32>
    %194 = vector.shape_cast %193 : vector<128xf32> to vector<1x128xf32>
    %195 = vector.broadcast %194 : vector<1x128xf32> to vector<96x128xf32>
    %196 = arith.mulf %191, %195 : vector<96x128xf32>
    %197 = arith.addf %190, %196 : vector<96x128xf32>
    %198 = vector.extract_strided_slice %157 {offsets = [120, 0], sizes = [96, 128], strides = [1, 1]} : vector<240x128xf32> to vector<96x128xf32>
    %199 = vector.extract_strided_slice %6 {offsets = [38, 0], sizes = [1, 128], strides = [1, 1]} : vector<49x128xf32> to vector<1x128xf32>
    %200 = vector.shape_cast %199 : vector<1x128xf32> to vector<128xf32>
    %201 = vector.shape_cast %200 : vector<128xf32> to vector<1x128xf32>
    %202 = vector.broadcast %201 : vector<1x128xf32> to vector<96x128xf32>
    %203 = arith.mulf %198, %202 : vector<96x128xf32>
    %204 = arith.addf %197, %203 : vector<96x128xf32>
    %205 = vector.extract_strided_slice %157 {offsets = [144, 0], sizes = [96, 128], strides = [1, 1]} : vector<240x128xf32> to vector<96x128xf32>
    %206 = vector.extract_strided_slice %6 {offsets = [45, 0], sizes = [1, 128], strides = [1, 1]} : vector<49x128xf32> to vector<1x128xf32>
    %207 = vector.shape_cast %206 : vector<1x128xf32> to vector<128xf32>
    %208 = vector.shape_cast %207 : vector<128xf32> to vector<1x128xf32>
    %209 = vector.broadcast %208 : vector<1x128xf32> to vector<96x128xf32>
    %210 = arith.mulf %205, %209 : vector<96x128xf32>
    %211 = arith.addf %204, %210 : vector<96x128xf32>
    %c236_i32 = arith.constant 236 : i32
    %212 = tpu.dynamic_rotate %5 by %c236_i32 dim 0 : vector<240x128xf32>, i32 -> vector<240x128xf32>
    %213 = vector.extract_strided_slice %212 {offsets = [0, 0], sizes = [96, 128], strides = [1, 1]} : vector<240x128xf32> to vector<96x128xf32>
    %214 = vector.extract_strided_slice %6 {offsets = [4, 0], sizes = [1, 128], strides = [1, 1]} : vector<49x128xf32> to vector<1x128xf32>
    %215 = vector.shape_cast %214 : vector<1x128xf32> to vector<128xf32>
    %216 = vector.shape_cast %215 : vector<128xf32> to vector<1x128xf32>
    %217 = vector.broadcast %216 : vector<1x128xf32> to vector<96x128xf32>
    %218 = arith.mulf %213, %217 : vector<96x128xf32>
    %219 = arith.addf %211, %218 : vector<96x128xf32>
    %220 = vector.extract_strided_slice %212 {offsets = [24, 0], sizes = [96, 128], strides = [1, 1]} : vector<240x128xf32> to vector<96x128xf32>
    %221 = vector.extract_strided_slice %6 {offsets = [11, 0], sizes = [1, 128], strides = [1, 1]} : vector<49x128xf32> to vector<1x128xf32>
    %222 = vector.shape_cast %221 : vector<1x128xf32> to vector<128xf32>
    %223 = vector.shape_cast %222 : vector<128xf32> to vector<1x128xf32>
    %224 = vector.broadcast %223 : vector<1x128xf32> to vector<96x128xf32>
    %225 = arith.mulf %220, %224 : vector<96x128xf32>
    %226 = arith.addf %219, %225 : vector<96x128xf32>
    %227 = vector.extract_strided_slice %212 {offsets = [48, 0], sizes = [96, 128], strides = [1, 1]} : vector<240x128xf32> to vector<96x128xf32>
    %228 = vector.extract_strided_slice %6 {offsets = [18, 0], sizes = [1, 128], strides = [1, 1]} : vector<49x128xf32> to vector<1x128xf32>
    %229 = vector.shape_cast %228 : vector<1x128xf32> to vector<128xf32>
    %230 = vector.shape_cast %229 : vector<128xf32> to vector<1x128xf32>
    %231 = vector.broadcast %230 : vector<1x128xf32> to vector<96x128xf32>
    %232 = arith.mulf %227, %231 : vector<96x128xf32>
    %233 = arith.addf %226, %232 : vector<96x128xf32>
    %234 = vector.extract_strided_slice %212 {offsets = [72, 0], sizes = [96, 128], strides = [1, 1]} : vector<240x128xf32> to vector<96x128xf32>
    %235 = vector.extract_strided_slice %6 {offsets = [25, 0], sizes = [1, 128], strides = [1, 1]} : vector<49x128xf32> to vector<1x128xf32>
    %236 = vector.shape_cast %235 : vector<1x128xf32> to vector<128xf32>
    %237 = vector.shape_cast %236 : vector<128xf32> to vector<1x128xf32>
    %238 = vector.broadcast %237 : vector<1x128xf32> to vector<96x128xf32>
    %239 = arith.mulf %234, %238 : vector<96x128xf32>
    %240 = arith.addf %233, %239 : vector<96x128xf32>
    %241 = vector.extract_strided_slice %212 {offsets = [96, 0], sizes = [96, 128], strides = [1, 1]} : vector<240x128xf32> to vector<96x128xf32>
    %242 = vector.extract_strided_slice %6 {offsets = [32, 0], sizes = [1, 128], strides = [1, 1]} : vector<49x128xf32> to vector<1x128xf32>
    %243 = vector.shape_cast %242 : vector<1x128xf32> to vector<128xf32>
    %244 = vector.shape_cast %243 : vector<128xf32> to vector<1x128xf32>
    %245 = vector.broadcast %244 : vector<1x128xf32> to vector<96x128xf32>
    %246 = arith.mulf %241, %245 : vector<96x128xf32>
    %247 = arith.addf %240, %246 : vector<96x128xf32>
    %248 = vector.extract_strided_slice %212 {offsets = [120, 0], sizes = [96, 128], strides = [1, 1]} : vector<240x128xf32> to vector<96x128xf32>
    %249 = vector.extract_strided_slice %6 {offsets = [39, 0], sizes = [1, 128], strides = [1, 1]} : vector<49x128xf32> to vector<1x128xf32>
    %250 = vector.shape_cast %249 : vector<1x128xf32> to vector<128xf32>
    %251 = vector.shape_cast %250 : vector<128xf32> to vector<1x128xf32>
    %252 = vector.broadcast %251 : vector<1x128xf32> to vector<96x128xf32>
    %253 = arith.mulf %248, %252 : vector<96x128xf32>
    %254 = arith.addf %247, %253 : vector<96x128xf32>
    %255 = vector.extract_strided_slice %212 {offsets = [144, 0], sizes = [96, 128], strides = [1, 1]} : vector<240x128xf32> to vector<96x128xf32>
    %256 = vector.extract_strided_slice %6 {offsets = [46, 0], sizes = [1, 128], strides = [1, 1]} : vector<49x128xf32> to vector<1x128xf32>
    %257 = vector.shape_cast %256 : vector<1x128xf32> to vector<128xf32>
    %258 = vector.shape_cast %257 : vector<128xf32> to vector<1x128xf32>
    %259 = vector.broadcast %258 : vector<1x128xf32> to vector<96x128xf32>
    %260 = arith.mulf %255, %259 : vector<96x128xf32>
    %261 = arith.addf %254, %260 : vector<96x128xf32>
    %c235_i32 = arith.constant 235 : i32
    %262 = tpu.dynamic_rotate %5 by %c235_i32 dim 0 : vector<240x128xf32>, i32 -> vector<240x128xf32>
    %263 = vector.extract_strided_slice %262 {offsets = [0, 0], sizes = [96, 128], strides = [1, 1]} : vector<240x128xf32> to vector<96x128xf32>
    %264 = vector.extract_strided_slice %6 {offsets = [5, 0], sizes = [1, 128], strides = [1, 1]} : vector<49x128xf32> to vector<1x128xf32>
    %265 = vector.shape_cast %264 : vector<1x128xf32> to vector<128xf32>
    %266 = vector.shape_cast %265 : vector<128xf32> to vector<1x128xf32>
    %267 = vector.broadcast %266 : vector<1x128xf32> to vector<96x128xf32>
    %268 = arith.mulf %263, %267 : vector<96x128xf32>
    %269 = arith.addf %261, %268 : vector<96x128xf32>
    %270 = vector.extract_strided_slice %262 {offsets = [24, 0], sizes = [96, 128], strides = [1, 1]} : vector<240x128xf32> to vector<96x128xf32>
    %271 = vector.extract_strided_slice %6 {offsets = [12, 0], sizes = [1, 128], strides = [1, 1]} : vector<49x128xf32> to vector<1x128xf32>
    %272 = vector.shape_cast %271 : vector<1x128xf32> to vector<128xf32>
    %273 = vector.shape_cast %272 : vector<128xf32> to vector<1x128xf32>
    %274 = vector.broadcast %273 : vector<1x128xf32> to vector<96x128xf32>
    %275 = arith.mulf %270, %274 : vector<96x128xf32>
    %276 = arith.addf %269, %275 : vector<96x128xf32>
    %277 = vector.extract_strided_slice %262 {offsets = [48, 0], sizes = [96, 128], strides = [1, 1]} : vector<240x128xf32> to vector<96x128xf32>
    %278 = vector.extract_strided_slice %6 {offsets = [19, 0], sizes = [1, 128], strides = [1, 1]} : vector<49x128xf32> to vector<1x128xf32>
    %279 = vector.shape_cast %278 : vector<1x128xf32> to vector<128xf32>
    %280 = vector.shape_cast %279 : vector<128xf32> to vector<1x128xf32>
    %281 = vector.broadcast %280 : vector<1x128xf32> to vector<96x128xf32>
    %282 = arith.mulf %277, %281 : vector<96x128xf32>
    %283 = arith.addf %276, %282 : vector<96x128xf32>
    %284 = vector.extract_strided_slice %262 {offsets = [72, 0], sizes = [96, 128], strides = [1, 1]} : vector<240x128xf32> to vector<96x128xf32>
    %285 = vector.extract_strided_slice %6 {offsets = [26, 0], sizes = [1, 128], strides = [1, 1]} : vector<49x128xf32> to vector<1x128xf32>
    %286 = vector.shape_cast %285 : vector<1x128xf32> to vector<128xf32>
    %287 = vector.shape_cast %286 : vector<128xf32> to vector<1x128xf32>
    %288 = vector.broadcast %287 : vector<1x128xf32> to vector<96x128xf32>
    %289 = arith.mulf %284, %288 : vector<96x128xf32>
    %290 = arith.addf %283, %289 : vector<96x128xf32>
    %291 = vector.extract_strided_slice %262 {offsets = [96, 0], sizes = [96, 128], strides = [1, 1]} : vector<240x128xf32> to vector<96x128xf32>
    %292 = vector.extract_strided_slice %6 {offsets = [33, 0], sizes = [1, 128], strides = [1, 1]} : vector<49x128xf32> to vector<1x128xf32>
    %293 = vector.shape_cast %292 : vector<1x128xf32> to vector<128xf32>
    %294 = vector.shape_cast %293 : vector<128xf32> to vector<1x128xf32>
    %295 = vector.broadcast %294 : vector<1x128xf32> to vector<96x128xf32>
    %296 = arith.mulf %291, %295 : vector<96x128xf32>
    %297 = arith.addf %290, %296 : vector<96x128xf32>
    %298 = vector.extract_strided_slice %262 {offsets = [120, 0], sizes = [96, 128], strides = [1, 1]} : vector<240x128xf32> to vector<96x128xf32>
    %299 = vector.extract_strided_slice %6 {offsets = [40, 0], sizes = [1, 128], strides = [1, 1]} : vector<49x128xf32> to vector<1x128xf32>
    %300 = vector.shape_cast %299 : vector<1x128xf32> to vector<128xf32>
    %301 = vector.shape_cast %300 : vector<128xf32> to vector<1x128xf32>
    %302 = vector.broadcast %301 : vector<1x128xf32> to vector<96x128xf32>
    %303 = arith.mulf %298, %302 : vector<96x128xf32>
    %304 = arith.addf %297, %303 : vector<96x128xf32>
    %305 = vector.extract_strided_slice %262 {offsets = [144, 0], sizes = [96, 128], strides = [1, 1]} : vector<240x128xf32> to vector<96x128xf32>
    %306 = vector.extract_strided_slice %6 {offsets = [47, 0], sizes = [1, 128], strides = [1, 1]} : vector<49x128xf32> to vector<1x128xf32>
    %307 = vector.shape_cast %306 : vector<1x128xf32> to vector<128xf32>
    %308 = vector.shape_cast %307 : vector<128xf32> to vector<1x128xf32>
    %309 = vector.broadcast %308 : vector<1x128xf32> to vector<96x128xf32>
    %310 = arith.mulf %305, %309 : vector<96x128xf32>
    %311 = arith.addf %304, %310 : vector<96x128xf32>
    %c234_i32 = arith.constant 234 : i32
    %312 = tpu.dynamic_rotate %5 by %c234_i32 dim 0 : vector<240x128xf32>, i32 -> vector<240x128xf32>
    %313 = vector.extract_strided_slice %312 {offsets = [0, 0], sizes = [96, 128], strides = [1, 1]} : vector<240x128xf32> to vector<96x128xf32>
    %314 = vector.extract_strided_slice %6 {offsets = [6, 0], sizes = [1, 128], strides = [1, 1]} : vector<49x128xf32> to vector<1x128xf32>
    %315 = vector.shape_cast %314 : vector<1x128xf32> to vector<128xf32>
    %316 = vector.shape_cast %315 : vector<128xf32> to vector<1x128xf32>
    %317 = vector.broadcast %316 : vector<1x128xf32> to vector<96x128xf32>
    %318 = arith.mulf %313, %317 : vector<96x128xf32>
    %319 = arith.addf %311, %318 : vector<96x128xf32>
    %320 = vector.extract_strided_slice %312 {offsets = [24, 0], sizes = [96, 128], strides = [1, 1]} : vector<240x128xf32> to vector<96x128xf32>
    %321 = vector.extract_strided_slice %6 {offsets = [13, 0], sizes = [1, 128], strides = [1, 1]} : vector<49x128xf32> to vector<1x128xf32>
    %322 = vector.shape_cast %321 : vector<1x128xf32> to vector<128xf32>
    %323 = vector.shape_cast %322 : vector<128xf32> to vector<1x128xf32>
    %324 = vector.broadcast %323 : vector<1x128xf32> to vector<96x128xf32>
    %325 = arith.mulf %320, %324 : vector<96x128xf32>
    %326 = arith.addf %319, %325 : vector<96x128xf32>
    %327 = vector.extract_strided_slice %312 {offsets = [48, 0], sizes = [96, 128], strides = [1, 1]} : vector<240x128xf32> to vector<96x128xf32>
    %328 = vector.extract_strided_slice %6 {offsets = [20, 0], sizes = [1, 128], strides = [1, 1]} : vector<49x128xf32> to vector<1x128xf32>
    %329 = vector.shape_cast %328 : vector<1x128xf32> to vector<128xf32>
    %330 = vector.shape_cast %329 : vector<128xf32> to vector<1x128xf32>
    %331 = vector.broadcast %330 : vector<1x128xf32> to vector<96x128xf32>
    %332 = arith.mulf %327, %331 : vector<96x128xf32>
    %333 = arith.addf %326, %332 : vector<96x128xf32>
    %334 = vector.extract_strided_slice %312 {offsets = [72, 0], sizes = [96, 128], strides = [1, 1]} : vector<240x128xf32> to vector<96x128xf32>
    %335 = vector.extract_strided_slice %6 {offsets = [27, 0], sizes = [1, 128], strides = [1, 1]} : vector<49x128xf32> to vector<1x128xf32>
    %336 = vector.shape_cast %335 : vector<1x128xf32> to vector<128xf32>
    %337 = vector.shape_cast %336 : vector<128xf32> to vector<1x128xf32>
    %338 = vector.broadcast %337 : vector<1x128xf32> to vector<96x128xf32>
    %339 = arith.mulf %334, %338 : vector<96x128xf32>
    %340 = arith.addf %333, %339 : vector<96x128xf32>
    %341 = vector.extract_strided_slice %312 {offsets = [96, 0], sizes = [96, 128], strides = [1, 1]} : vector<240x128xf32> to vector<96x128xf32>
    %342 = vector.extract_strided_slice %6 {offsets = [34, 0], sizes = [1, 128], strides = [1, 1]} : vector<49x128xf32> to vector<1x128xf32>
    %343 = vector.shape_cast %342 : vector<1x128xf32> to vector<128xf32>
    %344 = vector.shape_cast %343 : vector<128xf32> to vector<1x128xf32>
    %345 = vector.broadcast %344 : vector<1x128xf32> to vector<96x128xf32>
    %346 = arith.mulf %341, %345 : vector<96x128xf32>
    %347 = arith.addf %340, %346 : vector<96x128xf32>
    %348 = vector.extract_strided_slice %312 {offsets = [120, 0], sizes = [96, 128], strides = [1, 1]} : vector<240x128xf32> to vector<96x128xf32>
    %349 = vector.extract_strided_slice %6 {offsets = [41, 0], sizes = [1, 128], strides = [1, 1]} : vector<49x128xf32> to vector<1x128xf32>
    %350 = vector.shape_cast %349 : vector<1x128xf32> to vector<128xf32>
    %351 = vector.shape_cast %350 : vector<128xf32> to vector<1x128xf32>
    %352 = vector.broadcast %351 : vector<1x128xf32> to vector<96x128xf32>
    %353 = arith.mulf %348, %352 : vector<96x128xf32>
    %354 = arith.addf %347, %353 : vector<96x128xf32>
    %355 = vector.extract_strided_slice %312 {offsets = [144, 0], sizes = [96, 128], strides = [1, 1]} : vector<240x128xf32> to vector<96x128xf32>
    %356 = vector.extract_strided_slice %6 {offsets = [48, 0], sizes = [1, 128], strides = [1, 1]} : vector<49x128xf32> to vector<1x128xf32>
    %357 = vector.shape_cast %356 : vector<1x128xf32> to vector<128xf32>
    %358 = vector.shape_cast %357 : vector<128xf32> to vector<1x128xf32>
    %359 = vector.broadcast %358 : vector<1x128xf32> to vector<96x128xf32>
    %360 = arith.mulf %355, %359 : vector<96x128xf32>
    %361 = arith.addf %354, %360 : vector<96x128xf32>
    %362 = vector.extract_strided_slice %361 {offsets = [0, 0], sizes = [16, 128], strides = [1, 1]} : vector<96x128xf32> to vector<16x128xf32>
    %363 = vector.extract_strided_slice %361 {offsets = [24, 0], sizes = [16, 128], strides = [1, 1]} : vector<96x128xf32> to vector<16x128xf32>
    %364 = vector.extract_strided_slice %361 {offsets = [48, 0], sizes = [16, 128], strides = [1, 1]} : vector<96x128xf32> to vector<16x128xf32>
    %365 = vector.extract_strided_slice %361 {offsets = [72, 0], sizes = [16, 128], strides = [1, 1]} : vector<96x128xf32> to vector<16x128xf32>
    %366 = tpu.concatenate %362, %363, %364, %365 in 0 : vector<16x128xf32>, vector<16x128xf32>, vector<16x128xf32>, vector<16x128xf32> -> vector<64x128xf32>
    %c0_3 = arith.constant 0 : index
    %c0_4 = arith.constant 0 : index
    %367 = vector.load %arg4[%c0_3, %c0_4] : memref<1x128xf32, #tpu.memory_space<vmem>>, vector<1x128xf32>
    %368 = vector.shape_cast %367 : vector<1x128xf32> to vector<128xf32>
    %369 = vector.shape_cast %368 : vector<128xf32> to vector<1x128xf32>
    %370 = vector.broadcast %369 : vector<1x128xf32> to vector<64x128xf32>
    %371 = arith.addf %366, %370 : vector<64x128xf32>
    %cst_5 = arith.constant dense<0.000000e+00> : vector<64xf32>
    %372 = vector.multi_reduction <add>, %371, %cst_5 [1] : vector<64x128xf32> to vector<64xf32>
    %373 = vector.shape_cast %372 : vector<64xf32> to vector<64x1xf32>
    %cst_6 = arith.constant 3.125000e-02 : f32
    %374 = vector.broadcast %cst_6 : f32 to vector<64x1xf32>
    %375 = arith.mulf %373, %374 : vector<64x1xf32>
    %376 = vector.broadcast %375 : vector<64x1xf32> to vector<64x128xf32>
    %377 = arith.subf %371, %376 : vector<64x128xf32>
    %378 = arith.mulf %377, %377 : vector<64x128xf32>
    %cst_7 = arith.constant dense<0.000000e+00> : vector<64xf32>
    %379 = vector.multi_reduction <add>, %378, %cst_7 [1] : vector<64x128xf32> to vector<64xf32>
    %380 = vector.shape_cast %379 : vector<64xf32> to vector<64x1xf32>
    %381 = arith.mulf %375, %375 : vector<64x1xf32>
    %cst_8 = arith.constant 9.600000e+01 : f32
    %382 = vector.broadcast %cst_8 : f32 to vector<64x1xf32>
    %383 = arith.mulf %382, %381 : vector<64x1xf32>
    %384 = arith.subf %380, %383 : vector<64x1xf32>
    %cst_9 = arith.constant 3.125000e-02 : f32
    %385 = vector.broadcast %cst_9 : f32 to vector<64x1xf32>
    %386 = arith.mulf %384, %385 : vector<64x1xf32>
    %cst_10 = arith.constant 0.000000e+00 : f32
    %387 = vector.broadcast %cst_10 : f32 to vector<64x1xf32>
    %388 = arith.maximumf %386, %387 : vector<64x1xf32>
    %cst_11 = arith.constant 9.99999997E-7 : f32
    %389 = vector.broadcast %cst_11 : f32 to vector<64x1xf32>
    %390 = arith.addf %388, %389 : vector<64x1xf32>
    %391 = math.rsqrt %390 : vector<64x1xf32>
    %392 = vector.broadcast %391 : vector<64x1xf32> to vector<64x128xf32>
    %393 = arith.mulf %377, %392 : vector<64x128xf32>
    %394 = arith.truncf %393 : vector<64x128xf32> to vector<64x128xbf16>
    %c0_12 = arith.constant 0 : index
    %c0_13 = arith.constant 0 : index
    %395 = vector.load %arg5[%c0_12, %c0_13] : memref<128x512xbf16, #tpu.memory_space<vmem>>, vector<128x512xbf16>
    %cst_14 = arith.constant dense<0.000000e+00> : vector<64x512xf32>
    %396 = tpu.matmul %394, %395, %cst_14 {dimension_numbers = #tpu.dot_dimension_numbers<[1], [0], [0], [1], [0, 0, 1, 1], [], []>} : vector<64x128xbf16>, vector<128x512xbf16>, vector<64x512xf32> -> vector<64x512xf32>
    %c0_15 = arith.constant 0 : index
    %c0_16 = arith.constant 0 : index
    %397 = vector.load %arg6[%c0_15, %c0_16] : memref<1x512xf32, #tpu.memory_space<vmem>>, vector<1x512xf32>
    %398 = vector.shape_cast %397 : vector<1x512xf32> to vector<512xf32>
    %399 = vector.shape_cast %398 : vector<512xf32> to vector<1x512xf32>
    %400 = vector.broadcast %399 : vector<1x512xf32> to vector<64x512xf32>
    %401 = arith.addf %396, %400 : vector<64x512xf32>
    %cst_17 = arith.constant 5.000000e-01 : f32
    %402 = vector.broadcast %cst_17 : f32 to vector<64x512xf32>
    %403 = arith.mulf %402, %401 : vector<64x512xf32>
    %cst_18 = arith.constant 0.707106769 : f32
    %404 = vector.broadcast %cst_18 : f32 to vector<64x512xf32>
    %405 = arith.mulf %401, %404 : vector<64x512xf32>
    %406 = math.erf %405 : vector<64x512xf32>
    %cst_19 = arith.constant 1.000000e+00 : f32
    %407 = vector.broadcast %cst_19 : f32 to vector<64x512xf32>
    %408 = arith.addf %407, %406 : vector<64x512xf32>
    %409 = arith.mulf %403, %408 : vector<64x512xf32>
    %410 = arith.truncf %409 : vector<64x512xf32> to vector<64x512xbf16>
    %c0_20 = arith.constant 0 : index
    %c0_21 = arith.constant 0 : index
    %411 = vector.load %arg7[%c0_20, %c0_21] : memref<512x128xbf16, #tpu.memory_space<vmem>>, vector<512x128xbf16>
    %cst_22 = arith.constant dense<0.000000e+00> : vector<64x128xf32>
    %412 = tpu.matmul %410, %411, %cst_22 {dimension_numbers = #tpu.dot_dimension_numbers<[1], [0], [0], [1], [0, 0, 1, 1], [], []>} : vector<64x512xbf16>, vector<512x128xbf16>, vector<64x128xf32> -> vector<64x128xf32>
    %c0_23 = arith.constant 0 : index
    %c0_24 = arith.constant 0 : index
    %413 = vector.load %arg8[%c0_23, %c0_24] : memref<1x128xf32, #tpu.memory_space<vmem>>, vector<1x128xf32>
    %414 = vector.shape_cast %413 : vector<1x128xf32> to vector<128xf32>
    %415 = vector.shape_cast %414 : vector<128xf32> to vector<1x128xf32>
    %416 = vector.broadcast %415 : vector<1x128xf32> to vector<64x128xf32>
    %417 = arith.addf %412, %416 : vector<64x128xf32>
    %418 = arith.addf %162, %417 : vector<64x128xf32>
    %c0_25 = arith.constant 0 : index
    %c0_26 = arith.constant 0 : index
    %c0_27 = arith.constant 0 : index
    %419 = vector.load %arg9[%c0_25, %c0_26, %c0_27] : memref<1x64x128xf32, #tpu.memory_space<vmem>>, vector<1x64x128xf32>
    %420 = vector.shape_cast %419 : vector<1x64x128xf32> to vector<64x128xf32>
    %421 = vector.shape_cast %418 : vector<64x128xf32> to vector<1x64x128xf32>
    tpu.vector_store %arg9[%c0_25, %c0_26, %c0_27], %421 {strides = array<i32>} : memref<1x64x128xf32, #tpu.memory_space<vmem>>, vector<1x64x128xf32>,
    return
  }
  func.func @transform_0(%arg0: i32, %arg1: i32) -> (i32, i32, i32) {
    %c0_i32 = arith.constant 0 : i32
    %c0_i32_0 = arith.constant 0 : i32
    %c0_i32_1 = arith.constant 0 : i32
    return %arg0, %c0_i32, %c0_i32_0 : i32, i32, i32
  }
  func.func @transform_1(%arg0: i32, %arg1: i32) -> (i32, i32) {
    %c0_i32 = arith.constant 0 : i32
    %c0_i32_0 = arith.constant 0 : i32
    %c0_i32_1 = arith.constant 0 : i32
    return %c0_i32, %c0_i32_0 : i32, i32
  }
  func.func @transform_2(%arg0: i32, %arg1: i32) -> (i32, i32) {
    %c0_i32 = arith.constant 0 : i32
    %c0_i32_0 = arith.constant 0 : i32
    %c0_i32_1 = arith.constant 0 : i32
    return %c0_i32, %c0_i32_0 : i32, i32
  }
  func.func @transform_3(%arg0: i32, %arg1: i32) -> (i32, i32) {
    %c0_i32 = arith.constant 0 : i32
    %c0_i32_0 = arith.constant 0 : i32
    %c0_i32_1 = arith.constant 0 : i32
    return %c0_i32, %c0_i32_0 : i32, i32
  }
  func.func @transform_4(%arg0: i32, %arg1: i32) -> (i32, i32) {
    %c0_i32 = arith.constant 0 : i32
    %c0_i32_0 = arith.constant 0 : i32
    %c0_i32_1 = arith.constant 0 : i32
    return %c0_i32, %c0_i32_0 : i32, i32
  }
  func.func @transform_5(%arg0: i32, %arg1: i32) -> (i32, i32) {
    %c0_i32 = arith.constant 0 : i32
    %c0_i32_0 = arith.constant 0 : i32
    %c0_i32_1 = arith.constant 0 : i32
    return %c0_i32, %c0_i32_0 : i32, i32
  }
  func.func @transform_6(%arg0: i32, %arg1: i32) -> (i32, i32) {
    %c0_i32 = arith.constant 0 : i32
    %c0_i32_0 = arith.constant 0 : i32
    %c0_i32_1 = arith.constant 0 : i32
    return %c0_i32, %c0_i32_0 : i32, i32
  }
  func.func @transform_7(%arg0: i32, %arg1: i32) -> (i32, i32, i32) {
    %c0_i32 = arith.constant 0 : i32
    %c0_i32_0 = arith.constant 0 : i32
    return %arg0, %arg1, %c0_i32 : i32, i32, i32
  }
}

module attributes {stable_mosaic.version = 11 : i64} {
  func.func @_block_kernel(%arg0: i32, %arg1: i32, %arg2: memref<1x528x128xf32, #tpu.memory_space<vmem>>, %arg3: memref<49x128xf32, #tpu.memory_space<vmem>>, %arg4: memref<1x128xf32, #tpu.memory_space<vmem>>, %arg5: memref<128x512xbf16, #tpu.memory_space<vmem>>, %arg6: memref<1x512xf32, #tpu.memory_space<vmem>>, %arg7: memref<512x128xbf16, #tpu.memory_space<vmem>>, %arg8: memref<1x128xf32, #tpu.memory_space<vmem>>, %arg9: memref<1x64x128xf32, #tpu.memory_space<vmem>>) attributes {dimension_semantics = [#tpu.dimension_semantics<parallel>, #tpu.dimension_semantics<arbitrary>], iteration_bounds = array<i64: 2, 4>, scalar_prefetch = 0 : i64, scratch_operands = 0 : i64, tpu.core_type = #tpu.core_type<tc>, window_params = [{transform_indices = @transform_0, window_bounds = array<i64: 1, 528, 128>}, {pipeline_mode = #tpu.pipeline_mode<synchronous>, transform_indices = @transform_1, window_bounds = array<i64: 49, 128>}, {pipeline_mode = #tpu.pipeline_mode<synchronous>, transform_indices = @transform_2, window_bounds = array<i64: 1, 128>}, {pipeline_mode = #tpu.pipeline_mode<synchronous>, transform_indices = @transform_3, window_bounds = array<i64: 128, 512>}, {pipeline_mode = #tpu.pipeline_mode<synchronous>, transform_indices = @transform_4, window_bounds = array<i64: 1, 512>}, {pipeline_mode = #tpu.pipeline_mode<synchronous>, transform_indices = @transform_5, window_bounds = array<i64: 512, 128>}, {pipeline_mode = #tpu.pipeline_mode<synchronous>, transform_indices = @transform_6, window_bounds = array<i64: 1, 128>}, {transform_indices = @transform_7, window_bounds = array<i64: 1, 64, 128>}]} {
    %c4_i32 = arith.constant 4 : i32
    %0 = arith.muli %arg1, %c4_i32 : i32
    %c24_i32 = arith.constant 24 : i32
    %1 = arith.muli %0, %c24_i32 : i32
    %2 = tpu.assume_multiple %1, 8 : i32
    %c0 = arith.constant 0 : index
    %3 = arith.index_cast %2 : i32 to index
    %c0_0 = arith.constant 0 : index
    %4 = vector.load %arg2[%c0, %3, %c0_0] : memref<1x528x128xf32, #tpu.memory_space<vmem>>, vector<1x240x128xf32>
    %5 = vector.shape_cast %4 : vector<1x240x128xf32> to vector<240x128xf32>
    %c0_1 = arith.constant 0 : index
    %c0_2 = arith.constant 0 : index
    %6 = vector.load %arg3[%c0_1, %c0_2] : memref<49x128xf32, #tpu.memory_space<vmem>>, vector<49x128xf32>
    %cst = arith.constant 0.000000e+00 : f32
    %7 = vector.broadcast %cst : f32 to vector<96x128xf32>
    %8 = vector.extract_strided_slice %5 {offsets = [0, 0], sizes = [96, 128], strides = [1, 1]} : vector<240x128xf32> to vector<96x128xf32>
    %9 = vector.extract_strided_slice %6 {offsets = [0, 0], sizes = [1, 128], strides = [1, 1]} : vector<49x128xf32> to vector<1x128xf32>
    %10 = vector.shape_cast %9 : vector<1x128xf32> to vector<128xf32>
    %11 = vector.shape_cast %10 : vector<128xf32> to vector<1x128xf32>
    %12 = vector.broadcast %11 : vector<1x128xf32> to vector<96x128xf32>
    %13 = arith.mulf %8, %12 : vector<96x128xf32>
    %14 = arith.addf %7, %13 : vector<96x128xf32>
    %15 = vector.extract_strided_slice %5 {offsets = [24, 0], sizes = [96, 128], strides = [1, 1]} : vector<240x128xf32> to vector<96x128xf32>
    %16 = vector.extract_strided_slice %6 {offsets = [7, 0], sizes = [1, 128], strides = [1, 1]} : vector<49x128xf32> to vector<1x128xf32>
    %17 = vector.shape_cast %16 : vector<1x128xf32> to vector<128xf32>
    %18 = vector.shape_cast %17 : vector<128xf32> to vector<1x128xf32>
    %19 = vector.broadcast %18 : vector<1x128xf32> to vector<96x128xf32>
    %20 = arith.mulf %15, %19 : vector<96x128xf32>
    %21 = arith.addf %14, %20 : vector<96x128xf32>
    %22 = vector.extract_strided_slice %5 {offsets = [48, 0], sizes = [96, 128], strides = [1, 1]} : vector<240x128xf32> to vector<96x128xf32>
    %23 = vector.extract_strided_slice %6 {offsets = [14, 0], sizes = [1, 128], strides = [1, 1]} : vector<49x128xf32> to vector<1x128xf32>
    %24 = vector.shape_cast %23 : vector<1x128xf32> to vector<128xf32>
    %25 = vector.shape_cast %24 : vector<128xf32> to vector<1x128xf32>
    %26 = vector.broadcast %25 : vector<1x128xf32> to vector<96x128xf32>
    %27 = arith.mulf %22, %26 : vector<96x128xf32>
    %28 = arith.addf %21, %27 : vector<96x128xf32>
    %29 = vector.extract_strided_slice %5 {offsets = [72, 0], sizes = [96, 128], strides = [1, 1]} : vector<240x128xf32> to vector<96x128xf32>
    %30 = vector.extract_strided_slice %6 {offsets = [21, 0], sizes = [1, 128], strides = [1, 1]} : vector<49x128xf32> to vector<1x128xf32>
    %31 = vector.shape_cast %30 : vector<1x128xf32> to vector<128xf32>
    %32 = vector.shape_cast %31 : vector<128xf32> to vector<1x128xf32>
    %33 = vector.broadcast %32 : vector<1x128xf32> to vector<96x128xf32>
    %34 = arith.mulf %29, %33 : vector<96x128xf32>
    %35 = arith.addf %28, %34 : vector<96x128xf32>
    %36 = vector.extract_strided_slice %5 {offsets = [96, 0], sizes = [96, 128], strides = [1, 1]} : vector<240x128xf32> to vector<96x128xf32>
    %37 = vector.extract_strided_slice %6 {offsets = [28, 0], sizes = [1, 128], strides = [1, 1]} : vector<49x128xf32> to vector<1x128xf32>
    %38 = vector.shape_cast %37 : vector<1x128xf32> to vector<128xf32>
    %39 = vector.shape_cast %38 : vector<128xf32> to vector<1x128xf32>
    %40 = vector.broadcast %39 : vector<1x128xf32> to vector<96x128xf32>
    %41 = arith.mulf %36, %40 : vector<96x128xf32>
    %42 = arith.addf %35, %41 : vector<96x128xf32>
    %43 = vector.extract_strided_slice %5 {offsets = [120, 0], sizes = [96, 128], strides = [1, 1]} : vector<240x128xf32> to vector<96x128xf32>
    %44 = vector.extract_strided_slice %6 {offsets = [35, 0], sizes = [1, 128], strides = [1, 1]} : vector<49x128xf32> to vector<1x128xf32>
    %45 = vector.shape_cast %44 : vector<1x128xf32> to vector<128xf32>
    %46 = vector.shape_cast %45 : vector<128xf32> to vector<1x128xf32>
    %47 = vector.broadcast %46 : vector<1x128xf32> to vector<96x128xf32>
    %48 = arith.mulf %43, %47 : vector<96x128xf32>
    %49 = arith.addf %42, %48 : vector<96x128xf32>
    %50 = vector.extract_strided_slice %5 {offsets = [144, 0], sizes = [96, 128], strides = [1, 1]} : vector<240x128xf32> to vector<96x128xf32>
    %51 = vector.extract_strided_slice %6 {offsets = [42, 0], sizes = [1, 128], strides = [1, 1]} : vector<49x128xf32> to vector<1x128xf32>
    %52 = vector.shape_cast %51 : vector<1x128xf32> to vector<128xf32>
    %53 = vector.shape_cast %52 : vector<128xf32> to vector<1x128xf32>
    %54 = vector.broadcast %53 : vector<1x128xf32> to vector<96x128xf32>
    %55 = arith.mulf %50, %54 : vector<96x128xf32>
    %56 = arith.addf %49, %55 : vector<96x128xf32>
    %c239_i32 = arith.constant 239 : i32
    %57 = tpu.dynamic_rotate %5 by %c239_i32 dim 0 : vector<240x128xf32>, i32 -> vector<240x128xf32>
    %58 = vector.extract_strided_slice %57 {offsets = [0, 0], sizes = [96, 128], strides = [1, 1]} : vector<240x128xf32> to vector<96x128xf32>
    %59 = vector.extract_strided_slice %6 {offsets = [1, 0], sizes = [1, 128], strides = [1, 1]} : vector<49x128xf32> to vector<1x128xf32>
    %60 = vector.shape_cast %59 : vector<1x128xf32> to vector<128xf32>
    %61 = vector.shape_cast %60 : vector<128xf32> to vector<1x128xf32>
    %62 = vector.broadcast %61 : vector<1x128xf32> to vector<96x128xf32>
    %63 = arith.mulf %58, %62 : vector<96x128xf32>
    %64 = arith.addf %56, %63 : vector<96x128xf32>
    %65 = vector.extract_strided_slice %57 {offsets = [24, 0], sizes = [96, 128], strides = [1, 1]} : vector<240x128xf32> to vector<96x128xf32>
    %66 = vector.extract_strided_slice %6 {offsets = [8, 0], sizes = [1, 128], strides = [1, 1]} : vector<49x128xf32> to vector<1x128xf32>
    %67 = vector.shape_cast %66 : vector<1x128xf32> to vector<128xf32>
    %68 = vector.shape_cast %67 : vector<128xf32> to vector<1x128xf32>
    %69 = vector.broadcast %68 : vector<1x128xf32> to vector<96x128xf32>
    %70 = arith.mulf %65, %69 : vector<96x128xf32>
    %71 = arith.addf %64, %70 : vector<96x128xf32>
    %72 = vector.extract_strided_slice %57 {offsets = [48, 0], sizes = [96, 128], strides = [1, 1]} : vector<240x128xf32> to vector<96x128xf32>
    %73 = vector.extract_strided_slice %6 {offsets = [15, 0], sizes = [1, 128], strides = [1, 1]} : vector<49x128xf32> to vector<1x128xf32>
    %74 = vector.shape_cast %73 : vector<1x128xf32> to vector<128xf32>
    %75 = vector.shape_cast %74 : vector<128xf32> to vector<1x128xf32>
    %76 = vector.broadcast %75 : vector<1x128xf32> to vector<96x128xf32>
    %77 = arith.mulf %72, %76 : vector<96x128xf32>
    %78 = arith.addf %71, %77 : vector<96x128xf32>
    %79 = vector.extract_strided_slice %57 {offsets = [72, 0], sizes = [96, 128], strides = [1, 1]} : vector<240x128xf32> to vector<96x128xf32>
    %80 = vector.extract_strided_slice %6 {offsets = [22, 0], sizes = [1, 128], strides = [1, 1]} : vector<49x128xf32> to vector<1x128xf32>
    %81 = vector.shape_cast %80 : vector<1x128xf32> to vector<128xf32>
    %82 = vector.shape_cast %81 : vector<128xf32> to vector<1x128xf32>
    %83 = vector.broadcast %82 : vector<1x128xf32> to vector<96x128xf32>
    %84 = arith.mulf %79, %83 : vector<96x128xf32>
    %85 = arith.addf %78, %84 : vector<96x128xf32>
    %86 = vector.extract_strided_slice %57 {offsets = [96, 0], sizes = [96, 128], strides = [1, 1]} : vector<240x128xf32> to vector<96x128xf32>
    %87 = vector.extract_strided_slice %6 {offsets = [29, 0], sizes = [1, 128], strides = [1, 1]} : vector<49x128xf32> to vector<1x128xf32>
    %88 = vector.shape_cast %87 : vector<1x128xf32> to vector<128xf32>
    %89 = vector.shape_cast %88 : vector<128xf32> to vector<1x128xf32>
    %90 = vector.broadcast %89 : vector<1x128xf32> to vector<96x128xf32>
    %91 = arith.mulf %86, %90 : vector<96x128xf32>
    %92 = arith.addf %85, %91 : vector<96x128xf32>
    %93 = vector.extract_strided_slice %57 {offsets = [120, 0], sizes = [96, 128], strides = [1, 1]} : vector<240x128xf32> to vector<96x128xf32>
    %94 = vector.extract_strided_slice %6 {offsets = [36, 0], sizes = [1, 128], strides = [1, 1]} : vector<49x128xf32> to vector<1x128xf32>
    %95 = vector.shape_cast %94 : vector<1x128xf32> to vector<128xf32>
    %96 = vector.shape_cast %95 : vector<128xf32> to vector<1x128xf32>
    %97 = vector.broadcast %96 : vector<1x128xf32> to vector<96x128xf32>
    %98 = arith.mulf %93, %97 : vector<96x128xf32>
    %99 = arith.addf %92, %98 : vector<96x128xf32>
    %100 = vector.extract_strided_slice %57 {offsets = [144, 0], sizes = [96, 128], strides = [1, 1]} : vector<240x128xf32> to vector<96x128xf32>
    %101 = vector.extract_strided_slice %6 {offsets = [43, 0], sizes = [1, 128], strides = [1, 1]} : vector<49x128xf32> to vector<1x128xf32>
    %102 = vector.shape_cast %101 : vector<1x128xf32> to vector<128xf32>
    %103 = vector.shape_cast %102 : vector<128xf32> to vector<1x128xf32>
    %104 = vector.broadcast %103 : vector<1x128xf32> to vector<96x128xf32>
    %105 = arith.mulf %100, %104 : vector<96x128xf32>
    %106 = arith.addf %99, %105 : vector<96x128xf32>
    %c238_i32 = arith.constant 238 : i32
    %107 = tpu.dynamic_rotate %5 by %c238_i32 dim 0 : vector<240x128xf32>, i32 -> vector<240x128xf32>
    %108 = vector.extract_strided_slice %107 {offsets = [0, 0], sizes = [96, 128], strides = [1, 1]} : vector<240x128xf32> to vector<96x128xf32>
    %109 = vector.extract_strided_slice %6 {offsets = [2, 0], sizes = [1, 128], strides = [1, 1]} : vector<49x128xf32> to vector<1x128xf32>
    %110 = vector.shape_cast %109 : vector<1x128xf32> to vector<128xf32>
    %111 = vector.shape_cast %110 : vector<128xf32> to vector<1x128xf32>
    %112 = vector.broadcast %111 : vector<1x128xf32> to vector<96x128xf32>
    %113 = arith.mulf %108, %112 : vector<96x128xf32>
    %114 = arith.addf %106, %113 : vector<96x128xf32>
    %115 = vector.extract_strided_slice %107 {offsets = [24, 0], sizes = [96, 128], strides = [1, 1]} : vector<240x128xf32> to vector<96x128xf32>
    %116 = vector.extract_strided_slice %6 {offsets = [9, 0], sizes = [1, 128], strides = [1, 1]} : vector<49x128xf32> to vector<1x128xf32>
    %117 = vector.shape_cast %116 : vector<1x128xf32> to vector<128xf32>
    %118 = vector.shape_cast %117 : vector<128xf32> to vector<1x128xf32>
    %119 = vector.broadcast %118 : vector<1x128xf32> to vector<96x128xf32>
    %120 = arith.mulf %115, %119 : vector<96x128xf32>
    %121 = arith.addf %114, %120 : vector<96x128xf32>
    %122 = vector.extract_strided_slice %107 {offsets = [48, 0], sizes = [96, 128], strides = [1, 1]} : vector<240x128xf32> to vector<96x128xf32>
    %123 = vector.extract_strided_slice %6 {offsets = [16, 0], sizes = [1, 128], strides = [1, 1]} : vector<49x128xf32> to vector<1x128xf32>
    %124 = vector.shape_cast %123 : vector<1x128xf32> to vector<128xf32>
    %125 = vector.shape_cast %124 : vector<128xf32> to vector<1x128xf32>
    %126 = vector.broadcast %125 : vector<1x128xf32> to vector<96x128xf32>
    %127 = arith.mulf %122, %126 : vector<96x128xf32>
    %128 = arith.addf %121, %127 : vector<96x128xf32>
    %129 = vector.extract_strided_slice %107 {offsets = [72, 0], sizes = [96, 128], strides = [1, 1]} : vector<240x128xf32> to vector<96x128xf32>
    %130 = vector.extract_strided_slice %6 {offsets = [23, 0], sizes = [1, 128], strides = [1, 1]} : vector<49x128xf32> to vector<1x128xf32>
    %131 = vector.shape_cast %130 : vector<1x128xf32> to vector<128xf32>
    %132 = vector.shape_cast %131 : vector<128xf32> to vector<1x128xf32>
    %133 = vector.broadcast %132 : vector<1x128xf32> to vector<96x128xf32>
    %134 = arith.mulf %129, %133 : vector<96x128xf32>
    %135 = arith.addf %128, %134 : vector<96x128xf32>
    %136 = vector.extract_strided_slice %107 {offsets = [96, 0], sizes = [96, 128], strides = [1, 1]} : vector<240x128xf32> to vector<96x128xf32>
    %137 = vector.extract_strided_slice %6 {offsets = [30, 0], sizes = [1, 128], strides = [1, 1]} : vector<49x128xf32> to vector<1x128xf32>
    %138 = vector.shape_cast %137 : vector<1x128xf32> to vector<128xf32>
    %139 = vector.shape_cast %138 : vector<128xf32> to vector<1x128xf32>
    %140 = vector.broadcast %139 : vector<1x128xf32> to vector<96x128xf32>
    %141 = arith.mulf %136, %140 : vector<96x128xf32>
    %142 = arith.addf %135, %141 : vector<96x128xf32>
    %143 = vector.extract_strided_slice %107 {offsets = [120, 0], sizes = [96, 128], strides = [1, 1]} : vector<240x128xf32> to vector<96x128xf32>
    %144 = vector.extract_strided_slice %6 {offsets = [37, 0], sizes = [1, 128], strides = [1, 1]} : vector<49x128xf32> to vector<1x128xf32>
    %145 = vector.shape_cast %144 : vector<1x128xf32> to vector<128xf32>
    %146 = vector.shape_cast %145 : vector<128xf32> to vector<1x128xf32>
    %147 = vector.broadcast %146 : vector<1x128xf32> to vector<96x128xf32>
    %148 = arith.mulf %143, %147 : vector<96x128xf32>
    %149 = arith.addf %142, %148 : vector<96x128xf32>
    %150 = vector.extract_strided_slice %107 {offsets = [144, 0], sizes = [96, 128], strides = [1, 1]} : vector<240x128xf32> to vector<96x128xf32>
    %151 = vector.extract_strided_slice %6 {offsets = [44, 0], sizes = [1, 128], strides = [1, 1]} : vector<49x128xf32> to vector<1x128xf32>
    %152 = vector.shape_cast %151 : vector<1x128xf32> to vector<128xf32>
    %153 = vector.shape_cast %152 : vector<128xf32> to vector<1x128xf32>
    %154 = vector.broadcast %153 : vector<1x128xf32> to vector<96x128xf32>
    %155 = arith.mulf %150, %154 : vector<96x128xf32>
    %156 = arith.addf %149, %155 : vector<96x128xf32>
    %c237_i32 = arith.constant 237 : i32
    %157 = tpu.dynamic_rotate %5 by %c237_i32 dim 0 : vector<240x128xf32>, i32 -> vector<240x128xf32>
    %158 = vector.extract_strided_slice %157 {offsets = [72, 0], sizes = [16, 128], strides = [1, 1]} : vector<240x128xf32> to vector<16x128xf32>
    %159 = vector.extract_strided_slice %157 {offsets = [96, 0], sizes = [16, 128], strides = [1, 1]} : vector<240x128xf32> to vector<16x128xf32>
    %160 = vector.extract_strided_slice %157 {offsets = [120, 0], sizes = [16, 128], strides = [1, 1]} : vector<240x128xf32> to vector<16x128xf32>
    %161 = vector.extract_strided_slice %157 {offsets = [144, 0], sizes = [16, 128], strides = [1, 1]} : vector<240x128xf32> to vector<16x128xf32>
    %162 = tpu.concatenate %158, %159, %160, %161 in 0 : vector<16x128xf32>, vector<16x128xf32>, vector<16x128xf32>, vector<16x128xf32> -> vector<64x128xf32>
    %163 = vector.extract_strided_slice %157 {offsets = [0, 0], sizes = [96, 128], strides = [1, 1]} : vector<240x128xf32> to vector<96x128xf32>
    %164 = vector.extract_strided_slice %6 {offsets = [3, 0], sizes = [1, 128], strides = [1, 1]} : vector<49x128xf32> to vector<1x128xf32>
    %165 = vector.shape_cast %164 : vector<1x128xf32> to vector<128xf32>
    %166 = vector.shape_cast %165 : vector<128xf32> to vector<1x128xf32>
    %167 = vector.broadcast %166 : vector<1x128xf32> to vector<96x128xf32>
    %168 = arith.mulf %163, %167 : vector<96x128xf32>
    %169 = arith.addf %156, %168 : vector<96x128xf32>
    %170 = vector.extract_strided_slice %157 {offsets = [24, 0], sizes = [96, 128], strides = [1, 1]} : vector<240x128xf32> to vector<96x128xf32>
    %171 = vector.extract_strided_slice %6 {offsets = [10, 0], sizes = [1, 128], strides = [1, 1]} : vector<49x128xf32> to vector<1x128xf32>
    %172 = vector.shape_cast %171 : vector<1x128xf32> to vector<128xf32>
    %173 = vector.shape_cast %172 : vector<128xf32> to vector<1x128xf32>
    %174 = vector.broadcast %173 : vector<1x128xf32> to vector<96x128xf32>
    %175 = arith.mulf %170, %174 : vector<96x128xf32>
    %176 = arith.addf %169, %175 : vector<96x128xf32>
    %177 = vector.extract_strided_slice %157 {offsets = [48, 0], sizes = [96, 128], strides = [1, 1]} : vector<240x128xf32> to vector<96x128xf32>
    %178 = vector.extract_strided_slice %6 {offsets = [17, 0], sizes = [1, 128], strides = [1, 1]} : vector<49x128xf32> to vector<1x128xf32>
    %179 = vector.shape_cast %178 : vector<1x128xf32> to vector<128xf32>
    %180 = vector.shape_cast %179 : vector<128xf32> to vector<1x128xf32>
    %181 = vector.broadcast %180 : vector<1x128xf32> to vector<96x128xf32>
    %182 = arith.mulf %177, %181 : vector<96x128xf32>
    %183 = arith.addf %176, %182 : vector<96x128xf32>
    %184 = vector.extract_strided_slice %157 {offsets = [72, 0], sizes = [96, 128], strides = [1, 1]} : vector<240x128xf32> to vector<96x128xf32>
    %185 = vector.extract_strided_slice %6 {offsets = [24, 0], sizes = [1, 128], strides = [1, 1]} : vector<49x128xf32> to vector<1x128xf32>
    %186 = vector.shape_cast %185 : vector<1x128xf32> to vector<128xf32>
    %187 = vector.shape_cast %186 : vector<128xf32> to vector<1x128xf32>
    %188 = vector.broadcast %187 : vector<1x128xf32> to vector<96x128xf32>
    %189 = arith.mulf %184, %188 : vector<96x128xf32>
    %190 = arith.addf %183, %189 : vector<96x128xf32>
    %191 = vector.extract_strided_slice %157 {offsets = [96, 0], sizes = [96, 128], strides = [1, 1]} : vector<240x128xf32> to vector<96x128xf32>
    %192 = vector.extract_strided_slice %6 {offsets = [31, 0], sizes = [1, 128], strides = [1, 1]} : vector<49x128xf32> to vector<1x128xf32>
    %193 = vector.shape_cast %192 : vector<1x128xf32> to vector<128xf32>
    %194 = vector.shape_cast %193 : vector<128xf32> to vector<1x128xf32>
    %195 = vector.broadcast %194 : vector<1x128xf32> to vector<96x128xf32>
    %196 = arith.mulf %191, %195 : vector<96x128xf32>
    %197 = arith.addf %190, %196 : vector<96x128xf32>
    %198 = vector.extract_strided_slice %157 {offsets = [120, 0], sizes = [96, 128], strides = [1, 1]} : vector<240x128xf32> to vector<96x128xf32>
    %199 = vector.extract_strided_slice %6 {offsets = [38, 0], sizes = [1, 128], strides = [1, 1]} : vector<49x128xf32> to vector<1x128xf32>
    %200 = vector.shape_cast %199 : vector<1x128xf32> to vector<128xf32>
    %201 = vector.shape_cast %200 : vector<128xf32> to vector<1x128xf32>
    %202 = vector.broadcast %201 : vector<1x128xf32> to vector<96x128xf32>
    %203 = arith.mulf %198, %202 : vector<96x128xf32>
    %204 = arith.addf %197, %203 : vector<96x128xf32>
    %205 = vector.extract_strided_slice %157 {offsets = [144, 0], sizes = [96, 128], strides = [1, 1]} : vector<240x128xf32> to vector<96x128xf32>
    %206 = vector.extract_strided_slice %6 {offsets = [45, 0], sizes = [1, 128], strides = [1, 1]} : vector<49x128xf32> to vector<1x128xf32>
    %207 = vector.shape_cast %206 : vector<1x128xf32> to vector<128xf32>
    %208 = vector.shape_cast %207 : vector<128xf32> to vector<1x128xf32>
    %209 = vector.broadcast %208 : vector<1x128xf32> to vector<96x128xf32>
    %210 = arith.mulf %205, %209 : vector<96x128xf32>
    %211 = arith.addf %204, %210 : vector<96x128xf32>
    %c236_i32 = arith.constant 236 : i32
    %212 = tpu.dynamic_rotate %5 by %c236_i32 dim 0 : vector<240x128xf32>, i32 -> vector<240x128xf32>
    %213 = vector.extract_strided_slice %212 {offsets = [0, 0], sizes = [96, 128], strides = [1, 1]} : vector<240x128xf32> to vector<96x128xf32>
    %214 = vector.extract_strided_slice %6 {offsets = [4, 0], sizes = [1, 128], strides = [1, 1]} : vector<49x128xf32> to vector<1x128xf32>
    %215 = vector.shape_cast %214 : vector<1x128xf32> to vector<128xf32>
    %216 = vector.shape_cast %215 : vector<128xf32> to vector<1x128xf32>
    %217 = vector.broadcast %216 : vector<1x128xf32> to vector<96x128xf32>
    %218 = arith.mulf %213, %217 : vector<96x128xf32>
    %219 = arith.addf %211, %218 : vector<96x128xf32>
    %220 = vector.extract_strided_slice %212 {offsets = [24, 0], sizes = [96, 128], strides = [1, 1]} : vector<240x128xf32> to vector<96x128xf32>
    %221 = vector.extract_strided_slice %6 {offsets = [11, 0], sizes = [1, 128], strides = [1, 1]} : vector<49x128xf32> to vector<1x128xf32>
    %222 = vector.shape_cast %221 : vector<1x128xf32> to vector<128xf32>
    %223 = vector.shape_cast %222 : vector<128xf32> to vector<1x128xf32>
    %224 = vector.broadcast %223 : vector<1x128xf32> to vector<96x128xf32>
    %225 = arith.mulf %220, %224 : vector<96x128xf32>
    %226 = arith.addf %219, %225 : vector<96x128xf32>
    %227 = vector.extract_strided_slice %212 {offsets = [48, 0], sizes = [96, 128], strides = [1, 1]} : vector<240x128xf32> to vector<96x128xf32>
    %228 = vector.extract_strided_slice %6 {offsets = [18, 0], sizes = [1, 128], strides = [1, 1]} : vector<49x128xf32> to vector<1x128xf32>
    %229 = vector.shape_cast %228 : vector<1x128xf32> to vector<128xf32>
    %230 = vector.shape_cast %229 : vector<128xf32> to vector<1x128xf32>
    %231 = vector.broadcast %230 : vector<1x128xf32> to vector<96x128xf32>
    %232 = arith.mulf %227, %231 : vector<96x128xf32>
    %233 = arith.addf %226, %232 : vector<96x128xf32>
    %234 = vector.extract_strided_slice %212 {offsets = [72, 0], sizes = [96, 128], strides = [1, 1]} : vector<240x128xf32> to vector<96x128xf32>
    %235 = vector.extract_strided_slice %6 {offsets = [25, 0], sizes = [1, 128], strides = [1, 1]} : vector<49x128xf32> to vector<1x128xf32>
    %236 = vector.shape_cast %235 : vector<1x128xf32> to vector<128xf32>
    %237 = vector.shape_cast %236 : vector<128xf32> to vector<1x128xf32>
    %238 = vector.broadcast %237 : vector<1x128xf32> to vector<96x128xf32>
    %239 = arith.mulf %234, %238 : vector<96x128xf32>
    %240 = arith.addf %233, %239 : vector<96x128xf32>
    %241 = vector.extract_strided_slice %212 {offsets = [96, 0], sizes = [96, 128], strides = [1, 1]} : vector<240x128xf32> to vector<96x128xf32>
    %242 = vector.extract_strided_slice %6 {offsets = [32, 0], sizes = [1, 128], strides = [1, 1]} : vector<49x128xf32> to vector<1x128xf32>
    %243 = vector.shape_cast %242 : vector<1x128xf32> to vector<128xf32>
    %244 = vector.shape_cast %243 : vector<128xf32> to vector<1x128xf32>
    %245 = vector.broadcast %244 : vector<1x128xf32> to vector<96x128xf32>
    %246 = arith.mulf %241, %245 : vector<96x128xf32>
    %247 = arith.addf %240, %246 : vector<96x128xf32>
    %248 = vector.extract_strided_slice %212 {offsets = [120, 0], sizes = [96, 128], strides = [1, 1]} : vector<240x128xf32> to vector<96x128xf32>
    %249 = vector.extract_strided_slice %6 {offsets = [39, 0], sizes = [1, 128], strides = [1, 1]} : vector<49x128xf32> to vector<1x128xf32>
    %250 = vector.shape_cast %249 : vector<1x128xf32> to vector<128xf32>
    %251 = vector.shape_cast %250 : vector<128xf32> to vector<1x128xf32>
    %252 = vector.broadcast %251 : vector<1x128xf32> to vector<96x128xf32>
    %253 = arith.mulf %248, %252 : vector<96x128xf32>
    %254 = arith.addf %247, %253 : vector<96x128xf32>
    %255 = vector.extract_strided_slice %212 {offsets = [144, 0], sizes = [96, 128], strides = [1, 1]} : vector<240x128xf32> to vector<96x128xf32>
    %256 = vector.extract_strided_slice %6 {offsets = [46, 0], sizes = [1, 128], strides = [1, 1]} : vector<49x128xf32> to vector<1x128xf32>
    %257 = vector.shape_cast %256 : vector<1x128xf32> to vector<128xf32>
    %258 = vector.shape_cast %257 : vector<128xf32> to vector<1x128xf32>
    %259 = vector.broadcast %258 : vector<1x128xf32> to vector<96x128xf32>
    %260 = arith.mulf %255, %259 : vector<96x128xf32>
    %261 = arith.addf %254, %260 : vector<96x128xf32>
    %c235_i32 = arith.constant 235 : i32
    %262 = tpu.dynamic_rotate %5 by %c235_i32 dim 0 : vector<240x128xf32>, i32 -> vector<240x128xf32>
    %263 = vector.extract_strided_slice %262 {offsets = [0, 0], sizes = [96, 128], strides = [1, 1]} : vector<240x128xf32> to vector<96x128xf32>
    %264 = vector.extract_strided_slice %6 {offsets = [5, 0], sizes = [1, 128], strides = [1, 1]} : vector<49x128xf32> to vector<1x128xf32>
    %265 = vector.shape_cast %264 : vector<1x128xf32> to vector<128xf32>
    %266 = vector.shape_cast %265 : vector<128xf32> to vector<1x128xf32>
    %267 = vector.broadcast %266 : vector<1x128xf32> to vector<96x128xf32>
    %268 = arith.mulf %263, %267 : vector<96x128xf32>
    %269 = arith.addf %261, %268 : vector<96x128xf32>
    %270 = vector.extract_strided_slice %262 {offsets = [24, 0], sizes = [96, 128], strides = [1, 1]} : vector<240x128xf32> to vector<96x128xf32>
    %271 = vector.extract_strided_slice %6 {offsets = [12, 0], sizes = [1, 128], strides = [1, 1]} : vector<49x128xf32> to vector<1x128xf32>
    %272 = vector.shape_cast %271 : vector<1x128xf32> to vector<128xf32>
    %273 = vector.shape_cast %272 : vector<128xf32> to vector<1x128xf32>
    %274 = vector.broadcast %273 : vector<1x128xf32> to vector<96x128xf32>
    %275 = arith.mulf %270, %274 : vector<96x128xf32>
    %276 = arith.addf %269, %275 : vector<96x128xf32>
    %277 = vector.extract_strided_slice %262 {offsets = [48, 0], sizes = [96, 128], strides = [1, 1]} : vector<240x128xf32> to vector<96x128xf32>
    %278 = vector.extract_strided_slice %6 {offsets = [19, 0], sizes = [1, 128], strides = [1, 1]} : vector<49x128xf32> to vector<1x128xf32>
    %279 = vector.shape_cast %278 : vector<1x128xf32> to vector<128xf32>
    %280 = vector.shape_cast %279 : vector<128xf32> to vector<1x128xf32>
    %281 = vector.broadcast %280 : vector<1x128xf32> to vector<96x128xf32>
    %282 = arith.mulf %277, %281 : vector<96x128xf32>
    %283 = arith.addf %276, %282 : vector<96x128xf32>
    %284 = vector.extract_strided_slice %262 {offsets = [72, 0], sizes = [96, 128], strides = [1, 1]} : vector<240x128xf32> to vector<96x128xf32>
    %285 = vector.extract_strided_slice %6 {offsets = [26, 0], sizes = [1, 128], strides = [1, 1]} : vector<49x128xf32> to vector<1x128xf32>
    %286 = vector.shape_cast %285 : vector<1x128xf32> to vector<128xf32>
    %287 = vector.shape_cast %286 : vector<128xf32> to vector<1x128xf32>
    %288 = vector.broadcast %287 : vector<1x128xf32> to vector<96x128xf32>
    %289 = arith.mulf %284, %288 : vector<96x128xf32>
    %290 = arith.addf %283, %289 : vector<96x128xf32>
    %291 = vector.extract_strided_slice %262 {offsets = [96, 0], sizes = [96, 128], strides = [1, 1]} : vector<240x128xf32> to vector<96x128xf32>
    %292 = vector.extract_strided_slice %6 {offsets = [33, 0], sizes = [1, 128], strides = [1, 1]} : vector<49x128xf32> to vector<1x128xf32>
    %293 = vector.shape_cast %292 : vector<1x128xf32> to vector<128xf32>
    %294 = vector.shape_cast %293 : vector<128xf32> to vector<1x128xf32>
    %295 = vector.broadcast %294 : vector<1x128xf32> to vector<96x128xf32>
    %296 = arith.mulf %291, %295 : vector<96x128xf32>
    %297 = arith.addf %290, %296 : vector<96x128xf32>
    %298 = vector.extract_strided_slice %262 {offsets = [120, 0], sizes = [96, 128], strides = [1, 1]} : vector<240x128xf32> to vector<96x128xf32>
    %299 = vector.extract_strided_slice %6 {offsets = [40, 0], sizes = [1, 128], strides = [1, 1]} : vector<49x128xf32> to vector<1x128xf32>
    %300 = vector.shape_cast %299 : vector<1x128xf32> to vector<128xf32>
    %301 = vector.shape_cast %300 : vector<128xf32> to vector<1x128xf32>
    %302 = vector.broadcast %301 : vector<1x128xf32> to vector<96x128xf32>
    %303 = arith.mulf %298, %302 : vector<96x128xf32>
    %304 = arith.addf %297, %303 : vector<96x128xf32>
    %305 = vector.extract_strided_slice %262 {offsets = [144, 0], sizes = [96, 128], strides = [1, 1]} : vector<240x128xf32> to vector<96x128xf32>
    %306 = vector.extract_strided_slice %6 {offsets = [47, 0], sizes = [1, 128], strides = [1, 1]} : vector<49x128xf32> to vector<1x128xf32>
    %307 = vector.shape_cast %306 : vector<1x128xf32> to vector<128xf32>
    %308 = vector.shape_cast %307 : vector<128xf32> to vector<1x128xf32>
    %309 = vector.broadcast %308 : vector<1x128xf32> to vector<96x128xf32>
    %310 = arith.mulf %305, %309 : vector<96x128xf32>
    %311 = arith.addf %304, %310 : vector<96x128xf32>
    %c234_i32 = arith.constant 234 : i32
    %312 = tpu.dynamic_rotate %5 by %c234_i32 dim 0 : vector<240x128xf32>, i32 -> vector<240x128xf32>
    %313 = vector.extract_strided_slice %312 {offsets = [0, 0], sizes = [96, 128], strides = [1, 1]} : vector<240x128xf32> to vector<96x128xf32>
    %314 = vector.extract_strided_slice %6 {offsets = [6, 0], sizes = [1, 128], strides = [1, 1]} : vector<49x128xf32> to vector<1x128xf32>
    %315 = vector.shape_cast %314 : vector<1x128xf32> to vector<128xf32>
    %316 = vector.shape_cast %315 : vector<128xf32> to vector<1x128xf32>
    %317 = vector.broadcast %316 : vector<1x128xf32> to vector<96x128xf32>
    %318 = arith.mulf %313, %317 : vector<96x128xf32>
    %319 = arith.addf %311, %318 : vector<96x128xf32>
    %320 = vector.extract_strided_slice %312 {offsets = [24, 0], sizes = [96, 128], strides = [1, 1]} : vector<240x128xf32> to vector<96x128xf32>
    %321 = vector.extract_strided_slice %6 {offsets = [13, 0], sizes = [1, 128], strides = [1, 1]} : vector<49x128xf32> to vector<1x128xf32>
    %322 = vector.shape_cast %321 : vector<1x128xf32> to vector<128xf32>
    %323 = vector.shape_cast %322 : vector<128xf32> to vector<1x128xf32>
    %324 = vector.broadcast %323 : vector<1x128xf32> to vector<96x128xf32>
    %325 = arith.mulf %320, %324 : vector<96x128xf32>
    %326 = arith.addf %319, %325 : vector<96x128xf32>
    %327 = vector.extract_strided_slice %312 {offsets = [48, 0], sizes = [96, 128], strides = [1, 1]} : vector<240x128xf32> to vector<96x128xf32>
    %328 = vector.extract_strided_slice %6 {offsets = [20, 0], sizes = [1, 128], strides = [1, 1]} : vector<49x128xf32> to vector<1x128xf32>
    %329 = vector.shape_cast %328 : vector<1x128xf32> to vector<128xf32>
    %330 = vector.shape_cast %329 : vector<128xf32> to vector<1x128xf32>
    %331 = vector.broadcast %330 : vector<1x128xf32> to vector<96x128xf32>
    %332 = arith.mulf %327, %331 : vector<96x128xf32>
    %333 = arith.addf %326, %332 : vector<96x128xf32>
    %334 = vector.extract_strided_slice %312 {offsets = [72, 0], sizes = [96, 128], strides = [1, 1]} : vector<240x128xf32> to vector<96x128xf32>
    %335 = vector.extract_strided_slice %6 {offsets = [27, 0], sizes = [1, 128], strides = [1, 1]} : vector<49x128xf32> to vector<1x128xf32>
    %336 = vector.shape_cast %335 : vector<1x128xf32> to vector<128xf32>
    %337 = vector.shape_cast %336 : vector<128xf32> to vector<1x128xf32>
    %338 = vector.broadcast %337 : vector<1x128xf32> to vector<96x128xf32>
    %339 = arith.mulf %334, %338 : vector<96x128xf32>
    %340 = arith.addf %333, %339 : vector<96x128xf32>
    %341 = vector.extract_strided_slice %312 {offsets = [96, 0], sizes = [96, 128], strides = [1, 1]} : vector<240x128xf32> to vector<96x128xf32>
    %342 = vector.extract_strided_slice %6 {offsets = [34, 0], sizes = [1, 128], strides = [1, 1]} : vector<49x128xf32> to vector<1x128xf32>
    %343 = vector.shape_cast %342 : vector<1x128xf32> to vector<128xf32>
    %344 = vector.shape_cast %343 : vector<128xf32> to vector<1x128xf32>
    %345 = vector.broadcast %344 : vector<1x128xf32> to vector<96x128xf32>
    %346 = arith.mulf %341, %345 : vector<96x128xf32>
    %347 = arith.addf %340, %346 : vector<96x128xf32>
    %348 = vector.extract_strided_slice %312 {offsets = [120, 0], sizes = [96, 128], strides = [1, 1]} : vector<240x128xf32> to vector<96x128xf32>
    %349 = vector.extract_strided_slice %6 {offsets = [41, 0], sizes = [1, 128], strides = [1, 1]} : vector<49x128xf32> to vector<1x128xf32>
    %350 = vector.shape_cast %349 : vector<1x128xf32> to vector<128xf32>
    %351 = vector.shape_cast %350 : vector<128xf32> to vector<1x128xf32>
    %352 = vector.broadcast %351 : vector<1x128xf32> to vector<96x128xf32>
    %353 = arith.mulf %348, %352 : vector<96x128xf32>
    %354 = arith.addf %347, %353 : vector<96x128xf32>
    %355 = vector.extract_strided_slice %312 {offsets = [144, 0], sizes = [96, 128], strides = [1, 1]} : vector<240x128xf32> to vector<96x128xf32>
    %356 = vector.extract_strided_slice %6 {offsets = [48, 0], sizes = [1, 128], strides = [1, 1]} : vector<49x128xf32> to vector<1x128xf32>
    %357 = vector.shape_cast %356 : vector<1x128xf32> to vector<128xf32>
    %358 = vector.shape_cast %357 : vector<128xf32> to vector<1x128xf32>
    %359 = vector.broadcast %358 : vector<1x128xf32> to vector<96x128xf32>
    %360 = arith.mulf %355, %359 : vector<96x128xf32>
    %361 = arith.addf %354, %360 : vector<96x128xf32>
    %362 = vector.extract_strided_slice %361 {offsets = [0, 0], sizes = [16, 128], strides = [1, 1]} : vector<96x128xf32> to vector<16x128xf32>
    %363 = vector.extract_strided_slice %361 {offsets = [24, 0], sizes = [16, 128], strides = [1, 1]} : vector<96x128xf32> to vector<16x128xf32>
    %364 = vector.extract_strided_slice %361 {offsets = [48, 0], sizes = [16, 128], strides = [1, 1]} : vector<96x128xf32> to vector<16x128xf32>
    %365 = vector.extract_strided_slice %361 {offsets = [72, 0], sizes = [16, 128], strides = [1, 1]} : vector<96x128xf32> to vector<16x128xf32>
    %366 = tpu.concatenate %362, %363, %364, %365 in 0 : vector<16x128xf32>, vector<16x128xf32>, vector<16x128xf32>, vector<16x128xf32> -> vector<64x128xf32>
    %c0_3 = arith.constant 0 : index
    %c0_4 = arith.constant 0 : index
    %367 = vector.load %arg4[%c0_3, %c0_4] : memref<1x128xf32, #tpu.memory_space<vmem>>, vector<1x128xf32>
    %368 = vector.shape_cast %367 : vector<1x128xf32> to vector<128xf32>
    %369 = vector.shape_cast %368 : vector<128xf32> to vector<1x128xf32>
    %370 = vector.broadcast %369 : vector<1x128xf32> to vector<64x128xf32>
    %371 = arith.addf %366, %370 : vector<64x128xf32>
    %cst_5 = arith.constant dense<0.000000e+00> : vector<64xf32>
    %372 = vector.multi_reduction <add>, %371, %cst_5 [1] : vector<64x128xf32> to vector<64xf32>
    %373 = vector.shape_cast %372 : vector<64xf32> to vector<64x1xf32>
    %cst_6 = arith.constant 3.125000e-02 : f32
    %374 = vector.broadcast %cst_6 : f32 to vector<64x1xf32>
    %375 = arith.mulf %373, %374 : vector<64x1xf32>
    %376 = vector.broadcast %375 : vector<64x1xf32> to vector<64x128xf32>
    %377 = arith.subf %371, %376 : vector<64x128xf32>
    %378 = arith.mulf %377, %377 : vector<64x128xf32>
    %cst_7 = arith.constant dense<0.000000e+00> : vector<64xf32>
    %379 = vector.multi_reduction <add>, %378, %cst_7 [1] : vector<64x128xf32> to vector<64xf32>
    %380 = vector.shape_cast %379 : vector<64xf32> to vector<64x1xf32>
    %381 = arith.mulf %375, %375 : vector<64x1xf32>
    %cst_8 = arith.constant 9.600000e+01 : f32
    %382 = vector.broadcast %cst_8 : f32 to vector<64x1xf32>
    %383 = arith.mulf %382, %381 : vector<64x1xf32>
    %384 = arith.subf %380, %383 : vector<64x1xf32>
    %cst_9 = arith.constant 3.125000e-02 : f32
    %385 = vector.broadcast %cst_9 : f32 to vector<64x1xf32>
    %386 = arith.mulf %384, %385 : vector<64x1xf32>
    %cst_10 = arith.constant 0.000000e+00 : f32
    %387 = vector.broadcast %cst_10 : f32 to vector<64x1xf32>
    %388 = arith.maximumf %386, %387 : vector<64x1xf32>
    %cst_11 = arith.constant 9.99999997E-7 : f32
    %389 = vector.broadcast %cst_11 : f32 to vector<64x1xf32>
    %390 = arith.addf %388, %389 : vector<64x1xf32>
    %391 = math.rsqrt %390 : vector<64x1xf32>
    %392 = vector.broadcast %391 : vector<64x1xf32> to vector<64x128xf32>
    %393 = arith.mulf %377, %392 : vector<64x128xf32>
    %394 = arith.truncf %393 : vector<64x128xf32> to vector<64x128xbf16>
    %c0_12 = arith.constant 0 : index
    %c0_13 = arith.constant 0 : index
    %395 = vector.load %arg5[%c0_12, %c0_13] : memref<128x512xbf16, #tpu.memory_space<vmem>>, vector<128x512xbf16>
    %cst_14 = arith.constant dense<0.000000e+00> : vector<64x512xf32>
    %396 = tpu.matmul %394, %395, %cst_14 {dimension_numbers = #tpu.dot_dimension_numbers<[1], [0], [0], [1], [0, 0, 1, 1], [], []>} : vector<64x128xbf16>, vector<128x512xbf16>, vector<64x512xf32> -> vector<64x512xf32>
    %c0_15 = arith.constant 0 : index
    %c0_16 = arith.constant 0 : index
    %397 = vector.load %arg6[%c0_15, %c0_16] : memref<1x512xf32, #tpu.memory_space<vmem>>, vector<1x512xf32>
    %398 = vector.shape_cast %397 : vector<1x512xf32> to vector<512xf32>
    %399 = vector.shape_cast %398 : vector<512xf32> to vector<1x512xf32>
    %400 = vector.broadcast %399 : vector<1x512xf32> to vector<64x512xf32>
    %401 = arith.addf %396, %400 : vector<64x512xf32>
    %cst_17 = arith.constant 5.000000e-01 : f32
    %402 = vector.broadcast %cst_17 : f32 to vector<64x512xf32>
    %403 = arith.mulf %402, %401 : vector<64x512xf32>
    %cst_18 = arith.constant 0.707106769 : f32
    %404 = vector.broadcast %cst_18 : f32 to vector<64x512xf32>
    %405 = arith.mulf %401, %404 : vector<64x512xf32>
    %406 = math.erf %405 : vector<64x512xf32>
    %cst_19 = arith.constant 1.000000e+00 : f32
    %407 = vector.broadcast %cst_19 : f32 to vector<64x512xf32>
    %408 = arith.addf %407, %406 : vector<64x512xf32>
    %409 = arith.mulf %403, %408 : vector<64x512xf32>
    %410 = arith.truncf %409 : vector<64x512xf32> to vector<64x512xbf16>
    %c0_20 = arith.constant 0 : index
    %c0_21 = arith.constant 0 : index
    %411 = vector.load %arg7[%c0_20, %c0_21] : memref<512x128xbf16, #tpu.memory_space<vmem>>, vector<512x128xbf16>
    %cst_22 = arith.constant dense<0.000000e+00> : vector<64x128xf32>
    %412 = tpu.matmul %410, %411, %cst_22 {dimension_numbers = #tpu.dot_dimension_numbers<[1], [0], [0], [1], [0, 0, 1, 1], [], []>} : vector<64x512xbf16>, vector<512x128xbf16>, vector<64x128xf32> -> vector<64x128xf32>
    %c0_23 = arith.constant 0 : index
    %c0_24 = arith.constant 0 : index
    %413 = vector.load %arg8[%c0_23, %c0_24] : memref<1x128xf32, #tpu.memory_space<vmem>>, vector<1x128xf32>
    %414 = vector.shape_cast %413 : vector<1x128xf32> to vector<128xf32>
    %415 = vector.shape_cast %414 : vector<128xf32> to vector<1x128xf32>
    %416 = vector.broadcast %415 : vector<1x128xf32> to vector<64x128xf32>
    %417 = arith.addf %412, %416 : vector<64x128xf32>
    %418 = arith.addf %162, %417 : vector<64x128xf32>
    %c0_25 = arith.constant 0 : index
    %c0_26 = arith.constant 0 : index
    %c0_27 = arith.constant 0 : index
    %419 = vector.load %arg9[%c0_25, %c0_26, %c0_27] : memref<1x64x128xf32, #tpu.memory_space<vmem>>, vector<1x64x128xf32>
    %420 = vector.shape_cast %419 : vector<1x64x128xf32> to vector<64x128xf32>
    %421 = vector.shape_cast %418 : vector<64x128xf32> to vector<1x64x128xf32>
    tpu.vector_store %arg9[%c0_25, %c0_26, %c0_27], %421 {strides = array<i32>} : memref<1x64x128xf32, #tpu.memory_space<vmem>>, vector<1x64x128xf32>,
    return
  }
  func.func @transform_0(%arg0: i32, %arg1: i32) -> (i32, i32, i32) {
    %c0_i32 = arith.constant 0 : i32
    %c0_i32_0 = arith.constant 0 : i32
    %c0_i32_1 = arith.constant 0 : i32
    return %arg0, %c0_i32, %c0_i32_0 : i32, i32, i32
  }
  func.func @transform_1(%arg0: i32, %arg1: i32) -> (i32, i32) {
    %c0_i32 = arith.constant 0 : i32
    %c0_i32_0 = arith.constant 0 : i32
    %c0_i32_1 = arith.constant 0 : i32
    return %c0_i32, %c0_i32_0 : i32, i32
  }
  func.func @transform_2(%arg0: i32, %arg1: i32) -> (i32, i32) {
    %c0_i32 = arith.constant 0 : i32
    %c0_i32_0 = arith.constant 0 : i32
    %c0_i32_1 = arith.constant 0 : i32
    return %c0_i32, %c0_i32_0 : i32, i32
  }
  func.func @transform_3(%arg0: i32, %arg1: i32) -> (i32, i32) {
    %c0_i32 = arith.constant 0 : i32
    %c0_i32_0 = arith.constant 0 : i32
    %c0_i32_1 = arith.constant 0 : i32
    return %c0_i32, %c0_i32_0 : i32, i32
  }
  func.func @transform_4(%arg0: i32, %arg1: i32) -> (i32, i32) {
    %c0_i32 = arith.constant 0 : i32
    %c0_i32_0 = arith.constant 0 : i32
    %c0_i32_1 = arith.constant 0 : i32
    return %c0_i32, %c0_i32_0 : i32, i32
  }
  func.func @transform_5(%arg0: i32, %arg1: i32) -> (i32, i32) {
    %c0_i32 = arith.constant 0 : i32
    %c0_i32_0 = arith.constant 0 : i32
    %c0_i32_1 = arith.constant 0 : i32
    return %c0_i32, %c0_i32_0 : i32, i32
  }
  func.func @transform_6(%arg0: i32, %arg1: i32) -> (i32, i32) {
    %c0_i32 = arith.constant 0 : i32
    %c0_i32_0 = arith.constant 0 : i32
    %c0_i32_1 = arith.constant 0 : i32
    return %c0_i32, %c0_i32_0 : i32, i32
  }
  func.func @transform_7(%arg0: i32, %arg1: i32) -> (i32, i32, i32) {
    %c0_i32 = arith.constant 0 : i32
    %c0_i32_0 = arith.constant 0 : i32
    return %arg0, %arg1, %c0_i32 : i32, i32, i32
  }
}

</mosaic_0001>

<llo_original>
// kernel: mul.17
$region0: #{mul.17}
  #allocation2 [shape = 's32[1]{0}', space=sflag, size = 0x4, scoped, tag = 'scoped memory for mul.17']
  %s0 = inlined_call_operand.hbm [shape: f32[32], index: 0, kind: input, shape index: {}]
  %s1 = inlined_call_operand.vmem [shape: f32[32], index: 1, kind: input, shape index: {}]
  %s2 = inlined_call_operand.vmem [shape: f32[32], index: 2, kind: output, shape index: {}]
  $region1: #{mul.17} parent=0
    #allocation0 [shape = 'u8[512]{0}', space=vmem, size = 0x400, scoped, tag = 'operand span for operand 0']
    #allocation1 [shape = 's32[1]{0}', space=sflag, size = 0x4, scoped, tag = 'scoped memory for mul.17']
    %3 = vsyncpa [#allocation1], 0
    %s5 = ssub.s32 16, 16
    %6 = vsyncadd [#allocation1], %s5
    %s8 = sshll.u32 [#allocation0], 4
    %s9 = int_to_ptr.vmem [resolvable:$true] %s8
    %11 = dma.hbm_to_vmem [thread:$0]  %s0, 16, %s9, [#allocation1]
    %12 = dma.done [#allocation1], 16
    %v13 = vld [vmem:[#allocation0] sm:$0x1]
    %v14 = vld [vmem:[%s1] sm:$0x1]
    %15 = xla_tuple %v13, %v14
    %16 = xla_tuple %15
    %v17 = vmul.f32 %v13, %v14
    %18 = xla_tuple %v17
    %19 = vst [vmem:[%s2] sm:$0x1] %v17
    %20 = vsyncpa [#allocation1], 1

// kernel: convnext_block_forward.1
$region0: #{convnext_block_forward.1}
  #allocation0 [shape = 'u32[]', space=smem, size = 0x4, offset = 0x4, fixed_abs, tag = 'smem constant byte address 0x4 - core index']
  #allocation1 [shape = 'u32[144,128]{1,0:T(1,128)}', space=vmem, size = 0x12000, scoped, tag = 'internal scratch']
  %s0 = inlined_call_operand.vmem [shape: f32[2,528,128], index: 0, kind: input, shape index: {}]
  %s1 = inlined_call_operand.vmem [shape: f32[49,128], index: 1, kind: input, shape index: {}]
  %s2 = inlined_call_operand.vmem [shape: f32[1,128], index: 2, kind: input, shape index: {}]
  %s3 = inlined_call_operand.vmem [shape: bf16[128,512], index: 3, kind: input, shape index: {}]
  %s4 = inlined_call_operand.vmem [shape: f32[1,512], index: 4, kind: input, shape index: {}]
  %s5 = inlined_call_operand.vmem [shape: bf16[512,128], index: 5, kind: input, shape index: {}]
  %s6 = inlined_call_operand.vmem [shape: f32[1,128], index: 6, kind: input, shape index: {}]
  %s7 = inlined_call_operand.vmem [shape: f32[2,256,128], index: 7, kind: output, shape index: {}]
  %s8 = sld [smem:[#allocation0]]
  $region61: #{convnext_block_forward.1} parent=0
    _
  %s10 = ssub.s32 1, %s8
  %s11 = scalar_select 0, %s10, %s8
  loop: start=0, step=1, limit=10
  $region2: #{convnext_block_forward.1} parent=0 // loop_pre_header
    _
  $region3: #{convnext_block_forward.1} parent=0 // loop_header
    %s13 = sphi 0, %s17
    %p14 = scmp.ge.s32.totalorder %s13, 10
    %s20 = sphi 0, %s32
    %s21 = sphi 0, %s28
    %s22 = sphi 0, %s20
    %s23 = sphi 0, %s21
    %s24 = sphi 0, %s22
    %s25 = sphi 0, %s23
    %s35 = sphi 0, %s37
    %s38 = sphi 0, %s35
    %s39 = sphi 0, %s38
    %s55 = sphi 0, %s39
    %s59 = sphi 0, %s59
    %s61 = sphi 0, %s59
    %s62 = sphi 0, %s61
    %s76 = sphi 0, %s62
    %s80 = sphi 0, %s80
    %s82 = sphi 0, %s80
    %s83 = sphi 0, %s82
    %s97 = sphi 0, %s83
    %s101 = sphi 0, %s101
    %s103 = sphi 0, %s101
    %s104 = sphi 0, %s103
    %s118 = sphi 0, %s104
    %s122 = sphi 0, %s122
    %s124 = sphi 0, %s122
    %s125 = sphi 0, %s124
    %s139 = sphi 0, %s125
    %s143 = sphi 0, %s143
    %s145 = sphi 0, %s143
    %s146 = sphi 0, %s145
    %s160 = sphi 0, %s146
    %s164 = sphi 0, %s164
    %s166 = sphi 0, %s164
    %s167 = sphi 0, %s166
    %s181 = sphi 0, %s167
    %s189 = sphi 0, %s191
    %s192 = sphi 0, %s189
    %s193 = sphi 0, %s192
    %s209 = sphi 0, %s193
  $region4: #{convnext_block_forward.1} parent=0 // loop_header_branch
    %16 = sbr.rel (%p14) target = $region8
  $region5: #{convnext_block_forward.1} parent=0 // loop_body
    %s18 = ssub.s32 %s13, 1
    %s19 = ssub.s32 %s13, 2
    %s26 = sadd.s32 1, %s21
    %p27 = scmp.ge.s32.totalorder %s26, 4
    %s28 = scalar_select %p27, 0, %s26
    %s29 = sadd.s32 1, %s20
    %s30 = scalar_select %p27, %s29, %s20
    %p31 = scmp.ge.s32.totalorder %s30, 2
    %s32 = scalar_select %p31, 0, %s30
    %s33 = ssub.s32 %s20, %s32
    %p34 = scmp.eq.s32.totalorder %s33, 0
    %s36 = sadd.s32 %s35, 1
    %s37 = scalar_select %p34, %s35, %s36
    %p40 = pneg %p34
    %p41 = scmp.eq.s32.totalorder %s13, 7
    %p42 = por %p40, %p41
    %p43 = scmp.ne.s32.totalorder %s35, %s38
    %p44 = scmp.eq.s32.totalorder %s13, 0
    %p45 = por %p43, %p44
    %p46 = scmp.ne.s32.totalorder %s35, %s38
    %p47 = scmp.eq.s32.totalorder %s18, 7
    %p48 = por %p46, %p47
    %p49 = scmp.ne.s32.totalorder %s38, %s39
    %p50 = scmp.eq.s32.totalorder %s18, 0
    %p51 = por %p49, %p50
    %p52 = scmp.ne.s32.totalorder %s38, %s39
    %p53 = scmp.eq.s32.totalorder %s19, 7
    %p54 = por %p52, %p53
    %p56 = scmp.ne.s32.totalorder %s39, %s55
    %p57 = scmp.eq.s32.totalorder %s19, 0
    %p58 = por %p56, %p57
    %s60 = sadd.s32 %s59, 1
    %p63 = scmp.eq.s32.totalorder %s13, 7
    %p64 = scmp.ne.s32.totalorder %s59, %s61
    %p65 = scmp.eq.s32.totalorder %s13, 0
    %p66 = por %p64, %p65
    %p67 = scmp.ne.s32.totalorder %s59, %s61
    %p68 = scmp.eq.s32.totalorder %s18, 7
    %p69 = por %p67, %p68
    %p70 = scmp.ne.s32.totalorder %s61, %s62
    %p71 = scmp.eq.s32.totalorder %s18, 0
    %p72 = por %p70, %p71
    %p73 = scmp.ne.s32.totalorder %s61, %s62
    %p74 = scmp.eq.s32.totalorder %s19, 7
    %p75 = por %p73, %p74
    %p77 = scmp.ne.s32.totalorder %s62, %s76
    %p78 = scmp.eq.s32.totalorder %s19, 0
    %p79 = por %p77, %p78
    %s81 = sadd.s32 %s80, 1
    %p84 = scmp.eq.s32.totalorder %s13, 7
    %p85 = scmp.ne.s32.totalorder %s80, %s82
    %p86 = scmp.eq.s32.totalorder %s13, 0
    %p87 = por %p85, %p86
    %p88 = scmp.ne.s32.totalorder %s80, %s82
    %p89 = scmp.eq.s32.totalorder %s18, 7
    %p90 = por %p88, %p89
    %p91 = scmp.ne.s32.totalorder %s82, %s83
    %p92 = scmp.eq.s32.totalorder %s18, 0
    %p93 = por %p91, %p92
    %p94 = scmp.ne.s32.totalorder %s82, %s83
    %p95 = scmp.eq.s32.totalorder %s19, 7
    %p96 = por %p94, %p95
    %p98 = scmp.ne.s32.totalorder %s83, %s97
    %p99 = scmp.eq.s32.totalorder %s19, 0
    %p100 = por %p98, %p99
    %s102 = sadd.s32 %s101, 1
    %p105 = scmp.eq.s32.totalorder %s13, 7
    %p106 = scmp.ne.s32.totalorder %s101, %s103
    %p107 = scmp.eq.s32.totalorder %s13, 0
    %p108 = por %p106, %p107
    %p109 = scmp.ne.s32.totalorder %s101, %s103
    %p110 = scmp.eq.s32.totalorder %s18, 7
    %p111 = por %p109, %p110
    %p112 = scmp.ne.s32.totalorder %s103, %s104
    %p113 = scmp.eq.s32.totalorder %s18, 0
    %p114 = por %p112, %p113
    %p115 = scmp.ne.s32.totalorder %s103, %s104
    %p116 = scmp.eq.s32.totalorder %s19, 7
    %p117 = por %p115, %p116
    %p119 = scmp.ne.s32.totalorder %s104, %s118
    %p120 = scmp.eq.s32.totalorder %s19, 0
    %p121 = por %p119, %p120
    %s123 = sadd.s32 %s122, 1
    %p126 = scmp.eq.s32.totalorder %s13, 7
    %p127 = scmp.ne.s32.totalorder %s122, %s124
    %p128 = scmp.eq.s32.totalorder %s13, 0
    %p129 = por %p127, %p128
    %p130 = scmp.ne.s32.totalorder %s122, %s124
    %p131 = scmp.eq.s32.totalorder %s18, 7
    %p132 = por %p130, %p131
    %p133 = scmp.ne.s32.totalorder %s124, %s125
    %p134 = scmp.eq.s32.totalorder %s18, 0
    %p135 = por %p133, %p134
    %p136 = scmp.ne.s32.totalorder %s124, %s125
    %p137 = scmp.eq.s32.totalorder %s19, 7
    %p138 = por %p136, %p137
    %p140 = scmp.ne.s32.totalorder %s125, %s139
    %p141 = scmp.eq.s32.totalorder %s19, 0
    %p142 = por %p140, %p141
    %s144 = sadd.s32 %s143, 1
    %p147 = scmp.eq.s32.totalorder %s13, 7
    %p148 = scmp.ne.s32.totalorder %s143, %s145
    %p149 = scmp.eq.s32.totalorder %s13, 0
    %p150 = por %p148, %p149
    %p151 = scmp.ne.s32.totalorder %s143, %s145
    %p152 = scmp.eq.s32.totalorder %s18, 7
    %p153 = por %p151, %p152
    %p154 = scmp.ne.s32.totalorder %s145, %s146
    %p155 = scmp.eq.s32.totalorder %s18, 0
    %p156 = por %p154, %p155
    %p157 = scmp.ne.s32.totalorder %s145, %s146
    %p158 = scmp.eq.s32.totalorder %s19, 7
    %p159 = por %p157, %p158
    %p161 = scmp.ne.s32.totalorder %s146, %s160
    %p162 = scmp.eq.s32.totalorder %s19, 0
    %p163 = por %p161, %p162
    %s165 = sadd.s32 %s164, 1
    %p168 = scmp.eq.s32.totalorder %s13, 7
    %p169 = scmp.ne.s32.totalorder %s164, %s166
    %p170 = scmp.eq.s32.totalorder %s13, 0
    %p171 = por %p169, %p170
    %p172 = scmp.ne.s32.totalorder %s164, %s166
    %p173 = scmp.eq.s32.totalorder %s18, 7
    %p174 = por %p172, %p173
    %p175 = scmp.ne.s32.totalorder %s166, %s167
    %p176 = scmp.eq.s32.totalorder %s18, 0
    %p177 = por %p175, %p176
    %p178 = scmp.ne.s32.totalorder %s166, %s167
    %p179 = scmp.eq.s32.totalorder %s19, 7
    %p180 = por %p178, %p179
    %p182 = scmp.ne.s32.totalorder %s167, %s181
    %p183 = scmp.eq.s32.totalorder %s19, 0
    %p184 = por %p182, %p183
    %s185 = ssub.s32 %s20, %s32
    %s186 = ssub.s32 %s21, %s28
    %s187 = sor.u32 %s185, %s186
    %p188 = scmp.eq.s32.totalorder %s187, 0
    %s190 = sadd.s32 %s189, 1
    %s191 = scalar_select %p188, %s189, %s190
    %p194 = pneg %p188
    %p195 = scmp.eq.s32.totalorder %s13, 7
    %p196 = por %p194, %p195
    %p197 = scmp.ne.s32.totalorder %s189, %s192
    %p198 = scmp.eq.s32.totalorder %s13, 0
    %p199 = por %p197, %p198
    %p200 = scmp.ne.s32.totalorder %s189, %s192
    %p201 = scmp.eq.s32.totalorder %s18, 7
    %p202 = por %p200, %p201
    %p203 = scmp.ne.s32.totalorder %s192, %s193
    %p204 = scmp.eq.s32.totalorder %s18, 0
    %p205 = por %p203, %p204
    %p206 = scmp.ne.s32.totalorder %s192, %s193
    %p207 = scmp.eq.s32.totalorder %s19, 7
    %p208 = por %p206, %p207
    %p210 = scmp.ne.s32.totalorder %s193, %s209
    %p211 = scmp.eq.s32.totalorder %s19, 0
    %p212 = por %p210, %p211
    %p213 = scmp.le.s32.totalorder 1, %s13
    %p214 = scmp.lt.s32.totalorder %s13, 9
    %p215 = pnand %p213, %p214
    %p216 = pneg %p215
    // Predicated region
    $region9: #{convnext_block_forward.1} parent=5 // pred_check
      _
    $region10: #{convnext_block_forward.1} parent=5 // pred_check_branch
      %218 = sbr.rel (%p215) target = $region12
    $region11: #{convnext_block_forward.1} parent=5 // pred_region
      %s219 = ssub.s32 %s13, 1
      // Predicated region
      $region13: #{convnext_block_forward.1} parent=11 // pred_check
        %p220 = pneg %p51
      $region14: #{convnext_block_forward.1} parent=11 // pred_check_branch
        %222 = sbr.rel (%p220) target = $region16
      $region15: #{convnext_block_forward.1} parent=11 // pred_region
        %p223 = scmp.lt.s32.totalorder %s22, 1
        %s224 = scalar_select %p223, %s22, 1
        %s225 = smul.addr %s224, 66
        %s226 = smul.addr %s225, 8
        %s227 = scalar_lea.vmem %s0, %s226
      $region16: #{convnext_block_forward.1} parent=11 // pred_fallthru
        _
      // Predicated region
      $region17: #{convnext_block_forward.1} parent=11 // pred_check
        %p228 = pneg %p72
      $region18: #{convnext_block_forward.1} parent=11 // pred_check_branch
        %230 = sbr.rel (%p228) target = $region20
      $region19: #{convnext_block_forward.1} parent=11 // pred_region
        _
      $region20: #{convnext_block_forward.1} parent=11 // pred_fallthru
        _
      // Predicated region
      $region21: #{convnext_block_forward.1} parent=11 // pred_check
        %p231 = pneg %p93
      $region22: #{convnext_block_forward.1} parent=11 // pred_check_branch
        %233 = sbr.rel (%p231) target = $region24
      $region23: #{convnext_block_forward.1} parent=11 // pred_region
        _
      $region24: #{convnext_block_forward.1} parent=11 // pred_fallthru
        _
      // Predicated region
      $region25: #{convnext_block_forward.1} parent=11 // pred_check
        %p234 = pneg %p114
      $region26: #{convnext_block_forward.1} parent=11 // pred_check_branch
        %236 = sbr.rel (%p234) target = $region28
      $region27: #{convnext_block_forward.1} parent=11 // pred_region
        _
      $region28: #{convnext_block_forward.1} parent=11 // pred_fallthru
        _
      // Predicated region
      $region29: #{convnext_block_forward.1} parent=11 // pred_check
        %p237 = pneg %p135
      $region30: #{convnext_block_forward.1} parent=11 // pred_check_branch
        %239 = sbr.rel (%p237) target = $region32
      $region31: #{convnext_block_forward.1} parent=11 // pred_region
        _
      $region32: #{convnext_block_forward.1} parent=11 // pred_fallthru
        _
      // Predicated region
      $region33: #{convnext_block_forward.1} parent=11 // pred_check
        %p240 = pneg %p156
      $region34: #{convnext_block_forward.1} parent=11 // pred_check_branch
        %242 = sbr.rel (%p240) target = $region36
      $region35: #{convnext_block_forward.1} parent=11 // pred_region
        _
      $region36: #{convnext_block_forward.1} parent=11 // pred_fallthru
        _
      // Predicated region
      $region37: #{convnext_block_forward.1} parent=11 // pred_check
        %p243 = pneg %p177
      $region38: #{convnext_block_forward.1} parent=11 // pred_check_branch
        %245 = sbr.rel (%p243) target = $region40
      $region39: #{convnext_block_forward.1} parent=11 // pred_region
        _
      $region40: #{convnext_block_forward.1} parent=11 // pred_fallthru
        _
    $region12: #{convnext_block_forward.1} parent=5 // pred_fallthru
      _
    %p246 = scmp.lt.s32.totalorder %s13, 8
    // Predicated region
    $region41: #{convnext_block_forward.1} parent=5 // pred_check
      %p247 = pneg %p246
    $region42: #{convnext_block_forward.1} parent=5 // pred_check_branch
      %249 = sbr.rel (%p247) target = $region44
    $region43: #{convnext_block_forward.1} parent=5 // pred_region
      _
    $region44: #{convnext_block_forward.1} parent=5 // pred_fallthru
      _
    %p250 = scmp.le.s32.totalorder 1, %s13
    %p251 = scmp.lt.s32.totalorder %s13, 9
    %p252 = pnand %p250, %p251
    %p253 = pneg %p252
    // Predicated region
    $region45: #{convnext_block_forward.1} parent=5 // pred_check
      _
    $region46: #{convnext_block_forward.1} parent=5 // pred_check_branch
      %255 = sbr.rel (%p252) target = $region48
    $region47: #{convnext_block_forward.1} parent=5 // pred_region
      %s256 = ssub.s32 %s13, 1
      %p257 = scmp.lt.s32.totalorder %s22, 1
      %s258 = scalar_select %p257, %s22, 1
      %s259 = smul.addr %s258, 66
      %s260 = smul.addr %s259, 8
      %s261 = scalar_lea.vmem %s0, %s260
      %p262 = pneg %p51
      %p263 = pneg %p48
      %p264 = pneg %p72
      %p265 = pneg %p69
      %p266 = pneg %p93
      %p267 = pneg %p90
      %p268 = pneg %p114
      %p269 = pneg %p111
      %p270 = pneg %p135
      %p271 = pneg %p132
      %p272 = pneg %p156
      %p273 = pneg %p153
      %p274 = pneg %p177
      %p275 = pneg %p174
      %p276 = pneg %p205
      %p277 = pneg %p202
      %s278 = smul.u32 8, %s23
      %p279 = scmp.lt.s32.totalorder %s22, 1
      %s280 = scalar_select %p279, %s22, 1
      %p281 = scmp.lt.s32.totalorder %s278, 31
      %s282 = scalar_select %p281, %s278, 31
      %s283 = smul.addr %s280, 32
      %s284 = sadd.s32 %s282, %s283
      %s285 = smul.addr %s284, 8
      %s286 = scalar_lea.vmem %s7, %s285
      %p287 = scmp.lt.s32.totalorder %s22, 1
      %s288 = scalar_select %p287, %s22, 1
      %s289 = smul.addr %s288, 66
      %s290 = smul.addr %s289, 8
      %s291 = scalar_lea.vmem %s0, %s290
      %s292 = smul.u32 8, %s23
      %p293 = scmp.lt.s32.totalorder %s22, 1
      %s294 = scalar_select %p293, %s22, 1
      %p295 = scmp.lt.s32.totalorder %s292, 31
      %s296 = scalar_select %p295, %s292, 31
      %s297 = smul.addr %s294, 32
      %s298 = sadd.s32 %s296, %s297
      %s299 = smul.addr %s298, 8
      %s300 = scalar_lea.vmem %s7, %s299
      %s301 = smul.u32 8, %s23
      %s303 = smul.u32 %s23, 96
      %s304 = scalar_lea.vmem %s291, %s303
      %v305 = vld [vmem:[%s304] sm:$0xff]
      %v306 = vld [vmem:[%s304 + $0x8] sm:$0xff]
      %v307 = vld [vmem:[%s304 + $0x10] sm:$0xff]
      %v308 = vld [vmem:[%s304 + $0x18] sm:$0xff]
      %v309 = vld [vmem:[%s304 + $0x20] sm:$0xff]
      %v310 = vld [vmem:[%s304 + $0x28] sm:$0xff]
      %v311 = vld [vmem:[%s304 + $0x30] sm:$0xff]
      %v312 = vld [vmem:[%s304 + $0x38] sm:$0xff]
      %v313 = vld [vmem:[%s304 + $0x40] sm:$0xff]
      %v314 = vld [vmem:[%s304 + $0x48] sm:$0xff]
      %v315 = vld [vmem:[%s304 + $0x50] sm:$0xff]
      %v316 = vld [vmem:[%s304 + $0x58] sm:$0xff]
      %v317 = vld [vmem:[%s304 + $0x60] sm:$0xff]
      %v318 = vld [vmem:[%s304 + $0x68] sm:$0xff]
      %v319 = vld [vmem:[%s304 + $0x70] sm:$0xff]
      %v320 = vld [vmem:[%s304 + $0x78] sm:$0xff]
      %v321 = vld [vmem:[%s304 + $0x80] sm:$0xff]
      %v322 = vld [vmem:[%s304 + $0x88] sm:$0xff]
      %v323 = vld [vmem:[%s304 + $0x90] sm:$0xff]
      %v324 = vld [vmem:[%s304 + $0x98] sm:$0xff]
      %v325 = vld [vmem:[%s304 + $0xa0] sm:$0xff]
      %v326 = vld [vmem:[%s304 + $0xa8] sm:$0xff]
      %v327 = vld [vmem:[%s304 + $0xb0] sm:$0xff]
      %v328 = vld [vmem:[%s304 + $0xb8] sm:$0xff]
      %v329 = vld [vmem:[%s304 + $0xc0] sm:$0xff]
      %v330 = vld [vmem:[%s304 + $0xc8] sm:$0xff]
      %v331 = vld [vmem:[%s304 + $0xd0] sm:$0xff]
      %v332 = vld [vmem:[%s304 + $0xd8] sm:$0xff]
      %v333 = vld [vmem:[%s304 + $0xe0] sm:$0xff]
      %v334 = vld [vmem:[%s304 + $0xe8] sm:$0xff]
      %v335 = vld [vmem:[%s1] sm:$0xff]
      %v336 = vld [vmem:[%s1 + $0x8] sm:$0xff]
      %v337 = vld [vmem:[%s1 + $0x10] sm:$0xff]
      %v338 = vld [vmem:[%s1 + $0x18] sm:$0xff]
      %v339 = vld [vmem:[%s1 + $0x20] sm:$0xff]
      %v340 = vld [vmem:[%s1 + $0x28] sm:$0xff]
      %v341 = vld [vmem:[%s1 + $0x30] sm:$0x1]
      %v342 = vlaneseq
      %v343 = vshrl.u32 %v342, 7
      %v344 = vsub.s32 0, %v343
      %v345 = vrot.slane %v335, %v344
      %v346 = vmul.f32 %v305, %v345
      %v347 = vmul.f32 %v306, %v345
      %v348 = vmul.f32 %v308, %v345
      %v349 = vmul.f32 %v309, %v345
      %v350 = vmul.f32 %v311, %v345
      %v351 = vmul.f32 %v312, %v345
      %v352 = vmul.f32 %v314, %v345
      %v353 = vmul.f32 %v315, %v345
      %v354 = vadd.f32 %v346, 0.0
      %v355 = vadd.f32 %v347, 0.0
      %v356 = vadd.f32 %v348, 0.0
      %v357 = vadd.f32 %v349, 0.0
      %v358 = vadd.f32 %v350, 0.0
      %v359 = vadd.f32 %v351, 0.0
      %v360 = vadd.f32 %v352, 0.0
      %v361 = vadd.f32 %v353, 0.0
      %v362 = vlaneseq
      %v363 = vshrl.u32 %v362, 7
      %v364 = vsub.s32 7, %v363
      %v365 = vrot.slane %v335, %v364
      %v366 = vmul.f32 %v308, %v365
      %v367 = vmul.f32 %v309, %v365
      %v368 = vmul.f32 %v311, %v365
      %v369 = vmul.f32 %v312, %v365
      %v370 = vmul.f32 %v314, %v365
      %v371 = vmul.f32 %v315, %v365
      %v372 = vmul.f32 %v317, %v365
      %v373 = vmul.f32 %v318, %v365
      %v374 = vadd.f32 %v354, %v366
      %v375 = vadd.f32 %v355, %v367
      %v376 = vadd.f32 %v356, %v368
      %v377 = vadd.f32 %v357, %v369
      %v378 = vadd.f32 %v358, %v370
      %v379 = vadd.f32 %v359, %v371
      %v380 = vadd.f32 %v360, %v372
      %v381 = vadd.f32 %v361, %v373
      %v382 = vlaneseq
      %v383 = vshrl.u32 %v382, 7
      %v384 = vsub.s32 6, %v383
      %v385 = vrot.slane %v336, %v384
      %v386 = vmul.f32 %v311, %v385
      %v387 = vmul.f32 %v312, %v385
      %v388 = vmul.f32 %v314, %v385
      %v389 = vmul.f32 %v315, %v385
      %v390 = vmul.f32 %v317, %v385
      %v391 = vmul.f32 %v318, %v385
      %v392 = vmul.f32 %v320, %v385
      %v393 = vmul.f32 %v321, %v385
      %v394 = vadd.f32 %v374, %v386
      %v395 = vadd.f32 %v375, %v387
      %v396 = vadd.f32 %v376, %v388
      %v397 = vadd.f32 %v377, %v389
      %v398 = vadd.f32 %v378, %v390
      %v399 = vadd.f32 %v379, %v391
      %v400 = vadd.f32 %v380, %v392
      %v401 = vadd.f32 %v381, %v393
      %v402 = vlaneseq
      %v403 = vshrl.u32 %v402, 7
      %v404 = vsub.s32 5, %v403
      %v405 = vrot.slane %v337, %v404
      %v406 = vmul.f32 %v314, %v405
      %v407 = vmul.f32 %v315, %v405
      %v408 = vmul.f32 %v317, %v405
      %v409 = vmul.f32 %v318, %v405
      %v410 = vmul.f32 %v320, %v405
      %v411 = vmul.f32 %v321, %v405
      %v412 = vmul.f32 %v323, %v405
      %v413 = vmul.f32 %v324, %v405
      %v414 = vadd.f32 %v394, %v406
      %v415 = vadd.f32 %v395, %v407
      %v416 = vadd.f32 %v396, %v408
      %v417 = vadd.f32 %v397, %v409
      %v418 = vadd.f32 %v398, %v410
      %v419 = vadd.f32 %v399, %v411
      %v420 = vadd.f32 %v400, %v412
      %v421 = vadd.f32 %v401, %v413
      %v422 = vlaneseq
      %v423 = vshrl.u32 %v422, 7
      %v424 = vsub.s32 4, %v423
      %v425 = vrot.slane %v338, %v424
      %v426 = vmul.f32 %v317, %v425
      %v427 = vmul.f32 %v318, %v425
      %v428 = vmul.f32 %v320, %v425
      %v429 = vmul.f32 %v321, %v425
      %v430 = vmul.f32 %v323, %v425
      %v431 = vmul.f32 %v324, %v425
      %v432 = vmul.f32 %v326, %v425
      %v433 = vmul.f32 %v327, %v425
      %v434 = vadd.f32 %v414, %v426
      %v435 = vadd.f32 %v415, %v427
      %v436 = vadd.f32 %v416, %v428
      %v437 = vadd.f32 %v417, %v429
      %v438 = vadd.f32 %v418, %v430
      %v439 = vadd.f32 %v419, %v431
      %v440 = vadd.f32 %v420, %v432
      %v441 = vadd.f32 %v421, %v433
      %v442 = vlaneseq
      %v443 = vshrl.u32 %v442, 7
      %v444 = vsub.s32 3, %v443
      %v445 = vrot.slane %v339, %v444
      %v446 = vmul.f32 %v320, %v445
      %v447 = vmul.f32 %v321, %v445
      %v448 = vmul.f32 %v323, %v445
      %v449 = vmul.f32 %v324, %v445
      %v450 = vmul.f32 %v326, %v445
      %v451 = vmul.f32 %v327, %v445
      %v452 = vmul.f32 %v329, %v445
      %v453 = vmul.f32 %v330, %v445
      %v454 = vadd.f32 %v434, %v446
      %v455 = vadd.f32 %v435, %v447
      %v456 = vadd.f32 %v436, %v448
      %v457 = vadd.f32 %v437, %v449
      %v458 = vadd.f32 %v438, %v450
      %v459 = vadd.f32 %v439, %v451
      %v460 = vadd.f32 %v440, %v452
      %v461 = vadd.f32 %v441, %v453
      %v462 = vlaneseq
      %v463 = vshrl.u32 %v462, 7
      %v464 = vsub.s32 2, %v463
      %v465 = vrot.slane %v340, %v464
      %v466 = vmul.f32 %v323, %v465
      %v467 = vmul.f32 %v324, %v465
      %v468 = vmul.f32 %v326, %v465
      %v469 = vmul.f32 %v327, %v465
      %v470 = vmul.f32 %v329, %v465
      %v471 = vmul.f32 %v330, %v465
      %v472 = vmul.f32 %v332, %v465
      %v473 = vmul.f32 %v333, %v465
      %v474 = vadd.f32 %v454, %v466
      %v475 = vadd.f32 %v455, %v467
      %v476 = vadd.f32 %v456, %v468
      %v477 = vadd.f32 %v457, %v469
      %v478 = vadd.f32 %v458, %v470
      %v479 = vadd.f32 %v459, %v471
      %v480 = vadd.f32 %v460, %v472
      %v481 = vadd.f32 %v461, %v473
      %v482 = vrot.slane %v305, 1
      %v483 = vrot.slane %v306, 1
      %v484 = vrot.slane %v307, 1
      %v485 = vrot.slane %v308, 1
      %v486 = vrot.slane %v309, 1
      %v487 = vrot.slane %v310, 1
      %v488 = vrot.slane %v311, 1
      %v489 = vrot.slane %v312, 1
      %v490 = vrot.slane %v313, 1
      %v491 = vrot.slane %v314, 1
      %v492 = vrot.slane %v315, 1
      %v493 = vrot.slane %v316, 1
      %v494 = vrot.slane %v317, 1
      %v495 = vrot.slane %v318, 1
      %v496 = vrot.slane %v319, 1
      %v497 = vrot.slane %v320, 1
      %v498 = vrot.slane %v321, 1
      %v499 = vrot.slane %v322, 1
      %v500 = vrot.slane %v323, 1
      %v501 = vrot.slane %v324, 1
      %v502 = vrot.slane %v325, 1
      %v503 = vrot.slane %v326, 1
      %v504 = vrot.slane %v327, 1
      %v505 = vrot.slane %v328, 1
      %v506 = vrot.slane %v329, 1
      %v507 = vrot.slane %v330, 1
      %v508 = vrot.slane %v331, 1
      %v509 = vrot.slane %v332, 1
      %v510 = vrot.slane %v333, 1
      %v511 = vrot.slane %v334, 1
      %v512 = vlaneseq
      %v513 = vshrl.u32 %v512, 7
      %vm514 = vcmp.lt.s32.totalorder %v513, 7
      %v515 = vsel %vm514, %v510, %v511
      %v516 = vsel %vm514, %v509, %v510
      %v517 = vsel %vm514, %v507, %v508
      %v518 = vsel %vm514, %v506, %v507
      %v519 = vsel %vm514, %v504, %v505
      %v520 = vsel %vm514, %v503, %v504
      %v521 = vsel %vm514, %v501, %v502
      %v522 = vsel %vm514, %v500, %v501
      %v523 = vsel %vm514, %v498, %v499
      %v524 = vsel %vm514, %v497, %v498
      %v525 = vsel %vm514, %v495, %v496
      %v526 = vsel %vm514, %v494, %v495
      %v527 = vsel %vm514, %v492, %v493
      %v528 = vsel %vm514, %v491, %v492
      %v529 = vsel %vm514, %v489, %v490
      %v530 = vsel %vm514, %v488, %v489
      %v531 = vsel %vm514, %v486, %v487
      %v532 = vsel %vm514, %v485, %v486
      %v533 = vsel %vm514, %v483, %v484
      %v534 = vsel %vm514, %v482, %v483
      %v535 = vlaneseq
      %v536 = vshrl.u32 %v535, 7
      %v537 = vsub.s32 1, %v536
      %v538 = vrot.slane %v335, %v537
      %v539 = vmul.f32 %v534, %v538
      %v540 = vmul.f32 %v533, %v538
      %v541 = vmul.f32 %v532, %v538
      %v542 = vmul.f32 %v531, %v538
      %v543 = vmul.f32 %v530, %v538
      %v544 = vmul.f32 %v529, %v538
      %v545 = vmul.f32 %v528, %v538
      %v546 = vmul.f32 %v527, %v538
      %v547 = vadd.f32 %v474, %v539
      %v548 = vadd.f32 %v475, %v540
      %v549 = vadd.f32 %v476, %v541
      %v550 = vadd.f32 %v477, %v542
      %v551 = vadd.f32 %v478, %v543
      %v552 = vadd.f32 %v479, %v544
      %v553 = vadd.f32 %v480, %v545
      %v554 = vadd.f32 %v481, %v546
      %v555 = vlaneseq
      %v556 = vshrl.u32 %v555, 7
      %v557 = vsub.s32 0, %v556
      %v558 = vrot.slane %v336, %v557
      %v559 = vmul.f32 %v532, %v558
      %v560 = vmul.f32 %v531, %v558
      %v561 = vmul.f32 %v530, %v558
      %v562 = vmul.f32 %v529, %v558
      %v563 = vmul.f32 %v528, %v558
      %v564 = vmul.f32 %v527, %v558
      %v565 = vmul.f32 %v526, %v558
      %v566 = vmul.f32 %v525, %v558
      %v567 = vadd.f32 %v547, %v559
      %v568 = vadd.f32 %v548, %v560
      %v569 = vadd.f32 %v549, %v561
      %v570 = vadd.f32 %v550, %v562
      %v571 = vadd.f32 %v551, %v563
      %v572 = vadd.f32 %v552, %v564
      %v573 = vadd.f32 %v553, %v565
      %v574 = vadd.f32 %v554, %v566
      %v575 = vlaneseq
      %v576 = vshrl.u32 %v575, 7
      %v577 = vsub.s32 7, %v576
      %v578 = vrot.slane %v336, %v577
      %v579 = vmul.f32 %v530, %v578
      %v580 = vmul.f32 %v529, %v578
      %v581 = vmul.f32 %v528, %v578
      %v582 = vmul.f32 %v527, %v578
      %v583 = vmul.f32 %v526, %v578
      %v584 = vmul.f32 %v525, %v578
      %v585 = vmul.f32 %v524, %v578
      %v586 = vmul.f32 %v523, %v578
      %v587 = vadd.f32 %v567, %v579
      %v588 = vadd.f32 %v568, %v580
      %v589 = vadd.f32 %v569, %v581
      %v590 = vadd.f32 %v570, %v582
      %v591 = vadd.f32 %v571, %v583
      %v592 = vadd.f32 %v572, %v584
      %v593 = vadd.f32 %v573, %v585
      %v594 = vadd.f32 %v574, %v586
      %v595 = vlaneseq
      %v596 = vshrl.u32 %v595, 7
      %v597 = vsub.s32 6, %v596
      %v598 = vrot.slane %v337, %v597
      %v599 = vmul.f32 %v528, %v598
      %v600 = vmul.f32 %v527, %v598
      %v601 = vmul.f32 %v526, %v598
      %v602 = vmul.f32 %v525, %v598
      %v603 = vmul.f32 %v524, %v598
      %v604 = vmul.f32 %v523, %v598
      %v605 = vmul.f32 %v522, %v598
      %v606 = vmul.f32 %v521, %v598
      %v607 = vadd.f32 %v587, %v599
      %v608 = vadd.f32 %v588, %v600
      %v609 = vadd.f32 %v589, %v601
      %v610 = vadd.f32 %v590, %v602
      %v611 = vadd.f32 %v591, %v603
      %v612 = vadd.f32 %v592, %v604
      %v613 = vadd.f32 %v593, %v605
      %v614 = vadd.f32 %v594, %v606
      %v615 = vlaneseq
      %v616 = vshrl.u32 %v615, 7
      %v617 = vsub.s32 5, %v616
      %v618 = vrot.slane %v338, %v617
      %v619 = vmul.f32 %v526, %v618
      %v620 = vmul.f32 %v525, %v618
      %v621 = vmul.f32 %v524, %v618
      %v622 = vmul.f32 %v523, %v618
      %v623 = vmul.f32 %v522, %v618
      %v624 = vmul.f32 %v521, %v618
      %v625 = vmul.f32 %v520, %v618
      %v626 = vmul.f32 %v519, %v618
      %v627 = vadd.f32 %v607, %v619
      %v628 = vadd.f32 %v608, %v620
      %v629 = vadd.f32 %v609, %v621
      %v630 = vadd.f32 %v610, %v622
      %v631 = vadd.f32 %v611, %v623
      %v632 = vadd.f32 %v612, %v624
      %v633 = vadd.f32 %v613, %v625
      %v634 = vadd.f32 %v614, %v626
      %v635 = vlaneseq
      %v636 = vshrl.u32 %v635, 7
      %v637 = vsub.s32 4, %v636
      %v638 = vrot.slane %v339, %v637
      %v639 = vmul.f32 %v524, %v638
      %v640 = vmul.f32 %v523, %v638
      %v641 = vmul.f32 %v522, %v638
      %v642 = vmul.f32 %v521, %v638
      %v643 = vmul.f32 %v520, %v638
      %v644 = vmul.f32 %v519, %v638
      %v645 = vmul.f32 %v518, %v638
      %v646 = vmul.f32 %v517, %v638
      %v647 = vadd.f32 %v627, %v639
      %v648 = vadd.f32 %v628, %v640
      %v649 = vadd.f32 %v629, %v641
      %v650 = vadd.f32 %v630, %v642
      %v651 = vadd.f32 %v631, %v643
      %v652 = vadd.f32 %v632, %v644
      %v653 = vadd.f32 %v633, %v645
      %v654 = vadd.f32 %v634, %v646
      %v655 = vlaneseq
      %v656 = vshrl.u32 %v655, 7
      %v657 = vsub.s32 3, %v656
      %v658 = vrot.slane %v340, %v657
      %v659 = vmul.f32 %v522, %v658
      %v660 = vmul.f32 %v521, %v658
      %v661 = vmul.f32 %v520, %v658
      %v662 = vmul.f32 %v519, %v658
      %v663 = vmul.f32 %v518, %v658
      %v664 = vmul.f32 %v517, %v658
      %v665 = vmul.f32 %v516, %v658
      %v666 = vmul.f32 %v515, %v658
      %v667 = vadd.f32 %v647, %v659
      %v668 = vadd.f32 %v648, %v660
      %v669 = vadd.f32 %v649, %v661
      %v670 = vadd.f32 %v650, %v662
      %v671 = vadd.f32 %v651, %v663
      %v672 = vadd.f32 %v652, %v664
      %v673 = vadd.f32 %v653, %v665
      %v674 = vadd.f32 %v654, %v666
      %v675 = vrot.slane %v305, 2
      %v676 = vrot.slane %v306, 2
      %v677 = vrot.slane %v307, 2
      %v678 = vrot.slane %v308, 2
      %v679 = vrot.slane %v309, 2
      %v680 = vrot.slane %v310, 2
      %v681 = vrot.slane %v311, 2
      %v682 = vrot.slane %v312, 2
      %v683 = vrot.slane %v313, 2
      %v684 = vrot.slane %v314, 2
      %v685 = vrot.slane %v315, 2
      %v686 = vrot.slane %v316, 2
      %v687 = vrot.slane %v317, 2
      %v688 = vrot.slane %v318, 2
      %v689 = vrot.slane %v319, 2
      %v690 = vrot.slane %v320, 2
      %v691 = vrot.slane %v321, 2
      %v692 = vrot.slane %v322, 2
      %v693 = vrot.slane %v323, 2
      %v694 = vrot.slane %v324, 2
      %v695 = vrot.slane %v325, 2
      %v696 = vrot.slane %v326, 2
      %v697 = vrot.slane %v327, 2
      %v698 = vrot.slane %v328, 2
      %v699 = vrot.slane %v329, 2
      %v700 = vrot.slane %v330, 2
      %v701 = vrot.slane %v331, 2
      %v702 = vrot.slane %v332, 2
      %v703 = vrot.slane %v333, 2
      %v704 = vrot.slane %v334, 2
      %vm705 = vcmp.lt.s32.totalorder %v513, 6
      %v706 = vsel %vm705, %v703, %v704
      %v707 = vsel %vm705, %v702, %v703
      %v708 = vsel %vm705, %v700, %v701
      %v709 = vsel %vm705, %v699, %v700
      %v710 = vsel %vm705, %v697, %v698
      %v711 = vsel %vm705, %v696, %v697
      %v712 = vsel %vm705, %v694, %v695
      %v713 = vsel %vm705, %v693, %v694
      %v714 = vsel %vm705, %v691, %v692
      %v715 = vsel %vm705, %v690, %v691
      %v716 = vsel %vm705, %v688, %v689
      %v717 = vsel %vm705, %v687, %v688
      %v718 = vsel %vm705, %v685, %v686
      %v719 = vsel %vm705, %v684, %v685
      %v720 = vsel %vm705, %v682, %v683
      %v721 = vsel %vm705, %v681, %v682
      %v722 = vsel %vm705, %v679, %v680
      %v723 = vsel %vm705, %v678, %v679
      %v724 = vsel %vm705, %v676, %v677
      %v725 = vsel %vm705, %v675, %v676
      %v726 = vlaneseq
      %v727 = vshrl.u32 %v726, 7
      %v728 = vsub.s32 2, %v727
      %v729 = vrot.slane %v335, %v728
      %v730 = vmul.f32 %v725, %v729
      %v731 = vmul.f32 %v724, %v729
      %v732 = vmul.f32 %v723, %v729
      %v733 = vmul.f32 %v722, %v729
      %v734 = vmul.f32 %v721, %v729
      %v735 = vmul.f32 %v720, %v729
      %v736 = vmul.f32 %v719, %v729
      %v737 = vmul.f32 %v718, %v729
      %v738 = vadd.f32 %v667, %v730
      %v739 = vadd.f32 %v668, %v731
      %v740 = vadd.f32 %v669, %v732
      %v741 = vadd.f32 %v670, %v733
      %v742 = vadd.f32 %v671, %v734
      %v743 = vadd.f32 %v672, %v735
      %v744 = vadd.f32 %v673, %v736
      %v745 = vadd.f32 %v674, %v737
      %v746 = vlaneseq
      %v747 = vshrl.u32 %v746, 7
      %v748 = vsub.s32 1, %v747
      %v749 = vrot.slane %v336, %v748
      %v750 = vmul.f32 %v723, %v749
      %v751 = vmul.f32 %v722, %v749
      %v752 = vmul.f32 %v721, %v749
      %v753 = vmul.f32 %v720, %v749
      %v754 = vmul.f32 %v719, %v749
      %v755 = vmul.f32 %v718, %v749
      %v756 = vmul.f32 %v717, %v749
      %v757 = vmul.f32 %v716, %v749
      %v758 = vadd.f32 %v738, %v750
      %v759 = vadd.f32 %v739, %v751
      %v760 = vadd.f32 %v740, %v752
      %v761 = vadd.f32 %v741, %v753
      %v762 = vadd.f32 %v742, %v754
      %v763 = vadd.f32 %v743, %v755
      %v764 = vadd.f32 %v744, %v756
      %v765 = vadd.f32 %v745, %v757
      %v766 = vlaneseq
      %v767 = vshrl.u32 %v766, 7
      %v768 = vsub.s32 0, %v767
      %v769 = vrot.slane %v337, %v768
      %v770 = vmul.f32 %v721, %v769
      %v771 = vmul.f32 %v720, %v769
      %v772 = vmul.f32 %v719, %v769
      %v773 = vmul.f32 %v718, %v769
      %v774 = vmul.f32 %v717, %v769
      %v775 = vmul.f32 %v716, %v769
      %v776 = vmul.f32 %v715, %v769
      %v777 = vmul.f32 %v714, %v769
      %v778 = vadd.f32 %v758, %v770
      %v779 = vadd.f32 %v759, %v771
      %v780 = vadd.f32 %v760, %v772
      %v781 = vadd.f32 %v761, %v773
      %v782 = vadd.f32 %v762, %v774
      %v783 = vadd.f32 %v763, %v775
      %v784 = vadd.f32 %v764, %v776
      %v785 = vadd.f32 %v765, %v777
      %v786 = vlaneseq
      %v787 = vshrl.u32 %v786, 7
      %v788 = vsub.s32 7, %v787
      %v789 = vrot.slane %v337, %v788
      %v790 = vmul.f32 %v719, %v789
      %v791 = vmul.f32 %v718, %v789
      %v792 = vmul.f32 %v717, %v789
      %v793 = vmul.f32 %v716, %v789
      %v794 = vmul.f32 %v715, %v789
      %v795 = vmul.f32 %v714, %v789
      %v796 = vmul.f32 %v713, %v789
      %v797 = vmul.f32 %v712, %v789
      %v798 = vadd.f32 %v778, %v790
      %v799 = vadd.f32 %v779, %v791
      %v800 = vadd.f32 %v780, %v792
      %v801 = vadd.f32 %v781, %v793
      %v802 = vadd.f32 %v782, %v794
      %v803 = vadd.f32 %v783, %v795
      %v804 = vadd.f32 %v784, %v796
      %v805 = vadd.f32 %v785, %v797
      %v806 = vlaneseq
      %v807 = vshrl.u32 %v806, 7
      %v808 = vsub.s32 6, %v807
      %v809 = vrot.slane %v338, %v808
      %v810 = vmul.f32 %v717, %v809
      %v811 = vmul.f32 %v716, %v809
      %v812 = vmul.f32 %v715, %v809
      %v813 = vmul.f32 %v714, %v809
      %v814 = vmul.f32 %v713, %v809
      %v815 = vmul.f32 %v712, %v809
      %v816 = vmul.f32 %v711, %v809
      %v817 = vmul.f32 %v710, %v809
      %v818 = vadd.f32 %v798, %v810
      %v819 = vadd.f32 %v799, %v811
      %v820 = vadd.f32 %v800, %v812
      %v821 = vadd.f32 %v801, %v813
      %v822 = vadd.f32 %v802, %v814
      %v823 = vadd.f32 %v803, %v815
      %v824 = vadd.f32 %v804, %v816
      %v825 = vadd.f32 %v805, %v817
      %v826 = vlaneseq
      %v827 = vshrl.u32 %v826, 7
      %v828 = vsub.s32 5, %v827
      %v829 = vrot.slane %v339, %v828
      %v830 = vmul.f32 %v715, %v829
      %v831 = vmul.f32 %v714, %v829
      %v832 = vmul.f32 %v713, %v829
      %v833 = vmul.f32 %v712, %v829
      %v834 = vmul.f32 %v711, %v829
      %v835 = vmul.f32 %v710, %v829
      %v836 = vmul.f32 %v709, %v829
      %v837 = vmul.f32 %v708, %v829
      %v838 = vadd.f32 %v818, %v830
      %v839 = vadd.f32 %v819, %v831
      %v840 = vadd.f32 %v820, %v832
      %v841 = vadd.f32 %v821, %v833
      %v842 = vadd.f32 %v822, %v834
      %v843 = vadd.f32 %v823, %v835
      %v844 = vadd.f32 %v824, %v836
      %v845 = vadd.f32 %v825, %v837
      %v846 = vlaneseq
      %v847 = vshrl.u32 %v846, 7
      %v848 = vsub.s32 4, %v847
      %v849 = vrot.slane %v340, %v848
      %v850 = vmul.f32 %v713, %v849
      %v851 = vmul.f32 %v712, %v849
      %v852 = vmul.f32 %v711, %v849
      %v853 = vmul.f32 %v710, %v849
      %v854 = vmul.f32 %v709, %v849
      %v855 = vmul.f32 %v708, %v849
      %v856 = vmul.f32 %v707, %v849
      %v857 = vmul.f32 %v706, %v849
      %v858 = vadd.f32 %v838, %v850
      %v859 = vadd.f32 %v839, %v851
      %v860 = vadd.f32 %v840, %v852
      %v861 = vadd.f32 %v841, %v853
      %v862 = vadd.f32 %v842, %v854
      %v863 = vadd.f32 %v843, %v855
      %v864 = vadd.f32 %v844, %v856
      %v865 = vadd.f32 %v845, %v857
      %v866 = vrot.slane %v305, 3
      %v867 = vrot.slane %v306, 3
      %v868 = vrot.slane %v307, 3
      %v869 = vrot.slane %v308, 3
      %v870 = vrot.slane %v309, 3
      %v871 = vrot.slane %v310, 3
      %v872 = vrot.slane %v311, 3
      %v873 = vrot.slane %v312, 3
      %v874 = vrot.slane %v313, 3
      %v875 = vrot.slane %v314, 3
      %v876 = vrot.slane %v315, 3
      %v877 = vrot.slane %v316, 3
      %v878 = vrot.slane %v317, 3
      %v879 = vrot.slane %v318, 3
      %v880 = vrot.slane %v319, 3
      %v881 = vrot.slane %v320, 3
      %v882 = vrot.slane %v321, 3
      %v883 = vrot.slane %v322, 3
      %v884 = vrot.slane %v323, 3
      %v885 = vrot.slane %v324, 3
      %v886 = vrot.slane %v325, 3
      %v887 = vrot.slane %v326, 3
      %v888 = vrot.slane %v327, 3
      %v889 = vrot.slane %v328, 3
      %v890 = vrot.slane %v329, 3
      %v891 = vrot.slane %v330, 3
      %v892 = vrot.slane %v331, 3
      %v893 = vrot.slane %v332, 3
      %v894 = vrot.slane %v333, 3
      %v895 = vrot.slane %v334, 3
      %vm896 = vcmp.lt.s32.totalorder %v513, 5
      %v897 = vsel %vm896, %v894, %v895
      %v898 = vsel %vm896, %v893, %v894
      %v899 = vsel %vm896, %v891, %v892
      %v900 = vsel %vm896, %v890, %v891
      %v901 = vsel %vm896, %v888, %v889
      %v902 = vsel %vm896, %v887, %v888
      %v903 = vsel %vm896, %v885, %v886
      %v904 = vsel %vm896, %v884, %v885
      %v905 = vsel %vm896, %v882, %v883
      %v906 = vsel %vm896, %v881, %v882
      %v907 = vsel %vm896, %v879, %v880
      %v908 = vsel %vm896, %v878, %v879
      %v909 = vsel %vm896, %v876, %v877
      %v910 = vsel %vm896, %v875, %v876
      %v911 = vsel %vm896, %v873, %v874
      %v912 = vsel %vm896, %v872, %v873
      %v913 = vsel %vm896, %v870, %v871
      %v914 = vsel %vm896, %v869, %v870
      %v915 = vsel %vm896, %v867, %v868
      %v916 = vsel %vm896, %v866, %v867
      %v917 = vlaneseq
      %v918 = vshrl.u32 %v917, 7
      %v919 = vsub.s32 3, %v918
      %v920 = vrot.slane %v335, %v919
      %v921 = vmul.f32 %v916, %v920
      %v922 = vmul.f32 %v915, %v920
      %v923 = vmul.f32 %v914, %v920
      %v924 = vmul.f32 %v913, %v920
      %v925 = vmul.f32 %v912, %v920
      %v926 = vmul.f32 %v911, %v920
      %v927 = vmul.f32 %v910, %v920
      %v928 = vmul.f32 %v909, %v920
      %v929 = vadd.f32 %v858, %v921
      %v930 = vadd.f32 %v859, %v922
      %v931 = vadd.f32 %v860, %v923
      %v932 = vadd.f32 %v861, %v924
      %v933 = vadd.f32 %v862, %v925
      %v934 = vadd.f32 %v863, %v926
      %v935 = vadd.f32 %v864, %v927
      %v936 = vadd.f32 %v865, %v928
      %v937 = vlaneseq
      %v938 = vshrl.u32 %v937, 7
      %v939 = vsub.s32 2, %v938
      %v940 = vrot.slane %v336, %v939
      %v941 = vmul.f32 %v914, %v940
      %v942 = vmul.f32 %v913, %v940
      %v943 = vmul.f32 %v912, %v940
      %v944 = vmul.f32 %v911, %v940
      %v945 = vmul.f32 %v910, %v940
      %v946 = vmul.f32 %v909, %v940
      %v947 = vmul.f32 %v908, %v940
      %v948 = vmul.f32 %v907, %v940
      %v949 = vadd.f32 %v929, %v941
      %v950 = vadd.f32 %v930, %v942
      %v951 = vadd.f32 %v931, %v943
      %v952 = vadd.f32 %v932, %v944
      %v953 = vadd.f32 %v933, %v945
      %v954 = vadd.f32 %v934, %v946
      %v955 = vadd.f32 %v935, %v947
      %v956 = vadd.f32 %v936, %v948
      %v957 = vlaneseq
      %v958 = vshrl.u32 %v957, 7
      %v959 = vsub.s32 1, %v958
      %v960 = vrot.slane %v337, %v959
      %v961 = vmul.f32 %v912, %v960
      %v962 = vmul.f32 %v911, %v960
      %v963 = vmul.f32 %v910, %v960
      %v964 = vmul.f32 %v909, %v960
      %v965 = vmul.f32 %v908, %v960
      %v966 = vmul.f32 %v907, %v960
      %v967 = vmul.f32 %v906, %v960
      %v968 = vmul.f32 %v905, %v960
      %v969 = vadd.f32 %v949, %v961
      %v970 = vadd.f32 %v950, %v962
      %v971 = vadd.f32 %v951, %v963
      %v972 = vadd.f32 %v952, %v964
      %v973 = vadd.f32 %v953, %v965
      %v974 = vadd.f32 %v954, %v966
      %v975 = vadd.f32 %v955, %v967
      %v976 = vadd.f32 %v956, %v968
      %v977 = vlaneseq
      %v978 = vshrl.u32 %v977, 7
      %v979 = vsub.s32 0, %v978
      %v980 = vrot.slane %v338, %v979
      %v981 = vmul.f32 %v910, %v980
      %v982 = vmul.f32 %v909, %v980
      %v983 = vmul.f32 %v908, %v980
      %v984 = vmul.f32 %v907, %v980
      %v985 = vmul.f32 %v906, %v980
      %v986 = vmul.f32 %v905, %v980
      %v987 = vmul.f32 %v904, %v980
      %v988 = vmul.f32 %v903, %v980
      %v989 = vadd.f32 %v969, %v981
      %v990 = vadd.f32 %v970, %v982
      %v991 = vadd.f32 %v971, %v983
      %v992 = vadd.f32 %v972, %v984
      %v993 = vadd.f32 %v973, %v985
      %v994 = vadd.f32 %v974, %v986
      %v995 = vadd.f32 %v975, %v987
      %v996 = vadd.f32 %v976, %v988
      %v997 = vlaneseq
      %v998 = vshrl.u32 %v997, 7
      %v999 = vsub.s32 7, %v998
      %v1000 = vrot.slane %v338, %v999
      %v1001 = vmul.f32 %v908, %v1000
      %v1002 = vmul.f32 %v907, %v1000
      %v1003 = vmul.f32 %v906, %v1000
      %v1004 = vmul.f32 %v905, %v1000
      %v1005 = vmul.f32 %v904, %v1000
      %v1006 = vmul.f32 %v903, %v1000
      %v1007 = vmul.f32 %v902, %v1000
      %v1008 = vmul.f32 %v901, %v1000
      %v1009 = vadd.f32 %v989, %v1001
      %v1010 = vadd.f32 %v990, %v1002
      %v1011 = vadd.f32 %v991, %v1003
      %v1012 = vadd.f32 %v992, %v1004
      %v1013 = vadd.f32 %v993, %v1005
      %v1014 = vadd.f32 %v994, %v1006
      %v1015 = vadd.f32 %v995, %v1007
      %v1016 = vadd.f32 %v996, %v1008
      %v1017 = vlaneseq
      %v1018 = vshrl.u32 %v1017, 7
      %v1019 = vsub.s32 6, %v1018
      %v1020 = vrot.slane %v339, %v1019
      %v1021 = vmul.f32 %v906, %v1020
      %v1022 = vmul.f32 %v905, %v1020
      %v1023 = vmul.f32 %v904, %v1020
      %v1024 = vmul.f32 %v903, %v1020
      %v1025 = vmul.f32 %v902, %v1020
      %v1026 = vmul.f32 %v901, %v1020
      %v1027 = vmul.f32 %v900, %v1020
      %v1028 = vmul.f32 %v899, %v1020
      %v1029 = vadd.f32 %v1009, %v1021
      %v1030 = vadd.f32 %v1010, %v1022
      %v1031 = vadd.f32 %v1011, %v1023
      %v1032 = vadd.f32 %v1012, %v1024
      %v1033 = vadd.f32 %v1013, %v1025
      %v1034 = vadd.f32 %v1014, %v1026
      %v1035 = vadd.f32 %v1015, %v1027
      %v1036 = vadd.f32 %v1016, %v1028
      %v1037 = vlaneseq
      %v1038 = vshrl.u32 %v1037, 7
      %v1039 = vsub.s32 5, %v1038
      %v1040 = vrot.slane %v340, %v1039
      %v1041 = vmul.f32 %v904, %v1040
      %v1042 = vmul.f32 %v903, %v1040
      %v1043 = vmul.f32 %v902, %v1040
      %v1044 = vmul.f32 %v901, %v1040
      %v1045 = vmul.f32 %v900, %v1040
      %v1046 = vmul.f32 %v899, %v1040
      %v1047 = vmul.f32 %v898, %v1040
      %v1048 = vmul.f32 %v897, %v1040
      %v1049 = vadd.f32 %v1029, %v1041
      %v1050 = vadd.f32 %v1030, %v1042
      %v1051 = vadd.f32 %v1031, %v1043
      %v1052 = vadd.f32 %v1032, %v1044
      %v1053 = vadd.f32 %v1033, %v1045
      %v1054 = vadd.f32 %v1034, %v1046
      %v1055 = vadd.f32 %v1035, %v1047
      %v1056 = vadd.f32 %v1036, %v1048
      %v1057 = vrot.slane %v305, 4
      %v1058 = vrot.slane %v306, 4
      %v1059 = vrot.slane %v307, 4
      %v1060 = vrot.slane %v308, 4
      %v1061 = vrot.slane %v309, 4
      %v1062 = vrot.slane %v310, 4
      %v1063 = vrot.slane %v311, 4
      %v1064 = vrot.slane %v312, 4
      %v1065 = vrot.slane %v313, 4
      %v1066 = vrot.slane %v314, 4
      %v1067 = vrot.slane %v315, 4
      %v1068 = vrot.slane %v316, 4
      %v1069 = vrot.slane %v317, 4
      %v1070 = vrot.slane %v318, 4
      %v1071 = vrot.slane %v319, 4
      %v1072 = vrot.slane %v320, 4
      %v1073 = vrot.slane %v321, 4
      %v1074 = vrot.slane %v322, 4
      %v1075 = vrot.slane %v323, 4
      %v1076 = vrot.slane %v324, 4
      %v1077 = vrot.slane %v325, 4
      %v1078 = vrot.slane %v326, 4
      %v1079 = vrot.slane %v327, 4
      %v1080 = vrot.slane %v328, 4
      %v1081 = vrot.slane %v329, 4
      %v1082 = vrot.slane %v330, 4
      %v1083 = vrot.slane %v331, 4
      %v1084 = vrot.slane %v332, 4
      %v1085 = vrot.slane %v333, 4
      %v1086 = vrot.slane %v334, 4
      %vm1087 = vcmp.lt.s32.totalorder %v513, 4
      %v1088 = vsel %vm1087, %v1085, %v1086
      %v1089 = vsel %vm1087, %v1084, %v1085
      %v1090 = vsel %vm1087, %v1082, %v1083
      %v1091 = vsel %vm1087, %v1081, %v1082
      %v1092 = vsel %vm1087, %v1079, %v1080
      %v1093 = vsel %vm1087, %v1078, %v1079
      %v1094 = vsel %vm1087, %v1076, %v1077
      %v1095 = vsel %vm1087, %v1075, %v1076
      %v1096 = vsel %vm1087, %v1073, %v1074
      %v1097 = vsel %vm1087, %v1072, %v1073
      %v1098 = vsel %vm1087, %v1070, %v1071
      %v1099 = vsel %vm1087, %v1069, %v1070
      %v1100 = vsel %vm1087, %v1067, %v1068
      %v1101 = vsel %vm1087, %v1066, %v1067
      %v1102 = vsel %vm1087, %v1064, %v1065
      %v1103 = vsel %vm1087, %v1063, %v1064
      %v1104 = vsel %vm1087, %v1061, %v1062
      %v1105 = vsel %vm1087, %v1060, %v1061
      %v1106 = vsel %vm1087, %v1058, %v1059
      %v1107 = vsel %vm1087, %v1057, %v1058
      %v1108 = vlaneseq
      %v1109 = vshrl.u32 %v1108, 7
      %v1110 = vsub.s32 4, %v1109
      %v1111 = vrot.slane %v335, %v1110
      %v1112 = vmul.f32 %v1107, %v1111
      %v1113 = vmul.f32 %v1106, %v1111
      %v1114 = vmul.f32 %v1105, %v1111
      %v1115 = vmul.f32 %v1104, %v1111
      %v1116 = vmul.f32 %v1103, %v1111
      %v1117 = vmul.f32 %v1102, %v1111
      %v1118 = vmul.f32 %v1101, %v1111
      %v1119 = vmul.f32 %v1100, %v1111
      %v1120 = vadd.f32 %v1049, %v1112
      %v1121 = vadd.f32 %v1050, %v1113
      %v1122 = vadd.f32 %v1051, %v1114
      %v1123 = vadd.f32 %v1052, %v1115
      %v1124 = vadd.f32 %v1053, %v1116
      %v1125 = vadd.f32 %v1054, %v1117
      %v1126 = vadd.f32 %v1055, %v1118
      %v1127 = vadd.f32 %v1056, %v1119
      %v1128 = vlaneseq
      %v1129 = vshrl.u32 %v1128, 7
      %v1130 = vsub.s32 3, %v1129
      %v1131 = vrot.slane %v336, %v1130
      %v1132 = vmul.f32 %v1105, %v1131
      %v1133 = vmul.f32 %v1104, %v1131
      %v1134 = vmul.f32 %v1103, %v1131
      %v1135 = vmul.f32 %v1102, %v1131
      %v1136 = vmul.f32 %v1101, %v1131
      %v1137 = vmul.f32 %v1100, %v1131
      %v1138 = vmul.f32 %v1099, %v1131
      %v1139 = vmul.f32 %v1098, %v1131
      %v1140 = vadd.f32 %v1120, %v1132
      %v1141 = vadd.f32 %v1121, %v1133
      %v1142 = vadd.f32 %v1122, %v1134
      %v1143 = vadd.f32 %v1123, %v1135
      %v1144 = vadd.f32 %v1124, %v1136
      %v1145 = vadd.f32 %v1125, %v1137
      %v1146 = vadd.f32 %v1126, %v1138
      %v1147 = vadd.f32 %v1127, %v1139
      %v1148 = vlaneseq
      %v1149 = vshrl.u32 %v1148, 7
      %v1150 = vsub.s32 2, %v1149
      %v1151 = vrot.slane %v337, %v1150
      %v1152 = vmul.f32 %v1103, %v1151
      %v1153 = vmul.f32 %v1102, %v1151
      %v1154 = vmul.f32 %v1101, %v1151
      %v1155 = vmul.f32 %v1100, %v1151
      %v1156 = vmul.f32 %v1099, %v1151
      %v1157 = vmul.f32 %v1098, %v1151
      %v1158 = vmul.f32 %v1097, %v1151
      %v1159 = vmul.f32 %v1096, %v1151
      %v1160 = vadd.f32 %v1140, %v1152
      %v1161 = vadd.f32 %v1141, %v1153
      %v1162 = vadd.f32 %v1142, %v1154
      %v1163 = vadd.f32 %v1143, %v1155
      %v1164 = vadd.f32 %v1144, %v1156
      %v1165 = vadd.f32 %v1145, %v1157
      %v1166 = vadd.f32 %v1146, %v1158
      %v1167 = vadd.f32 %v1147, %v1159
      %v1168 = vlaneseq
      %v1169 = vshrl.u32 %v1168, 7
      %v1170 = vsub.s32 1, %v1169
      %v1171 = vrot.slane %v338, %v1170
      %v1172 = vmul.f32 %v1101, %v1171
      %v1173 = vmul.f32 %v1100, %v1171
      %v1174 = vmul.f32 %v1099, %v1171
      %v1175 = vmul.f32 %v1098, %v1171
      %v1176 = vmul.f32 %v1097, %v1171
      %v1177 = vmul.f32 %v1096, %v1171
      %v1178 = vmul.f32 %v1095, %v1171
      %v1179 = vmul.f32 %v1094, %v1171
      %v1180 = vadd.f32 %v1160, %v1172
      %v1181 = vadd.f32 %v1161, %v1173
      %v1182 = vadd.f32 %v1162, %v1174
      %v1183 = vadd.f32 %v1163, %v1175
      %v1184 = vadd.f32 %v1164, %v1176
      %v1185 = vadd.f32 %v1165, %v1177
      %v1186 = vadd.f32 %v1166, %v1178
      %v1187 = vadd.f32 %v1167, %v1179
      %v1188 = vlaneseq
      %v1189 = vshrl.u32 %v1188, 7
      %v1190 = vsub.s32 0, %v1189
      %v1191 = vrot.slane %v339, %v1190
      %v1192 = vmul.f32 %v1099, %v1191
      %v1193 = vmul.f32 %v1098, %v1191
      %v1194 = vmul.f32 %v1097, %v1191
      %v1195 = vmul.f32 %v1096, %v1191
      %v1196 = vmul.f32 %v1095, %v1191
      %v1197 = vmul.f32 %v1094, %v1191
      %v1198 = vmul.f32 %v1093, %v1191
      %v1199 = vmul.f32 %v1092, %v1191
      %v1200 = vadd.f32 %v1180, %v1192
      %v1201 = vadd.f32 %v1181, %v1193
      %v1202 = vadd.f32 %v1182, %v1194
      %v1203 = vadd.f32 %v1183, %v1195
      %v1204 = vadd.f32 %v1184, %v1196
      %v1205 = vadd.f32 %v1185, %v1197
      %v1206 = vadd.f32 %v1186, %v1198
      %v1207 = vadd.f32 %v1187, %v1199
      %v1208 = vlaneseq
      %v1209 = vshrl.u32 %v1208, 7
      %v1210 = vsub.s32 7, %v1209
      %v1211 = vrot.slane %v339, %v1210
      %v1212 = vmul.f32 %v1097, %v1211
      %v1213 = vmul.f32 %v1096, %v1211
      %v1214 = vmul.f32 %v1095, %v1211
      %v1215 = vmul.f32 %v1094, %v1211
      %v1216 = vmul.f32 %v1093, %v1211
      %v1217 = vmul.f32 %v1092, %v1211
      %v1218 = vmul.f32 %v1091, %v1211
      %v1219 = vmul.f32 %v1090, %v1211
      %v1220 = vadd.f32 %v1200, %v1212
      %v1221 = vadd.f32 %v1201, %v1213
      %v1222 = vadd.f32 %v1202, %v1214
      %v1223 = vadd.f32 %v1203, %v1215
      %v1224 = vadd.f32 %v1204, %v1216
      %v1225 = vadd.f32 %v1205, %v1217
      %v1226 = vadd.f32 %v1206, %v1218
      %v1227 = vadd.f32 %v1207, %v1219
      %v1228 = vlaneseq
      %v1229 = vshrl.u32 %v1228, 7
      %v1230 = vsub.s32 6, %v1229
      %v1231 = vrot.slane %v340, %v1230
      %v1232 = vmul.f32 %v1095, %v1231
      %v1233 = vmul.f32 %v1094, %v1231
      %v1234 = vmul.f32 %v1093, %v1231
      %v1235 = vmul.f32 %v1092, %v1231
      %v1236 = vmul.f32 %v1091, %v1231
      %v1237 = vmul.f32 %v1090, %v1231
      %v1238 = vmul.f32 %v1089, %v1231
      %v1239 = vmul.f32 %v1088, %v1231
      %v1240 = vadd.f32 %v1220, %v1232
      %v1241 = vadd.f32 %v1221, %v1233
      %v1242 = vadd.f32 %v1222, %v1234
      %v1243 = vadd.f32 %v1223, %v1235
      %v1244 = vadd.f32 %v1224, %v1236
      %v1245 = vadd.f32 %v1225, %v1237
      %v1246 = vadd.f32 %v1226, %v1238
      %v1247 = vadd.f32 %v1227, %v1239
      %v1248 = vrot.slane %v305, 5
      %v1249 = vrot.slane %v306, 5
      %v1250 = vrot.slane %v307, 5
      %v1251 = vrot.slane %v308, 5
      %v1252 = vrot.slane %v309, 5
      %v1253 = vrot.slane %v310, 5
      %v1254 = vrot.slane %v311, 5
      %v1255 = vrot.slane %v312, 5
      %v1256 = vrot.slane %v313, 5
      %v1257 = vrot.slane %v314, 5
      %v1258 = vrot.slane %v315, 5
      %v1259 = vrot.slane %v316, 5
      %v1260 = vrot.slane %v317, 5
      %v1261 = vrot.slane %v318, 5
      %v1262 = vrot.slane %v319, 5
      %v1263 = vrot.slane %v320, 5
      %v1264 = vrot.slane %v321, 5
      %v1265 = vrot.slane %v322, 5
      %v1266 = vrot.slane %v323, 5
      %v1267 = vrot.slane %v324, 5
      %v1268 = vrot.slane %v325, 5
      %v1269 = vrot.slane %v326, 5
      %v1270 = vrot.slane %v327, 5
      %v1271 = vrot.slane %v328, 5
      %v1272 = vrot.slane %v329, 5
      %v1273 = vrot.slane %v330, 5
      %v1274 = vrot.slane %v331, 5
      %v1275 = vrot.slane %v332, 5
      %v1276 = vrot.slane %v333, 5
      %v1277 = vrot.slane %v334, 5
      %vm1278 = vcmp.lt.s32.totalorder %v513, 3
      %v1279 = vsel %vm1278, %v1276, %v1277
      %v1280 = vsel %vm1278, %v1275, %v1276
      %v1281 = vsel %vm1278, %v1273, %v1274
      %v1282 = vsel %vm1278, %v1272, %v1273
      %v1283 = vsel %vm1278, %v1270, %v1271
      %v1284 = vsel %vm1278, %v1269, %v1270
      %v1285 = vsel %vm1278, %v1267, %v1268
      %v1286 = vsel %vm1278, %v1266, %v1267
      %v1287 = vsel %vm1278, %v1264, %v1265
      %v1288 = vsel %vm1278, %v1263, %v1264
      %v1289 = vsel %vm1278, %v1261, %v1262
      %v1290 = vsel %vm1278, %v1260, %v1261
      %v1291 = vsel %vm1278, %v1258, %v1259
      %v1292 = vsel %vm1278, %v1257, %v1258
      %v1293 = vsel %vm1278, %v1255, %v1256
      %v1294 = vsel %vm1278, %v1254, %v1255
      %v1295 = vsel %vm1278, %v1252, %v1253
      %v1296 = vsel %vm1278, %v1251, %v1252
      %v1297 = vsel %vm1278, %v1249, %v1250
      %v1298 = vsel %vm1278, %v1248, %v1249
      %v1299 = vlaneseq
      %v1300 = vshrl.u32 %v1299, 7
      %v1301 = vsub.s32 5, %v1300
      %v1302 = vrot.slane %v335, %v1301
      %v1303 = vmul.f32 %v1298, %v1302
      %v1304 = vmul.f32 %v1297, %v1302
      %v1305 = vmul.f32 %v1296, %v1302
      %v1306 = vmul.f32 %v1295, %v1302
      %v1307 = vmul.f32 %v1294, %v1302
      %v1308 = vmul.f32 %v1293, %v1302
      %v1309 = vmul.f32 %v1292, %v1302
      %v1310 = vmul.f32 %v1291, %v1302
      %v1311 = vadd.f32 %v1240, %v1303
      %v1312 = vadd.f32 %v1241, %v1304
      %v1313 = vadd.f32 %v1242, %v1305
      %v1314 = vadd.f32 %v1243, %v1306
      %v1315 = vadd.f32 %v1244, %v1307
      %v1316 = vadd.f32 %v1245, %v1308
      %v1317 = vadd.f32 %v1246, %v1309
      %v1318 = vadd.f32 %v1247, %v1310
      %v1319 = vlaneseq
      %v1320 = vshrl.u32 %v1319, 7
      %v1321 = vsub.s32 4, %v1320
      %v1322 = vrot.slane %v336, %v1321
      %v1323 = vmul.f32 %v1296, %v1322
      %v1324 = vmul.f32 %v1295, %v1322
      %v1325 = vmul.f32 %v1294, %v1322
      %v1326 = vmul.f32 %v1293, %v1322
      %v1327 = vmul.f32 %v1292, %v1322
      %v1328 = vmul.f32 %v1291, %v1322
      %v1329 = vmul.f32 %v1290, %v1322
      %v1330 = vmul.f32 %v1289, %v1322
      %v1331 = vadd.f32 %v1311, %v1323
      %v1332 = vadd.f32 %v1312, %v1324
      %v1333 = vadd.f32 %v1313, %v1325
      %v1334 = vadd.f32 %v1314, %v1326
      %v1335 = vadd.f32 %v1315, %v1327
      %v1336 = vadd.f32 %v1316, %v1328
      %v1337 = vadd.f32 %v1317, %v1329
      %v1338 = vadd.f32 %v1318, %v1330
      %v1339 = vlaneseq
      %v1340 = vshrl.u32 %v1339, 7
      %v1341 = vsub.s32 3, %v1340
      %v1342 = vrot.slane %v337, %v1341
      %v1343 = vmul.f32 %v1294, %v1342
      %v1344 = vmul.f32 %v1293, %v1342
      %v1345 = vmul.f32 %v1292, %v1342
      %v1346 = vmul.f32 %v1291, %v1342
      %v1347 = vmul.f32 %v1290, %v1342
      %v1348 = vmul.f32 %v1289, %v1342
      %v1349 = vmul.f32 %v1288, %v1342
      %v1350 = vmul.f32 %v1287, %v1342
      %v1351 = vadd.f32 %v1331, %v1343
      %v1352 = vadd.f32 %v1332, %v1344
      %v1353 = vadd.f32 %v1333, %v1345
      %v1354 = vadd.f32 %v1334, %v1346
      %v1355 = vadd.f32 %v1335, %v1347
      %v1356 = vadd.f32 %v1336, %v1348
      %v1357 = vadd.f32 %v1337, %v1349
      %v1358 = vadd.f32 %v1338, %v1350
      %v1359 = vlaneseq
      %v1360 = vshrl.u32 %v1359, 7
      %v1361 = vsub.s32 2, %v1360
      %v1362 = vrot.slane %v338, %v1361
      %v1363 = vmul.f32 %v1292, %v1362
      %v1364 = vmul.f32 %v1291, %v1362
      %v1365 = vmul.f32 %v1290, %v1362
      %v1366 = vmul.f32 %v1289, %v1362
      %v1367 = vmul.f32 %v1288, %v1362
      %v1368 = vmul.f32 %v1287, %v1362
      %v1369 = vmul.f32 %v1286, %v1362
      %v1370 = vmul.f32 %v1285, %v1362
      %v1371 = vadd.f32 %v1351, %v1363
      %v1372 = vadd.f32 %v1352, %v1364
      %v1373 = vadd.f32 %v1353, %v1365
      %v1374 = vadd.f32 %v1354, %v1366
      %v1375 = vadd.f32 %v1355, %v1367
      %v1376 = vadd.f32 %v1356, %v1368
      %v1377 = vadd.f32 %v1357, %v1369
      %v1378 = vadd.f32 %v1358, %v1370
      %v1379 = vlaneseq
      %v1380 = vshrl.u32 %v1379, 7
      %v1381 = vsub.s32 1, %v1380
      %v1382 = vrot.slane %v339, %v1381
      %v1383 = vmul.f32 %v1290, %v1382
      %v1384 = vmul.f32 %v1289, %v1382
      %v1385 = vmul.f32 %v1288, %v1382
      %v1386 = vmul.f32 %v1287, %v1382
      %v1387 = vmul.f32 %v1286, %v1382
      %v1388 = vmul.f32 %v1285, %v1382
      %v1389 = vmul.f32 %v1284, %v1382
      %v1390 = vmul.f32 %v1283, %v1382
      %v1391 = vadd.f32 %v1371, %v1383
      %v1392 = vadd.f32 %v1372, %v1384
      %v1393 = vadd.f32 %v1373, %v1385
      %v1394 = vadd.f32 %v1374, %v1386
      %v1395 = vadd.f32 %v1375, %v1387
      %v1396 = vadd.f32 %v1376, %v1388
      %v1397 = vadd.f32 %v1377, %v1389
      %v1398 = vadd.f32 %v1378, %v1390
      %v1399 = vlaneseq
      %v1400 = vshrl.u32 %v1399, 7
      %v1401 = vsub.s32 0, %v1400
      %v1402 = vrot.slane %v340, %v1401
      %v1403 = vmul.f32 %v1288, %v1402
      %v1404 = vmul.f32 %v1287, %v1402
      %v1405 = vmul.f32 %v1286, %v1402
      %v1406 = vmul.f32 %v1285, %v1402
      %v1407 = vmul.f32 %v1284, %v1402
      %v1408 = vmul.f32 %v1283, %v1402
      %v1409 = vmul.f32 %v1282, %v1402
      %v1410 = vmul.f32 %v1281, %v1402
      %v1411 = vadd.f32 %v1391, %v1403
      %v1412 = vadd.f32 %v1392, %v1404
      %v1413 = vadd.f32 %v1393, %v1405
      %v1414 = vadd.f32 %v1394, %v1406
      %v1415 = vadd.f32 %v1395, %v1407
      %v1416 = vadd.f32 %v1396, %v1408
      %v1417 = vadd.f32 %v1397, %v1409
      %v1418 = vadd.f32 %v1398, %v1410
      %v1419 = vlaneseq
      %v1420 = vshrl.u32 %v1419, 7
      %v1421 = vsub.s32 7, %v1420
      %v1422 = vrot.slane %v340, %v1421
      %v1423 = vmul.f32 %v1286, %v1422
      %v1424 = vmul.f32 %v1285, %v1422
      %v1425 = vmul.f32 %v1284, %v1422
      %v1426 = vmul.f32 %v1283, %v1422
      %v1427 = vmul.f32 %v1282, %v1422
      %v1428 = vmul.f32 %v1281, %v1422
      %v1429 = vmul.f32 %v1280, %v1422
      %v1430 = vmul.f32 %v1279, %v1422
      %v1431 = vadd.f32 %v1411, %v1423
      %v1432 = vadd.f32 %v1412, %v1424
      %v1433 = vadd.f32 %v1413, %v1425
      %v1434 = vadd.f32 %v1414, %v1426
      %v1435 = vadd.f32 %v1415, %v1427
      %v1436 = vadd.f32 %v1416, %v1428
      %v1437 = vadd.f32 %v1417, %v1429
      %v1438 = vadd.f32 %v1418, %v1430
      %v1439 = vrot.slane %v305, 6
      %v1440 = vrot.slane %v306, 6
      %v1441 = vrot.slane %v307, 6
      %v1442 = vrot.slane %v308, 6
      %v1443 = vrot.slane %v309, 6
      %v1444 = vrot.slane %v310, 6
      %v1445 = vrot.slane %v311, 6
      %v1446 = vrot.slane %v312, 6
      %v1447 = vrot.slane %v313, 6
      %v1448 = vrot.slane %v314, 6
      %v1449 = vrot.slane %v315, 6
      %v1450 = vrot.slane %v316, 6
      %v1451 = vrot.slane %v317, 6
      %v1452 = vrot.slane %v318, 6
      %v1453 = vrot.slane %v319, 6
      %v1454 = vrot.slane %v320, 6
      %v1455 = vrot.slane %v321, 6
      %v1456 = vrot.slane %v322, 6
      %v1457 = vrot.slane %v323, 6
      %v1458 = vrot.slane %v324, 6
      %v1459 = vrot.slane %v325, 6
      %v1460 = vrot.slane %v326, 6
      %v1461 = vrot.slane %v327, 6
      %v1462 = vrot.slane %v328, 6
      %v1463 = vrot.slane %v329, 6
      %v1464 = vrot.slane %v330, 6
      %v1465 = vrot.slane %v331, 6
      %v1466 = vrot.slane %v332, 6
      %v1467 = vrot.slane %v333, 6
      %v1468 = vrot.slane %v334, 6
      %vm1469 = vcmp.lt.s32.totalorder %v513, 2
      %v1470 = vsel %vm1469, %v1467, %v1468
      %v1471 = vsel %vm1469, %v1466, %v1467
      %v1472 = vsel %vm1469, %v1464, %v1465
      %v1473 = vsel %vm1469, %v1463, %v1464
      %v1474 = vsel %vm1469, %v1461, %v1462
      %v1475 = vsel %vm1469, %v1460, %v1461
      %v1476 = vsel %vm1469, %v1458, %v1459
      %v1477 = vsel %vm1469, %v1457, %v1458
      %v1478 = vsel %vm1469, %v1455, %v1456
      %v1479 = vsel %vm1469, %v1454, %v1455
      %v1480 = vsel %vm1469, %v1452, %v1453
      %v1481 = vsel %vm1469, %v1451, %v1452
      %v1482 = vsel %vm1469, %v1449, %v1450
      %v1483 = vsel %vm1469, %v1448, %v1449
      %v1484 = vsel %vm1469, %v1446, %v1447
      %v1485 = vsel %vm1469, %v1445, %v1446
      %v1486 = vsel %vm1469, %v1443, %v1444
      %v1487 = vsel %vm1469, %v1442, %v1443
      %v1488 = vsel %vm1469, %v1440, %v1441
      %v1489 = vsel %vm1469, %v1439, %v1440
      %v1490 = vlaneseq
      %v1491 = vshrl.u32 %v1490, 7
      %v1492 = vsub.s32 6, %v1491
      %v1493 = vrot.slane %v335, %v1492
      %v1494 = vmul.f32 %v1489, %v1493
      %v1495 = vmul.f32 %v1488, %v1493
      %v1496 = vmul.f32 %v1487, %v1493
      %v1497 = vmul.f32 %v1486, %v1493
      %v1498 = vmul.f32 %v1485, %v1493
      %v1499 = vmul.f32 %v1484, %v1493
      %v1500 = vmul.f32 %v1483, %v1493
      %v1501 = vmul.f32 %v1482, %v1493
      %v1502 = vadd.f32 %v1431, %v1494
      %v1503 = vadd.f32 %v1432, %v1495
      %v1504 = vadd.f32 %v1433, %v1496
      %v1505 = vadd.f32 %v1434, %v1497
      %v1506 = vadd.f32 %v1435, %v1498
      %v1507 = vadd.f32 %v1436, %v1499
      %v1508 = vadd.f32 %v1437, %v1500
      %v1509 = vadd.f32 %v1438, %v1501
      %v1510 = vlaneseq
      %v1511 = vshrl.u32 %v1510, 7
      %v1512 = vsub.s32 5, %v1511
      %v1513 = vrot.slane %v336, %v1512
      %v1514 = vmul.f32 %v1487, %v1513
      %v1515 = vmul.f32 %v1486, %v1513
      %v1516 = vmul.f32 %v1485, %v1513
      %v1517 = vmul.f32 %v1484, %v1513
      %v1518 = vmul.f32 %v1483, %v1513
      %v1519 = vmul.f32 %v1482, %v1513
      %v1520 = vmul.f32 %v1481, %v1513
      %v1521 = vmul.f32 %v1480, %v1513
      %v1522 = vadd.f32 %v1502, %v1514
      %v1523 = vadd.f32 %v1503, %v1515
      %v1524 = vadd.f32 %v1504, %v1516
      %v1525 = vadd.f32 %v1505, %v1517
      %v1526 = vadd.f32 %v1506, %v1518
      %v1527 = vadd.f32 %v1507, %v1519
      %v1528 = vadd.f32 %v1508, %v1520
      %v1529 = vadd.f32 %v1509, %v1521
      %v1530 = vlaneseq
      %v1531 = vshrl.u32 %v1530, 7
      %v1532 = vsub.s32 4, %v1531
      %v1533 = vrot.slane %v337, %v1532
      %v1534 = vmul.f32 %v1485, %v1533
      %v1535 = vmul.f32 %v1484, %v1533
      %v1536 = vmul.f32 %v1483, %v1533
      %v1537 = vmul.f32 %v1482, %v1533
      %v1538 = vmul.f32 %v1481, %v1533
      %v1539 = vmul.f32 %v1480, %v1533
      %v1540 = vmul.f32 %v1479, %v1533
      %v1541 = vmul.f32 %v1478, %v1533
      %v1542 = vadd.f32 %v1522, %v1534
      %v1543 = vadd.f32 %v1523, %v1535
      %v1544 = vadd.f32 %v1524, %v1536
      %v1545 = vadd.f32 %v1525, %v1537
      %v1546 = vadd.f32 %v1526, %v1538
      %v1547 = vadd.f32 %v1527, %v1539
      %v1548 = vadd.f32 %v1528, %v1540
      %v1549 = vadd.f32 %v1529, %v1541
      %v1550 = vlaneseq
      %v1551 = vshrl.u32 %v1550, 7
      %v1552 = vsub.s32 3, %v1551
      %v1553 = vrot.slane %v338, %v1552
      %v1554 = vmul.f32 %v1483, %v1553
      %v1555 = vmul.f32 %v1482, %v1553
      %v1556 = vmul.f32 %v1481, %v1553
      %v1557 = vmul.f32 %v1480, %v1553
      %v1558 = vmul.f32 %v1479, %v1553
      %v1559 = vmul.f32 %v1478, %v1553
      %v1560 = vmul.f32 %v1477, %v1553
      %v1561 = vmul.f32 %v1476, %v1553
      %v1562 = vadd.f32 %v1542, %v1554
      %v1563 = vadd.f32 %v1543, %v1555
      %v1564 = vadd.f32 %v1544, %v1556
      %v1565 = vadd.f32 %v1545, %v1557
      %v1566 = vadd.f32 %v1546, %v1558
      %v1567 = vadd.f32 %v1547, %v1559
      %v1568 = vadd.f32 %v1548, %v1560
      %v1569 = vadd.f32 %v1549, %v1561
      %v1570 = vlaneseq
      %v1571 = vshrl.u32 %v1570, 7
      %v1572 = vsub.s32 2, %v1571
      %v1573 = vrot.slane %v339, %v1572
      %v1574 = vmul.f32 %v1481, %v1573
      %v1575 = vmul.f32 %v1480, %v1573
      %v1576 = vmul.f32 %v1479, %v1573
      %v1577 = vmul.f32 %v1478, %v1573
      %v1578 = vmul.f32 %v1477, %v1573
      %v1579 = vmul.f32 %v1476, %v1573
      %v1580 = vmul.f32 %v1475, %v1573
      %v1581 = vmul.f32 %v1474, %v1573
      %v1582 = vadd.f32 %v1562, %v1574
      %v1583 = vadd.f32 %v1563, %v1575
      %v1584 = vadd.f32 %v1564, %v1576
      %v1585 = vadd.f32 %v1565, %v1577
      %v1586 = vadd.f32 %v1566, %v1578
      %v1587 = vadd.f32 %v1567, %v1579
      %v1588 = vadd.f32 %v1568, %v1580
      %v1589 = vadd.f32 %v1569, %v1581
      %v1590 = vlaneseq
      %v1591 = vshrl.u32 %v1590, 7
      %v1592 = vsub.s32 1, %v1591
      %v1593 = vrot.slane %v340, %v1592
      %v1594 = vmul.f32 %v1479, %v1593
      %v1595 = vmul.f32 %v1478, %v1593
      %v1596 = vmul.f32 %v1477, %v1593
      %v1597 = vmul.f32 %v1476, %v1593
      %v1598 = vmul.f32 %v1475, %v1593
      %v1599 = vmul.f32 %v1474, %v1593
      %v1600 = vmul.f32 %v1473, %v1593
      %v1601 = vmul.f32 %v1472, %v1593
      %v1602 = vadd.f32 %v1582, %v1594
      %v1603 = vadd.f32 %v1583, %v1595
      %v1604 = vadd.f32 %v1584, %v1596
      %v1605 = vadd.f32 %v1585, %v1597
      %v1606 = vadd.f32 %v1586, %v1598
      %v1607 = vadd.f32 %v1587, %v1599
      %v1608 = vadd.f32 %v1588, %v1600
      %v1609 = vadd.f32 %v1589, %v1601
      %v1610 = vlaneseq
      %v1611 = vshrl.u32 %v1610, 7
      %v1612 = vsub.s32 0, %v1611
      %v1613 = vrot.slane %v341, %v1612
      %v1614 = vmul.f32 %v1477, %v1613
      %v1615 = vmul.f32 %v1476, %v1613
      %v1616 = vmul.f32 %v1475, %v1613
      %v1617 = vmul.f32 %v1474, %v1613
      %v1618 = vmul.f32 %v1473, %v1613
      %v1619 = vmul.f32 %v1472, %v1613
      %v1620 = vmul.f32 %v1471, %v1613
      %v1621 = vmul.f32 %v1470, %v1613
      %v1622 = vadd.f32 %v1602, %v1614
      %v1623 = vadd.f32 %v1603, %v1615
      %v1624 = vadd.f32 %v1604, %v1616
      %v1625 = vadd.f32 %v1605, %v1617
      %v1626 = vadd.f32 %v1606, %v1618
      %v1627 = vadd.f32 %v1607, %v1619
      %v1628 = vadd.f32 %v1608, %v1620
      %v1629 = vadd.f32 %v1609, %v1621
      %v1630 = vld [vmem:[%s2] sm:$0x1]
      %v1632 = vlaneseq
      %v1633 = vshrl.u32 %v1632, 7
      %v1634 = vsub.s32 0, %v1633
      %v1635 = vrot.slane %v1630, %v1634
      %v1637 = vadd.f32 %v1622, %v1635
      %v1638 = vadd.f32 %v1623, %v1635
      %v1639 = vadd.f32 %v1624, %v1635
      %v1640 = vadd.f32 %v1625, %v1635
      %v1641 = vadd.f32 %v1626, %v1635
      %v1642 = vadd.f32 %v1627, %v1635
      %v1643 = vadd.f32 %v1628, %v1635
      %v1644 = vadd.f32 %v1629, %v1635
      %1645 = vadd.xlane.f32.xlu0 %v1637
      %v1646 = vpop.xlane.xlu0 %1645
      %1647 = vadd.xlane.f32.xlu0 %v1638
      %v1648 = vpop.xlane.xlu0 %1647
      %1649 = vadd.xlane.f32.xlu0 %v1639
      %v1650 = vpop.xlane.xlu0 %1649
      %1651 = vadd.xlane.f32.xlu0 %v1640
      %v1652 = vpop.xlane.xlu0 %1651
      %1653 = vadd.xlane.f32.xlu0 %v1641
      %v1654 = vpop.xlane.xlu0 %1653
      %1655 = vadd.xlane.f32.xlu0 %v1642
      %v1656 = vpop.xlane.xlu0 %1655
      %1657 = vadd.xlane.f32.xlu0 %v1643
      %v1658 = vpop.xlane.xlu0 %1657
      %1659 = vadd.xlane.f32.xlu0 %v1644
      %v1660 = vpop.xlane.xlu0 %1659
      %v1661 = vmul.f32 %v1646, 0.03125
      %v1662 = vmul.f32 %v1648, 0.03125
      %v1663 = vmul.f32 %v1650, 0.03125
      %v1664 = vmul.f32 %v1652, 0.03125
      %v1665 = vmul.f32 %v1654, 0.03125
      %v1666 = vmul.f32 %v1656, 0.03125
      %v1667 = vmul.f32 %v1658, 0.03125
      %v1668 = vmul.f32 %v1660, 0.03125
      %v1669 = vsub.f32 %v1637, %v1661
      %v1670 = vsub.f32 %v1638, %v1662
      %v1671 = vsub.f32 %v1639, %v1663
      %v1672 = vsub.f32 %v1640, %v1664
      %v1673 = vsub.f32 %v1641, %v1665
      %v1674 = vsub.f32 %v1642, %v1666
      %v1675 = vsub.f32 %v1643, %v1667
      %v1676 = vsub.f32 %v1644, %v1668
      %v1677 = vmul.f32 %v1669, %v1669
      %v1678 = vmul.f32 %v1670, %v1670
      %v1679 = vmul.f32 %v1671, %v1671
      %v1680 = vmul.f32 %v1672, %v1672
      %v1681 = vmul.f32 %v1673, %v1673
      %v1682 = vmul.f32 %v1674, %v1674
      %v1683 = vmul.f32 %v1675, %v1675
      %v1684 = vmul.f32 %v1676, %v1676
      %1685 = vadd.xlane.f32.xlu0 %v1677
      %v1686 = vpop.xlane.xlu0 %1685
      %1687 = vadd.xlane.f32.xlu0 %v1678
      %v1688 = vpop.xlane.xlu0 %1687
      %1689 = vadd.xlane.f32.xlu0 %v1679
      %v1690 = vpop.xlane.xlu0 %1689
      %1691 = vadd.xlane.f32.xlu0 %v1680
      %v1692 = vpop.xlane.xlu0 %1691
      %1693 = vadd.xlane.f32.xlu0 %v1681
      %v1694 = vpop.xlane.xlu0 %1693
      %1695 = vadd.xlane.f32.xlu0 %v1682
      %v1696 = vpop.xlane.xlu0 %1695
      %1697 = vadd.xlane.f32.xlu0 %v1683
      %v1698 = vpop.xlane.xlu0 %1697
      %1699 = vadd.xlane.f32.xlu0 %v1684
      %v1700 = vpop.xlane.xlu0 %1699
      %v1701 = vmul.f32 %v1661, %v1661
      %v1702 = vmul.f32 %v1662, %v1662
      %v1703 = vmul.f32 %v1663, %v1663
      %v1704 = vmul.f32 %v1664, %v1664
      %v1705 = vmul.f32 %v1665, %v1665
      %v1706 = vmul.f32 %v1666, %v1666
      %v1707 = vmul.f32 %v1667, %v1667
      %v1708 = vmul.f32 %v1668, %v1668
      %v1709 = vmul.f32 %v1701, 96.0
      %v1710 = vmul.f32 %v1702, 96.0
      %v1711 = vmul.f32 %v1703, 96.0
      %v1712 = vmul.f32 %v1704, 96.0
      %v1713 = vmul.f32 %v1705, 96.0
      %v1714 = vmul.f32 %v1706, 96.0
      %v1715 = vmul.f32 %v1707, 96.0
      %v1716 = vmul.f32 %v1708, 96.0
      %v1717 = vsub.f32 %v1686, %v1709
      %v1718 = vsub.f32 %v1688, %v1710
      %v1719 = vsub.f32 %v1690, %v1711
      %v1720 = vsub.f32 %v1692, %v1712
      %v1721 = vsub.f32 %v1694, %v1713
      %v1722 = vsub.f32 %v1696, %v1714
      %v1723 = vsub.f32 %v1698, %v1715
      %v1724 = vsub.f32 %v1700, %v1716
      %v1725 = vmul.f32 %v1717, 0.03125
      %v1726 = vmul.f32 %v1718, 0.03125
      %v1727 = vmul.f32 %v1719, 0.03125
      %v1728 = vmul.f32 %v1720, 0.03125
      %v1729 = vmul.f32 %v1721, 0.03125
      %v1730 = vmul.f32 %v1722, 0.03125
      %v1731 = vmul.f32 %v1723, 0.03125
      %v1732 = vmul.f32 %v1724, 0.03125
      %v1733 = vmax.f32 %v1725, 0.0
      %v1734 = vmax.f32 %v1726, 0.0
      %v1735 = vmax.f32 %v1727, 0.0
      %v1736 = vmax.f32 %v1728, 0.0
      %v1737 = vmax.f32 %v1729, 0.0
      %v1738 = vmax.f32 %v1730, 0.0
      %v1739 = vmax.f32 %v1731, 0.0
      %v1740 = vmax.f32 %v1732, 0.0
      %v1741 = vadd.f32 %v1733, 1e-06
      %v1742 = vadd.f32 %v1734, 1e-06
      %v1743 = vadd.f32 %v1735, 1e-06
      %v1744 = vadd.f32 %v1736, 1e-06
      %v1745 = vadd.f32 %v1737, 1e-06
      %v1746 = vadd.f32 %v1738, 1e-06
      %v1747 = vadd.f32 %v1739, 1e-06
      %v1748 = vadd.f32 %v1740, 1e-06
      %v1749 = vrsqrt.pop %v1741
      %v1750 = vrsqrt.pop %v1742
      %v1751 = vrsqrt.pop %v1743
      %v1752 = vrsqrt.pop %v1744
      %v1753 = vrsqrt.pop %v1745
      %v1754 = vrsqrt.pop %v1746
      %v1755 = vrsqrt.pop %v1747
      %v1756 = vrsqrt.pop %v1748
      %v1757 = vmul.f32 %v1669, %v1749
      %v1758 = vmul.f32 %v1670, %v1750
      %v1759 = vmul.f32 %v1671, %v1751
      %v1760 = vmul.f32 %v1672, %v1752
      %v1761 = vmul.f32 %v1673, %v1753
      %v1762 = vmul.f32 %v1674, %v1754
      %v1763 = vmul.f32 %v1675, %v1755
      %v1764 = vmul.f32 %v1676, %v1756
      %v1765 = vpack.c.bf16 %v1758, %v1757
      %v1766 = vpack.c.bf16 %v1760, %v1759
      %v1767 = vpack.c.bf16 %v1762, %v1761
      %v1768 = vpack.c.bf16 %v1764, %v1763
      %v1769 = vld [vmem:[%s3] sm:$0xff]
      %v1770 = vld [vmem:[%s3 + $0x8] sm:$0xff]
      %v1771 = vld [vmem:[%s3 + $0x10] sm:$0xff]
      %v1772 = vld [vmem:[%s3 + $0x18] sm:$0xff]
      %v1773 = vld [vmem:[%s3 + $0x20] sm:$0xff]
      %v1774 = vld [vmem:[%s3 + $0x28] sm:$0xff]
      %v1775 = vld [vmem:[%s3 + $0x30] sm:$0xff]
      %v1776 = vld [vmem:[%s3 + $0x38] sm:$0xff]
      %v1777 = vld [vmem:[%s3 + $0x40] sm:$0xff]
      %v1778 = vld [vmem:[%s3 + $0x48] sm:$0xff]
      %v1779 = vld [vmem:[%s3 + $0x50] sm:$0xff]
      %v1780 = vld [vmem:[%s3 + $0x58] sm:$0xff]
      %v1781 = vld [vmem:[%s3 + $0x60] sm:$0xff]
      %v1782 = vld [vmem:[%s3 + $0x68] sm:$0xff]
      %v1783 = vld [vmem:[%s3 + $0x70] sm:$0xff]
      %v1784 = vld [vmem:[%s3 + $0x78] sm:$0xff]
      %v1785 = vld [vmem:[%s3 + $0x80] sm:$0xff]
      %v1786 = vld [vmem:[%s3 + $0x88] sm:$0xff]
      %v1787 = vld [vmem:[%s3 + $0x90] sm:$0xff]
      %v1788 = vld [vmem:[%s3 + $0x98] sm:$0xff]
      %v1789 = vld [vmem:[%s3 + $0xa0] sm:$0xff]
      %v1790 = vld [vmem:[%s3 + $0xa8] sm:$0xff]
      %v1791 = vld [vmem:[%s3 + $0xb0] sm:$0xff]
      %v1792 = vld [vmem:[%s3 + $0xb8] sm:$0xff]
      %v1793 = vld [vmem:[%s3 + $0xc0] sm:$0xff]
      %v1794 = vld [vmem:[%s3 + $0xc8] sm:$0xff]
      %v1795 = vld [vmem:[%s3 + $0xd0] sm:$0xff]
      %v1796 = vld [vmem:[%s3 + $0xd8] sm:$0xff]
      %v1797 = vld [vmem:[%s3 + $0xe0] sm:$0xff]
      %v1798 = vld [vmem:[%s3 + $0xe8] sm:$0xff]
      %v1799 = vld [vmem:[%s3 + $0xf0] sm:$0xff]
      %v1800 = vld [vmem:[%s3 + $0xf8] sm:$0xff]
      %v1801 = vld [vmem:[%s4] sm:$0xf]
      %v1803 = vlaneseq
      %v1804 = vshrl.u32 %v1803, 7
      %v1805 = vsub.s32 0, %v1804
      %v1806 = vrot.slane %v1801, %v1805
      %v1807 = vlaneseq
      %v1808 = vshrl.u32 %v1807, 7
      %v1809 = vsub.s32 1, %v1808
      %v1810 = vrot.slane %v1801, %v1809
      %v1811 = vlaneseq
      %v1812 = vshrl.u32 %v1811, 7
      %v1813 = vsub.s32 2, %v1812
      %v1814 = vrot.slane %v1801, %v1813
      %v1815 = vlaneseq
      %v1816 = vshrl.u32 %v1815, 7
      %v1817 = vsub.s32 3, %v1816
      %v1818 = vrot.slane %v1801, %v1817
      %v1855 = vunpack.c.l.b16 %v1769
      %v1856 = vunpack.c.h.b16 %v1769
      %v1857 = vunpack.c.l.b16 %v1770
      %v1858 = vunpack.c.h.b16 %v1770
      %v1859 = vunpack.c.l.b16 %v1771
      %v1860 = vunpack.c.h.b16 %v1771
      %v1861 = vunpack.c.l.b16 %v1772
      %v1862 = vunpack.c.h.b16 %v1772
      %v1863 = vunpack.c.l.b16 %v1773
      %v1864 = vunpack.c.h.b16 %v1773
      %v1865 = vunpack.c.l.b16 %v1774
      %v1866 = vunpack.c.h.b16 %v1774
      %v1867 = vunpack.c.l.b16 %v1775
      %v1868 = vunpack.c.h.b16 %v1775
      %v1869 = vunpack.c.l.b16 %v1776
      %v1870 = vunpack.c.h.b16 %v1776
      %v1871 = vunpack.c.l.b16 %v1777
      %v1872 = vunpack.c.h.b16 %v1777
      %v1873 = vunpack.c.l.b16 %v1778
      %v1874 = vunpack.c.h.b16 %v1778
      %v1875 = vunpack.c.l.b16 %v1779
      %v1876 = vunpack.c.h.b16 %v1779
      %v1877 = vunpack.c.l.b16 %v1780
      %v1878 = vunpack.c.h.b16 %v1780
      %v1879 = vunpack.c.l.b16 %v1781
      %v1880 = vunpack.c.h.b16 %v1781
      %v1881 = vunpack.c.l.b16 %v1782
      %v1882 = vunpack.c.h.b16 %v1782
      %v1883 = vunpack.c.l.b16 %v1783
      %v1884 = vunpack.c.h.b16 %v1783
      %v1885 = vunpack.c.l.b16 %v1784
      %v1886 = vunpack.c.h.b16 %v1784
      %v1887 = vunpack.c.l.b16 %v1785
      %v1888 = vunpack.c.h.b16 %v1785
      %v1889 = vunpack.c.l.b16 %v1786
      %v1890 = vunpack.c.h.b16 %v1786
      %v1891 = vunpack.c.l.b16 %v1787
      %v1892 = vunpack.c.h.b16 %v1787
      %v1893 = vunpack.c.l.b16 %v1788
      %v1894 = vunpack.c.h.b16 %v1788
      %v1895 = vunpack.c.l.b16 %v1789
      %v1896 = vunpack.c.h.b16 %v1789
      %v1897 = vunpack.c.l.b16 %v1790
      %v1898 = vunpack.c.h.b16 %v1790
      %v1899 = vunpack.c.l.b16 %v1791
      %v1900 = vunpack.c.h.b16 %v1791
      %v1901 = vunpack.c.l.b16 %v1792
      %v1902 = vunpack.c.h.b16 %v1792
      %v1903 = vunpack.c.l.b16 %v1793
      %v1904 = vunpack.c.h.b16 %v1793
      %v1905 = vunpack.c.l.b16 %v1794
      %v1906 = vunpack.c.h.b16 %v1794
      %v1907 = vunpack.c.l.b16 %v1795
      %v1908 = vunpack.c.h.b16 %v1795
      %v1909 = vunpack.c.l.b16 %v1796
      %v1910 = vunpack.c.h.b16 %v1796
      %v1911 = vunpack.c.l.b16 %v1797
      %v1912 = vunpack.c.h.b16 %v1797
      %v1913 = vunpack.c.l.b16 %v1798
      %v1914 = vunpack.c.h.b16 %v1798
      %v1915 = vunpack.c.l.b16 %v1799
      %v1916 = vunpack.c.h.b16 %v1799
      %v1917 = vunpack.c.l.b16 %v1800
      %v1918 = vunpack.c.h.b16 %v1800
      %v1919 = vpack.c.b16 %v1859, %v1855
      %v1920 = vpack.c.b16 %v1860, %v1856
      %v1921 = vpack.c.b16 %v1861, %v1857
      %v1922 = vpack.c.b16 %v1862, %v1858
      %v1923 = vpack.c.b16 %v1867, %v1863
      %v1924 = vpack.c.b16 %v1868, %v1864
      %v1925 = vpack.c.b16 %v1869, %v1865
      %v1926 = vpack.c.b16 %v1870, %v1866
      %v1927 = vpack.c.b16 %v1875, %v1871
      %v1928 = vpack.c.b16 %v1876, %v1872
      %v1929 = vpack.c.b16 %v1877, %v1873
      %v1930 = vpack.c.b16 %v1878, %v1874
      %v1931 = vpack.c.b16 %v1883, %v1879
      %v1932 = vpack.c.b16 %v1884, %v1880
      %v1933 = vpack.c.b16 %v1885, %v1881
      %v1934 = vpack.c.b16 %v1886, %v1882
      %v1935 = vpack.c.b16 %v1891, %v1887
      %v1936 = vpack.c.b16 %v1892, %v1888
      %v1937 = vpack.c.b16 %v1893, %v1889
      %v1938 = vpack.c.b16 %v1894, %v1890
      %v1939 = vpack.c.b16 %v1899, %v1895
      %v1940 = vpack.c.b16 %v1900, %v1896
      %v1941 = vpack.c.b16 %v1901, %v1897
      %v1942 = vpack.c.b16 %v1902, %v1898
      %v1943 = vpack.c.b16 %v1907, %v1903
      %v1944 = vpack.c.b16 %v1908, %v1904
      %v1945 = vpack.c.b16 %v1909, %v1905
      %v1946 = vpack.c.b16 %v1910, %v1906
      %v1947 = vpack.c.b16 %v1915, %v1911
      %v1948 = vpack.c.b16 %v1916, %v1912
      %v1949 = vpack.c.b16 %v1917, %v1913
      %v1950 = vpack.c.b16 %v1918, %v1914
      %1983 = vmatprep.subr.bf16.mxu0 %v1948
      %1984 = vmatpush1.bf16.msra.mxu0 %v1947
      %1985 = vmatprep.subr.bf16.mxu0 %v1944
      %1986 = vmatpush1.bf16.msra.mxu0 %v1943
      %1987 = vmatprep.subr.bf16.mxu0 %v1940
      %1988 = vmatpush1.bf16.msra.mxu0 %v1939
      %1989 = vmatprep.subr.bf16.mxu0 %v1936
      %1990 = vmatpush1.bf16.msra.mxu0 %v1935
      %1991 = vmatprep.subr.bf16.mxu0 %v1932
      %1992 = vmatpush1.bf16.msra.mxu0 %v1931
      %1993 = vmatprep.subr.bf16.mxu0 %v1928
      %1994 = vmatpush1.bf16.msra.mxu0 %v1927
      %1995 = vmatprep.subr.bf16.mxu0 %v1924
      %1996 = vmatpush1.bf16.msra.mxu0 %v1923
      %1997 = vmatprep.subr.bf16.mxu0 %v1920
      %1998 = vmatpush1.bf16.msra.mxu0 %v1919
      %1999 = vmatprep.subr.bf16.mxu0 0
      %2000 = vmatpush2.bf16.msra.mxu0 0
      %2001 = vmatprep.subr.bf16.mxu0 0
      %2002 = vmatpush2.bf16.msra.mxu0 0
      %2003 = vmatprep.subr.bf16.mxu0 0
      %2004 = vmatpush2.bf16.msra.mxu0 0
      %2005 = vmatprep.subr.bf16.mxu0 0
      %2006 = vmatpush2.bf16.msra.mxu0 0
      %2007 = vmatprep.subr.bf16.mxu0 0
      %2008 = vmatpush2.bf16.msra.mxu0 0
      %2009 = vmatprep.subr.bf16.mxu0 0
      %2010 = vmatpush2.bf16.msra.mxu0 0
      %2011 = vmatprep.subr.bf16.mxu0 0
      %2012 = vmatpush2.bf16.msra.mxu0 0
      %2013 = vmatprep.subr.bf16.mxu0 0
      %2014 = vmatpush2.bf16.msra.mxu0 0
      %2015 = vmatprep.mubr.bf16.mxu0 0
      %2016 = vmatmul.mubr.bf16.gmra.mxu0 %v1765
      %v2017 = vpop.f32.mrf.mxu0
      %v2018 = vadd.f32 %v1806, %v2017
      %v2019 = vpop.f32.mrf.mxu0
      %v2020 = vadd.f32 %v1810, %v2019
      %v2021 = vpop.f32.mrf.mxu0
      %v2022 = vadd.f32 %v1806, %v2021
      %v2023 = vpop.f32.mrf.mxu0
      %v2024 = vadd.f32 %v1810, %v2023
      %2025 = vmatprep.mubr.bf16.mxu0 0
      %2026 = vmatmul.mubr.bf16.gmra.mxu0 %v1766
      %v2027 = vpop.f32.mrf.mxu0
      %v2028 = vadd.f32 %v1806, %v2027
      %v2029 = vpop.f32.mrf.mxu0
      %v2030 = vadd.f32 %v1810, %v2029
      %v2031 = vpop.f32.mrf.mxu0
      %v2032 = vadd.f32 %v1806, %v2031
      %v2033 = vpop.f32.mrf.mxu0
      %v2034 = vadd.f32 %v1810, %v2033
      %2035 = vmatprep.mubr.bf16.mxu0 0
      %2036 = vmatmul.mubr.bf16.gmra.mxu0 %v1767
      %v2037 = vpop.f32.mrf.mxu0
      %v2038 = vadd.f32 %v1806, %v2037
      %v2039 = vpop.f32.mrf.mxu0
      %v2040 = vadd.f32 %v1810, %v2039
      %v2041 = vpop.f32.mrf.mxu0
      %v2042 = vadd.f32 %v1806, %v2041
      %v2043 = vpop.f32.mrf.mxu0
      %v2044 = vadd.f32 %v1810, %v2043
      %2045 = vmatprep.mubr.bf16.mxu0 0
      %2046 = vmatmul.mubr.bf16.gmra.mxu0 %v1768
      %v2047 = vpop.f32.mrf.mxu0
      %v2048 = vadd.f32 %v1806, %v2047
      %v2049 = vpop.f32.mrf.mxu0
      %v2050 = vadd.f32 %v1810, %v2049
      %v2051 = vpop.f32.mrf.mxu0
      %v2052 = vadd.f32 %v1806, %v2051
      %v2053 = vpop.f32.mrf.mxu0
      %v2054 = vadd.f32 %v1810, %v2053
      %2055 = vdwg.mxu0
      %2056 = vmatprep.subr.bf16.mxu0 %v1950
      %2057 = vmatpush1.bf16.msra.mxu0 %v1949
      %2058 = vmatprep.subr.bf16.mxu0 %v1946
      %2059 = vmatpush1.bf16.msra.mxu0 %v1945
      %2060 = vmatprep.subr.bf16.mxu0 %v1942
      %2061 = vmatpush1.bf16.msra.mxu0 %v1941
      %2062 = vmatprep.subr.bf16.mxu0 %v1938
      %2063 = vmatpush1.bf16.msra.mxu0 %v1937
      %2064 = vmatprep.subr.bf16.mxu0 %v1934
      %2065 = vmatpush1.bf16.msra.mxu0 %v1933
      %2066 = vmatprep.subr.bf16.mxu0 %v1930
      %2067 = vmatpush1.bf16.msra.mxu0 %v1929
      %2068 = vmatprep.subr.bf16.mxu0 %v1926
      %2069 = vmatpush1.bf16.msra.mxu0 %v1925
      %2070 = vmatprep.subr.bf16.mxu0 %v1922
      %2071 = vmatpush1.bf16.msra.mxu0 %v1921
      %2072 = vmatprep.subr.bf16.mxu0 0
      %2073 = vmatpush2.bf16.msra.mxu0 0
      %2074 = vmatprep.subr.bf16.mxu0 0
      %2075 = vmatpush2.bf16.msra.mxu0 0
      %2076 = vmatprep.subr.bf16.mxu0 0
      %2077 = vmatpush2.bf16.msra.mxu0 0
      %2078 = vmatprep.subr.bf16.mxu0 0
      %2079 = vmatpush2.bf16.msra.mxu0 0
      %2080 = vmatprep.subr.bf16.mxu0 0
      %2081 = vmatpush2.bf16.msra.mxu0 0
      %2082 = vmatprep.subr.bf16.mxu0 0
      %2083 = vmatpush2.bf16.msra.mxu0 0
      %2084 = vmatprep.subr.bf16.mxu0 0
      %2085 = vmatpush2.bf16.msra.mxu0 0
      %2086 = vmatprep.subr.bf16.mxu0 0
      %2087 = vmatpush2.bf16.msra.mxu0 0
      %2088 = vmatprep.mubr.bf16.mxu0 0
      %2089 = vmatmul.mubr.bf16.gmra.mxu0 %v1765
      %v2090 = vpop.f32.mrf.mxu0
      %v2091 = vadd.f32 %v1814, %v2090
      %v2092 = vpop.f32.mrf.mxu0
      %v2093 = vadd.f32 %v1818, %v2092
      %v2094 = vpop.f32.mrf.mxu0
      %v2095 = vadd.f32 %v1814, %v2094
      %v2096 = vpop.f32.mrf.mxu0
      %v2097 = vadd.f32 %v1818, %v2096
      %2098 = vmatprep.mubr.bf16.mxu0 0
      %2099 = vmatmul.mubr.bf16.gmra.mxu0 %v1766
      %v2100 = vpop.f32.mrf.mxu0
      %v2101 = vadd.f32 %v1814, %v2100
      %v2102 = vpop.f32.mrf.mxu0
      %v2103 = vadd.f32 %v1818, %v2102
      %v2104 = vpop.f32.mrf.mxu0
      %v2105 = vadd.f32 %v1814, %v2104
      %v2106 = vpop.f32.mrf.mxu0
      %v2107 = vadd.f32 %v1818, %v2106
      %2108 = vmatprep.mubr.bf16.mxu0 0
      %2109 = vmatmul.mubr.bf16.gmra.mxu0 %v1767
      %v2110 = vpop.f32.mrf.mxu0
      %v2111 = vadd.f32 %v1814, %v2110
      %v2112 = vpop.f32.mrf.mxu0
      %v2113 = vadd.f32 %v1818, %v2112
      %v2114 = vpop.f32.mrf.mxu0
      %v2115 = vadd.f32 %v1814, %v2114
      %v2116 = vpop.f32.mrf.mxu0
      %v2117 = vadd.f32 %v1818, %v2116
      %2118 = vmatprep.mubr.bf16.mxu0 0
      %2119 = vmatmul.mubr.bf16.gmra.mxu0 %v1768
      %v2120 = vpop.f32.mrf.mxu0
      %v2121 = vadd.f32 %v1814, %v2120
      %v2122 = vpop.f32.mrf.mxu0
      %v2123 = vadd.f32 %v1818, %v2122
      %v2124 = vpop.f32.mrf.mxu0
      %v2125 = vadd.f32 %v1814, %v2124
      %v2126 = vpop.f32.mrf.mxu0
      %v2127 = vadd.f32 %v1818, %v2126
      %2128 = vdwg.mxu0
      %v2129 = vmul.f32 %v2018, 0.5
      %v2130 = vmul.f32 %v2020, 0.5
      %v2131 = vmul.f32 %v2091, 0.5
      %v2132 = vmul.f32 %v2093, 0.5
      %v2133 = vmul.f32 %v2022, 0.5
      %v2134 = vmul.f32 %v2024, 0.5
      %v2135 = vmul.f32 %v2095, 0.5
      %v2136 = vmul.f32 %v2097, 0.5
      %v2137 = vmul.f32 %v2028, 0.5
      %v2138 = vmul.f32 %v2030, 0.5
      %v2139 = vmul.f32 %v2101, 0.5
      %v2140 = vmul.f32 %v2103, 0.5
      %v2141 = vmul.f32 %v2032, 0.5
      %v2142 = vmul.f32 %v2034, 0.5
      %v2143 = vmul.f32 %v2105, 0.5
      %v2144 = vmul.f32 %v2107, 0.5
      %v2145 = vmul.f32 %v2038, 0.5
      %v2146 = vmul.f32 %v2040, 0.5
      %v2147 = vmul.f32 %v2111, 0.5
      %v2148 = vmul.f32 %v2113, 0.5
      %v2149 = vmul.f32 %v2042, 0.5
      %v2150 = vmul.f32 %v2044, 0.5
      %v2151 = vmul.f32 %v2115, 0.5
      %v2152 = vmul.f32 %v2117, 0.5
      %v2153 = vmul.f32 %v2048, 0.5
      %v2154 = vmul.f32 %v2050, 0.5
      %v2155 = vmul.f32 %v2121, 0.5
      %v2156 = vmul.f32 %v2123, 0.5
      %v2157 = vmul.f32 %v2052, 0.5
      %v2158 = vmul.f32 %v2054, 0.5
      %v2159 = vmul.f32 %v2125, 0.5
      %v2160 = vmul.f32 %v2127, 0.5
      %v2161 = vmul.f32 %v2018, 0.70710677
      %v2162 = vmul.f32 %v2020, 0.70710677
      %v2163 = vmul.f32 %v2091, 0.70710677
      %v2164 = vmul.f32 %v2093, 0.70710677
      %v2165 = vmul.f32 %v2022, 0.70710677
      %v2166 = vmul.f32 %v2024, 0.70710677
      %v2167 = vmul.f32 %v2095, 0.70710677
      %v2168 = vmul.f32 %v2097, 0.70710677
      %v2169 = vmul.f32 %v2028, 0.70710677
      %v2170 = vmul.f32 %v2030, 0.70710677
      %v2171 = vmul.f32 %v2101, 0.70710677
      %v2172 = vmul.f32 %v2103, 0.70710677
      %v2173 = vmul.f32 %v2032, 0.70710677
      %v2174 = vmul.f32 %v2034, 0.70710677
      %v2175 = vmul.f32 %v2105, 0.70710677
      %v2176 = vmul.f32 %v2107, 0.70710677
      %v2177 = vmul.f32 %v2038, 0.70710677
      %v2178 = vmul.f32 %v2040, 0.70710677
      %v2179 = vmul.f32 %v2111, 0.70710677
      %v2180 = vmul.f32 %v2113, 0.70710677
      %v2181 = vmul.f32 %v2042, 0.70710677
      %v2182 = vmul.f32 %v2044, 0.70710677
      %v2183 = vmul.f32 %v2115, 0.70710677
      %v2184 = vmul.f32 %v2117, 0.70710677
      %v2185 = vmul.f32 %v2048, 0.70710677
      %v2186 = vmul.f32 %v2050, 0.70710677
      %v2187 = vmul.f32 %v2121, 0.70710677
      %v2188 = vmul.f32 %v2123, 0.70710677
      %v2189 = vmul.f32 %v2052, 0.70710677
      %v2190 = vmul.f32 %v2054, 0.70710677
      %v2191 = vmul.f32 %v2125, 0.70710677
      %v2192 = vmul.f32 %v2127, 0.70710677
      %v2193 = verf.f32.pop %v2161
      %v2194 = verf.f32.pop %v2162
      %v2195 = verf.f32.pop %v2163
      %v2196 = verf.f32.pop %v2164
      %v2197 = verf.f32.pop %v2165
      %v2198 = verf.f32.pop %v2166
      %v2199 = verf.f32.pop %v2167
      %v2200 = verf.f32.pop %v2168
      %v2201 = verf.f32.pop %v2169
      %v2202 = verf.f32.pop %v2170
      %v2203 = verf.f32.pop %v2171
      %v2204 = verf.f32.pop %v2172
      %v2205 = verf.f32.pop %v2173
      %v2206 = verf.f32.pop %v2174
      %v2207 = verf.f32.pop %v2175
      %v2208 = verf.f32.pop %v2176
      %v2209 = verf.f32.pop %v2177
      %v2210 = verf.f32.pop %v2178
      %v2211 = verf.f32.pop %v2179
      %v2212 = verf.f32.pop %v2180
      %v2213 = verf.f32.pop %v2181
      %v2214 = verf.f32.pop %v2182
      %v2215 = verf.f32.pop %v2183
      %v2216 = verf.f32.pop %v2184
      %v2217 = verf.f32.pop %v2185
      %v2218 = verf.f32.pop %v2186
      %v2219 = verf.f32.pop %v2187
      %v2220 = verf.f32.pop %v2188
      %v2221 = verf.f32.pop %v2189
      %v2222 = verf.f32.pop %v2190
      %v2223 = verf.f32.pop %v2191
      %v2224 = verf.f32.pop %v2192
      %v2225 = vadd.f32 %v2193, 1.0
      %v2226 = vadd.f32 %v2194, 1.0
      %v2227 = vadd.f32 %v2195, 1.0
      %v2228 = vadd.f32 %v2196, 1.0
      %v2229 = vadd.f32 %v2197, 1.0
      %v2230 = vadd.f32 %v2198, 1.0
      %v2231 = vadd.f32 %v2199, 1.0
      %v2232 = vadd.f32 %v2200, 1.0
      %v2233 = vadd.f32 %v2201, 1.0
      %v2234 = vadd.f32 %v2202, 1.0
      %v2235 = vadd.f32 %v2203, 1.0
      %v2236 = vadd.f32 %v2204, 1.0
      %v2237 = vadd.f32 %v2205, 1.0
      %v2238 = vadd.f32 %v2206, 1.0
      %v2239 = vadd.f32 %v2207, 1.0
      %v2240 = vadd.f32 %v2208, 1.0
      %v2241 = vadd.f32 %v2209, 1.0
      %v2242 = vadd.f32 %v2210, 1.0
      %v2243 = vadd.f32 %v2211, 1.0
      %v2244 = vadd.f32 %v2212, 1.0
      %v2245 = vadd.f32 %v2213, 1.0
      %v2246 = vadd.f32 %v2214, 1.0
      %v2247 = vadd.f32 %v2215, 1.0
      %v2248 = vadd.f32 %v2216, 1.0
      %v2249 = vadd.f32 %v2217, 1.0
      %v2250 = vadd.f32 %v2218, 1.0
      %v2251 = vadd.f32 %v2219, 1.0
      %v2252 = vadd.f32 %v2220, 1.0
      %v2253 = vadd.f32 %v2221, 1.0
      %v2254 = vadd.f32 %v2222, 1.0
      %v2255 = vadd.f32 %v2223, 1.0
      %v2256 = vadd.f32 %v2224, 1.0
      %v2257 = vmul.f32 %v2129, %v2225
      %v2258 = vmul.f32 %v2130, %v2226
      %v2259 = vmul.f32 %v2131, %v2227
      %v2260 = vmul.f32 %v2132, %v2228
      %v2261 = vmul.f32 %v2133, %v2229
      %v2262 = vmul.f32 %v2134, %v2230
      %v2263 = vmul.f32 %v2135, %v2231
      %v2264 = vmul.f32 %v2136, %v2232
      %v2265 = vmul.f32 %v2137, %v2233
      %v2266 = vmul.f32 %v2138, %v2234
      %v2267 = vmul.f32 %v2139, %v2235
      %v2268 = vmul.f32 %v2140, %v2236
      %v2269 = vmul.f32 %v2141, %v2237
      %v2270 = vmul.f32 %v2142, %v2238
      %v2271 = vmul.f32 %v2143, %v2239
      %v2272 = vmul.f32 %v2144, %v2240
      %v2273 = vmul.f32 %v2145, %v2241
      %v2274 = vmul.f32 %v2146, %v2242
      %v2275 = vmul.f32 %v2147, %v2243
      %v2276 = vmul.f32 %v2148, %v2244
      %v2277 = vmul.f32 %v2149, %v2245
      %v2278 = vmul.f32 %v2150, %v2246
      %v2279 = vmul.f32 %v2151, %v2247
      %v2280 = vmul.f32 %v2152, %v2248
      %v2281 = vmul.f32 %v2153, %v2249
      %v2282 = vmul.f32 %v2154, %v2250
      %v2283 = vmul.f32 %v2155, %v2251
      %v2284 = vmul.f32 %v2156, %v2252
      %v2285 = vmul.f32 %v2157, %v2253
      %v2286 = vmul.f32 %v2158, %v2254
      %v2287 = vmul.f32 %v2159, %v2255
      %v2288 = vmul.f32 %v2160, %v2256
      %v2289 = vpack.c.bf16 %v2261, %v2257
      %v2290 = vpack.c.bf16 %v2262, %v2258
      %v2291 = vpack.c.bf16 %v2263, %v2259
      %v2292 = vpack.c.bf16 %v2264, %v2260
      %v2293 = vpack.c.bf16 %v2269, %v2265
      %v2294 = vpack.c.bf16 %v2270, %v2266
      %v2295 = vpack.c.bf16 %v2271, %v2267
      %v2296 = vpack.c.bf16 %v2272, %v2268
      %v2297 = vpack.c.bf16 %v2277, %v2273
      %v2298 = vpack.c.bf16 %v2278, %v2274
      %v2299 = vpack.c.bf16 %v2279, %v2275
      %v2300 = vpack.c.bf16 %v2280, %v2276
      %v2301 = vpack.c.bf16 %v2285, %v2281
      %v2302 = vpack.c.bf16 %v2286, %v2282
      %v2303 = vpack.c.bf16 %v2287, %v2283
      %v2304 = vpack.c.bf16 %v2288, %v2284
      %v2305 = vld [vmem:[%s5] sm:$0xf]
      %v2306 = vld [vmem:[%s5 + $0x4] sm:$0xf]
      %v2307 = vld [vmem:[%s5 + $0x8] sm:$0xf]
      %v2308 = vld [vmem:[%s5 + $0xc] sm:$0xf]
      %v2309 = vld [vmem:[%s5 + $0x10] sm:$0xf]
      %v2310 = vld [vmem:[%s5 + $0x14] sm:$0xf]
      %v2311 = vld [vmem:[%s5 + $0x18] sm:$0xf]
      %v2312 = vld [vmem:[%s5 + $0x1c] sm:$0xf]
      %v2313 = vld [vmem:[%s5 + $0x20] sm:$0xf]
      %v2314 = vld [vmem:[%s5 + $0x24] sm:$0xf]
      %v2315 = vld [vmem:[%s5 + $0x28] sm:$0xf]
      %v2316 = vld [vmem:[%s5 + $0x2c] sm:$0xf]
      %v2317 = vld [vmem:[%s5 + $0x30] sm:$0xf]
      %v2318 = vld [vmem:[%s5 + $0x34] sm:$0xf]
      %v2319 = vld [vmem:[%s5 + $0x38] sm:$0xf]
      %v2320 = vld [vmem:[%s5 + $0x3c] sm:$0xf]
      %v2321 = vld [vmem:[%s5 + $0x40] sm:$0xf]
      %v2322 = vld [vmem:[%s5 + $0x44] sm:$0xf]
      %v2323 = vld [vmem:[%s5 + $0x48] sm:$0xf]
      %v2324 = vld [vmem:[%s5 + $0x4c] sm:$0xf]
      %v2325 = vld [vmem:[%s5 + $0x50] sm:$0xf]
      %v2326 = vld [vmem:[%s5 + $0x54] sm:$0xf]
      %v2327 = vld [vmem:[%s5 + $0x58] sm:$0xf]
      %v2328 = vld [vmem:[%s5 + $0x5c] sm:$0xf]
      %v2329 = vld [vmem:[%s5 + $0x60] sm:$0xf]
      %v2330 = vld [vmem:[%s5 + $0x64] sm:$0xf]
      %v2331 = vld [vmem:[%s5 + $0x68] sm:$0xf]
      %v2332 = vld [vmem:[%s5 + $0x6c] sm:$0xf]
      %v2333 = vld [vmem:[%s5 + $0x70] sm:$0xf]
      %v2334 = vld [vmem:[%s5 + $0x74] sm:$0xf]
      %v2335 = vld [vmem:[%s5 + $0x78] sm:$0xf]
      %v2336 = vld [vmem:[%s5 + $0x7c] sm:$0xf]
      %v2337 = vld [vmem:[%s5 + $0x80] sm:$0xf]
      %v2338 = vld [vmem:[%s5 + $0x84] sm:$0xf]
      %v2339 = vld [vmem:[%s5 + $0x88] sm:$0xf]
      %v2340 = vld [vmem:[%s5 + $0x8c] sm:$0xf]
      %v2341 = vld [vmem:[%s5 + $0x90] sm:$0xf]
      %v2342 = vld [vmem:[%s5 + $0x94] sm:$0xf]
      %v2343 = vld [vmem:[%s5 + $0x98] sm:$0xf]
      %v2344 = vld [vmem:[%s5 + $0x9c] sm:$0xf]
      %v2345 = vld [vmem:[%s5 + $0xa0] sm:$0xf]
      %v2346 = vld [vmem:[%s5 + $0xa4] sm:$0xf]
      %v2347 = vld [vmem:[%s5 + $0xa8] sm:$0xf]
      %v2348 = vld [vmem:[%s5 + $0xac] sm:$0xf]
      %v2349 = vld [vmem:[%s5 + $0xb0] sm:$0xf]
      %v2350 = vld [vmem:[%s5 + $0xb4] sm:$0xf]
      %v2351 = vld [vmem:[%s5 + $0xb8] sm:$0xf]
      %v2352 = vld [vmem:[%s5 + $0xbc] sm:$0xf]
      %v2353 = vld [vmem:[%s5 + $0xc0] sm:$0xf]
      %v2354 = vld [vmem:[%s5 + $0xc4] sm:$0xf]
      %v2355 = vld [vmem:[%s5 + $0xc8] sm:$0xf]
      %v2356 = vld [vmem:[%s5 + $0xcc] sm:$0xf]
      %v2357 = vld [vmem:[%s5 + $0xd0] sm:$0xf]
      %v2358 = vld [vmem:[%s5 + $0xd4] sm:$0xf]
      %v2359 = vld [vmem:[%s5 + $0xd8] sm:$0xf]
      %v2360 = vld [vmem:[%s5 + $0xdc] sm:$0xf]
      %v2361 = vld [vmem:[%s5 + $0xe0] sm:$0xf]
      %v2362 = vld [vmem:[%s5 + $0xe4] sm:$0xf]
      %v2363 = vld [vmem:[%s5 + $0xe8] sm:$0xf]
      %v2364 = vld [vmem:[%s5 + $0xec] sm:$0xf]
      %v2365 = vld [vmem:[%s5 + $0xf0] sm:$0xf]
      %v2366 = vld [vmem:[%s5 + $0xf4] sm:$0xf]
      %v2367 = vld [vmem:[%s5 + $0xf8] sm:$0xf]
      %v2368 = vld [vmem:[%s5 + $0xfc] sm:$0xf]
      %v2369 = vld [vmem:[%s6] sm:$0x1]
      %v2371 = vlaneseq
      %v2372 = vshrl.u32 %v2371, 7
      %v2373 = vsub.s32 0, %v2372
      %v2374 = vrot.slane %v2369, %v2373
      %v2440 = vunpack.c.l.b16 %v2305
      %v2441 = vunpack.c.l.b16 %v2306
      %v2442 = vunpack.c.l.b16 %v2307
      %v2443 = vunpack.c.l.b16 %v2308
      %v2444 = vunpack.c.l.b16 %v2309
      %v2445 = vunpack.c.l.b16 %v2310
      %v2446 = vunpack.c.l.b16 %v2311
      %v2447 = vunpack.c.l.b16 %v2312
      %v2448 = vunpack.c.l.b16 %v2313
      %v2449 = vunpack.c.l.b16 %v2314
      %v2450 = vunpack.c.l.b16 %v2315
      %v2451 = vunpack.c.l.b16 %v2316
      %v2452 = vunpack.c.l.b16 %v2317
      %v2453 = vunpack.c.l.b16 %v2318
      %v2454 = vunpack.c.l.b16 %v2319
      %v2455 = vunpack.c.l.b16 %v2320
      %v2456 = vunpack.c.l.b16 %v2321
      %v2457 = vunpack.c.l.b16 %v2322
      %v2458 = vunpack.c.l.b16 %v2323
      %v2459 = vunpack.c.l.b16 %v2324
      %v2460 = vunpack.c.l.b16 %v2325
      %v2461 = vunpack.c.l.b16 %v2326
      %v2462 = vunpack.c.l.b16 %v2327
      %v2463 = vunpack.c.l.b16 %v2328
      %v2464 = vunpack.c.l.b16 %v2329
      %v2465 = vunpack.c.l.b16 %v2330
      %v2466 = vunpack.c.l.b16 %v2331
      %v2467 = vunpack.c.l.b16 %v2332
      %v2468 = vunpack.c.l.b16 %v2333
      %v2469 = vunpack.c.l.b16 %v2334
      %v2470 = vunpack.c.l.b16 %v2335
      %v2471 = vunpack.c.l.b16 %v2336
      %v2472 = vunpack.c.l.b16 %v2337
      %v2473 = vunpack.c.l.b16 %v2338
      %v2474 = vunpack.c.l.b16 %v2339
      %v2475 = vunpack.c.l.b16 %v2340
      %v2476 = vunpack.c.l.b16 %v2341
      %v2477 = vunpack.c.l.b16 %v2342
      %v2478 = vunpack.c.l.b16 %v2343
      %v2479 = vunpack.c.l.b16 %v2344
      %v2480 = vunpack.c.l.b16 %v2345
      %v2481 = vunpack.c.l.b16 %v2346
      %v2482 = vunpack.c.l.b16 %v2347
      %v2483 = vunpack.c.l.b16 %v2348
      %v2484 = vunpack.c.l.b16 %v2349
      %v2485 = vunpack.c.l.b16 %v2350
      %v2486 = vunpack.c.l.b16 %v2351
      %v2487 = vunpack.c.l.b16 %v2352
      %v2488 = vunpack.c.l.b16 %v2353
      %v2489 = vunpack.c.l.b16 %v2354
      %v2490 = vunpack.c.l.b16 %v2355
      %v2491 = vunpack.c.l.b16 %v2356
      %v2492 = vunpack.c.l.b16 %v2357
      %v2493 = vunpack.c.l.b16 %v2358
      %v2494 = vunpack.c.l.b16 %v2359
      %v2495 = vunpack.c.l.b16 %v2360
      %v2496 = vunpack.c.l.b16 %v2361
      %v2497 = vunpack.c.l.b16 %v2362
      %v2498 = vunpack.c.l.b16 %v2363
      %v2499 = vunpack.c.l.b16 %v2364
      %v2500 = vunpack.c.l.b16 %v2365
      %v2501 = vunpack.c.l.b16 %v2366
      %v2502 = vunpack.c.l.b16 %v2367
      %v2503 = vunpack.c.l.b16 %v2368
      %v2504 = vpack.c.b16 %v2441, %v2440
      %v2505 = vpack.c.b16 %v2443, %v2442
      %v2506 = vpack.c.b16 %v2445, %v2444
      %v2507 = vpack.c.b16 %v2447, %v2446
      %v2508 = vpack.c.b16 %v2449, %v2448
      %v2509 = vpack.c.b16 %v2451, %v2450
      %v2510 = vpack.c.b16 %v2453, %v2452
      %v2511 = vpack.c.b16 %v2455, %v2454
      %v2512 = vpack.c.b16 %v2457, %v2456
      %v2513 = vpack.c.b16 %v2459, %v2458
      %v2514 = vpack.c.b16 %v2461, %v2460
      %v2515 = vpack.c.b16 %v2463, %v2462
      %v2516 = vpack.c.b16 %v2465, %v2464
      %v2517 = vpack.c.b16 %v2467, %v2466
      %v2518 = vpack.c.b16 %v2469, %v2468
      %v2519 = vpack.c.b16 %v2471, %v2470
      %v2520 = vpack.c.b16 %v2473, %v2472
      %v2521 = vpack.c.b16 %v2475, %v2474
      %v2522 = vpack.c.b16 %v2477, %v2476
      %v2523 = vpack.c.b16 %v2479, %v2478
      %v2524 = vpack.c.b16 %v2481, %v2480
      %v2525 = vpack.c.b16 %v2483, %v2482
      %v2526 = vpack.c.b16 %v2485, %v2484
      %v2527 = vpack.c.b16 %v2487, %v2486
      %v2528 = vpack.c.b16 %v2489, %v2488
      %v2529 = vpack.c.b16 %v2491, %v2490
      %v2530 = vpack.c.b16 %v2493, %v2492
      %v2531 = vpack.c.b16 %v2495, %v2494
      %v2532 = vpack.c.b16 %v2497, %v2496
      %v2533 = vpack.c.b16 %v2499, %v2498
      %v2534 = vpack.c.b16 %v2501, %v2500
      %v2535 = vpack.c.b16 %v2503, %v2502
      %2568 = vmatprep.subr.bf16.mxu0 0
      %2569 = vmatpush1.bf16.msra.mxu0 %v2511
      %2570 = vmatprep.subr.bf16.mxu0 0
      %2571 = vmatpush1.bf16.msra.mxu0 %v2510
      %2572 = vmatprep.subr.bf16.mxu0 0
      %2573 = vmatpush1.bf16.msra.mxu0 %v2509
      %2574 = vmatprep.subr.bf16.mxu0 0
      %2575 = vmatpush1.bf16.msra.mxu0 %v2508
      %2576 = vmatprep.subr.bf16.mxu0 0
      %2577 = vmatpush1.bf16.msra.mxu0 %v2507
      %2578 = vmatprep.subr.bf16.mxu0 0
      %2579 = vmatpush1.bf16.msra.mxu0 %v2506
      %2580 = vmatprep.subr.bf16.mxu0 0
      %2581 = vmatpush1.bf16.msra.mxu0 %v2505
      %2582 = vmatprep.subr.bf16.mxu0 0
      %2583 = vmatpush1.bf16.msra.mxu0 %v2504
      %2584 = vmatprep.subr.bf16.mxu0 0
      %2585 = vmatpush2.bf16.msra.mxu0 %v2519
      %2586 = vmatprep.subr.bf16.mxu0 0
      %2587 = vmatpush2.bf16.msra.mxu0 %v2518
      %2588 = vmatprep.subr.bf16.mxu0 0
      %2589 = vmatpush2.bf16.msra.mxu0 %v2517
      %2590 = vmatprep.subr.bf16.mxu0 0
      %2591 = vmatpush2.bf16.msra.mxu0 %v2516
      %2592 = vmatprep.subr.bf16.mxu0 0
      %2593 = vmatpush2.bf16.msra.mxu0 %v2515
      %2594 = vmatprep.subr.bf16.mxu0 0
      %2595 = vmatpush2.bf16.msra.mxu0 %v2514
      %2596 = vmatprep.subr.bf16.mxu0 0
      %2597 = vmatpush2.bf16.msra.mxu0 %v2513
      %2598 = vmatprep.subr.bf16.mxu0 0
      %2599 = vmatpush2.bf16.msra.mxu0 %v2512
      %2600 = vmatprep.mubr.bf16.mxu0 %v2290
      %2601 = vmatmul.mubr.bf16.gmra.mxu0 %v2289
      %v2602 = vpop.f32.mrf.mxu0
      %v2603 = vadd.f32 %v2374, %v2602
      %v2604 = vpop.f32.mrf.mxu0
      %v2605 = vpop.f32.mrf.mxu0
      %v2606 = vadd.f32 %v2374, %v2605
      %v2607 = vpop.f32.mrf.mxu0
      %2608 = vmatprep.mubr.bf16.mxu0 %v2294
      %2609 = vmatmul.mubr.bf16.gmra.mxu0 %v2293
      %v2610 = vpop.f32.mrf.mxu0
      %v2611 = vadd.f32 %v2374, %v2610
      %v2612 = vpop.f32.mrf.mxu0
      %v2613 = vpop.f32.mrf.mxu0
      %v2614 = vadd.f32 %v2374, %v2613
      %v2615 = vpop.f32.mrf.mxu0
      %2616 = vmatprep.mubr.bf16.mxu0 %v2298
      %2617 = vmatmul.mubr.bf16.gmra.mxu0 %v2297
      %v2618 = vpop.f32.mrf.mxu0
      %v2619 = vadd.f32 %v2374, %v2618
      %v2620 = vpop.f32.mrf.mxu0
      %v2621 = vpop.f32.mrf.mxu0
      %v2622 = vadd.f32 %v2374, %v2621
      %v2623 = vpop.f32.mrf.mxu0
      %2624 = vmatprep.mubr.bf16.mxu0 %v2302
      %2625 = vmatmul.mubr.bf16.gmra.mxu0 %v2301
      %v2626 = vpop.f32.mrf.mxu0
      %v2627 = vadd.f32 %v2374, %v2626
      %v2628 = vpop.f32.mrf.mxu0
      %v2629 = vpop.f32.mrf.mxu0
      %v2630 = vadd.f32 %v2374, %v2629
      %v2631 = vpop.f32.mrf.mxu0
      %2632 = vdwg.mxu0
      %2633 = vmatprep.subr.bf16.mxu0 0
      %2634 = vmatpush1.bf16.msra.mxu0 %v2527
      %2635 = vmatprep.subr.bf16.mxu0 0
      %2636 = vmatpush1.bf16.msra.mxu0 %v2526
      %2637 = vmatprep.subr.bf16.mxu0 0
      %2638 = vmatpush1.bf16.msra.mxu0 %v2525
      %2639 = vmatprep.subr.bf16.mxu0 0
      %2640 = vmatpush1.bf16.msra.mxu0 %v2524
      %2641 = vmatprep.subr.bf16.mxu0 0
      %2642 = vmatpush1.bf16.msra.mxu0 %v2523
      %2643 = vmatprep.subr.bf16.mxu0 0
      %2644 = vmatpush1.bf16.msra.mxu0 %v2522
      %2645 = vmatprep.subr.bf16.mxu0 0
      %2646 = vmatpush1.bf16.msra.mxu0 %v2521
      %2647 = vmatprep.subr.bf16.mxu0 0
      %2648 = vmatpush1.bf16.msra.mxu0 %v2520
      %2649 = vmatprep.subr.bf16.mxu0 0
      %2650 = vmatpush2.bf16.msra.mxu0 %v2535
      %2651 = vmatprep.subr.bf16.mxu0 0
      %2652 = vmatpush2.bf16.msra.mxu0 %v2534
      %2653 = vmatprep.subr.bf16.mxu0 0
      %2654 = vmatpush2.bf16.msra.mxu0 %v2533
      %2655 = vmatprep.subr.bf16.mxu0 0
      %2656 = vmatpush2.bf16.msra.mxu0 %v2532
      %2657 = vmatprep.subr.bf16.mxu0 0
      %2658 = vmatpush2.bf16.msra.mxu0 %v2531
      %2659 = vmatprep.subr.bf16.mxu0 0
      %2660 = vmatpush2.bf16.msra.mxu0 %v2530
      %2661 = vmatprep.subr.bf16.mxu0 0
      %2662 = vmatpush2.bf16.msra.mxu0 %v2529
      %2663 = vmatprep.subr.bf16.mxu0 0
      %2664 = vmatpush2.bf16.msra.mxu0 %v2528
      %2665 = vmatprep.mubr.bf16.mxu0 %v2292
      %2666 = vmatmul.mubr.bf16.gmra.mxu0 %v2291
      %v2667 = vpop.f32.mrf.mxu0
      %v2668 = vadd.f32 %v2603, %v2667
      %v2669 = vpop.f32.mrf.mxu0
      %v2670 = vpop.f32.mrf.mxu0
      %v2671 = vadd.f32 %v2606, %v2670
      %v2672 = vpop.f32.mrf.mxu0
      %2673 = vmatprep.mubr.bf16.mxu0 %v2296
      %2674 = vmatmul.mubr.bf16.gmra.mxu0 %v2295
      %v2675 = vpop.f32.mrf.mxu0
      %v2676 = vadd.f32 %v2611, %v2675
      %v2677 = vpop.f32.mrf.mxu0
      %v2678 = vpop.f32.mrf.mxu0
      %v2679 = vadd.f32 %v2614, %v2678
      %v2680 = vpop.f32.mrf.mxu0
      %2681 = vmatprep.mubr.bf16.mxu0 %v2300
      %2682 = vmatmul.mubr.bf16.gmra.mxu0 %v2299
      %v2683 = vpop.f32.mrf.mxu0
      %v2684 = vadd.f32 %v2619, %v2683
      %v2685 = vpop.f32.mrf.mxu0
      %v2686 = vpop.f32.mrf.mxu0
      %v2687 = vadd.f32 %v2622, %v2686
      %v2688 = vpop.f32.mrf.mxu0
      %2689 = vmatprep.mubr.bf16.mxu0 %v2304
      %2690 = vmatmul.mubr.bf16.gmra.mxu0 %v2303
      %v2691 = vpop.f32.mrf.mxu0
      %v2692 = vadd.f32 %v2627, %v2691
      %v2693 = vpop.f32.mrf.mxu0
      %v2694 = vpop.f32.mrf.mxu0
      %v2695 = vadd.f32 %v2630, %v2694
      %v2696 = vpop.f32.mrf.mxu0
      %2697 = vdwg.mxu0
      %v2698 = vadd.f32 %v910, %v2668
      %v2699 = vadd.f32 %v909, %v2671
      %v2700 = vadd.f32 %v908, %v2676
      %v2701 = vadd.f32 %v907, %v2679
      %v2702 = vadd.f32 %v906, %v2684
      %v2703 = vadd.f32 %v905, %v2687
      %v2704 = vadd.f32 %v904, %v2692
      %v2705 = vadd.f32 %v903, %v2695
      %2706 = vst [vmem:[%s300] sm:$0xff] %v2698
      %2707 = vst [vmem:[%s300 + $0x8] sm:$0xff] %v2699
      %2708 = vst [vmem:[%s300 + $0x10] sm:$0xff] %v2700
      %2709 = vst [vmem:[%s300 + $0x18] sm:$0xff] %v2701
      %2710 = vst [vmem:[%s300 + $0x20] sm:$0xff] %v2702
      %2711 = vst [vmem:[%s300 + $0x28] sm:$0xff] %v2703
      %2712 = vst [vmem:[%s300 + $0x30] sm:$0xff] %v2704
      %2713 = vst [vmem:[%s300 + $0x38] sm:$0xff] %v2705
      %s2714 = smul.u32 8, %s23
      %p2715 = scmp.lt.s32.totalorder %s22, 1
      %s2716 = scalar_select %p2715, %s22, 1
      %p2717 = scmp.lt.s32.totalorder %s2714, 31
      %s2718 = scalar_select %p2717, %s2714, 31
      %s2719 = smul.addr %s2716, 32
      %s2720 = sadd.s32 %s2718, %s2719
      %s2721 = smul.addr %s2720, 8
      %s2722 = scalar_lea.vmem %s7, %s2721
      // Predicated region
      $region49: #{convnext_block_forward.1} parent=47 // pred_check
        %p2723 = pneg %p202
      $region50: #{convnext_block_forward.1} parent=47 // pred_check_branch
        %2725 = sbr.rel (%p2723) target = $region52
      $region51: #{convnext_block_forward.1} parent=47 // pred_region
        %s2726 = smul.u32 8, %s23
      $region52: #{convnext_block_forward.1} parent=47 // pred_fallthru
        _
    $region48: #{convnext_block_forward.1} parent=5 // pred_fallthru
      _
    %p2727 = scmp.le.s32.totalorder 2, %s13
    // Predicated region
    $region53: #{convnext_block_forward.1} parent=5 // pred_check
      %p2728 = pneg %p2727
    $region54: #{convnext_block_forward.1} parent=5 // pred_check_branch
      %2730 = sbr.rel (%p2728) target = $region56
    $region55: #{convnext_block_forward.1} parent=5 // pred_region
      %s2731 = ssub.s32 %s13, 2
      // Predicated region
      $region57: #{convnext_block_forward.1} parent=55 // pred_check
        %p2732 = pneg %p208
      $region58: #{convnext_block_forward.1} parent=55 // pred_check_branch
        %2734 = sbr.rel (%p2732) target = $region60
      $region59: #{convnext_block_forward.1} parent=55 // pred_region
        %s2735 = smul.u32 8, %s25
        %p2736 = scmp.lt.s32.totalorder %s24, 1
        %s2737 = scalar_select %p2736, %s24, 1
        %p2738 = scmp.lt.s32.totalorder %s2735, 31
        %s2739 = scalar_select %p2738, %s2735, 31
        %s2740 = smul.addr %s2737, 32
        %s2741 = sadd.s32 %s2739, %s2740
        %s2742 = smul.addr %s2741, 8
        %s2743 = scalar_lea.vmem %s7, %s2742
      $region60: #{convnext_block_forward.1} parent=55 // pred_fallthru
        _
    $region56: #{convnext_block_forward.1} parent=5 // pred_fallthru
      _
  $region6: #{convnext_block_forward.1} parent=0 // loop_footer
    %s17 = sadd.s32 1, %s13
  $region7: #{convnext_block_forward.1} parent=0 // loop_footer_branch
    %12 = sbr.rel target = $region3
  $region8: #{convnext_block_forward.1} parent=0 // loop_exit
    _

// kernel: mul.17
$region0: #{mul.17}
  #allocation2 [shape = 's32[1]{0}', space=sflag, size = 0x4, scoped, tag = 'scoped memory for mul.17']
  %s0 = inlined_call_operand.hbm [shape: f32[32], index: 0, kind: input, shape index: {}]
  %s1 = inlined_call_operand.vmem [shape: f32[32], index: 1, kind: input, shape index: {}]
  %s2 = inlined_call_operand.vmem [shape: f32[32], index: 2, kind: output, shape index: {}]
  $region1: #{mul.17} parent=0
    #allocation0 [shape = 'u8[512]{0}', space=vmem, size = 0x400, scoped, tag = 'operand span for operand 0']
    #allocation1 [shape = 's32[1]{0}', space=sflag, size = 0x4, scoped, tag = 'scoped memory for mul.17']
    %3 = vsyncpa [#allocation1], 0
    %s5 = ssub.s32 16, 16
    %6 = vsyncadd [#allocation1], %s5
    %s8 = sshll.u32 [#allocation0], 4
    %s9 = int_to_ptr.vmem [resolvable:$true] %s8
    %11 = dma.hbm_to_vmem [thread:$0]  %s0, 16, %s9, [#allocation1]
    %12 = dma.done [#allocation1], 16
    %v13 = vld [vmem:[#allocation0] sm:$0x1]
    %v14 = vld [vmem:[%s1] sm:$0x1]
    %15 = xla_tuple %v13, %v14
    %16 = xla_tuple %15
    %v17 = vmul.f32 %v13, %v14
    %18 = xla_tuple %v17
    %19 = vst [vmem:[%s2] sm:$0x1] %v17
    %20 = vsyncpa [#allocation1], 1

// kernel: convnext_block_forward.1
$region0: #{convnext_block_forward.1}
  #allocation0 [shape = 'u32[]', space=smem, size = 0x4, offset = 0x4, fixed_abs, tag = 'smem constant byte address 0x4 - core index']
  #allocation1 [shape = 'u32[144,128]{1,0:T(1,128)}', space=vmem, size = 0x12000, scoped, tag = 'internal scratch']
  %s0 = inlined_call_operand.vmem [shape: f32[2,528,128], index: 0, kind: input, shape index: {}]
  %s1 = inlined_call_operand.vmem [shape: f32[49,128], index: 1, kind: input, shape index: {}]
  %s2 = inlined_call_operand.vmem [shape: f32[1,128], index: 2, kind: input, shape index: {}]
  %s3 = inlined_call_operand.vmem [shape: bf16[128,512], index: 3, kind: input, shape index: {}]
  %s4 = inlined_call_operand.vmem [shape: f32[1,512], index: 4, kind: input, shape index: {}]
  %s5 = inlined_call_operand.vmem [shape: bf16[512,128], index: 5, kind: input, shape index: {}]
  %s6 = inlined_call_operand.vmem [shape: f32[1,128], index: 6, kind: input, shape index: {}]
  %s7 = inlined_call_operand.vmem [shape: f32[2,256,128], index: 7, kind: output, shape index: {}]
  %s8 = sld [smem:[#allocation0]]
  $region61: #{convnext_block_forward.1} parent=0
    _
  %s10 = ssub.s32 1, %s8
  %s11 = scalar_select 0, %s10, %s8
  loop: start=0, step=1, limit=10
  $region2: #{convnext_block_forward.1} parent=0 // loop_pre_header
    _
  $region3: #{convnext_block_forward.1} parent=0 // loop_header
    %s13 = sphi 0, %s17
    %p14 = scmp.ge.s32.totalorder %s13, 10
    %s20 = sphi 0, %s32
    %s21 = sphi 0, %s28
    %s22 = sphi 0, %s20
    %s23 = sphi 0, %s21
    %s24 = sphi 0, %s22
    %s25 = sphi 0, %s23
    %s35 = sphi 0, %s37
    %s38 = sphi 0, %s35
    %s39 = sphi 0, %s38
    %s55 = sphi 0, %s39
    %s59 = sphi 0, %s59
    %s61 = sphi 0, %s59
    %s62 = sphi 0, %s61
    %s76 = sphi 0, %s62
    %s80 = sphi 0, %s80
    %s82 = sphi 0, %s80
    %s83 = sphi 0, %s82
    %s97 = sphi 0, %s83
    %s101 = sphi 0, %s101
    %s103 = sphi 0, %s101
    %s104 = sphi 0, %s103
    %s118 = sphi 0, %s104
    %s122 = sphi 0, %s122
    %s124 = sphi 0, %s122
    %s125 = sphi 0, %s124
    %s139 = sphi 0, %s125
    %s143 = sphi 0, %s143
    %s145 = sphi 0, %s143
    %s146 = sphi 0, %s145
    %s160 = sphi 0, %s146
    %s164 = sphi 0, %s164
    %s166 = sphi 0, %s164
    %s167 = sphi 0, %s166
    %s181 = sphi 0, %s167
    %s189 = sphi 0, %s191
    %s192 = sphi 0, %s189
    %s193 = sphi 0, %s192
    %s209 = sphi 0, %s193
  $region4: #{convnext_block_forward.1} parent=0 // loop_header_branch
    %16 = sbr.rel (%p14) target = $region8
  $region5: #{convnext_block_forward.1} parent=0 // loop_body
    %s18 = ssub.s32 %s13, 1
    %s19 = ssub.s32 %s13, 2
    %s26 = sadd.s32 1, %s21
    %p27 = scmp.ge.s32.totalorder %s26, 4
    %s28 = scalar_select %p27, 0, %s26
    %s29 = sadd.s32 1, %s20
    %s30 = scalar_select %p27, %s29, %s20
    %p31 = scmp.ge.s32.totalorder %s30, 2
    %s32 = scalar_select %p31, 0, %s30
    %s33 = ssub.s32 %s20, %s32
    %p34 = scmp.eq.s32.totalorder %s33, 0
    %s36 = sadd.s32 %s35, 1
    %s37 = scalar_select %p34, %s35, %s36
    %p40 = pneg %p34
    %p41 = scmp.eq.s32.totalorder %s13, 7
    %p42 = por %p40, %p41
    %p43 = scmp.ne.s32.totalorder %s35, %s38
    %p44 = scmp.eq.s32.totalorder %s13, 0
    %p45 = por %p43, %p44
    %p46 = scmp.ne.s32.totalorder %s35, %s38
    %p47 = scmp.eq.s32.totalorder %s18, 7
    %p48 = por %p46, %p47
    %p49 = scmp.ne.s32.totalorder %s38, %s39
    %p50 = scmp.eq.s32.totalorder %s18, 0
    %p51 = por %p49, %p50
    %p52 = scmp.ne.s32.totalorder %s38, %s39
    %p53 = scmp.eq.s32.totalorder %s19, 7
    %p54 = por %p52, %p53
    %p56 = scmp.ne.s32.totalorder %s39, %s55
    %p57 = scmp.eq.s32.totalorder %s19, 0
    %p58 = por %p56, %p57
    %s60 = sadd.s32 %s59, 1
    %p63 = scmp.eq.s32.totalorder %s13, 7
    %p64 = scmp.ne.s32.totalorder %s59, %s61
    %p65 = scmp.eq.s32.totalorder %s13, 0
    %p66 = por %p64, %p65
    %p67 = scmp.ne.s32.totalorder %s59, %s61
    %p68 = scmp.eq.s32.totalorder %s18, 7
    %p69 = por %p67, %p68
    %p70 = scmp.ne.s32.totalorder %s61, %s62
    %p71 = scmp.eq.s32.totalorder %s18, 0
    %p72 = por %p70, %p71
    %p73 = scmp.ne.s32.totalorder %s61, %s62
    %p74 = scmp.eq.s32.totalorder %s19, 7
    %p75 = por %p73, %p74
    %p77 = scmp.ne.s32.totalorder %s62, %s76
    %p78 = scmp.eq.s32.totalorder %s19, 0
    %p79 = por %p77, %p78
    %s81 = sadd.s32 %s80, 1
    %p84 = scmp.eq.s32.totalorder %s13, 7
    %p85 = scmp.ne.s32.totalorder %s80, %s82
    %p86 = scmp.eq.s32.totalorder %s13, 0
    %p87 = por %p85, %p86
    %p88 = scmp.ne.s32.totalorder %s80, %s82
    %p89 = scmp.eq.s32.totalorder %s18, 7
    %p90 = por %p88, %p89
    %p91 = scmp.ne.s32.totalorder %s82, %s83
    %p92 = scmp.eq.s32.totalorder %s18, 0
    %p93 = por %p91, %p92
    %p94 = scmp.ne.s32.totalorder %s82, %s83
    %p95 = scmp.eq.s32.totalorder %s19, 7
    %p96 = por %p94, %p95
    %p98 = scmp.ne.s32.totalorder %s83, %s97
    %p99 = scmp.eq.s32.totalorder %s19, 0
    %p100 = por %p98, %p99
    %s102 = sadd.s32 %s101, 1
    %p105 = scmp.eq.s32.totalorder %s13, 7
    %p106 = scmp.ne.s32.totalorder %s101, %s103
    %p107 = scmp.eq.s32.totalorder %s13, 0
    %p108 = por %p106, %p107
    %p109 = scmp.ne.s32.totalorder %s101, %s103
    %p110 = scmp.eq.s32.totalorder %s18, 7
    %p111 = por %p109, %p110
    %p112 = scmp.ne.s32.totalorder %s103, %s104
    %p113 = scmp.eq.s32.totalorder %s18, 0
    %p114 = por %p112, %p113
    %p115 = scmp.ne.s32.totalorder %s103, %s104
    %p116 = scmp.eq.s32.totalorder %s19, 7
    %p117 = por %p115, %p116
    %p119 = scmp.ne.s32.totalorder %s104, %s118
    %p120 = scmp.eq.s32.totalorder %s19, 0
    %p121 = por %p119, %p120
    %s123 = sadd.s32 %s122, 1
    %p126 = scmp.eq.s32.totalorder %s13, 7
    %p127 = scmp.ne.s32.totalorder %s122, %s124
    %p128 = scmp.eq.s32.totalorder %s13, 0
    %p129 = por %p127, %p128
    %p130 = scmp.ne.s32.totalorder %s122, %s124
    %p131 = scmp.eq.s32.totalorder %s18, 7
    %p132 = por %p130, %p131
    %p133 = scmp.ne.s32.totalorder %s124, %s125
    %p134 = scmp.eq.s32.totalorder %s18, 0
    %p135 = por %p133, %p134
    %p136 = scmp.ne.s32.totalorder %s124, %s125
    %p137 = scmp.eq.s32.totalorder %s19, 7
    %p138 = por %p136, %p137
    %p140 = scmp.ne.s32.totalorder %s125, %s139
    %p141 = scmp.eq.s32.totalorder %s19, 0
    %p142 = por %p140, %p141
    %s144 = sadd.s32 %s143, 1
    %p147 = scmp.eq.s32.totalorder %s13, 7
    %p148 = scmp.ne.s32.totalorder %s143, %s145
    %p149 = scmp.eq.s32.totalorder %s13, 0
    %p150 = por %p148, %p149
    %p151 = scmp.ne.s32.totalorder %s143, %s145
    %p152 = scmp.eq.s32.totalorder %s18, 7
    %p153 = por %p151, %p152
    %p154 = scmp.ne.s32.totalorder %s145, %s146
    %p155 = scmp.eq.s32.totalorder %s18, 0
    %p156 = por %p154, %p155
    %p157 = scmp.ne.s32.totalorder %s145, %s146
    %p158 = scmp.eq.s32.totalorder %s19, 7
    %p159 = por %p157, %p158
    %p161 = scmp.ne.s32.totalorder %s146, %s160
    %p162 = scmp.eq.s32.totalorder %s19, 0
    %p163 = por %p161, %p162
    %s165 = sadd.s32 %s164, 1
    %p168 = scmp.eq.s32.totalorder %s13, 7
    %p169 = scmp.ne.s32.totalorder %s164, %s166
    %p170 = scmp.eq.s32.totalorder %s13, 0
    %p171 = por %p169, %p170
    %p172 = scmp.ne.s32.totalorder %s164, %s166
    %p173 = scmp.eq.s32.totalorder %s18, 7
    %p174 = por %p172, %p173
    %p175 = scmp.ne.s32.totalorder %s166, %s167
    %p176 = scmp.eq.s32.totalorder %s18, 0
    %p177 = por %p175, %p176
    %p178 = scmp.ne.s32.totalorder %s166, %s167
    %p179 = scmp.eq.s32.totalorder %s19, 7
    %p180 = por %p178, %p179
    %p182 = scmp.ne.s32.totalorder %s167, %s181
    %p183 = scmp.eq.s32.totalorder %s19, 0
    %p184 = por %p182, %p183
    %s185 = ssub.s32 %s20, %s32
    %s186 = ssub.s32 %s21, %s28
    %s187 = sor.u32 %s185, %s186
    %p188 = scmp.eq.s32.totalorder %s187, 0
    %s190 = sadd.s32 %s189, 1
    %s191 = scalar_select %p188, %s189, %s190
    %p194 = pneg %p188
    %p195 = scmp.eq.s32.totalorder %s13, 7
    %p196 = por %p194, %p195
    %p197 = scmp.ne.s32.totalorder %s189, %s192
    %p198 = scmp.eq.s32.totalorder %s13, 0
    %p199 = por %p197, %p198
    %p200 = scmp.ne.s32.totalorder %s189, %s192
    %p201 = scmp.eq.s32.totalorder %s18, 7
    %p202 = por %p200, %p201
    %p203 = scmp.ne.s32.totalorder %s192, %s193
    %p204 = scmp.eq.s32.totalorder %s18, 0
    %p205 = por %p203, %p204
    %p206 = scmp.ne.s32.totalorder %s192, %s193
    %p207 = scmp.eq.s32.totalorder %s19, 7
    %p208 = por %p206, %p207
    %p210 = scmp.ne.s32.totalorder %s193, %s209
    %p211 = scmp.eq.s32.totalorder %s19, 0
    %p212 = por %p210, %p211
    %p213 = scmp.le.s32.totalorder 1, %s13
    %p214 = scmp.lt.s32.totalorder %s13, 9
    %p215 = pnand %p213, %p214
    %p216 = pneg %p215
    // Predicated region
    $region9: #{convnext_block_forward.1} parent=5 // pred_check
      _
    $region10: #{convnext_block_forward.1} parent=5 // pred_check_branch
      %218 = sbr.rel (%p215) target = $region12
    $region11: #{convnext_block_forward.1} parent=5 // pred_region
      %s219 = ssub.s32 %s13, 1
      // Predicated region
      $region13: #{convnext_block_forward.1} parent=11 // pred_check
        %p220 = pneg %p72
      $region14: #{convnext_block_forward.1} parent=11 // pred_check_branch
        %222 = sbr.rel (%p220) target = $region16
      $region15: #{convnext_block_forward.1} parent=11 // pred_region
        _
      $region16: #{convnext_block_forward.1} parent=11 // pred_fallthru
        _
      // Predicated region
      $region17: #{convnext_block_forward.1} parent=11 // pred_check
        %p223 = pneg %p93
      $region18: #{convnext_block_forward.1} parent=11 // pred_check_branch
        %225 = sbr.rel (%p223) target = $region20
      $region19: #{convnext_block_forward.1} parent=11 // pred_region
        _
      $region20: #{convnext_block_forward.1} parent=11 // pred_fallthru
        _
      // Predicated region
      $region21: #{convnext_block_forward.1} parent=11 // pred_check
        %p226 = pneg %p114
      $region22: #{convnext_block_forward.1} parent=11 // pred_check_branch
        %228 = sbr.rel (%p226) target = $region24
      $region23: #{convnext_block_forward.1} parent=11 // pred_region
        _
      $region24: #{convnext_block_forward.1} parent=11 // pred_fallthru
        _
      // Predicated region
      $region25: #{convnext_block_forward.1} parent=11 // pred_check
        %p229 = pneg %p135
      $region26: #{convnext_block_forward.1} parent=11 // pred_check_branch
        %231 = sbr.rel (%p229) target = $region28
      $region27: #{convnext_block_forward.1} parent=11 // pred_region
        _
      $region28: #{convnext_block_forward.1} parent=11 // pred_fallthru
        _
      // Predicated region
      $region29: #{convnext_block_forward.1} parent=11 // pred_check
        %p232 = pneg %p156
      $region30: #{convnext_block_forward.1} parent=11 // pred_check_branch
        %234 = sbr.rel (%p232) target = $region32
      $region31: #{convnext_block_forward.1} parent=11 // pred_region
        _
      $region32: #{convnext_block_forward.1} parent=11 // pred_fallthru
        _
      // Predicated region
      $region33: #{convnext_block_forward.1} parent=11 // pred_check
        %p235 = pneg %p177
      $region34: #{convnext_block_forward.1} parent=11 // pred_check_branch
        %237 = sbr.rel (%p235) target = $region36
      $region35: #{convnext_block_forward.1} parent=11 // pred_region
        _
      $region36: #{convnext_block_forward.1} parent=11 // pred_fallthru
        _
    $region12: #{convnext_block_forward.1} parent=5 // pred_fallthru
      _
    %p238 = scmp.lt.s32.totalorder %s13, 8
    // Predicated region
    $region37: #{convnext_block_forward.1} parent=5 // pred_check
      %p239 = pneg %p238
    $region38: #{convnext_block_forward.1} parent=5 // pred_check_branch
      %241 = sbr.rel (%p239) target = $region40
    $region39: #{convnext_block_forward.1} parent=5 // pred_region
      // Predicated region
      $region41: #{convnext_block_forward.1} parent=39 // pred_check
        %p242 = pneg %p45
      $region42: #{convnext_block_forward.1} parent=39 // pred_check_branch
        %244 = sbr.rel (%p242) target = $region44
      $region43: #{convnext_block_forward.1} parent=39 // pred_region
        %p245 = scmp.lt.s32.totalorder %s20, 1
        %s246 = scalar_select %p245, %s20, 1
        %s247 = smul.addr %s246, 66
        %s248 = smul.addr %s247, 8
        %s249 = scalar_lea.vmem %s0, %s248
      $region44: #{convnext_block_forward.1} parent=39 // pred_fallthru
        _
    $region40: #{convnext_block_forward.1} parent=5 // pred_fallthru
      _
    %p250 = scmp.le.s32.totalorder 1, %s13
    %p251 = scmp.lt.s32.totalorder %s13, 9
    %p252 = pnand %p250, %p251
    %p253 = pneg %p252
    // Predicated region
    $region45: #{convnext_block_forward.1} parent=5 // pred_check
      _
    $region46: #{convnext_block_forward.1} parent=5 // pred_check_branch
      %255 = sbr.rel (%p252) target = $region48
    $region47: #{convnext_block_forward.1} parent=5 // pred_region
      %s256 = ssub.s32 %s13, 1
      %p257 = scmp.lt.s32.totalorder %s22, 1
      %s258 = scalar_select %p257, %s22, 1
      %s259 = smul.addr %s258, 66
      %s260 = smul.addr %s259, 8
      %s261 = scalar_lea.vmem %s0, %s260
      %p262 = pneg %p51
      %p263 = pneg %p48
      %p264 = pneg %p72
      %p265 = pneg %p69
      %p266 = pneg %p93
      %p267 = pneg %p90
      %p268 = pneg %p114
      %p269 = pneg %p111
      %p270 = pneg %p135
      %p271 = pneg %p132
      %p272 = pneg %p156
      %p273 = pneg %p153
      %p274 = pneg %p177
      %p275 = pneg %p174
      %p276 = pneg %p205
      %p277 = pneg %p202
      %s278 = smul.u32 8, %s23
      %p279 = scmp.lt.s32.totalorder %s22, 1
      %s280 = scalar_select %p279, %s22, 1
      %p281 = scmp.lt.s32.totalorder %s278, 31
      %s282 = scalar_select %p281, %s278, 31
      %s283 = smul.addr %s280, 32
      %s284 = sadd.s32 %s282, %s283
      %s285 = smul.addr %s284, 8
      %s286 = scalar_lea.vmem %s7, %s285
      %p287 = scmp.lt.s32.totalorder %s22, 1
      %s288 = scalar_select %p287, %s22, 1
      %s289 = smul.addr %s288, 66
      %s290 = smul.addr %s289, 8
      %s291 = scalar_lea.vmem %s0, %s290
      %s292 = smul.u32 8, %s23
      %p293 = scmp.lt.s32.totalorder %s22, 1
      %s294 = scalar_select %p293, %s22, 1
      %p295 = scmp.lt.s32.totalorder %s292, 31
      %s296 = scalar_select %p295, %s292, 31
      %s297 = smul.addr %s294, 32
      %s298 = sadd.s32 %s296, %s297
      %s299 = smul.addr %s298, 8
      %s300 = scalar_lea.vmem %s7, %s299
      %s301 = smul.u32 8, %s23
      %s303 = smul.u32 %s23, 96
      %s304 = scalar_lea.vmem %s291, %s303
      %v305 = vld [vmem:[%s304] sm:$0xff]
      %v306 = vld [vmem:[%s304 + $0x8] sm:$0xff]
      %v307 = vld [vmem:[%s304 + $0x10] sm:$0xff]
      %v308 = vld [vmem:[%s304 + $0x18] sm:$0xff]
      %v309 = vld [vmem:[%s304 + $0x20] sm:$0xff]
      %v310 = vld [vmem:[%s304 + $0x28] sm:$0xff]
      %v311 = vld [vmem:[%s304 + $0x30] sm:$0xff]
      %v312 = vld [vmem:[%s304 + $0x38] sm:$0xff]
      %v313 = vld [vmem:[%s304 + $0x40] sm:$0xff]
      %v314 = vld [vmem:[%s304 + $0x48] sm:$0xff]
      %v315 = vld [vmem:[%s304 + $0x50] sm:$0xff]
      %v316 = vld [vmem:[%s304 + $0x58] sm:$0xff]
      %v317 = vld [vmem:[%s304 + $0x60] sm:$0xff]
      %v318 = vld [vmem:[%s304 + $0x68] sm:$0xff]
      %v319 = vld [vmem:[%s304 + $0x70] sm:$0xff]
      %v320 = vld [vmem:[%s304 + $0x78] sm:$0xff]
      %v321 = vld [vmem:[%s304 + $0x80] sm:$0xff]
      %v322 = vld [vmem:[%s304 + $0x88] sm:$0xff]
      %v323 = vld [vmem:[%s304 + $0x90] sm:$0xff]
      %v324 = vld [vmem:[%s304 + $0x98] sm:$0xff]
      %v325 = vld [vmem:[%s304 + $0xa0] sm:$0xff]
      %v326 = vld [vmem:[%s304 + $0xa8] sm:$0xff]
      %v327 = vld [vmem:[%s304 + $0xb0] sm:$0xff]
      %v328 = vld [vmem:[%s304 + $0xb8] sm:$0xff]
      %v329 = vld [vmem:[%s304 + $0xc0] sm:$0xff]
      %v330 = vld [vmem:[%s304 + $0xc8] sm:$0xff]
      %v331 = vld [vmem:[%s304 + $0xd0] sm:$0xff]
      %v332 = vld [vmem:[%s304 + $0xd8] sm:$0xff]
      %v333 = vld [vmem:[%s304 + $0xe0] sm:$0xff]
      %v334 = vld [vmem:[%s304 + $0xe8] sm:$0xff]
      %v335 = vld [vmem:[%s1] sm:$0xff]
      %v336 = vld [vmem:[%s1 + $0x8] sm:$0xff]
      %v337 = vld [vmem:[%s1 + $0x10] sm:$0xff]
      %v338 = vld [vmem:[%s1 + $0x18] sm:$0xff]
      %v339 = vld [vmem:[%s1 + $0x20] sm:$0xff]
      %v340 = vld [vmem:[%s1 + $0x28] sm:$0xff]
      %v341 = vld [vmem:[%s1 + $0x30] sm:$0x1]
      %v342 = vlaneseq
      %v343 = vshrl.u32 %v342, 7
      %v344 = vsub.s32 0, %v343
      %v345 = vrot.slane %v335, %v344
      %v346 = vmul.f32 %v305, %v345
      %v347 = vmul.f32 %v306, %v345
      %v348 = vmul.f32 %v308, %v345
      %v349 = vmul.f32 %v309, %v345
      %v350 = vmul.f32 %v311, %v345
      %v351 = vmul.f32 %v312, %v345
      %v352 = vmul.f32 %v314, %v345
      %v353 = vmul.f32 %v315, %v345
      %v354 = vadd.f32 %v346, 0.0
      %v355 = vadd.f32 %v347, 0.0
      %v356 = vadd.f32 %v348, 0.0
      %v357 = vadd.f32 %v349, 0.0
      %v358 = vadd.f32 %v350, 0.0
      %v359 = vadd.f32 %v351, 0.0
      %v360 = vadd.f32 %v352, 0.0
      %v361 = vadd.f32 %v353, 0.0
      %v362 = vlaneseq
      %v363 = vshrl.u32 %v362, 7
      %v364 = vsub.s32 7, %v363
      %v365 = vrot.slane %v335, %v364
      %v366 = vmul.f32 %v308, %v365
      %v367 = vmul.f32 %v309, %v365
      %v368 = vmul.f32 %v311, %v365
      %v369 = vmul.f32 %v312, %v365
      %v370 = vmul.f32 %v314, %v365
      %v371 = vmul.f32 %v315, %v365
      %v372 = vmul.f32 %v317, %v365
      %v373 = vmul.f32 %v318, %v365
      %v374 = vadd.f32 %v354, %v366
      %v375 = vadd.f32 %v355, %v367
      %v376 = vadd.f32 %v356, %v368
      %v377 = vadd.f32 %v357, %v369
      %v378 = vadd.f32 %v358, %v370
      %v379 = vadd.f32 %v359, %v371
      %v380 = vadd.f32 %v360, %v372
      %v381 = vadd.f32 %v361, %v373
      %v382 = vlaneseq
      %v383 = vshrl.u32 %v382, 7
      %v384 = vsub.s32 6, %v383
      %v385 = vrot.slane %v336, %v384
      %v386 = vmul.f32 %v311, %v385
      %v387 = vmul.f32 %v312, %v385
      %v388 = vmul.f32 %v314, %v385
      %v389 = vmul.f32 %v315, %v385
      %v390 = vmul.f32 %v317, %v385
      %v391 = vmul.f32 %v318, %v385
      %v392 = vmul.f32 %v320, %v385
      %v393 = vmul.f32 %v321, %v385
      %v394 = vadd.f32 %v374, %v386
      %v395 = vadd.f32 %v375, %v387
      %v396 = vadd.f32 %v376, %v388
      %v397 = vadd.f32 %v377, %v389
      %v398 = vadd.f32 %v378, %v390
      %v399 = vadd.f32 %v379, %v391
      %v400 = vadd.f32 %v380, %v392
      %v401 = vadd.f32 %v381, %v393
      %v402 = vlaneseq
      %v403 = vshrl.u32 %v402, 7
      %v404 = vsub.s32 5, %v403
      %v405 = vrot.slane %v337, %v404
      %v406 = vmul.f32 %v314, %v405
      %v407 = vmul.f32 %v315, %v405
      %v408 = vmul.f32 %v317, %v405
      %v409 = vmul.f32 %v318, %v405
      %v410 = vmul.f32 %v320, %v405
      %v411 = vmul.f32 %v321, %v405
      %v412 = vmul.f32 %v323, %v405
      %v413 = vmul.f32 %v324, %v405
      %v414 = vadd.f32 %v394, %v406
      %v415 = vadd.f32 %v395, %v407
      %v416 = vadd.f32 %v396, %v408
      %v417 = vadd.f32 %v397, %v409
      %v418 = vadd.f32 %v398, %v410
      %v419 = vadd.f32 %v399, %v411
      %v420 = vadd.f32 %v400, %v412
      %v421 = vadd.f32 %v401, %v413
      %v422 = vlaneseq
      %v423 = vshrl.u32 %v422, 7
      %v424 = vsub.s32 4, %v423
      %v425 = vrot.slane %v338, %v424
      %v426 = vmul.f32 %v317, %v425
      %v427 = vmul.f32 %v318, %v425
      %v428 = vmul.f32 %v320, %v425
      %v429 = vmul.f32 %v321, %v425
      %v430 = vmul.f32 %v323, %v425
      %v431 = vmul.f32 %v324, %v425
      %v432 = vmul.f32 %v326, %v425
      %v433 = vmul.f32 %v327, %v425
      %v434 = vadd.f32 %v414, %v426
      %v435 = vadd.f32 %v415, %v427
      %v436 = vadd.f32 %v416, %v428
      %v437 = vadd.f32 %v417, %v429
      %v438 = vadd.f32 %v418, %v430
      %v439 = vadd.f32 %v419, %v431
      %v440 = vadd.f32 %v420, %v432
      %v441 = vadd.f32 %v421, %v433
      %v442 = vlaneseq
      %v443 = vshrl.u32 %v442, 7
      %v444 = vsub.s32 3, %v443
      %v445 = vrot.slane %v339, %v444
      %v446 = vmul.f32 %v320, %v445
      %v447 = vmul.f32 %v321, %v445
      %v448 = vmul.f32 %v323, %v445
      %v449 = vmul.f32 %v324, %v445
      %v450 = vmul.f32 %v326, %v445
      %v451 = vmul.f32 %v327, %v445
      %v452 = vmul.f32 %v329, %v445
      %v453 = vmul.f32 %v330, %v445
      %v454 = vadd.f32 %v434, %v446
      %v455 = vadd.f32 %v435, %v447
      %v456 = vadd.f32 %v436, %v448
      %v457 = vadd.f32 %v437, %v449
      %v458 = vadd.f32 %v438, %v450
      %v459 = vadd.f32 %v439, %v451
      %v460 = vadd.f32 %v440, %v452
      %v461 = vadd.f32 %v441, %v453
      %v462 = vlaneseq
      %v463 = vshrl.u32 %v462, 7
      %v464 = vsub.s32 2, %v463
      %v465 = vrot.slane %v340, %v464
      %v466 = vmul.f32 %v323, %v465
      %v467 = vmul.f32 %v324, %v465
      %v468 = vmul.f32 %v326, %v465
      %v469 = vmul.f32 %v327, %v465
      %v470 = vmul.f32 %v329, %v465
      %v471 = vmul.f32 %v330, %v465
      %v472 = vmul.f32 %v332, %v465
      %v473 = vmul.f32 %v333, %v465
      %v474 = vadd.f32 %v454, %v466
      %v475 = vadd.f32 %v455, %v467
      %v476 = vadd.f32 %v456, %v468
      %v477 = vadd.f32 %v457, %v469
      %v478 = vadd.f32 %v458, %v470
      %v479 = vadd.f32 %v459, %v471
      %v480 = vadd.f32 %v460, %v472
      %v481 = vadd.f32 %v461, %v473
      %v482 = vrot.slane %v305, 1
      %v483 = vrot.slane %v306, 1
      %v484 = vrot.slane %v307, 1
      %v485 = vrot.slane %v308, 1
      %v486 = vrot.slane %v309, 1
      %v487 = vrot.slane %v310, 1
      %v488 = vrot.slane %v311, 1
      %v489 = vrot.slane %v312, 1
      %v490 = vrot.slane %v313, 1
      %v491 = vrot.slane %v314, 1
      %v492 = vrot.slane %v315, 1
      %v493 = vrot.slane %v316, 1
      %v494 = vrot.slane %v317, 1
      %v495 = vrot.slane %v318, 1
      %v496 = vrot.slane %v319, 1
      %v497 = vrot.slane %v320, 1
      %v498 = vrot.slane %v321, 1
      %v499 = vrot.slane %v322, 1
      %v500 = vrot.slane %v323, 1
      %v501 = vrot.slane %v324, 1
      %v502 = vrot.slane %v325, 1
      %v503 = vrot.slane %v326, 1
      %v504 = vrot.slane %v327, 1
      %v505 = vrot.slane %v328, 1
      %v506 = vrot.slane %v329, 1
      %v507 = vrot.slane %v330, 1
      %v508 = vrot.slane %v331, 1
      %v509 = vrot.slane %v332, 1
      %v510 = vrot.slane %v333, 1
      %v511 = vrot.slane %v334, 1
      %v512 = vlaneseq
      %v513 = vshrl.u32 %v512, 7
      %vm514 = vcmp.lt.s32.totalorder %v513, 7
      %v515 = vsel %vm514, %v510, %v511
      %v516 = vsel %vm514, %v509, %v510
      %v517 = vsel %vm514, %v507, %v508
      %v518 = vsel %vm514, %v506, %v507
      %v519 = vsel %vm514, %v504, %v505
      %v520 = vsel %vm514, %v503, %v504
      %v521 = vsel %vm514, %v501, %v502
      %v522 = vsel %vm514, %v500, %v501
      %v523 = vsel %vm514, %v498, %v499
      %v524 = vsel %vm514, %v497, %v498
      %v525 = vsel %vm514, %v495, %v496
      %v526 = vsel %vm514, %v494, %v495
      %v527 = vsel %vm514, %v492, %v493
      %v528 = vsel %vm514, %v491, %v492
      %v529 = vsel %vm514, %v489, %v490
      %v530 = vsel %vm514, %v488, %v489
      %v531 = vsel %vm514, %v486, %v487
      %v532 = vsel %vm514, %v485, %v486
      %v533 = vsel %vm514, %v483, %v484
      %v534 = vsel %vm514, %v482, %v483
      %v535 = vlaneseq
      %v536 = vshrl.u32 %v535, 7
      %v537 = vsub.s32 1, %v536
      %v538 = vrot.slane %v335, %v537
      %v539 = vmul.f32 %v534, %v538
      %v540 = vmul.f32 %v533, %v538
      %v541 = vmul.f32 %v532, %v538
      %v542 = vmul.f32 %v531, %v538
      %v543 = vmul.f32 %v530, %v538
      %v544 = vmul.f32 %v529, %v538
      %v545 = vmul.f32 %v528, %v538
      %v546 = vmul.f32 %v527, %v538
      %v547 = vadd.f32 %v474, %v539
      %v548 = vadd.f32 %v475, %v540
      %v549 = vadd.f32 %v476, %v541
      %v550 = vadd.f32 %v477, %v542
      %v551 = vadd.f32 %v478, %v543
      %v552 = vadd.f32 %v479, %v544
      %v553 = vadd.f32 %v480, %v545
      %v554 = vadd.f32 %v481, %v546
      %v555 = vlaneseq
      %v556 = vshrl.u32 %v555, 7
      %v557 = vsub.s32 0, %v556
      %v558 = vrot.slane %v336, %v557
      %v559 = vmul.f32 %v532, %v558
      %v560 = vmul.f32 %v531, %v558
      %v561 = vmul.f32 %v530, %v558
      %v562 = vmul.f32 %v529, %v558
      %v563 = vmul.f32 %v528, %v558
      %v564 = vmul.f32 %v527, %v558
      %v565 = vmul.f32 %v526, %v558
      %v566 = vmul.f32 %v525, %v558
      %v567 = vadd.f32 %v547, %v559
      %v568 = vadd.f32 %v548, %v560
      %v569 = vadd.f32 %v549, %v561
      %v570 = vadd.f32 %v550, %v562
      %v571 = vadd.f32 %v551, %v563
      %v572 = vadd.f32 %v552, %v564
      %v573 = vadd.f32 %v553, %v565
      %v574 = vadd.f32 %v554, %v566
      %v575 = vlaneseq
      %v576 = vshrl.u32 %v575, 7
      %v577 = vsub.s32 7, %v576
      %v578 = vrot.slane %v336, %v577
      %v579 = vmul.f32 %v530, %v578
      %v580 = vmul.f32 %v529, %v578
      %v581 = vmul.f32 %v528, %v578
      %v582 = vmul.f32 %v527, %v578
      %v583 = vmul.f32 %v526, %v578
      %v584 = vmul.f32 %v525, %v578
      %v585 = vmul.f32 %v524, %v578
      %v586 = vmul.f32 %v523, %v578
      %v587 = vadd.f32 %v567, %v579
      %v588 = vadd.f32 %v568, %v580
      %v589 = vadd.f32 %v569, %v581
      %v590 = vadd.f32 %v570, %v582
      %v591 = vadd.f32 %v571, %v583
      %v592 = vadd.f32 %v572, %v584
      %v593 = vadd.f32 %v573, %v585
      %v594 = vadd.f32 %v574, %v586
      %v595 = vlaneseq
      %v596 = vshrl.u32 %v595, 7
      %v597 = vsub.s32 6, %v596
      %v598 = vrot.slane %v337, %v597
      %v599 = vmul.f32 %v528, %v598
      %v600 = vmul.f32 %v527, %v598
      %v601 = vmul.f32 %v526, %v598
      %v602 = vmul.f32 %v525, %v598
      %v603 = vmul.f32 %v524, %v598
      %v604 = vmul.f32 %v523, %v598
      %v605 = vmul.f32 %v522, %v598
      %v606 = vmul.f32 %v521, %v598
      %v607 = vadd.f32 %v587, %v599
      %v608 = vadd.f32 %v588, %v600
      %v609 = vadd.f32 %v589, %v601
      %v610 = vadd.f32 %v590, %v602
      %v611 = vadd.f32 %v591, %v603
      %v612 = vadd.f32 %v592, %v604
      %v613 = vadd.f32 %v593, %v605
      %v614 = vadd.f32 %v594, %v606
      %v615 = vlaneseq
      %v616 = vshrl.u32 %v615, 7
      %v617 = vsub.s32 5, %v616
      %v618 = vrot.slane %v338, %v617
      %v619 = vmul.f32 %v526, %v618
      %v620 = vmul.f32 %v525, %v618
      %v621 = vmul.f32 %v524, %v618
      %v622 = vmul.f32 %v523, %v618
      %v623 = vmul.f32 %v522, %v618
      %v624 = vmul.f32 %v521, %v618
      %v625 = vmul.f32 %v520, %v618
      %v626 = vmul.f32 %v519, %v618
      %v627 = vadd.f32 %v607, %v619
      %v628 = vadd.f32 %v608, %v620
      %v629 = vadd.f32 %v609, %v621
      %v630 = vadd.f32 %v610, %v622
      %v631 = vadd.f32 %v611, %v623
      %v632 = vadd.f32 %v612, %v624
      %v633 = vadd.f32 %v613, %v625
      %v634 = vadd.f32 %v614, %v626
      %v635 = vlaneseq
      %v636 = vshrl.u32 %v635, 7
      %v637 = vsub.s32 4, %v636
      %v638 = vrot.slane %v339, %v637
      %v639 = vmul.f32 %v524, %v638
      %v640 = vmul.f32 %v523, %v638
      %v641 = vmul.f32 %v522, %v638
      %v642 = vmul.f32 %v521, %v638
      %v643 = vmul.f32 %v520, %v638
      %v644 = vmul.f32 %v519, %v638
      %v645 = vmul.f32 %v518, %v638
      %v646 = vmul.f32 %v517, %v638
      %v647 = vadd.f32 %v627, %v639
      %v648 = vadd.f32 %v628, %v640
      %v649 = vadd.f32 %v629, %v641
      %v650 = vadd.f32 %v630, %v642
      %v651 = vadd.f32 %v631, %v643
      %v652 = vadd.f32 %v632, %v644
      %v653 = vadd.f32 %v633, %v645
      %v654 = vadd.f32 %v634, %v646
      %v655 = vlaneseq
      %v656 = vshrl.u32 %v655, 7
      %v657 = vsub.s32 3, %v656
      %v658 = vrot.slane %v340, %v657
      %v659 = vmul.f32 %v522, %v658
      %v660 = vmul.f32 %v521, %v658
      %v661 = vmul.f32 %v520, %v658
      %v662 = vmul.f32 %v519, %v658
      %v663 = vmul.f32 %v518, %v658
      %v664 = vmul.f32 %v517, %v658
      %v665 = vmul.f32 %v516, %v658
      %v666 = vmul.f32 %v515, %v658
      %v667 = vadd.f32 %v647, %v659
      %v668 = vadd.f32 %v648, %v660
      %v669 = vadd.f32 %v649, %v661
      %v670 = vadd.f32 %v650, %v662
      %v671 = vadd.f32 %v651, %v663
      %v672 = vadd.f32 %v652, %v664
      %v673 = vadd.f32 %v653, %v665
      %v674 = vadd.f32 %v654, %v666
      %v675 = vrot.slane %v305, 2
      %v676 = vrot.slane %v306, 2
      %v677 = vrot.slane %v307, 2
      %v678 = vrot.slane %v308, 2
      %v679 = vrot.slane %v309, 2
      %v680 = vrot.slane %v310, 2
      %v681 = vrot.slane %v311, 2
      %v682 = vrot.slane %v312, 2
      %v683 = vrot.slane %v313, 2
      %v684 = vrot.slane %v314, 2
      %v685 = vrot.slane %v315, 2
      %v686 = vrot.slane %v316, 2
      %v687 = vrot.slane %v317, 2
      %v688 = vrot.slane %v318, 2
      %v689 = vrot.slane %v319, 2
      %v690 = vrot.slane %v320, 2
      %v691 = vrot.slane %v321, 2
      %v692 = vrot.slane %v322, 2
      %v693 = vrot.slane %v323, 2
      %v694 = vrot.slane %v324, 2
      %v695 = vrot.slane %v325, 2
      %v696 = vrot.slane %v326, 2
      %v697 = vrot.slane %v327, 2
      %v698 = vrot.slane %v328, 2
      %v699 = vrot.slane %v329, 2
      %v700 = vrot.slane %v330, 2
      %v701 = vrot.slane %v331, 2
      %v702 = vrot.slane %v332, 2
      %v703 = vrot.slane %v333, 2
      %v704 = vrot.slane %v334, 2
      %vm705 = vcmp.lt.s32.totalorder %v513, 6
      %v706 = vsel %vm705, %v703, %v704
      %v707 = vsel %vm705, %v702, %v703
      %v708 = vsel %vm705, %v700, %v701
      %v709 = vsel %vm705, %v699, %v700
      %v710 = vsel %vm705, %v697, %v698
      %v711 = vsel %vm705, %v696, %v697
      %v712 = vsel %vm705, %v694, %v695
      %v713 = vsel %vm705, %v693, %v694
      %v714 = vsel %vm705, %v691, %v692
      %v715 = vsel %vm705, %v690, %v691
      %v716 = vsel %vm705, %v688, %v689
      %v717 = vsel %vm705, %v687, %v688
      %v718 = vsel %vm705, %v685, %v686
      %v719 = vsel %vm705, %v684, %v685
      %v720 = vsel %vm705, %v682, %v683
      %v721 = vsel %vm705, %v681, %v682
      %v722 = vsel %vm705, %v679, %v680
      %v723 = vsel %vm705, %v678, %v679
      %v724 = vsel %vm705, %v676, %v677
      %v725 = vsel %vm705, %v675, %v676
      %v726 = vlaneseq
      %v727 = vshrl.u32 %v726, 7
      %v728 = vsub.s32 2, %v727
      %v729 = vrot.slane %v335, %v728
      %v730 = vmul.f32 %v725, %v729
      %v731 = vmul.f32 %v724, %v729
      %v732 = vmul.f32 %v723, %v729
      %v733 = vmul.f32 %v722, %v729
      %v734 = vmul.f32 %v721, %v729
      %v735 = vmul.f32 %v720, %v729
      %v736 = vmul.f32 %v719, %v729
      %v737 = vmul.f32 %v718, %v729
      %v738 = vadd.f32 %v667, %v730
      %v739 = vadd.f32 %v668, %v731
      %v740 = vadd.f32 %v669, %v732
      %v741 = vadd.f32 %v670, %v733
      %v742 = vadd.f32 %v671, %v734
      %v743 = vadd.f32 %v672, %v735
      %v744 = vadd.f32 %v673, %v736
      %v745 = vadd.f32 %v674, %v737
      %v746 = vlaneseq
      %v747 = vshrl.u32 %v746, 7
      %v748 = vsub.s32 1, %v747
      %v749 = vrot.slane %v336, %v748
      %v750 = vmul.f32 %v723, %v749
      %v751 = vmul.f32 %v722, %v749
      %v752 = vmul.f32 %v721, %v749
      %v753 = vmul.f32 %v720, %v749
      %v754 = vmul.f32 %v719, %v749
      %v755 = vmul.f32 %v718, %v749
      %v756 = vmul.f32 %v717, %v749
      %v757 = vmul.f32 %v716, %v749
      %v758 = vadd.f32 %v738, %v750
      %v759 = vadd.f32 %v739, %v751
      %v760 = vadd.f32 %v740, %v752
      %v761 = vadd.f32 %v741, %v753
      %v762 = vadd.f32 %v742, %v754
      %v763 = vadd.f32 %v743, %v755
      %v764 = vadd.f32 %v744, %v756
      %v765 = vadd.f32 %v745, %v757
      %v766 = vlaneseq
      %v767 = vshrl.u32 %v766, 7
      %v768 = vsub.s32 0, %v767
      %v769 = vrot.slane %v337, %v768
      %v770 = vmul.f32 %v721, %v769
      %v771 = vmul.f32 %v720, %v769
      %v772 = vmul.f32 %v719, %v769
      %v773 = vmul.f32 %v718, %v769
      %v774 = vmul.f32 %v717, %v769
      %v775 = vmul.f32 %v716, %v769
      %v776 = vmul.f32 %v715, %v769
      %v777 = vmul.f32 %v714, %v769
      %v778 = vadd.f32 %v758, %v770
      %v779 = vadd.f32 %v759, %v771
      %v780 = vadd.f32 %v760, %v772
      %v781 = vadd.f32 %v761, %v773
      %v782 = vadd.f32 %v762, %v774
      %v783 = vadd.f32 %v763, %v775
      %v784 = vadd.f32 %v764, %v776
      %v785 = vadd.f32 %v765, %v777
      %v786 = vlaneseq
      %v787 = vshrl.u32 %v786, 7
      %v788 = vsub.s32 7, %v787
      %v789 = vrot.slane %v337, %v788
      %v790 = vmul.f32 %v719, %v789
      %v791 = vmul.f32 %v718, %v789
      %v792 = vmul.f32 %v717, %v789
      %v793 = vmul.f32 %v716, %v789
      %v794 = vmul.f32 %v715, %v789
      %v795 = vmul.f32 %v714, %v789
      %v796 = vmul.f32 %v713, %v789
      %v797 = vmul.f32 %v712, %v789
      %v798 = vadd.f32 %v778, %v790
      %v799 = vadd.f32 %v779, %v791
      %v800 = vadd.f32 %v780, %v792
      %v801 = vadd.f32 %v781, %v793
      %v802 = vadd.f32 %v782, %v794
      %v803 = vadd.f32 %v783, %v795
      %v804 = vadd.f32 %v784, %v796
      %v805 = vadd.f32 %v785, %v797
      %v806 = vlaneseq
      %v807 = vshrl.u32 %v806, 7
      %v808 = vsub.s32 6, %v807
      %v809 = vrot.slane %v338, %v808
      %v810 = vmul.f32 %v717, %v809
      %v811 = vmul.f32 %v716, %v809
      %v812 = vmul.f32 %v715, %v809
      %v813 = vmul.f32 %v714, %v809
      %v814 = vmul.f32 %v713, %v809
      %v815 = vmul.f32 %v712, %v809
      %v816 = vmul.f32 %v711, %v809
      %v817 = vmul.f32 %v710, %v809
      %v818 = vadd.f32 %v798, %v810
      %v819 = vadd.f32 %v799, %v811
      %v820 = vadd.f32 %v800, %v812
      %v821 = vadd.f32 %v801, %v813
      %v822 = vadd.f32 %v802, %v814
      %v823 = vadd.f32 %v803, %v815
      %v824 = vadd.f32 %v804, %v816
      %v825 = vadd.f32 %v805, %v817
      %v826 = vlaneseq
      %v827 = vshrl.u32 %v826, 7
      %v828 = vsub.s32 5, %v827
      %v829 = vrot.slane %v339, %v828
      %v830 = vmul.f32 %v715, %v829
      %v831 = vmul.f32 %v714, %v829
      %v832 = vmul.f32 %v713, %v829
      %v833 = vmul.f32 %v712, %v829
      %v834 = vmul.f32 %v711, %v829
      %v835 = vmul.f32 %v710, %v829
      %v836 = vmul.f32 %v709, %v829
      %v837 = vmul.f32 %v708, %v829
      %v838 = vadd.f32 %v818, %v830
      %v839 = vadd.f32 %v819, %v831
      %v840 = vadd.f32 %v820, %v832
      %v841 = vadd.f32 %v821, %v833
      %v842 = vadd.f32 %v822, %v834
      %v843 = vadd.f32 %v823, %v835
      %v844 = vadd.f32 %v824, %v836
      %v845 = vadd.f32 %v825, %v837
      %v846 = vlaneseq
      %v847 = vshrl.u32 %v846, 7
      %v848 = vsub.s32 4, %v847
      %v849 = vrot.slane %v340, %v848
      %v850 = vmul.f32 %v713, %v849
      %v851 = vmul.f32 %v712, %v849
      %v852 = vmul.f32 %v711, %v849
      %v853 = vmul.f32 %v710, %v849
      %v854 = vmul.f32 %v709, %v849
      %v855 = vmul.f32 %v708, %v849
      %v856 = vmul.f32 %v707, %v849
      %v857 = vmul.f32 %v706, %v849
      %v858 = vadd.f32 %v838, %v850
      %v859 = vadd.f32 %v839, %v851
      %v860 = vadd.f32 %v840, %v852
      %v861 = vadd.f32 %v841, %v853
      %v862 = vadd.f32 %v842, %v854
      %v863 = vadd.f32 %v843, %v855
      %v864 = vadd.f32 %v844, %v856
      %v865 = vadd.f32 %v845, %v857
      %v866 = vrot.slane %v305, 3
      %v867 = vrot.slane %v306, 3
      %v868 = vrot.slane %v307, 3
      %v869 = vrot.slane %v308, 3
      %v870 = vrot.slane %v309, 3
      %v871 = vrot.slane %v310, 3
      %v872 = vrot.slane %v311, 3
      %v873 = vrot.slane %v312, 3
      %v874 = vrot.slane %v313, 3
      %v875 = vrot.slane %v314, 3
      %v876 = vrot.slane %v315, 3
      %v877 = vrot.slane %v316, 3
      %v878 = vrot.slane %v317, 3
      %v879 = vrot.slane %v318, 3
      %v880 = vrot.slane %v319, 3
      %v881 = vrot.slane %v320, 3
      %v882 = vrot.slane %v321, 3
      %v883 = vrot.slane %v322, 3
      %v884 = vrot.slane %v323, 3
      %v885 = vrot.slane %v324, 3
      %v886 = vrot.slane %v325, 3
      %v887 = vrot.slane %v326, 3
      %v888 = vrot.slane %v327, 3
      %v889 = vrot.slane %v328, 3
      %v890 = vrot.slane %v329, 3
      %v891 = vrot.slane %v330, 3
      %v892 = vrot.slane %v331, 3
      %v893 = vrot.slane %v332, 3
      %v894 = vrot.slane %v333, 3
      %v895 = vrot.slane %v334, 3
      %vm896 = vcmp.lt.s32.totalorder %v513, 5
      %v897 = vsel %vm896, %v894, %v895
      %v898 = vsel %vm896, %v893, %v894
      %v899 = vsel %vm896, %v891, %v892
      %v900 = vsel %vm896, %v890, %v891
      %v901 = vsel %vm896, %v888, %v889
      %v902 = vsel %vm896, %v887, %v888
      %v903 = vsel %vm896, %v885, %v886
      %v904 = vsel %vm896, %v884, %v885
      %v905 = vsel %vm896, %v882, %v883
      %v906 = vsel %vm896, %v881, %v882
      %v907 = vsel %vm896, %v879, %v880
      %v908 = vsel %vm896, %v878, %v879
      %v909 = vsel %vm896, %v876, %v877
      %v910 = vsel %vm896, %v875, %v876
      %v911 = vsel %vm896, %v873, %v874
      %v912 = vsel %vm896, %v872, %v873
      %v913 = vsel %vm896, %v870, %v871
      %v914 = vsel %vm896, %v869, %v870
      %v915 = vsel %vm896, %v867, %v868
      %v916 = vsel %vm896, %v866, %v867
      %v917 = vlaneseq
      %v918 = vshrl.u32 %v917, 7
      %v919 = vsub.s32 3, %v918
      %v920 = vrot.slane %v335, %v919
      %v921 = vmul.f32 %v916, %v920
      %v922 = vmul.f32 %v915, %v920
      %v923 = vmul.f32 %v914, %v920
      %v924 = vmul.f32 %v913, %v920
      %v925 = vmul.f32 %v912, %v920
      %v926 = vmul.f32 %v911, %v920
      %v927 = vmul.f32 %v910, %v920
      %v928 = vmul.f32 %v909, %v920
      %v929 = vadd.f32 %v858, %v921
      %v930 = vadd.f32 %v859, %v922
      %v931 = vadd.f32 %v860, %v923
      %v932 = vadd.f32 %v861, %v924
      %v933 = vadd.f32 %v862, %v925
      %v934 = vadd.f32 %v863, %v926
      %v935 = vadd.f32 %v864, %v927
      %v936 = vadd.f32 %v865, %v928
      %v937 = vlaneseq
      %v938 = vshrl.u32 %v937, 7
      %v939 = vsub.s32 2, %v938
      %v940 = vrot.slane %v336, %v939
      %v941 = vmul.f32 %v914, %v940
      %v942 = vmul.f32 %v913, %v940
      %v943 = vmul.f32 %v912, %v940
      %v944 = vmul.f32 %v911, %v940
      %v945 = vmul.f32 %v910, %v940
      %v946 = vmul.f32 %v909, %v940
      %v947 = vmul.f32 %v908, %v940
      %v948 = vmul.f32 %v907, %v940
      %v949 = vadd.f32 %v929, %v941
      %v950 = vadd.f32 %v930, %v942
      %v951 = vadd.f32 %v931, %v943
      %v952 = vadd.f32 %v932, %v944
      %v953 = vadd.f32 %v933, %v945
      %v954 = vadd.f32 %v934, %v946
      %v955 = vadd.f32 %v935, %v947
      %v956 = vadd.f32 %v936, %v948
      %v957 = vlaneseq
      %v958 = vshrl.u32 %v957, 7
      %v959 = vsub.s32 1, %v958
      %v960 = vrot.slane %v337, %v959
      %v961 = vmul.f32 %v912, %v960
      %v962 = vmul.f32 %v911, %v960
      %v963 = vmul.f32 %v910, %v960
      %v964 = vmul.f32 %v909, %v960
      %v965 = vmul.f32 %v908, %v960
      %v966 = vmul.f32 %v907, %v960
      %v967 = vmul.f32 %v906, %v960
      %v968 = vmul.f32 %v905, %v960
      %v969 = vadd.f32 %v949, %v961
      %v970 = vadd.f32 %v950, %v962
      %v971 = vadd.f32 %v951, %v963
      %v972 = vadd.f32 %v952, %v964
      %v973 = vadd.f32 %v953, %v965
      %v974 = vadd.f32 %v954, %v966
      %v975 = vadd.f32 %v955, %v967
      %v976 = vadd.f32 %v956, %v968
      %v977 = vlaneseq
      %v978 = vshrl.u32 %v977, 7
      %v979 = vsub.s32 0, %v978
      %v980 = vrot.slane %v338, %v979
      %v981 = vmul.f32 %v910, %v980
      %v982 = vmul.f32 %v909, %v980
      %v983 = vmul.f32 %v908, %v980
      %v984 = vmul.f32 %v907, %v980
      %v985 = vmul.f32 %v906, %v980
      %v986 = vmul.f32 %v905, %v980
      %v987 = vmul.f32 %v904, %v980
      %v988 = vmul.f32 %v903, %v980
      %v989 = vadd.f32 %v969, %v981
      %v990 = vadd.f32 %v970, %v982
      %v991 = vadd.f32 %v971, %v983
      %v992 = vadd.f32 %v972, %v984
      %v993 = vadd.f32 %v973, %v985
      %v994 = vadd.f32 %v974, %v986
      %v995 = vadd.f32 %v975, %v987
      %v996 = vadd.f32 %v976, %v988
      %v997 = vlaneseq
      %v998 = vshrl.u32 %v997, 7
      %v999 = vsub.s32 7, %v998
      %v1000 = vrot.slane %v338, %v999
      %v1001 = vmul.f32 %v908, %v1000
      %v1002 = vmul.f32 %v907, %v1000
      %v1003 = vmul.f32 %v906, %v1000
      %v1004 = vmul.f32 %v905, %v1000
      %v1005 = vmul.f32 %v904, %v1000
      %v1006 = vmul.f32 %v903, %v1000
      %v1007 = vmul.f32 %v902, %v1000
      %v1008 = vmul.f32 %v901, %v1000
      %v1009 = vadd.f32 %v989, %v1001
      %v1010 = vadd.f32 %v990, %v1002
      %v1011 = vadd.f32 %v991, %v1003
      %v1012 = vadd.f32 %v992, %v1004
      %v1013 = vadd.f32 %v993, %v1005
      %v1014 = vadd.f32 %v994, %v1006
      %v1015 = vadd.f32 %v995, %v1007
      %v1016 = vadd.f32 %v996, %v1008
      %v1017 = vlaneseq
      %v1018 = vshrl.u32 %v1017, 7
      %v1019 = vsub.s32 6, %v1018
      %v1020 = vrot.slane %v339, %v1019
      %v1021 = vmul.f32 %v906, %v1020
      %v1022 = vmul.f32 %v905, %v1020
      %v1023 = vmul.f32 %v904, %v1020
      %v1024 = vmul.f32 %v903, %v1020
      %v1025 = vmul.f32 %v902, %v1020
      %v1026 = vmul.f32 %v901, %v1020
      %v1027 = vmul.f32 %v900, %v1020
      %v1028 = vmul.f32 %v899, %v1020
      %v1029 = vadd.f32 %v1009, %v1021
      %v1030 = vadd.f32 %v1010, %v1022
      %v1031 = vadd.f32 %v1011, %v1023
      %v1032 = vadd.f32 %v1012, %v1024
      %v1033 = vadd.f32 %v1013, %v1025
      %v1034 = vadd.f32 %v1014, %v1026
      %v1035 = vadd.f32 %v1015, %v1027
      %v1036 = vadd.f32 %v1016, %v1028
      %v1037 = vlaneseq
      %v1038 = vshrl.u32 %v1037, 7
      %v1039 = vsub.s32 5, %v1038
      %v1040 = vrot.slane %v340, %v1039
      %v1041 = vmul.f32 %v904, %v1040
      %v1042 = vmul.f32 %v903, %v1040
      %v1043 = vmul.f32 %v902, %v1040
      %v1044 = vmul.f32 %v901, %v1040
      %v1045 = vmul.f32 %v900, %v1040
      %v1046 = vmul.f32 %v899, %v1040
      %v1047 = vmul.f32 %v898, %v1040
      %v1048 = vmul.f32 %v897, %v1040
      %v1049 = vadd.f32 %v1029, %v1041
      %v1050 = vadd.f32 %v1030, %v1042
      %v1051 = vadd.f32 %v1031, %v1043
      %v1052 = vadd.f32 %v1032, %v1044
      %v1053 = vadd.f32 %v1033, %v1045
      %v1054 = vadd.f32 %v1034, %v1046
      %v1055 = vadd.f32 %v1035, %v1047
      %v1056 = vadd.f32 %v1036, %v1048
      %v1057 = vrot.slane %v305, 4
      %v1058 = vrot.slane %v306, 4
      %v1059 = vrot.slane %v307, 4
      %v1060 = vrot.slane %v308, 4
      %v1061 = vrot.slane %v309, 4
      %v1062 = vrot.slane %v310, 4
      %v1063 = vrot.slane %v311, 4
      %v1064 = vrot.slane %v312, 4
      %v1065 = vrot.slane %v313, 4
      %v1066 = vrot.slane %v314, 4
      %v1067 = vrot.slane %v315, 4
      %v1068 = vrot.slane %v316, 4
      %v1069 = vrot.slane %v317, 4
      %v1070 = vrot.slane %v318, 4
      %v1071 = vrot.slane %v319, 4
      %v1072 = vrot.slane %v320, 4
      %v1073 = vrot.slane %v321, 4
      %v1074 = vrot.slane %v322, 4
      %v1075 = vrot.slane %v323, 4
      %v1076 = vrot.slane %v324, 4
      %v1077 = vrot.slane %v325, 4
      %v1078 = vrot.slane %v326, 4
      %v1079 = vrot.slane %v327, 4
      %v1080 = vrot.slane %v328, 4
      %v1081 = vrot.slane %v329, 4
      %v1082 = vrot.slane %v330, 4
      %v1083 = vrot.slane %v331, 4
      %v1084 = vrot.slane %v332, 4
      %v1085 = vrot.slane %v333, 4
      %v1086 = vrot.slane %v334, 4
      %vm1087 = vcmp.lt.s32.totalorder %v513, 4
      %v1088 = vsel %vm1087, %v1085, %v1086
      %v1089 = vsel %vm1087, %v1084, %v1085
      %v1090 = vsel %vm1087, %v1082, %v1083
      %v1091 = vsel %vm1087, %v1081, %v1082
      %v1092 = vsel %vm1087, %v1079, %v1080
      %v1093 = vsel %vm1087, %v1078, %v1079
      %v1094 = vsel %vm1087, %v1076, %v1077
      %v1095 = vsel %vm1087, %v1075, %v1076
      %v1096 = vsel %vm1087, %v1073, %v1074
      %v1097 = vsel %vm1087, %v1072, %v1073
      %v1098 = vsel %vm1087, %v1070, %v1071
      %v1099 = vsel %vm1087, %v1069, %v1070
      %v1100 = vsel %vm1087, %v1067, %v1068
      %v1101 = vsel %vm1087, %v1066, %v1067
      %v1102 = vsel %vm1087, %v1064, %v1065
      %v1103 = vsel %vm1087, %v1063, %v1064
      %v1104 = vsel %vm1087, %v1061, %v1062
      %v1105 = vsel %vm1087, %v1060, %v1061
      %v1106 = vsel %vm1087, %v1058, %v1059
      %v1107 = vsel %vm1087, %v1057, %v1058
      %v1108 = vlaneseq
      %v1109 = vshrl.u32 %v1108, 7
      %v1110 = vsub.s32 4, %v1109
      %v1111 = vrot.slane %v335, %v1110
      %v1112 = vmul.f32 %v1107, %v1111
      %v1113 = vmul.f32 %v1106, %v1111
      %v1114 = vmul.f32 %v1105, %v1111
      %v1115 = vmul.f32 %v1104, %v1111
      %v1116 = vmul.f32 %v1103, %v1111
      %v1117 = vmul.f32 %v1102, %v1111
      %v1118 = vmul.f32 %v1101, %v1111
      %v1119 = vmul.f32 %v1100, %v1111
      %v1120 = vadd.f32 %v1049, %v1112
      %v1121 = vadd.f32 %v1050, %v1113
      %v1122 = vadd.f32 %v1051, %v1114
      %v1123 = vadd.f32 %v1052, %v1115
      %v1124 = vadd.f32 %v1053, %v1116
      %v1125 = vadd.f32 %v1054, %v1117
      %v1126 = vadd.f32 %v1055, %v1118
      %v1127 = vadd.f32 %v1056, %v1119
      %v1128 = vlaneseq
      %v1129 = vshrl.u32 %v1128, 7
      %v1130 = vsub.s32 3, %v1129
      %v1131 = vrot.slane %v336, %v1130
      %v1132 = vmul.f32 %v1105, %v1131
      %v1133 = vmul.f32 %v1104, %v1131
      %v1134 = vmul.f32 %v1103, %v1131
      %v1135 = vmul.f32 %v1102, %v1131
      %v1136 = vmul.f32 %v1101, %v1131
      %v1137 = vmul.f32 %v1100, %v1131
      %v1138 = vmul.f32 %v1099, %v1131
      %v1139 = vmul.f32 %v1098, %v1131
      %v1140 = vadd.f32 %v1120, %v1132
      %v1141 = vadd.f32 %v1121, %v1133
      %v1142 = vadd.f32 %v1122, %v1134
      %v1143 = vadd.f32 %v1123, %v1135
      %v1144 = vadd.f32 %v1124, %v1136
      %v1145 = vadd.f32 %v1125, %v1137
      %v1146 = vadd.f32 %v1126, %v1138
      %v1147 = vadd.f32 %v1127, %v1139
      %v1148 = vlaneseq
      %v1149 = vshrl.u32 %v1148, 7
      %v1150 = vsub.s32 2, %v1149
      %v1151 = vrot.slane %v337, %v1150
      %v1152 = vmul.f32 %v1103, %v1151
      %v1153 = vmul.f32 %v1102, %v1151
      %v1154 = vmul.f32 %v1101, %v1151
      %v1155 = vmul.f32 %v1100, %v1151
      %v1156 = vmul.f32 %v1099, %v1151
      %v1157 = vmul.f32 %v1098, %v1151
      %v1158 = vmul.f32 %v1097, %v1151
      %v1159 = vmul.f32 %v1096, %v1151
      %v1160 = vadd.f32 %v1140, %v1152
      %v1161 = vadd.f32 %v1141, %v1153
      %v1162 = vadd.f32 %v1142, %v1154
      %v1163 = vadd.f32 %v1143, %v1155
      %v1164 = vadd.f32 %v1144, %v1156
      %v1165 = vadd.f32 %v1145, %v1157
      %v1166 = vadd.f32 %v1146, %v1158
      %v1167 = vadd.f32 %v1147, %v1159
      %v1168 = vlaneseq
      %v1169 = vshrl.u32 %v1168, 7
      %v1170 = vsub.s32 1, %v1169
      %v1171 = vrot.slane %v338, %v1170
      %v1172 = vmul.f32 %v1101, %v1171
      %v1173 = vmul.f32 %v1100, %v1171
      %v1174 = vmul.f32 %v1099, %v1171
      %v1175 = vmul.f32 %v1098, %v1171
      %v1176 = vmul.f32 %v1097, %v1171
      %v1177 = vmul.f32 %v1096, %v1171
      %v1178 = vmul.f32 %v1095, %v1171
      %v1179 = vmul.f32 %v1094, %v1171
      %v1180 = vadd.f32 %v1160, %v1172
      %v1181 = vadd.f32 %v1161, %v1173
      %v1182 = vadd.f32 %v1162, %v1174
      %v1183 = vadd.f32 %v1163, %v1175
      %v1184 = vadd.f32 %v1164, %v1176
      %v1185 = vadd.f32 %v1165, %v1177
      %v1186 = vadd.f32 %v1166, %v1178
      %v1187 = vadd.f32 %v1167, %v1179
      %v1188 = vlaneseq
      %v1189 = vshrl.u32 %v1188, 7
      %v1190 = vsub.s32 0, %v1189
      %v1191 = vrot.slane %v339, %v1190
      %v1192 = vmul.f32 %v1099, %v1191
      %v1193 = vmul.f32 %v1098, %v1191
      %v1194 = vmul.f32 %v1097, %v1191
      %v1195 = vmul.f32 %v1096, %v1191
      %v1196 = vmul.f32 %v1095, %v1191
      %v1197 = vmul.f32 %v1094, %v1191
      %v1198 = vmul.f32 %v1093, %v1191
      %v1199 = vmul.f32 %v1092, %v1191
      %v1200 = vadd.f32 %v1180, %v1192
      %v1201 = vadd.f32 %v1181, %v1193
      %v1202 = vadd.f32 %v1182, %v1194
      %v1203 = vadd.f32 %v1183, %v1195
      %v1204 = vadd.f32 %v1184, %v1196
      %v1205 = vadd.f32 %v1185, %v1197
      %v1206 = vadd.f32 %v1186, %v1198
      %v1207 = vadd.f32 %v1187, %v1199
      %v1208 = vlaneseq
      %v1209 = vshrl.u32 %v1208, 7
      %v1210 = vsub.s32 7, %v1209
      %v1211 = vrot.slane %v339, %v1210
      %v1212 = vmul.f32 %v1097, %v1211
      %v1213 = vmul.f32 %v1096, %v1211
      %v1214 = vmul.f32 %v1095, %v1211
      %v1215 = vmul.f32 %v1094, %v1211
      %v1216 = vmul.f32 %v1093, %v1211
      %v1217 = vmul.f32 %v1092, %v1211
      %v1218 = vmul.f32 %v1091, %v1211
      %v1219 = vmul.f32 %v1090, %v1211
      %v1220 = vadd.f32 %v1200, %v1212
      %v1221 = vadd.f32 %v1201, %v1213
      %v1222 = vadd.f32 %v1202, %v1214
      %v1223 = vadd.f32 %v1203, %v1215
      %v1224 = vadd.f32 %v1204, %v1216
      %v1225 = vadd.f32 %v1205, %v1217
      %v1226 = vadd.f32 %v1206, %v1218
      %v1227 = vadd.f32 %v1207, %v1219
      %v1228 = vlaneseq
      %v1229 = vshrl.u32 %v1228, 7
      %v1230 = vsub.s32 6, %v1229
      %v1231 = vrot.slane %v340, %v1230
      %v1232 = vmul.f32 %v1095, %v1231
      %v1233 = vmul.f32 %v1094, %v1231
      %v1234 = vmul.f32 %v1093, %v1231
      %v1235 = vmul.f32 %v1092, %v1231
      %v1236 = vmul.f32 %v1091, %v1231
      %v1237 = vmul.f32 %v1090, %v1231
      %v1238 = vmul.f32 %v1089, %v1231
      %v1239 = vmul.f32 %v1088, %v1231
      %v1240 = vadd.f32 %v1220, %v1232
      %v1241 = vadd.f32 %v1221, %v1233
      %v1242 = vadd.f32 %v1222, %v1234
      %v1243 = vadd.f32 %v1223, %v1235
      %v1244 = vadd.f32 %v1224, %v1236
      %v1245 = vadd.f32 %v1225, %v1237
      %v1246 = vadd.f32 %v1226, %v1238
      %v1247 = vadd.f32 %v1227, %v1239
      %v1248 = vrot.slane %v305, 5
      %v1249 = vrot.slane %v306, 5
      %v1250 = vrot.slane %v307, 5
      %v1251 = vrot.slane %v308, 5
      %v1252 = vrot.slane %v309, 5
      %v1253 = vrot.slane %v310, 5
      %v1254 = vrot.slane %v311, 5
      %v1255 = vrot.slane %v312, 5
      %v1256 = vrot.slane %v313, 5
      %v1257 = vrot.slane %v314, 5
      %v1258 = vrot.slane %v315, 5
      %v1259 = vrot.slane %v316, 5
      %v1260 = vrot.slane %v317, 5
      %v1261 = vrot.slane %v318, 5
      %v1262 = vrot.slane %v319, 5
      %v1263 = vrot.slane %v320, 5
      %v1264 = vrot.slane %v321, 5
      %v1265 = vrot.slane %v322, 5
      %v1266 = vrot.slane %v323, 5
      %v1267 = vrot.slane %v324, 5
      %v1268 = vrot.slane %v325, 5
      %v1269 = vrot.slane %v326, 5
      %v1270 = vrot.slane %v327, 5
      %v1271 = vrot.slane %v328, 5
      %v1272 = vrot.slane %v329, 5
      %v1273 = vrot.slane %v330, 5
      %v1274 = vrot.slane %v331, 5
      %v1275 = vrot.slane %v332, 5
      %v1276 = vrot.slane %v333, 5
      %v1277 = vrot.slane %v334, 5
      %vm1278 = vcmp.lt.s32.totalorder %v513, 3
      %v1279 = vsel %vm1278, %v1276, %v1277
      %v1280 = vsel %vm1278, %v1275, %v1276
      %v1281 = vsel %vm1278, %v1273, %v1274
      %v1282 = vsel %vm1278, %v1272, %v1273
      %v1283 = vsel %vm1278, %v1270, %v1271
      %v1284 = vsel %vm1278, %v1269, %v1270
      %v1285 = vsel %vm1278, %v1267, %v1268
      %v1286 = vsel %vm1278, %v1266, %v1267
      %v1287 = vsel %vm1278, %v1264, %v1265
      %v1288 = vsel %vm1278, %v1263, %v1264
      %v1289 = vsel %vm1278, %v1261, %v1262
      %v1290 = vsel %vm1278, %v1260, %v1261
      %v1291 = vsel %vm1278, %v1258, %v1259
      %v1292 = vsel %vm1278, %v1257, %v1258
      %v1293 = vsel %vm1278, %v1255, %v1256
      %v1294 = vsel %vm1278, %v1254, %v1255
      %v1295 = vsel %vm1278, %v1252, %v1253
      %v1296 = vsel %vm1278, %v1251, %v1252
      %v1297 = vsel %vm1278, %v1249, %v1250
      %v1298 = vsel %vm1278, %v1248, %v1249
      %v1299 = vlaneseq
      %v1300 = vshrl.u32 %v1299, 7
      %v1301 = vsub.s32 5, %v1300
      %v1302 = vrot.slane %v335, %v1301
      %v1303 = vmul.f32 %v1298, %v1302
      %v1304 = vmul.f32 %v1297, %v1302
      %v1305 = vmul.f32 %v1296, %v1302
      %v1306 = vmul.f32 %v1295, %v1302
      %v1307 = vmul.f32 %v1294, %v1302
      %v1308 = vmul.f32 %v1293, %v1302
      %v1309 = vmul.f32 %v1292, %v1302
      %v1310 = vmul.f32 %v1291, %v1302
      %v1311 = vadd.f32 %v1240, %v1303
      %v1312 = vadd.f32 %v1241, %v1304
      %v1313 = vadd.f32 %v1242, %v1305
      %v1314 = vadd.f32 %v1243, %v1306
      %v1315 = vadd.f32 %v1244, %v1307
      %v1316 = vadd.f32 %v1245, %v1308
      %v1317 = vadd.f32 %v1246, %v1309
      %v1318 = vadd.f32 %v1247, %v1310
      %v1319 = vlaneseq
      %v1320 = vshrl.u32 %v1319, 7
      %v1321 = vsub.s32 4, %v1320
      %v1322 = vrot.slane %v336, %v1321
      %v1323 = vmul.f32 %v1296, %v1322
      %v1324 = vmul.f32 %v1295, %v1322
      %v1325 = vmul.f32 %v1294, %v1322
      %v1326 = vmul.f32 %v1293, %v1322
      %v1327 = vmul.f32 %v1292, %v1322
      %v1328 = vmul.f32 %v1291, %v1322
      %v1329 = vmul.f32 %v1290, %v1322
      %v1330 = vmul.f32 %v1289, %v1322
      %v1331 = vadd.f32 %v1311, %v1323
      %v1332 = vadd.f32 %v1312, %v1324
      %v1333 = vadd.f32 %v1313, %v1325
      %v1334 = vadd.f32 %v1314, %v1326
      %v1335 = vadd.f32 %v1315, %v1327
      %v1336 = vadd.f32 %v1316, %v1328
      %v1337 = vadd.f32 %v1317, %v1329
      %v1338 = vadd.f32 %v1318, %v1330
      %v1339 = vlaneseq
      %v1340 = vshrl.u32 %v1339, 7
      %v1341 = vsub.s32 3, %v1340
      %v1342 = vrot.slane %v337, %v1341
      %v1343 = vmul.f32 %v1294, %v1342
      %v1344 = vmul.f32 %v1293, %v1342
      %v1345 = vmul.f32 %v1292, %v1342
      %v1346 = vmul.f32 %v1291, %v1342
      %v1347 = vmul.f32 %v1290, %v1342
      %v1348 = vmul.f32 %v1289, %v1342
      %v1349 = vmul.f32 %v1288, %v1342
      %v1350 = vmul.f32 %v1287, %v1342
      %v1351 = vadd.f32 %v1331, %v1343
      %v1352 = vadd.f32 %v1332, %v1344
      %v1353 = vadd.f32 %v1333, %v1345
      %v1354 = vadd.f32 %v1334, %v1346
      %v1355 = vadd.f32 %v1335, %v1347
      %v1356 = vadd.f32 %v1336, %v1348
      %v1357 = vadd.f32 %v1337, %v1349
      %v1358 = vadd.f32 %v1338, %v1350
      %v1359 = vlaneseq
      %v1360 = vshrl.u32 %v1359, 7
      %v1361 = vsub.s32 2, %v1360
      %v1362 = vrot.slane %v338, %v1361
      %v1363 = vmul.f32 %v1292, %v1362
      %v1364 = vmul.f32 %v1291, %v1362
      %v1365 = vmul.f32 %v1290, %v1362
      %v1366 = vmul.f32 %v1289, %v1362
      %v1367 = vmul.f32 %v1288, %v1362
      %v1368 = vmul.f32 %v1287, %v1362
      %v1369 = vmul.f32 %v1286, %v1362
      %v1370 = vmul.f32 %v1285, %v1362
      %v1371 = vadd.f32 %v1351, %v1363
      %v1372 = vadd.f32 %v1352, %v1364
      %v1373 = vadd.f32 %v1353, %v1365
      %v1374 = vadd.f32 %v1354, %v1366
      %v1375 = vadd.f32 %v1355, %v1367
      %v1376 = vadd.f32 %v1356, %v1368
      %v1377 = vadd.f32 %v1357, %v1369
      %v1378 = vadd.f32 %v1358, %v1370
      %v1379 = vlaneseq
      %v1380 = vshrl.u32 %v1379, 7
      %v1381 = vsub.s32 1, %v1380
      %v1382 = vrot.slane %v339, %v1381
      %v1383 = vmul.f32 %v1290, %v1382
      %v1384 = vmul.f32 %v1289, %v1382
      %v1385 = vmul.f32 %v1288, %v1382
      %v1386 = vmul.f32 %v1287, %v1382
      %v1387 = vmul.f32 %v1286, %v1382
      %v1388 = vmul.f32 %v1285, %v1382
      %v1389 = vmul.f32 %v1284, %v1382
      %v1390 = vmul.f32 %v1283, %v1382
      %v1391 = vadd.f32 %v1371, %v1383
      %v1392 = vadd.f32 %v1372, %v1384
      %v1393 = vadd.f32 %v1373, %v1385
      %v1394 = vadd.f32 %v1374, %v1386
      %v1395 = vadd.f32 %v1375, %v1387
      %v1396 = vadd.f32 %v1376, %v1388
      %v1397 = vadd.f32 %v1377, %v1389
      %v1398 = vadd.f32 %v1378, %v1390
      %v1399 = vlaneseq
      %v1400 = vshrl.u32 %v1399, 7
      %v1401 = vsub.s32 0, %v1400
      %v1402 = vrot.slane %v340, %v1401
      %v1403 = vmul.f32 %v1288, %v1402
      %v1404 = vmul.f32 %v1287, %v1402
      %v1405 = vmul.f32 %v1286, %v1402
      %v1406 = vmul.f32 %v1285, %v1402
      %v1407 = vmul.f32 %v1284, %v1402
      %v1408 = vmul.f32 %v1283, %v1402
      %v1409 = vmul.f32 %v1282, %v1402
      %v1410 = vmul.f32 %v1281, %v1402
      %v1411 = vadd.f32 %v1391, %v1403
      %v1412 = vadd.f32 %v1392, %v1404
      %v1413 = vadd.f32 %v1393, %v1405
      %v1414 = vadd.f32 %v1394, %v1406
      %v1415 = vadd.f32 %v1395, %v1407
      %v1416 = vadd.f32 %v1396, %v1408
      %v1417 = vadd.f32 %v1397, %v1409
      %v1418 = vadd.f32 %v1398, %v1410
      %v1419 = vlaneseq
      %v1420 = vshrl.u32 %v1419, 7
      %v1421 = vsub.s32 7, %v1420
      %v1422 = vrot.slane %v340, %v1421
      %v1423 = vmul.f32 %v1286, %v1422
      %v1424 = vmul.f32 %v1285, %v1422
      %v1425 = vmul.f32 %v1284, %v1422
      %v1426 = vmul.f32 %v1283, %v1422
      %v1427 = vmul.f32 %v1282, %v1422
      %v1428 = vmul.f32 %v1281, %v1422
      %v1429 = vmul.f32 %v1280, %v1422
      %v1430 = vmul.f32 %v1279, %v1422
      %v1431 = vadd.f32 %v1411, %v1423
      %v1432 = vadd.f32 %v1412, %v1424
      %v1433 = vadd.f32 %v1413, %v1425
      %v1434 = vadd.f32 %v1414, %v1426
      %v1435 = vadd.f32 %v1415, %v1427
      %v1436 = vadd.f32 %v1416, %v1428
      %v1437 = vadd.f32 %v1417, %v1429
      %v1438 = vadd.f32 %v1418, %v1430
      %v1439 = vrot.slane %v305, 6
      %v1440 = vrot.slane %v306, 6
      %v1441 = vrot.slane %v307, 6
      %v1442 = vrot.slane %v308, 6
      %v1443 = vrot.slane %v309, 6
      %v1444 = vrot.slane %v310, 6
      %v1445 = vrot.slane %v311, 6
      %v1446 = vrot.slane %v312, 6
      %v1447 = vrot.slane %v313, 6
      %v1448 = vrot.slane %v314, 6
      %v1449 = vrot.slane %v315, 6
      %v1450 = vrot.slane %v316, 6
      %v1451 = vrot.slane %v317, 6
      %v1452 = vrot.slane %v318, 6
      %v1453 = vrot.slane %v319, 6
      %v1454 = vrot.slane %v320, 6
      %v1455 = vrot.slane %v321, 6
      %v1456 = vrot.slane %v322, 6
      %v1457 = vrot.slane %v323, 6
      %v1458 = vrot.slane %v324, 6
      %v1459 = vrot.slane %v325, 6
      %v1460 = vrot.slane %v326, 6
      %v1461 = vrot.slane %v327, 6
      %v1462 = vrot.slane %v328, 6
      %v1463 = vrot.slane %v329, 6
      %v1464 = vrot.slane %v330, 6
      %v1465 = vrot.slane %v331, 6
      %v1466 = vrot.slane %v332, 6
      %v1467 = vrot.slane %v333, 6
      %v1468 = vrot.slane %v334, 6
      %vm1469 = vcmp.lt.s32.totalorder %v513, 2
      %v1470 = vsel %vm1469, %v1467, %v1468
      %v1471 = vsel %vm1469, %v1466, %v1467
      %v1472 = vsel %vm1469, %v1464, %v1465
      %v1473 = vsel %vm1469, %v1463, %v1464
      %v1474 = vsel %vm1469, %v1461, %v1462
      %v1475 = vsel %vm1469, %v1460, %v1461
      %v1476 = vsel %vm1469, %v1458, %v1459
      %v1477 = vsel %vm1469, %v1457, %v1458
      %v1478 = vsel %vm1469, %v1455, %v1456
      %v1479 = vsel %vm1469, %v1454, %v1455
      %v1480 = vsel %vm1469, %v1452, %v1453
      %v1481 = vsel %vm1469, %v1451, %v1452
      %v1482 = vsel %vm1469, %v1449, %v1450
      %v1483 = vsel %vm1469, %v1448, %v1449
      %v1484 = vsel %vm1469, %v1446, %v1447
      %v1485 = vsel %vm1469, %v1445, %v1446
      %v1486 = vsel %vm1469, %v1443, %v1444
      %v1487 = vsel %vm1469, %v1442, %v1443
      %v1488 = vsel %vm1469, %v1440, %v1441
      %v1489 = vsel %vm1469, %v1439, %v1440
      %v1490 = vlaneseq
      %v1491 = vshrl.u32 %v1490, 7
      %v1492 = vsub.s32 6, %v1491
      %v1493 = vrot.slane %v335, %v1492
      %v1494 = vmul.f32 %v1489, %v1493
      %v1495 = vmul.f32 %v1488, %v1493
      %v1496 = vmul.f32 %v1487, %v1493
      %v1497 = vmul.f32 %v1486, %v1493
      %v1498 = vmul.f32 %v1485, %v1493
      %v1499 = vmul.f32 %v1484, %v1493
      %v1500 = vmul.f32 %v1483, %v1493
      %v1501 = vmul.f32 %v1482, %v1493
      %v1502 = vadd.f32 %v1431, %v1494
      %v1503 = vadd.f32 %v1432, %v1495
      %v1504 = vadd.f32 %v1433, %v1496
      %v1505 = vadd.f32 %v1434, %v1497
      %v1506 = vadd.f32 %v1435, %v1498
      %v1507 = vadd.f32 %v1436, %v1499
      %v1508 = vadd.f32 %v1437, %v1500
      %v1509 = vadd.f32 %v1438, %v1501
      %v1510 = vlaneseq
      %v1511 = vshrl.u32 %v1510, 7
      %v1512 = vsub.s32 5, %v1511
      %v1513 = vrot.slane %v336, %v1512
      %v1514 = vmul.f32 %v1487, %v1513
      %v1515 = vmul.f32 %v1486, %v1513
      %v1516 = vmul.f32 %v1485, %v1513
      %v1517 = vmul.f32 %v1484, %v1513
      %v1518 = vmul.f32 %v1483, %v1513
      %v1519 = vmul.f32 %v1482, %v1513
      %v1520 = vmul.f32 %v1481, %v1513
      %v1521 = vmul.f32 %v1480, %v1513
      %v1522 = vadd.f32 %v1502, %v1514
      %v1523 = vadd.f32 %v1503, %v1515
      %v1524 = vadd.f32 %v1504, %v1516
      %v1525 = vadd.f32 %v1505, %v1517
      %v1526 = vadd.f32 %v1506, %v1518
      %v1527 = vadd.f32 %v1507, %v1519
      %v1528 = vadd.f32 %v1508, %v1520
      %v1529 = vadd.f32 %v1509, %v1521
      %v1530 = vlaneseq
      %v1531 = vshrl.u32 %v1530, 7
      %v1532 = vsub.s32 4, %v1531
      %v1533 = vrot.slane %v337, %v1532
      %v1534 = vmul.f32 %v1485, %v1533
      %v1535 = vmul.f32 %v1484, %v1533
      %v1536 = vmul.f32 %v1483, %v1533
      %v1537 = vmul.f32 %v1482, %v1533
      %v1538 = vmul.f32 %v1481, %v1533
      %v1539 = vmul.f32 %v1480, %v1533
      %v1540 = vmul.f32 %v1479, %v1533
      %v1541 = vmul.f32 %v1478, %v1533
      %v1542 = vadd.f32 %v1522, %v1534
      %v1543 = vadd.f32 %v1523, %v1535
      %v1544 = vadd.f32 %v1524, %v1536
      %v1545 = vadd.f32 %v1525, %v1537
      %v1546 = vadd.f32 %v1526, %v1538
      %v1547 = vadd.f32 %v1527, %v1539
      %v1548 = vadd.f32 %v1528, %v1540
      %v1549 = vadd.f32 %v1529, %v1541
      %v1550 = vlaneseq
      %v1551 = vshrl.u32 %v1550, 7
      %v1552 = vsub.s32 3, %v1551
      %v1553 = vrot.slane %v338, %v1552
      %v1554 = vmul.f32 %v1483, %v1553
      %v1555 = vmul.f32 %v1482, %v1553
      %v1556 = vmul.f32 %v1481, %v1553
      %v1557 = vmul.f32 %v1480, %v1553
      %v1558 = vmul.f32 %v1479, %v1553
      %v1559 = vmul.f32 %v1478, %v1553
      %v1560 = vmul.f32 %v1477, %v1553
      %v1561 = vmul.f32 %v1476, %v1553
      %v1562 = vadd.f32 %v1542, %v1554
      %v1563 = vadd.f32 %v1543, %v1555
      %v1564 = vadd.f32 %v1544, %v1556
      %v1565 = vadd.f32 %v1545, %v1557
      %v1566 = vadd.f32 %v1546, %v1558
      %v1567 = vadd.f32 %v1547, %v1559
      %v1568 = vadd.f32 %v1548, %v1560
      %v1569 = vadd.f32 %v1549, %v1561
      %v1570 = vlaneseq
      %v1571 = vshrl.u32 %v1570, 7
      %v1572 = vsub.s32 2, %v1571
      %v1573 = vrot.slane %v339, %v1572
      %v1574 = vmul.f32 %v1481, %v1573
      %v1575 = vmul.f32 %v1480, %v1573
      %v1576 = vmul.f32 %v1479, %v1573
      %v1577 = vmul.f32 %v1478, %v1573
      %v1578 = vmul.f32 %v1477, %v1573
      %v1579 = vmul.f32 %v1476, %v1573
      %v1580 = vmul.f32 %v1475, %v1573
      %v1581 = vmul.f32 %v1474, %v1573
      %v1582 = vadd.f32 %v1562, %v1574
      %v1583 = vadd.f32 %v1563, %v1575
      %v1584 = vadd.f32 %v1564, %v1576
      %v1585 = vadd.f32 %v1565, %v1577
      %v1586 = vadd.f32 %v1566, %v1578
      %v1587 = vadd.f32 %v1567, %v1579
      %v1588 = vadd.f32 %v1568, %v1580
      %v1589 = vadd.f32 %v1569, %v1581
      %v1590 = vlaneseq
      %v1591 = vshrl.u32 %v1590, 7
      %v1592 = vsub.s32 1, %v1591
      %v1593 = vrot.slane %v340, %v1592
      %v1594 = vmul.f32 %v1479, %v1593
      %v1595 = vmul.f32 %v1478, %v1593
      %v1596 = vmul.f32 %v1477, %v1593
      %v1597 = vmul.f32 %v1476, %v1593
      %v1598 = vmul.f32 %v1475, %v1593
      %v1599 = vmul.f32 %v1474, %v1593
      %v1600 = vmul.f32 %v1473, %v1593
      %v1601 = vmul.f32 %v1472, %v1593
      %v1602 = vadd.f32 %v1582, %v1594
      %v1603 = vadd.f32 %v1583, %v1595
      %v1604 = vadd.f32 %v1584, %v1596
      %v1605 = vadd.f32 %v1585, %v1597
      %v1606 = vadd.f32 %v1586, %v1598
      %v1607 = vadd.f32 %v1587, %v1599
      %v1608 = vadd.f32 %v1588, %v1600
      %v1609 = vadd.f32 %v1589, %v1601
      %v1610 = vlaneseq
      %v1611 = vshrl.u32 %v1610, 7
      %v1612 = vsub.s32 0, %v1611
      %v1613 = vrot.slane %v341, %v1612
      %v1614 = vmul.f32 %v1477, %v1613
      %v1615 = vmul.f32 %v1476, %v1613
      %v1616 = vmul.f32 %v1475, %v1613
      %v1617 = vmul.f32 %v1474, %v1613
      %v1618 = vmul.f32 %v1473, %v1613
      %v1619 = vmul.f32 %v1472, %v1613
      %v1620 = vmul.f32 %v1471, %v1613
      %v1621 = vmul.f32 %v1470, %v1613
      %v1622 = vadd.f32 %v1602, %v1614
      %v1623 = vadd.f32 %v1603, %v1615
      %v1624 = vadd.f32 %v1604, %v1616
      %v1625 = vadd.f32 %v1605, %v1617
      %v1626 = vadd.f32 %v1606, %v1618
      %v1627 = vadd.f32 %v1607, %v1619
      %v1628 = vadd.f32 %v1608, %v1620
      %v1629 = vadd.f32 %v1609, %v1621
      %v1630 = vld [vmem:[%s2] sm:$0x1]
      %v1632 = vlaneseq
      %v1633 = vshrl.u32 %v1632, 7
      %v1634 = vsub.s32 0, %v1633
      %v1635 = vrot.slane %v1630, %v1634
      %v1637 = vadd.f32 %v1622, %v1635
      %v1638 = vadd.f32 %v1623, %v1635
      %v1639 = vadd.f32 %v1624, %v1635
      %v1640 = vadd.f32 %v1625, %v1635
      %v1641 = vadd.f32 %v1626, %v1635
      %v1642 = vadd.f32 %v1627, %v1635
      %v1643 = vadd.f32 %v1628, %v1635
      %v1644 = vadd.f32 %v1629, %v1635
      %1645 = vadd.xlane.f32.xlu0 %v1637
      %v1646 = vpop.xlane.xlu0 %1645
      %1647 = vadd.xlane.f32.xlu0 %v1638
      %v1648 = vpop.xlane.xlu0 %1647
      %1649 = vadd.xlane.f32.xlu0 %v1639
      %v1650 = vpop.xlane.xlu0 %1649
      %1651 = vadd.xlane.f32.xlu0 %v1640
      %v1652 = vpop.xlane.xlu0 %1651
      %1653 = vadd.xlane.f32.xlu0 %v1641
      %v1654 = vpop.xlane.xlu0 %1653
      %1655 = vadd.xlane.f32.xlu0 %v1642
      %v1656 = vpop.xlane.xlu0 %1655
      %1657 = vadd.xlane.f32.xlu0 %v1643
      %v1658 = vpop.xlane.xlu0 %1657
      %1659 = vadd.xlane.f32.xlu0 %v1644
      %v1660 = vpop.xlane.xlu0 %1659
      %v1661 = vmul.f32 %v1646, 0.03125
      %v1662 = vmul.f32 %v1648, 0.03125
      %v1663 = vmul.f32 %v1650, 0.03125
      %v1664 = vmul.f32 %v1652, 0.03125
      %v1665 = vmul.f32 %v1654, 0.03125
      %v1666 = vmul.f32 %v1656, 0.03125
      %v1667 = vmul.f32 %v1658, 0.03125
      %v1668 = vmul.f32 %v1660, 0.03125
      %v1669 = vsub.f32 %v1637, %v1661
      %v1670 = vsub.f32 %v1638, %v1662
      %v1671 = vsub.f32 %v1639, %v1663
      %v1672 = vsub.f32 %v1640, %v1664
      %v1673 = vsub.f32 %v1641, %v1665
      %v1674 = vsub.f32 %v1642, %v1666
      %v1675 = vsub.f32 %v1643, %v1667
      %v1676 = vsub.f32 %v1644, %v1668
      %v1677 = vmul.f32 %v1669, %v1669
      %v1678 = vmul.f32 %v1670, %v1670
      %v1679 = vmul.f32 %v1671, %v1671
      %v1680 = vmul.f32 %v1672, %v1672
      %v1681 = vmul.f32 %v1673, %v1673
      %v1682 = vmul.f32 %v1674, %v1674
      %v1683 = vmul.f32 %v1675, %v1675
      %v1684 = vmul.f32 %v1676, %v1676
      %1685 = vadd.xlane.f32.xlu0 %v1677
      %v1686 = vpop.xlane.xlu0 %1685
      %1687 = vadd.xlane.f32.xlu0 %v1678
      %v1688 = vpop.xlane.xlu0 %1687
      %1689 = vadd.xlane.f32.xlu0 %v1679
      %v1690 = vpop.xlane.xlu0 %1689
      %1691 = vadd.xlane.f32.xlu0 %v1680
      %v1692 = vpop.xlane.xlu0 %1691
      %1693 = vadd.xlane.f32.xlu0 %v1681
      %v1694 = vpop.xlane.xlu0 %1693
      %1695 = vadd.xlane.f32.xlu0 %v1682
      %v1696 = vpop.xlane.xlu0 %1695
      %1697 = vadd.xlane.f32.xlu0 %v1683
      %v1698 = vpop.xlane.xlu0 %1697
      %1699 = vadd.xlane.f32.xlu0 %v1684
      %v1700 = vpop.xlane.xlu0 %1699
      %v1701 = vmul.f32 %v1661, %v1661
      %v1702 = vmul.f32 %v1662, %v1662
      %v1703 = vmul.f32 %v1663, %v1663
      %v1704 = vmul.f32 %v1664, %v1664
      %v1705 = vmul.f32 %v1665, %v1665
      %v1706 = vmul.f32 %v1666, %v1666
      %v1707 = vmul.f32 %v1667, %v1667
      %v1708 = vmul.f32 %v1668, %v1668
      %v1709 = vmul.f32 %v1701, 96.0
      %v1710 = vmul.f32 %v1702, 96.0
      %v1711 = vmul.f32 %v1703, 96.0
      %v1712 = vmul.f32 %v1704, 96.0
      %v1713 = vmul.f32 %v1705, 96.0
      %v1714 = vmul.f32 %v1706, 96.0
      %v1715 = vmul.f32 %v1707, 96.0
      %v1716 = vmul.f32 %v1708, 96.0
      %v1717 = vsub.f32 %v1686, %v1709
      %v1718 = vsub.f32 %v1688, %v1710
      %v1719 = vsub.f32 %v1690, %v1711
      %v1720 = vsub.f32 %v1692, %v1712
      %v1721 = vsub.f32 %v1694, %v1713
      %v1722 = vsub.f32 %v1696, %v1714
      %v1723 = vsub.f32 %v1698, %v1715
      %v1724 = vsub.f32 %v1700, %v1716
      %v1725 = vmul.f32 %v1717, 0.03125
      %v1726 = vmul.f32 %v1718, 0.03125
      %v1727 = vmul.f32 %v1719, 0.03125
      %v1728 = vmul.f32 %v1720, 0.03125
      %v1729 = vmul.f32 %v1721, 0.03125
      %v1730 = vmul.f32 %v1722, 0.03125
      %v1731 = vmul.f32 %v1723, 0.03125
      %v1732 = vmul.f32 %v1724, 0.03125
      %v1733 = vmax.f32 %v1725, 0.0
      %v1734 = vmax.f32 %v1726, 0.0
      %v1735 = vmax.f32 %v1727, 0.0
      %v1736 = vmax.f32 %v1728, 0.0
      %v1737 = vmax.f32 %v1729, 0.0
      %v1738 = vmax.f32 %v1730, 0.0
      %v1739 = vmax.f32 %v1731, 0.0
      %v1740 = vmax.f32 %v1732, 0.0
      %v1741 = vadd.f32 %v1733, 1e-06
      %v1742 = vadd.f32 %v1734, 1e-06
      %v1743 = vadd.f32 %v1735, 1e-06
      %v1744 = vadd.f32 %v1736, 1e-06
      %v1745 = vadd.f32 %v1737, 1e-06
      %v1746 = vadd.f32 %v1738, 1e-06
      %v1747 = vadd.f32 %v1739, 1e-06
      %v1748 = vadd.f32 %v1740, 1e-06
      %v1749 = vrsqrt.pop %v1741
      %v1750 = vrsqrt.pop %v1742
      %v1751 = vrsqrt.pop %v1743
      %v1752 = vrsqrt.pop %v1744
      %v1753 = vrsqrt.pop %v1745
      %v1754 = vrsqrt.pop %v1746
      %v1755 = vrsqrt.pop %v1747
      %v1756 = vrsqrt.pop %v1748
      %v1757 = vmul.f32 %v1669, %v1749
      %v1758 = vmul.f32 %v1670, %v1750
      %v1759 = vmul.f32 %v1671, %v1751
      %v1760 = vmul.f32 %v1672, %v1752
      %v1761 = vmul.f32 %v1673, %v1753
      %v1762 = vmul.f32 %v1674, %v1754
      %v1763 = vmul.f32 %v1675, %v1755
      %v1764 = vmul.f32 %v1676, %v1756
      %v1765 = vpack.c.bf16 %v1758, %v1757
      %v1766 = vpack.c.bf16 %v1760, %v1759
      %v1767 = vpack.c.bf16 %v1762, %v1761
      %v1768 = vpack.c.bf16 %v1764, %v1763
      %v1769 = vld [vmem:[%s3] sm:$0xff]
      %v1770 = vld [vmem:[%s3 + $0x8] sm:$0xff]
      %v1771 = vld [vmem:[%s3 + $0x10] sm:$0xff]
      %v1772 = vld [vmem:[%s3 + $0x18] sm:$0xff]
      %v1773 = vld [vmem:[%s3 + $0x20] sm:$0xff]
      %v1774 = vld [vmem:[%s3 + $0x28] sm:$0xff]
      %v1775 = vld [vmem:[%s3 + $0x30] sm:$0xff]
      %v1776 = vld [vmem:[%s3 + $0x38] sm:$0xff]
      %v1777 = vld [vmem:[%s3 + $0x40] sm:$0xff]
      %v1778 = vld [vmem:[%s3 + $0x48] sm:$0xff]
      %v1779 = vld [vmem:[%s3 + $0x50] sm:$0xff]
      %v1780 = vld [vmem:[%s3 + $0x58] sm:$0xff]
      %v1781 = vld [vmem:[%s3 + $0x60] sm:$0xff]
      %v1782 = vld [vmem:[%s3 + $0x68] sm:$0xff]
      %v1783 = vld [vmem:[%s3 + $0x70] sm:$0xff]
      %v1784 = vld [vmem:[%s3 + $0x78] sm:$0xff]
      %v1785 = vld [vmem:[%s3 + $0x80] sm:$0xff]
      %v1786 = vld [vmem:[%s3 + $0x88] sm:$0xff]
      %v1787 = vld [vmem:[%s3 + $0x90] sm:$0xff]
      %v1788 = vld [vmem:[%s3 + $0x98] sm:$0xff]
      %v1789 = vld [vmem:[%s3 + $0xa0] sm:$0xff]
      %v1790 = vld [vmem:[%s3 + $0xa8] sm:$0xff]
      %v1791 = vld [vmem:[%s3 + $0xb0] sm:$0xff]
      %v1792 = vld [vmem:[%s3 + $0xb8] sm:$0xff]
      %v1793 = vld [vmem:[%s3 + $0xc0] sm:$0xff]
      %v1794 = vld [vmem:[%s3 + $0xc8] sm:$0xff]
      %v1795 = vld [vmem:[%s3 + $0xd0] sm:$0xff]
      %v1796 = vld [vmem:[%s3 + $0xd8] sm:$0xff]
      %v1797 = vld [vmem:[%s3 + $0xe0] sm:$0xff]
      %v1798 = vld [vmem:[%s3 + $0xe8] sm:$0xff]
      %v1799 = vld [vmem:[%s3 + $0xf0] sm:$0xff]
      %v1800 = vld [vmem:[%s3 + $0xf8] sm:$0xff]
      %v1801 = vld [vmem:[%s4] sm:$0xf]
      %v1803 = vlaneseq
      %v1804 = vshrl.u32 %v1803, 7
      %v1805 = vsub.s32 0, %v1804
      %v1806 = vrot.slane %v1801, %v1805
      %v1807 = vlaneseq
      %v1808 = vshrl.u32 %v1807, 7
      %v1809 = vsub.s32 1, %v1808
      %v1810 = vrot.slane %v1801, %v1809
      %v1811 = vlaneseq
      %v1812 = vshrl.u32 %v1811, 7
      %v1813 = vsub.s32 2, %v1812
      %v1814 = vrot.slane %v1801, %v1813
      %v1815 = vlaneseq
      %v1816 = vshrl.u32 %v1815, 7
      %v1817 = vsub.s32 3, %v1816
      %v1818 = vrot.slane %v1801, %v1817
      %v1855 = vunpack.c.l.b16 %v1769
      %v1856 = vunpack.c.h.b16 %v1769
      %v1857 = vunpack.c.l.b16 %v1770
      %v1858 = vunpack.c.h.b16 %v1770
      %v1859 = vunpack.c.l.b16 %v1771
      %v1860 = vunpack.c.h.b16 %v1771
      %v1861 = vunpack.c.l.b16 %v1772
      %v1862 = vunpack.c.h.b16 %v1772
      %v1863 = vunpack.c.l.b16 %v1773
      %v1864 = vunpack.c.h.b16 %v1773
      %v1865 = vunpack.c.l.b16 %v1774
      %v1866 = vunpack.c.h.b16 %v1774
      %v1867 = vunpack.c.l.b16 %v1775
      %v1868 = vunpack.c.h.b16 %v1775
      %v1869 = vunpack.c.l.b16 %v1776
      %v1870 = vunpack.c.h.b16 %v1776
      %v1871 = vunpack.c.l.b16 %v1777
      %v1872 = vunpack.c.h.b16 %v1777
      %v1873 = vunpack.c.l.b16 %v1778
      %v1874 = vunpack.c.h.b16 %v1778
      %v1875 = vunpack.c.l.b16 %v1779
      %v1876 = vunpack.c.h.b16 %v1779
      %v1877 = vunpack.c.l.b16 %v1780
      %v1878 = vunpack.c.h.b16 %v1780
      %v1879 = vunpack.c.l.b16 %v1781
      %v1880 = vunpack.c.h.b16 %v1781
      %v1881 = vunpack.c.l.b16 %v1782
      %v1882 = vunpack.c.h.b16 %v1782
      %v1883 = vunpack.c.l.b16 %v1783
      %v1884 = vunpack.c.h.b16 %v1783
      %v1885 = vunpack.c.l.b16 %v1784
      %v1886 = vunpack.c.h.b16 %v1784
      %v1887 = vunpack.c.l.b16 %v1785
      %v1888 = vunpack.c.h.b16 %v1785
      %v1889 = vunpack.c.l.b16 %v1786
      %v1890 = vunpack.c.h.b16 %v1786
      %v1891 = vunpack.c.l.b16 %v1787
      %v1892 = vunpack.c.h.b16 %v1787
      %v1893 = vunpack.c.l.b16 %v1788
      %v1894 = vunpack.c.h.b16 %v1788
      %v1895 = vunpack.c.l.b16 %v1789
      %v1896 = vunpack.c.h.b16 %v1789
      %v1897 = vunpack.c.l.b16 %v1790
      %v1898 = vunpack.c.h.b16 %v1790
      %v1899 = vunpack.c.l.b16 %v1791
      %v1900 = vunpack.c.h.b16 %v1791
      %v1901 = vunpack.c.l.b16 %v1792
      %v1902 = vunpack.c.h.b16 %v1792
      %v1903 = vunpack.c.l.b16 %v1793
      %v1904 = vunpack.c.h.b16 %v1793
      %v1905 = vunpack.c.l.b16 %v1794
      %v1906 = vunpack.c.h.b16 %v1794
      %v1907 = vunpack.c.l.b16 %v1795
      %v1908 = vunpack.c.h.b16 %v1795
      %v1909 = vunpack.c.l.b16 %v1796
      %v1910 = vunpack.c.h.b16 %v1796
      %v1911 = vunpack.c.l.b16 %v1797
      %v1912 = vunpack.c.h.b16 %v1797
      %v1913 = vunpack.c.l.b16 %v1798
      %v1914 = vunpack.c.h.b16 %v1798
      %v1915 = vunpack.c.l.b16 %v1799
      %v1916 = vunpack.c.h.b16 %v1799
      %v1917 = vunpack.c.l.b16 %v1800
      %v1918 = vunpack.c.h.b16 %v1800
      %v1919 = vpack.c.b16 %v1859, %v1855
      %v1920 = vpack.c.b16 %v1860, %v1856
      %v1921 = vpack.c.b16 %v1861, %v1857
      %v1922 = vpack.c.b16 %v1862, %v1858
      %v1923 = vpack.c.b16 %v1867, %v1863
      %v1924 = vpack.c.b16 %v1868, %v1864
      %v1925 = vpack.c.b16 %v1869, %v1865
      %v1926 = vpack.c.b16 %v1870, %v1866
      %v1927 = vpack.c.b16 %v1875, %v1871
      %v1928 = vpack.c.b16 %v1876, %v1872
      %v1929 = vpack.c.b16 %v1877, %v1873
      %v1930 = vpack.c.b16 %v1878, %v1874
      %v1931 = vpack.c.b16 %v1883, %v1879
      %v1932 = vpack.c.b16 %v1884, %v1880
      %v1933 = vpack.c.b16 %v1885, %v1881
      %v1934 = vpack.c.b16 %v1886, %v1882
      %v1935 = vpack.c.b16 %v1891, %v1887
      %v1936 = vpack.c.b16 %v1892, %v1888
      %v1937 = vpack.c.b16 %v1893, %v1889
      %v1938 = vpack.c.b16 %v1894, %v1890
      %v1939 = vpack.c.b16 %v1899, %v1895
      %v1940 = vpack.c.b16 %v1900, %v1896
      %v1941 = vpack.c.b16 %v1901, %v1897
      %v1942 = vpack.c.b16 %v1902, %v1898
      %v1943 = vpack.c.b16 %v1907, %v1903
      %v1944 = vpack.c.b16 %v1908, %v1904
      %v1945 = vpack.c.b16 %v1909, %v1905
      %v1946 = vpack.c.b16 %v1910, %v1906
      %v1947 = vpack.c.b16 %v1915, %v1911
      %v1948 = vpack.c.b16 %v1916, %v1912
      %v1949 = vpack.c.b16 %v1917, %v1913
      %v1950 = vpack.c.b16 %v1918, %v1914
      %1983 = vmatprep.subr.bf16.mxu0 %v1948
      %1984 = vmatpush1.bf16.msra.mxu0 %v1947
      %1985 = vmatprep.subr.bf16.mxu0 %v1944
      %1986 = vmatpush1.bf16.msra.mxu0 %v1943
      %1987 = vmatprep.subr.bf16.mxu0 %v1940
      %1988 = vmatpush1.bf16.msra.mxu0 %v1939
      %1989 = vmatprep.subr.bf16.mxu0 %v1936
      %1990 = vmatpush1.bf16.msra.mxu0 %v1935
      %1991 = vmatprep.subr.bf16.mxu0 %v1932
      %1992 = vmatpush1.bf16.msra.mxu0 %v1931
      %1993 = vmatprep.subr.bf16.mxu0 %v1928
      %1994 = vmatpush1.bf16.msra.mxu0 %v1927
      %1995 = vmatprep.subr.bf16.mxu0 %v1924
      %1996 = vmatpush1.bf16.msra.mxu0 %v1923
      %1997 = vmatprep.subr.bf16.mxu0 %v1920
      %1998 = vmatpush1.bf16.msra.mxu0 %v1919
      %1999 = vmatprep.subr.bf16.mxu0 0
      %2000 = vmatpush2.bf16.msra.mxu0 0
      %2001 = vmatprep.subr.bf16.mxu0 0
      %2002 = vmatpush2.bf16.msra.mxu0 0
      %2003 = vmatprep.subr.bf16.mxu0 0
      %2004 = vmatpush2.bf16.msra.mxu0 0
      %2005 = vmatprep.subr.bf16.mxu0 0
      %2006 = vmatpush2.bf16.msra.mxu0 0
      %2007 = vmatprep.subr.bf16.mxu0 0
      %2008 = vmatpush2.bf16.msra.mxu0 0
      %2009 = vmatprep.subr.bf16.mxu0 0
      %2010 = vmatpush2.bf16.msra.mxu0 0
      %2011 = vmatprep.subr.bf16.mxu0 0
      %2012 = vmatpush2.bf16.msra.mxu0 0
      %2013 = vmatprep.subr.bf16.mxu0 0
      %2014 = vmatpush2.bf16.msra.mxu0 0
      %2015 = vmatprep.mubr.bf16.mxu0 0
      %2016 = vmatmul.mubr.bf16.gmra.mxu0 %v1765
      %v2017 = vpop.f32.mrf.mxu0
      %v2018 = vadd.f32 %v1806, %v2017
      %v2019 = vpop.f32.mrf.mxu0
      %v2020 = vadd.f32 %v1810, %v2019
      %v2021 = vpop.f32.mrf.mxu0
      %v2022 = vadd.f32 %v1806, %v2021
      %v2023 = vpop.f32.mrf.mxu0
      %v2024 = vadd.f32 %v1810, %v2023
      %2025 = vmatprep.mubr.bf16.mxu0 0
      %2026 = vmatmul.mubr.bf16.gmra.mxu0 %v1766
      %v2027 = vpop.f32.mrf.mxu0
      %v2028 = vadd.f32 %v1806, %v2027
      %v2029 = vpop.f32.mrf.mxu0
      %v2030 = vadd.f32 %v1810, %v2029
      %v2031 = vpop.f32.mrf.mxu0
      %v2032 = vadd.f32 %v1806, %v2031
      %v2033 = vpop.f32.mrf.mxu0
      %v2034 = vadd.f32 %v1810, %v2033
      %2035 = vmatprep.mubr.bf16.mxu0 0
      %2036 = vmatmul.mubr.bf16.gmra.mxu0 %v1767
      %v2037 = vpop.f32.mrf.mxu0
      %v2038 = vadd.f32 %v1806, %v2037
      %v2039 = vpop.f32.mrf.mxu0
      %v2040 = vadd.f32 %v1810, %v2039
      %v2041 = vpop.f32.mrf.mxu0
      %v2042 = vadd.f32 %v1806, %v2041
      %v2043 = vpop.f32.mrf.mxu0
      %v2044 = vadd.f32 %v1810, %v2043
      %2045 = vmatprep.mubr.bf16.mxu0 0
      %2046 = vmatmul.mubr.bf16.gmra.mxu0 %v1768
      %v2047 = vpop.f32.mrf.mxu0
      %v2048 = vadd.f32 %v1806, %v2047
      %v2049 = vpop.f32.mrf.mxu0
      %v2050 = vadd.f32 %v1810, %v2049
      %v2051 = vpop.f32.mrf.mxu0
      %v2052 = vadd.f32 %v1806, %v2051
      %v2053 = vpop.f32.mrf.mxu0
      %v2054 = vadd.f32 %v1810, %v2053
      %2055 = vdwg.mxu0
      %2056 = vmatprep.subr.bf16.mxu0 %v1950
      %2057 = vmatpush1.bf16.msra.mxu0 %v1949
      %2058 = vmatprep.subr.bf16.mxu0 %v1946
      %2059 = vmatpush1.bf16.msra.mxu0 %v1945
      %2060 = vmatprep.subr.bf16.mxu0 %v1942
      %2061 = vmatpush1.bf16.msra.mxu0 %v1941
      %2062 = vmatprep.subr.bf16.mxu0 %v1938
      %2063 = vmatpush1.bf16.msra.mxu0 %v1937
      %2064 = vmatprep.subr.bf16.mxu0 %v1934
      %2065 = vmatpush1.bf16.msra.mxu0 %v1933
      %2066 = vmatprep.subr.bf16.mxu0 %v1930
      %2067 = vmatpush1.bf16.msra.mxu0 %v1929
      %2068 = vmatprep.subr.bf16.mxu0 %v1926
      %2069 = vmatpush1.bf16.msra.mxu0 %v1925
      %2070 = vmatprep.subr.bf16.mxu0 %v1922
      %2071 = vmatpush1.bf16.msra.mxu0 %v1921
      %2072 = vmatprep.subr.bf16.mxu0 0
      %2073 = vmatpush2.bf16.msra.mxu0 0
      %2074 = vmatprep.subr.bf16.mxu0 0
      %2075 = vmatpush2.bf16.msra.mxu0 0
      %2076 = vmatprep.subr.bf16.mxu0 0
      %2077 = vmatpush2.bf16.msra.mxu0 0
      %2078 = vmatprep.subr.bf16.mxu0 0
      %2079 = vmatpush2.bf16.msra.mxu0 0
      %2080 = vmatprep.subr.bf16.mxu0 0
      %2081 = vmatpush2.bf16.msra.mxu0 0
      %2082 = vmatprep.subr.bf16.mxu0 0
      %2083 = vmatpush2.bf16.msra.mxu0 0
      %2084 = vmatprep.subr.bf16.mxu0 0
      %2085 = vmatpush2.bf16.msra.mxu0 0
      %2086 = vmatprep.subr.bf16.mxu0 0
      %2087 = vmatpush2.bf16.msra.mxu0 0
      %2088 = vmatprep.mubr.bf16.mxu0 0
      %2089 = vmatmul.mubr.bf16.gmra.mxu0 %v1765
      %v2090 = vpop.f32.mrf.mxu0
      %v2091 = vadd.f32 %v1814, %v2090
      %v2092 = vpop.f32.mrf.mxu0
      %v2093 = vadd.f32 %v1818, %v2092
      %v2094 = vpop.f32.mrf.mxu0
      %v2095 = vadd.f32 %v1814, %v2094
      %v2096 = vpop.f32.mrf.mxu0
      %v2097 = vadd.f32 %v1818, %v2096
      %2098 = vmatprep.mubr.bf16.mxu0 0
      %2099 = vmatmul.mubr.bf16.gmra.mxu0 %v1766
      %v2100 = vpop.f32.mrf.mxu0
      %v2101 = vadd.f32 %v1814, %v2100
      %v2102 = vpop.f32.mrf.mxu0
      %v2103 = vadd.f32 %v1818, %v2102
      %v2104 = vpop.f32.mrf.mxu0
      %v2105 = vadd.f32 %v1814, %v2104
      %v2106 = vpop.f32.mrf.mxu0
      %v2107 = vadd.f32 %v1818, %v2106
      %2108 = vmatprep.mubr.bf16.mxu0 0
      %2109 = vmatmul.mubr.bf16.gmra.mxu0 %v1767
      %v2110 = vpop.f32.mrf.mxu0
      %v2111 = vadd.f32 %v1814, %v2110
      %v2112 = vpop.f32.mrf.mxu0
      %v2113 = vadd.f32 %v1818, %v2112
      %v2114 = vpop.f32.mrf.mxu0
      %v2115 = vadd.f32 %v1814, %v2114
      %v2116 = vpop.f32.mrf.mxu0
      %v2117 = vadd.f32 %v1818, %v2116
      %2118 = vmatprep.mubr.bf16.mxu0 0
      %2119 = vmatmul.mubr.bf16.gmra.mxu0 %v1768
      %v2120 = vpop.f32.mrf.mxu0
      %v2121 = vadd.f32 %v1814, %v2120
      %v2122 = vpop.f32.mrf.mxu0
      %v2123 = vadd.f32 %v1818, %v2122
      %v2124 = vpop.f32.mrf.mxu0
      %v2125 = vadd.f32 %v1814, %v2124
      %v2126 = vpop.f32.mrf.mxu0
      %v2127 = vadd.f32 %v1818, %v2126
      %2128 = vdwg.mxu0
      %v2129 = vmul.f32 %v2018, 0.5
      %v2130 = vmul.f32 %v2020, 0.5
      %v2131 = vmul.f32 %v2091, 0.5
      %v2132 = vmul.f32 %v2093, 0.5
      %v2133 = vmul.f32 %v2022, 0.5
      %v2134 = vmul.f32 %v2024, 0.5
      %v2135 = vmul.f32 %v2095, 0.5
      %v2136 = vmul.f32 %v2097, 0.5
      %v2137 = vmul.f32 %v2028, 0.5
      %v2138 = vmul.f32 %v2030, 0.5
      %v2139 = vmul.f32 %v2101, 0.5
      %v2140 = vmul.f32 %v2103, 0.5
      %v2141 = vmul.f32 %v2032, 0.5
      %v2142 = vmul.f32 %v2034, 0.5
      %v2143 = vmul.f32 %v2105, 0.5
      %v2144 = vmul.f32 %v2107, 0.5
      %v2145 = vmul.f32 %v2038, 0.5
      %v2146 = vmul.f32 %v2040, 0.5
      %v2147 = vmul.f32 %v2111, 0.5
      %v2148 = vmul.f32 %v2113, 0.5
      %v2149 = vmul.f32 %v2042, 0.5
      %v2150 = vmul.f32 %v2044, 0.5
      %v2151 = vmul.f32 %v2115, 0.5
      %v2152 = vmul.f32 %v2117, 0.5
      %v2153 = vmul.f32 %v2048, 0.5
      %v2154 = vmul.f32 %v2050, 0.5
      %v2155 = vmul.f32 %v2121, 0.5
      %v2156 = vmul.f32 %v2123, 0.5
      %v2157 = vmul.f32 %v2052, 0.5
      %v2158 = vmul.f32 %v2054, 0.5
      %v2159 = vmul.f32 %v2125, 0.5
      %v2160 = vmul.f32 %v2127, 0.5
      %v2161 = vmul.f32 %v2018, 0.70710677
      %v2162 = vmul.f32 %v2020, 0.70710677
      %v2163 = vmul.f32 %v2091, 0.70710677
      %v2164 = vmul.f32 %v2093, 0.70710677
      %v2165 = vmul.f32 %v2022, 0.70710677
      %v2166 = vmul.f32 %v2024, 0.70710677
      %v2167 = vmul.f32 %v2095, 0.70710677
      %v2168 = vmul.f32 %v2097, 0.70710677
      %v2169 = vmul.f32 %v2028, 0.70710677
      %v2170 = vmul.f32 %v2030, 0.70710677
      %v2171 = vmul.f32 %v2101, 0.70710677
      %v2172 = vmul.f32 %v2103, 0.70710677
      %v2173 = vmul.f32 %v2032, 0.70710677
      %v2174 = vmul.f32 %v2034, 0.70710677
      %v2175 = vmul.f32 %v2105, 0.70710677
      %v2176 = vmul.f32 %v2107, 0.70710677
      %v2177 = vmul.f32 %v2038, 0.70710677
      %v2178 = vmul.f32 %v2040, 0.70710677
      %v2179 = vmul.f32 %v2111, 0.70710677
      %v2180 = vmul.f32 %v2113, 0.70710677
      %v2181 = vmul.f32 %v2042, 0.70710677
      %v2182 = vmul.f32 %v2044, 0.70710677
      %v2183 = vmul.f32 %v2115, 0.70710677
      %v2184 = vmul.f32 %v2117, 0.70710677
      %v2185 = vmul.f32 %v2048, 0.70710677
      %v2186 = vmul.f32 %v2050, 0.70710677
      %v2187 = vmul.f32 %v2121, 0.70710677
      %v2188 = vmul.f32 %v2123, 0.70710677
      %v2189 = vmul.f32 %v2052, 0.70710677
      %v2190 = vmul.f32 %v2054, 0.70710677
      %v2191 = vmul.f32 %v2125, 0.70710677
      %v2192 = vmul.f32 %v2127, 0.70710677
      %v2193 = verf.f32.pop %v2161
      %v2194 = verf.f32.pop %v2162
      %v2195 = verf.f32.pop %v2163
      %v2196 = verf.f32.pop %v2164
      %v2197 = verf.f32.pop %v2165
      %v2198 = verf.f32.pop %v2166
      %v2199 = verf.f32.pop %v2167
      %v2200 = verf.f32.pop %v2168
      %v2201 = verf.f32.pop %v2169
      %v2202 = verf.f32.pop %v2170
      %v2203 = verf.f32.pop %v2171
      %v2204 = verf.f32.pop %v2172
      %v2205 = verf.f32.pop %v2173
      %v2206 = verf.f32.pop %v2174
      %v2207 = verf.f32.pop %v2175
      %v2208 = verf.f32.pop %v2176
      %v2209 = verf.f32.pop %v2177
      %v2210 = verf.f32.pop %v2178
      %v2211 = verf.f32.pop %v2179
      %v2212 = verf.f32.pop %v2180
      %v2213 = verf.f32.pop %v2181
      %v2214 = verf.f32.pop %v2182
      %v2215 = verf.f32.pop %v2183
      %v2216 = verf.f32.pop %v2184
      %v2217 = verf.f32.pop %v2185
      %v2218 = verf.f32.pop %v2186
      %v2219 = verf.f32.pop %v2187
      %v2220 = verf.f32.pop %v2188
      %v2221 = verf.f32.pop %v2189
      %v2222 = verf.f32.pop %v2190
      %v2223 = verf.f32.pop %v2191
      %v2224 = verf.f32.pop %v2192
      %v2225 = vadd.f32 %v2193, 1.0
      %v2226 = vadd.f32 %v2194, 1.0
      %v2227 = vadd.f32 %v2195, 1.0
      %v2228 = vadd.f32 %v2196, 1.0
      %v2229 = vadd.f32 %v2197, 1.0
      %v2230 = vadd.f32 %v2198, 1.0
      %v2231 = vadd.f32 %v2199, 1.0
      %v2232 = vadd.f32 %v2200, 1.0
      %v2233 = vadd.f32 %v2201, 1.0
      %v2234 = vadd.f32 %v2202, 1.0
      %v2235 = vadd.f32 %v2203, 1.0
      %v2236 = vadd.f32 %v2204, 1.0
      %v2237 = vadd.f32 %v2205, 1.0
      %v2238 = vadd.f32 %v2206, 1.0
      %v2239 = vadd.f32 %v2207, 1.0
      %v2240 = vadd.f32 %v2208, 1.0
      %v2241 = vadd.f32 %v2209, 1.0
      %v2242 = vadd.f32 %v2210, 1.0
      %v2243 = vadd.f32 %v2211, 1.0
      %v2244 = vadd.f32 %v2212, 1.0
      %v2245 = vadd.f32 %v2213, 1.0
      %v2246 = vadd.f32 %v2214, 1.0
      %v2247 = vadd.f32 %v2215, 1.0
      %v2248 = vadd.f32 %v2216, 1.0
      %v2249 = vadd.f32 %v2217, 1.0
      %v2250 = vadd.f32 %v2218, 1.0
      %v2251 = vadd.f32 %v2219, 1.0
      %v2252 = vadd.f32 %v2220, 1.0
      %v2253 = vadd.f32 %v2221, 1.0
      %v2254 = vadd.f32 %v2222, 1.0
      %v2255 = vadd.f32 %v2223, 1.0
      %v2256 = vadd.f32 %v2224, 1.0
      %v2257 = vmul.f32 %v2129, %v2225
      %v2258 = vmul.f32 %v2130, %v2226
      %v2259 = vmul.f32 %v2131, %v2227
      %v2260 = vmul.f32 %v2132, %v2228
      %v2261 = vmul.f32 %v2133, %v2229
      %v2262 = vmul.f32 %v2134, %v2230
      %v2263 = vmul.f32 %v2135, %v2231
      %v2264 = vmul.f32 %v2136, %v2232
      %v2265 = vmul.f32 %v2137, %v2233
      %v2266 = vmul.f32 %v2138, %v2234
      %v2267 = vmul.f32 %v2139, %v2235
      %v2268 = vmul.f32 %v2140, %v2236
      %v2269 = vmul.f32 %v2141, %v2237
      %v2270 = vmul.f32 %v2142, %v2238
      %v2271 = vmul.f32 %v2143, %v2239
      %v2272 = vmul.f32 %v2144, %v2240
      %v2273 = vmul.f32 %v2145, %v2241
      %v2274 = vmul.f32 %v2146, %v2242
      %v2275 = vmul.f32 %v2147, %v2243
      %v2276 = vmul.f32 %v2148, %v2244
      %v2277 = vmul.f32 %v2149, %v2245
      %v2278 = vmul.f32 %v2150, %v2246
      %v2279 = vmul.f32 %v2151, %v2247
      %v2280 = vmul.f32 %v2152, %v2248
      %v2281 = vmul.f32 %v2153, %v2249
      %v2282 = vmul.f32 %v2154, %v2250
      %v2283 = vmul.f32 %v2155, %v2251
      %v2284 = vmul.f32 %v2156, %v2252
      %v2285 = vmul.f32 %v2157, %v2253
      %v2286 = vmul.f32 %v2158, %v2254
      %v2287 = vmul.f32 %v2159, %v2255
      %v2288 = vmul.f32 %v2160, %v2256
      %v2289 = vpack.c.bf16 %v2261, %v2257
      %v2290 = vpack.c.bf16 %v2262, %v2258
      %v2291 = vpack.c.bf16 %v2263, %v2259
      %v2292 = vpack.c.bf16 %v2264, %v2260
      %v2293 = vpack.c.bf16 %v2269, %v2265
      %v2294 = vpack.c.bf16 %v2270, %v2266
      %v2295 = vpack.c.bf16 %v2271, %v2267
      %v2296 = vpack.c.bf16 %v2272, %v2268
      %v2297 = vpack.c.bf16 %v2277, %v2273
      %v2298 = vpack.c.bf16 %v2278, %v2274
      %v2299 = vpack.c.bf16 %v2279, %v2275
      %v2300 = vpack.c.bf16 %v2280, %v2276
      %v2301 = vpack.c.bf16 %v2285, %v2281
      %v2302 = vpack.c.bf16 %v2286, %v2282
      %v2303 = vpack.c.bf16 %v2287, %v2283
      %v2304 = vpack.c.bf16 %v2288, %v2284
      %v2305 = vld [vmem:[%s5] sm:$0xf]
      %v2306 = vld [vmem:[%s5 + $0x4] sm:$0xf]
      %v2307 = vld [vmem:[%s5 + $0x8] sm:$0xf]
      %v2308 = vld [vmem:[%s5 + $0xc] sm:$0xf]
      %v2309 = vld [vmem:[%s5 + $0x10] sm:$0xf]
      %v2310 = vld [vmem:[%s5 + $0x14] sm:$0xf]
      %v2311 = vld [vmem:[%s5 + $0x18] sm:$0xf]
      %v2312 = vld [vmem:[%s5 + $0x1c] sm:$0xf]
      %v2313 = vld [vmem:[%s5 + $0x20] sm:$0xf]
      %v2314 = vld [vmem:[%s5 + $0x24] sm:$0xf]
      %v2315 = vld [vmem:[%s5 + $0x28] sm:$0xf]
      %v2316 = vld [vmem:[%s5 + $0x2c] sm:$0xf]
      %v2317 = vld [vmem:[%s5 + $0x30] sm:$0xf]
      %v2318 = vld [vmem:[%s5 + $0x34] sm:$0xf]
      %v2319 = vld [vmem:[%s5 + $0x38] sm:$0xf]
      %v2320 = vld [vmem:[%s5 + $0x3c] sm:$0xf]
      %v2321 = vld [vmem:[%s5 + $0x40] sm:$0xf]
      %v2322 = vld [vmem:[%s5 + $0x44] sm:$0xf]
      %v2323 = vld [vmem:[%s5 + $0x48] sm:$0xf]
      %v2324 = vld [vmem:[%s5 + $0x4c] sm:$0xf]
      %v2325 = vld [vmem:[%s5 + $0x50] sm:$0xf]
      %v2326 = vld [vmem:[%s5 + $0x54] sm:$0xf]
      %v2327 = vld [vmem:[%s5 + $0x58] sm:$0xf]
      %v2328 = vld [vmem:[%s5 + $0x5c] sm:$0xf]
      %v2329 = vld [vmem:[%s5 + $0x60] sm:$0xf]
      %v2330 = vld [vmem:[%s5 + $0x64] sm:$0xf]
      %v2331 = vld [vmem:[%s5 + $0x68] sm:$0xf]
      %v2332 = vld [vmem:[%s5 + $0x6c] sm:$0xf]
      %v2333 = vld [vmem:[%s5 + $0x70] sm:$0xf]
      %v2334 = vld [vmem:[%s5 + $0x74] sm:$0xf]
      %v2335 = vld [vmem:[%s5 + $0x78] sm:$0xf]
      %v2336 = vld [vmem:[%s5 + $0x7c] sm:$0xf]
      %v2337 = vld [vmem:[%s5 + $0x80] sm:$0xf]
      %v2338 = vld [vmem:[%s5 + $0x84] sm:$0xf]
      %v2339 = vld [vmem:[%s5 + $0x88] sm:$0xf]
      %v2340 = vld [vmem:[%s5 + $0x8c] sm:$0xf]
      %v2341 = vld [vmem:[%s5 + $0x90] sm:$0xf]
      %v2342 = vld [vmem:[%s5 + $0x94] sm:$0xf]
      %v2343 = vld [vmem:[%s5 + $0x98] sm:$0xf]
      %v2344 = vld [vmem:[%s5 + $0x9c] sm:$0xf]
      %v2345 = vld [vmem:[%s5 + $0xa0] sm:$0xf]
      %v2346 = vld [vmem:[%s5 + $0xa4] sm:$0xf]
      %v2347 = vld [vmem:[%s5 + $0xa8] sm:$0xf]
      %v2348 = vld [vmem:[%s5 + $0xac] sm:$0xf]
      %v2349 = vld [vmem:[%s5 + $0xb0] sm:$0xf]
      %v2350 = vld [vmem:[%s5 + $0xb4] sm:$0xf]
      %v2351 = vld [vmem:[%s5 + $0xb8] sm:$0xf]
      %v2352 = vld [vmem:[%s5 + $0xbc] sm:$0xf]
      %v2353 = vld [vmem:[%s5 + $0xc0] sm:$0xf]
      %v2354 = vld [vmem:[%s5 + $0xc4] sm:$0xf]
      %v2355 = vld [vmem:[%s5 + $0xc8] sm:$0xf]
      %v2356 = vld [vmem:[%s5 + $0xcc] sm:$0xf]
      %v2357 = vld [vmem:[%s5 + $0xd0] sm:$0xf]
      %v2358 = vld [vmem:[%s5 + $0xd4] sm:$0xf]
      %v2359 = vld [vmem:[%s5 + $0xd8] sm:$0xf]
      %v2360 = vld [vmem:[%s5 + $0xdc] sm:$0xf]
      %v2361 = vld [vmem:[%s5 + $0xe0] sm:$0xf]
      %v2362 = vld [vmem:[%s5 + $0xe4] sm:$0xf]
      %v2363 = vld [vmem:[%s5 + $0xe8] sm:$0xf]
      %v2364 = vld [vmem:[%s5 + $0xec] sm:$0xf]
      %v2365 = vld [vmem:[%s5 + $0xf0] sm:$0xf]
      %v2366 = vld [vmem:[%s5 + $0xf4] sm:$0xf]
      %v2367 = vld [vmem:[%s5 + $0xf8] sm:$0xf]
      %v2368 = vld [vmem:[%s5 + $0xfc] sm:$0xf]
      %v2369 = vld [vmem:[%s6] sm:$0x1]
      %v2371 = vlaneseq
      %v2372 = vshrl.u32 %v2371, 7
      %v2373 = vsub.s32 0, %v2372
      %v2374 = vrot.slane %v2369, %v2373
      %v2440 = vunpack.c.l.b16 %v2305
      %v2441 = vunpack.c.l.b16 %v2306
      %v2442 = vunpack.c.l.b16 %v2307
      %v2443 = vunpack.c.l.b16 %v2308
      %v2444 = vunpack.c.l.b16 %v2309
      %v2445 = vunpack.c.l.b16 %v2310
      %v2446 = vunpack.c.l.b16 %v2311
      %v2447 = vunpack.c.l.b16 %v2312
      %v2448 = vunpack.c.l.b16 %v2313
      %v2449 = vunpack.c.l.b16 %v2314
      %v2450 = vunpack.c.l.b16 %v2315
      %v2451 = vunpack.c.l.b16 %v2316
      %v2452 = vunpack.c.l.b16 %v2317
      %v2453 = vunpack.c.l.b16 %v2318
      %v2454 = vunpack.c.l.b16 %v2319
      %v2455 = vunpack.c.l.b16 %v2320
      %v2456 = vunpack.c.l.b16 %v2321
      %v2457 = vunpack.c.l.b16 %v2322
      %v2458 = vunpack.c.l.b16 %v2323
      %v2459 = vunpack.c.l.b16 %v2324
      %v2460 = vunpack.c.l.b16 %v2325
      %v2461 = vunpack.c.l.b16 %v2326
      %v2462 = vunpack.c.l.b16 %v2327
      %v2463 = vunpack.c.l.b16 %v2328
      %v2464 = vunpack.c.l.b16 %v2329
      %v2465 = vunpack.c.l.b16 %v2330
      %v2466 = vunpack.c.l.b16 %v2331
      %v2467 = vunpack.c.l.b16 %v2332
      %v2468 = vunpack.c.l.b16 %v2333
      %v2469 = vunpack.c.l.b16 %v2334
      %v2470 = vunpack.c.l.b16 %v2335
      %v2471 = vunpack.c.l.b16 %v2336
      %v2472 = vunpack.c.l.b16 %v2337
      %v2473 = vunpack.c.l.b16 %v2338
      %v2474 = vunpack.c.l.b16 %v2339
      %v2475 = vunpack.c.l.b16 %v2340
      %v2476 = vunpack.c.l.b16 %v2341
      %v2477 = vunpack.c.l.b16 %v2342
      %v2478 = vunpack.c.l.b16 %v2343
      %v2479 = vunpack.c.l.b16 %v2344
      %v2480 = vunpack.c.l.b16 %v2345
      %v2481 = vunpack.c.l.b16 %v2346
      %v2482 = vunpack.c.l.b16 %v2347
      %v2483 = vunpack.c.l.b16 %v2348
      %v2484 = vunpack.c.l.b16 %v2349
      %v2485 = vunpack.c.l.b16 %v2350
      %v2486 = vunpack.c.l.b16 %v2351
      %v2487 = vunpack.c.l.b16 %v2352
      %v2488 = vunpack.c.l.b16 %v2353
      %v2489 = vunpack.c.l.b16 %v2354
      %v2490 = vunpack.c.l.b16 %v2355
      %v2491 = vunpack.c.l.b16 %v2356
      %v2492 = vunpack.c.l.b16 %v2357
      %v2493 = vunpack.c.l.b16 %v2358
      %v2494 = vunpack.c.l.b16 %v2359
      %v2495 = vunpack.c.l.b16 %v2360
      %v2496 = vunpack.c.l.b16 %v2361
      %v2497 = vunpack.c.l.b16 %v2362
      %v2498 = vunpack.c.l.b16 %v2363
      %v2499 = vunpack.c.l.b16 %v2364
      %v2500 = vunpack.c.l.b16 %v2365
      %v2501 = vunpack.c.l.b16 %v2366
      %v2502 = vunpack.c.l.b16 %v2367
      %v2503 = vunpack.c.l.b16 %v2368
      %v2504 = vpack.c.b16 %v2441, %v2440
      %v2505 = vpack.c.b16 %v2443, %v2442
      %v2506 = vpack.c.b16 %v2445, %v2444
      %v2507 = vpack.c.b16 %v2447, %v2446
      %v2508 = vpack.c.b16 %v2449, %v2448
      %v2509 = vpack.c.b16 %v2451, %v2450
      %v2510 = vpack.c.b16 %v2453, %v2452
      %v2511 = vpack.c.b16 %v2455, %v2454
      %v2512 = vpack.c.b16 %v2457, %v2456
      %v2513 = vpack.c.b16 %v2459, %v2458
      %v2514 = vpack.c.b16 %v2461, %v2460
      %v2515 = vpack.c.b16 %v2463, %v2462
      %v2516 = vpack.c.b16 %v2465, %v2464
      %v2517 = vpack.c.b16 %v2467, %v2466
      %v2518 = vpack.c.b16 %v2469, %v2468
      %v2519 = vpack.c.b16 %v2471, %v2470
      %v2520 = vpack.c.b16 %v2473, %v2472
      %v2521 = vpack.c.b16 %v2475, %v2474
      %v2522 = vpack.c.b16 %v2477, %v2476
      %v2523 = vpack.c.b16 %v2479, %v2478
      %v2524 = vpack.c.b16 %v2481, %v2480
      %v2525 = vpack.c.b16 %v2483, %v2482
      %v2526 = vpack.c.b16 %v2485, %v2484
      %v2527 = vpack.c.b16 %v2487, %v2486
      %v2528 = vpack.c.b16 %v2489, %v2488
      %v2529 = vpack.c.b16 %v2491, %v2490
      %v2530 = vpack.c.b16 %v2493, %v2492
      %v2531 = vpack.c.b16 %v2495, %v2494
      %v2532 = vpack.c.b16 %v2497, %v2496
      %v2533 = vpack.c.b16 %v2499, %v2498
      %v2534 = vpack.c.b16 %v2501, %v2500
      %v2535 = vpack.c.b16 %v2503, %v2502
      %2568 = vmatprep.subr.bf16.mxu0 0
      %2569 = vmatpush1.bf16.msra.mxu0 %v2511
      %2570 = vmatprep.subr.bf16.mxu0 0
      %2571 = vmatpush1.bf16.msra.mxu0 %v2510
      %2572 = vmatprep.subr.bf16.mxu0 0
      %2573 = vmatpush1.bf16.msra.mxu0 %v2509
      %2574 = vmatprep.subr.bf16.mxu0 0
      %2575 = vmatpush1.bf16.msra.mxu0 %v2508
      %2576 = vmatprep.subr.bf16.mxu0 0
      %2577 = vmatpush1.bf16.msra.mxu0 %v2507
      %2578 = vmatprep.subr.bf16.mxu0 0
      %2579 = vmatpush1.bf16.msra.mxu0 %v2506
      %2580 = vmatprep.subr.bf16.mxu0 0
      %2581 = vmatpush1.bf16.msra.mxu0 %v2505
      %2582 = vmatprep.subr.bf16.mxu0 0
      %2583 = vmatpush1.bf16.msra.mxu0 %v2504
      %2584 = vmatprep.subr.bf16.mxu0 0
      %2585 = vmatpush2.bf16.msra.mxu0 %v2519
      %2586 = vmatprep.subr.bf16.mxu0 0
      %2587 = vmatpush2.bf16.msra.mxu0 %v2518
      %2588 = vmatprep.subr.bf16.mxu0 0
      %2589 = vmatpush2.bf16.msra.mxu0 %v2517
      %2590 = vmatprep.subr.bf16.mxu0 0
      %2591 = vmatpush2.bf16.msra.mxu0 %v2516
      %2592 = vmatprep.subr.bf16.mxu0 0
      %2593 = vmatpush2.bf16.msra.mxu0 %v2515
      %2594 = vmatprep.subr.bf16.mxu0 0
      %2595 = vmatpush2.bf16.msra.mxu0 %v2514
      %2596 = vmatprep.subr.bf16.mxu0 0
      %2597 = vmatpush2.bf16.msra.mxu0 %v2513
      %2598 = vmatprep.subr.bf16.mxu0 0
      %2599 = vmatpush2.bf16.msra.mxu0 %v2512
      %2600 = vmatprep.mubr.bf16.mxu0 %v2290
      %2601 = vmatmul.mubr.bf16.gmra.mxu0 %v2289
      %v2602 = vpop.f32.mrf.mxu0
      %v2603 = vadd.f32 %v2374, %v2602
      %v2604 = vpop.f32.mrf.mxu0
      %v2605 = vpop.f32.mrf.mxu0
      %v2606 = vadd.f32 %v2374, %v2605
      %v2607 = vpop.f32.mrf.mxu0
      %2608 = vmatprep.mubr.bf16.mxu0 %v2294
      %2609 = vmatmul.mubr.bf16.gmra.mxu0 %v2293
      %v2610 = vpop.f32.mrf.mxu0
      %v2611 = vadd.f32 %v2374, %v2610
      %v2612 = vpop.f32.mrf.mxu0
      %v2613 = vpop.f32.mrf.mxu0
      %v2614 = vadd.f32 %v2374, %v2613
      %v2615 = vpop.f32.mrf.mxu0
      %2616 = vmatprep.mubr.bf16.mxu0 %v2298
      %2617 = vmatmul.mubr.bf16.gmra.mxu0 %v2297
      %v2618 = vpop.f32.mrf.mxu0
      %v2619 = vadd.f32 %v2374, %v2618
      %v2620 = vpop.f32.mrf.mxu0
      %v2621 = vpop.f32.mrf.mxu0
      %v2622 = vadd.f32 %v2374, %v2621
      %v2623 = vpop.f32.mrf.mxu0
      %2624 = vmatprep.mubr.bf16.mxu0 %v2302
      %2625 = vmatmul.mubr.bf16.gmra.mxu0 %v2301
      %v2626 = vpop.f32.mrf.mxu0
      %v2627 = vadd.f32 %v2374, %v2626
      %v2628 = vpop.f32.mrf.mxu0
      %v2629 = vpop.f32.mrf.mxu0
      %v2630 = vadd.f32 %v2374, %v2629
      %v2631 = vpop.f32.mrf.mxu0
      %2632 = vdwg.mxu0
      %2633 = vmatprep.subr.bf16.mxu0 0
      %2634 = vmatpush1.bf16.msra.mxu0 %v2527
      %2635 = vmatprep.subr.bf16.mxu0 0
      %2636 = vmatpush1.bf16.msra.mxu0 %v2526
      %2637 = vmatprep.subr.bf16.mxu0 0
      %2638 = vmatpush1.bf16.msra.mxu0 %v2525
      %2639 = vmatprep.subr.bf16.mxu0 0
      %2640 = vmatpush1.bf16.msra.mxu0 %v2524
      %2641 = vmatprep.subr.bf16.mxu0 0
      %2642 = vmatpush1.bf16.msra.mxu0 %v2523
      %2643 = vmatprep.subr.bf16.mxu0 0
      %2644 = vmatpush1.bf16.msra.mxu0 %v2522
      %2645 = vmatprep.subr.bf16.mxu0 0
      %2646 = vmatpush1.bf16.msra.mxu0 %v2521
      %2647 = vmatprep.subr.bf16.mxu0 0
      %2648 = vmatpush1.bf16.msra.mxu0 %v2520
      %2649 = vmatprep.subr.bf16.mxu0 0
      %2650 = vmatpush2.bf16.msra.mxu0 %v2535
      %2651 = vmatprep.subr.bf16.mxu0 0
      %2652 = vmatpush2.bf16.msra.mxu0 %v2534
      %2653 = vmatprep.subr.bf16.mxu0 0
      %2654 = vmatpush2.bf16.msra.mxu0 %v2533
      %2655 = vmatprep.subr.bf16.mxu0 0
      %2656 = vmatpush2.bf16.msra.mxu0 %v2532
      %2657 = vmatprep.subr.bf16.mxu0 0
      %2658 = vmatpush2.bf16.msra.mxu0 %v2531
      %2659 = vmatprep.subr.bf16.mxu0 0
      %2660 = vmatpush2.bf16.msra.mxu0 %v2530
      %2661 = vmatprep.subr.bf16.mxu0 0
      %2662 = vmatpush2.bf16.msra.mxu0 %v2529
      %2663 = vmatprep.subr.bf16.mxu0 0
      %2664 = vmatpush2.bf16.msra.mxu0 %v2528
      %2665 = vmatprep.mubr.bf16.mxu0 %v2292
      %2666 = vmatmul.mubr.bf16.gmra.mxu0 %v2291
      %v2667 = vpop.f32.mrf.mxu0
      %v2668 = vadd.f32 %v2603, %v2667
      %v2669 = vpop.f32.mrf.mxu0
      %v2670 = vpop.f32.mrf.mxu0
      %v2671 = vadd.f32 %v2606, %v2670
      %v2672 = vpop.f32.mrf.mxu0
      %2673 = vmatprep.mubr.bf16.mxu0 %v2296
      %2674 = vmatmul.mubr.bf16.gmra.mxu0 %v2295
      %v2675 = vpop.f32.mrf.mxu0
      %v2676 = vadd.f32 %v2611, %v2675
      %v2677 = vpop.f32.mrf.mxu0
      %v2678 = vpop.f32.mrf.mxu0
      %v2679 = vadd.f32 %v2614, %v2678
      %v2680 = vpop.f32.mrf.mxu0
      %2681 = vmatprep.mubr.bf16.mxu0 %v2300
      %2682 = vmatmul.mubr.bf16.gmra.mxu0 %v2299
      %v2683 = vpop.f32.mrf.mxu0
      %v2684 = vadd.f32 %v2619, %v2683
      %v2685 = vpop.f32.mrf.mxu0
      %v2686 = vpop.f32.mrf.mxu0
      %v2687 = vadd.f32 %v2622, %v2686
      %v2688 = vpop.f32.mrf.mxu0
      %2689 = vmatprep.mubr.bf16.mxu0 %v2304
      %2690 = vmatmul.mubr.bf16.gmra.mxu0 %v2303
      %v2691 = vpop.f32.mrf.mxu0
      %v2692 = vadd.f32 %v2627, %v2691
      %v2693 = vpop.f32.mrf.mxu0
      %v2694 = vpop.f32.mrf.mxu0
      %v2695 = vadd.f32 %v2630, %v2694
      %v2696 = vpop.f32.mrf.mxu0
      %2697 = vdwg.mxu0
      %v2698 = vadd.f32 %v910, %v2668
      %v2699 = vadd.f32 %v909, %v2671
      %v2700 = vadd.f32 %v908, %v2676
      %v2701 = vadd.f32 %v907, %v2679
      %v2702 = vadd.f32 %v906, %v2684
      %v2703 = vadd.f32 %v905, %v2687
      %v2704 = vadd.f32 %v904, %v2692
      %v2705 = vadd.f32 %v903, %v2695
      %2706 = vst [vmem:[%s300] sm:$0xff] %v2698
      %2707 = vst [vmem:[%s300 + $0x8] sm:$0xff] %v2699
      %2708 = vst [vmem:[%s300 + $0x10] sm:$0xff] %v2700
      %2709 = vst [vmem:[%s300 + $0x18] sm:$0xff] %v2701
      %2710 = vst [vmem:[%s300 + $0x20] sm:$0xff] %v2702
      %2711 = vst [vmem:[%s300 + $0x28] sm:$0xff] %v2703
      %2712 = vst [vmem:[%s300 + $0x30] sm:$0xff] %v2704
      %2713 = vst [vmem:[%s300 + $0x38] sm:$0xff] %v2705
      %s2714 = smul.u32 8, %s23
      %p2715 = scmp.lt.s32.totalorder %s22, 1
      %s2716 = scalar_select %p2715, %s22, 1
      %p2717 = scmp.lt.s32.totalorder %s2714, 31
      %s2718 = scalar_select %p2717, %s2714, 31
      %s2719 = smul.addr %s2716, 32
      %s2720 = sadd.s32 %s2718, %s2719
      %s2721 = smul.addr %s2720, 8
      %s2722 = scalar_lea.vmem %s7, %s2721
      // Predicated region
      $region49: #{convnext_block_forward.1} parent=47 // pred_check
        %p2723 = pneg %p202
      $region50: #{convnext_block_forward.1} parent=47 // pred_check_branch
        %2725 = sbr.rel (%p2723) target = $region52
      $region51: #{convnext_block_forward.1} parent=47 // pred_region
        %s2726 = smul.u32 8, %s23
      $region52: #{convnext_block_forward.1} parent=47 // pred_fallthru
        _
    $region48: #{convnext_block_forward.1} parent=5 // pred_fallthru
      _
    %p2727 = scmp.le.s32.totalorder 2, %s13
    // Predicated region
    $region53: #{convnext_block_forward.1} parent=5 // pred_check
      %p2728 = pneg %p2727
    $region54: #{convnext_block_forward.1} parent=5 // pred_check_branch
      %2730 = sbr.rel (%p2728) target = $region56
    $region55: #{convnext_block_forward.1} parent=5 // pred_region
      %s2731 = ssub.s32 %s13, 2
      // Predicated region
      $region57: #{convnext_block_forward.1} parent=55 // pred_check
        %p2732 = pneg %p208
      $region58: #{convnext_block_forward.1} parent=55 // pred_check_branch
        %2734 = sbr.rel (%p2732) target = $region60
      $region59: #{convnext_block_forward.1} parent=55 // pred_region
        %s2735 = smul.u32 8, %s25
        %p2736 = scmp.lt.s32.totalorder %s24, 1
        %s2737 = scalar_select %p2736, %s24, 1
        %p2738 = scmp.lt.s32.totalorder %s2735, 31
        %s2739 = scalar_select %p2738, %s2735, 31
        %s2740 = smul.addr %s2737, 32
        %s2741 = sadd.s32 %s2739, %s2740
        %s2742 = smul.addr %s2741, 8
        %s2743 = scalar_lea.vmem %s7, %s2742
      $region60: #{convnext_block_forward.1} parent=55 // pred_fallthru
        _
    $region56: #{convnext_block_forward.1} parent=5 // pred_fallthru
      _
  $region6: #{convnext_block_forward.1} parent=0 // loop_footer
    %s17 = sadd.s32 1, %s13
  $region7: #{convnext_block_forward.1} parent=0 // loop_footer_branch
    %12 = sbr.rel target = $region3
  $region8: #{convnext_block_forward.1} parent=0 // loop_exit
    _

</llo_original>
